<compile_context>
chip_gen: v7x
topology: tpu7x:2x2x1
jax: 0.10.0
libtpu: 0.0.40
codegen_flags: <defaults>
</compile_context>

<pallas_src>
import math

import numpy as np
import jax
import jax.numpy as jnp
from jax.experimental import pallas as pl
from jax.experimental.pallas import tpu as pltpu

# ---------------- small config (mirrors vit_base_patch16_224 structure) ----------------
B = 2
IN_CH = 3
IMG = 16
PATCH = 8
NPATCH = (IMG // PATCH) ** 2          # 4 patches
SEQ = NPATCH + 1                      # +1 cls token = 5
EMBED = 32
HEADS = 4
HEAD_DIM = EMBED // HEADS             # 8
DEPTH = 2
MLP = 4 * EMBED                       # 128
NHID = 32                             # backbone head width (stands in for 1000)
NTOKENS = 8                           # num_classes of the hierarchical softmax
K_PER_CLASS = 4                       # ntokens_per_class
NCLASSES = NTOKENS // K_PER_CLASS     # 2
LN_EPS = 1e-6
CPP = IN_CH * PATCH * PATCH           # 192

BS = B * SEQ                          # 10 rows (cls rows first, then patches)
PB = 8                                # padded row count for the head / HS tail & output
EAUG = EMBED + 8                      # augmented contraction dim (bias row + zero pad)
OUT_LANES = 128

VMEM = pltpu.MemorySpace.VMEM
NEG_BIG = -1e30

# ---- packed-slab row layout (all offsets multiples of 8 for multi-row components) ----
# data slab (per call), lane width CPP
DROW_TP = 16
DROW_BP = 24
DATA_ROWS = 32
# vecs slab, lane width MLP(=128)
VR_ADD = 0                            # rows 0..BS-1 : cls/pos/patch-bias additive slab
VR_BIAS = 16                          # rows 16..16+BS-1 : batch-block attention mask
VR_NORM_G = 32
VR_NORM_B = 33
VR_HEAD_B = 34
VR_HS_BT = 35
VR_HS_BB = 36
VR_BLK = 40                           # + 8*d : ln1_g, ln1_b, ln2_g, ln2_b, proj_b, fc1_b, fc2_b
VEC_ROWS = VR_BLK + 8 * DEPTH         # 56
# w_blk slab (DEPTH, WB_ROWS, MLP)
WB_FC1 = 0
WB_FC2 = EMBED                        # 32
WB_PROJ = EMBED + MLP                 # 160, + 8*head
WB_ROWS = WB_PROJ + HEADS * HEAD_DIM  # 192
# w_misc slab (WM_ROWS, WM_LANES)
WM_LANES = max(EMBED, NHID)
WM_PATCH = 0
WM_HEAD = CPP                         # 192
WM_HST = CPP + EMBED                  # 224
WM_HSB = WM_HST + NHID                # 256
WM_ROWS = WM_HSB + NHID               # 288


# ------------------------------------ fused kernel ------------------------------------
def _fused_vitae_kernel(data_ref, w_qkv_ref, w_blk_ref, w_misc_ref, vecs_ref, out_ref):
    f32 = jnp.float32

    def ln(v, g, b):
        mu = jnp.mean(v, axis=-1, keepdims=True)
        c = v - mu
        var = jnp.mean(c * c, axis=-1, keepdims=True)
        return c * jax.lax.rsqrt(var + LN_EPS) * g + b

    def softmax_rows(s):
        m = jnp.max(s, axis=-1, keepdims=True)
        e = jnp.exp(s - m)
        return e * pl.reciprocal(jnp.sum(e, axis=-1, keepdims=True), approx=True)

    # ---- patch embedding; cls token, pos embed, patch bias folded into one additive slab ----
    x_in = data_ref[0:BS, :]                                        # (BS, CPP)
    patch_w = w_misc_ref[WM_PATCH:WM_PATCH + CPP, 0:EMBED]          # (CPP, E)
    add_slab = vecs_ref[VR_ADD:VR_ADD + BS, 0:EMBED]                # (BS, E)
    x = jnp.dot(x_in, patch_w, preferred_element_type=f32) + add_slab

    bias = vecs_ref[VR_BIAS:VR_BIAS + BS, 0:BS]                     # (BS, BS) 0 / -1e30 mask
    ones_aug = jnp.ones((BS, EAUG - EMBED), f32)                    # hoisted out of the loops
    inv_sqrt2 = 1.0 / math.sqrt(2.0)

    # ---- transformer blocks (all static, aligned slices on VMEM-resident slabs) ----
    for d in range(DEPTH):
        r = VR_BLK + 8 * d
        ln1_g = vecs_ref[r + 0:r + 1, 0:EMBED]
        ln1_b = vecs_ref[r + 1:r + 2, 0:EMBED]
        ln2_g = vecs_ref[r + 2:r + 3, 0:EMBED]
        ln2_b = vecs_ref[r + 3:r + 4, 0:EMBED]
        proj_b = vecs_ref[r + 4:r + 5, 0:EMBED]
        fc1_b = vecs_ref[r + 5:r + 6, 0:MLP]
        fc2_b = vecs_ref[r + 6:r + 7, 0:EMBED]

        # --- MHSA: per-head lane-aligned matmuls; qkv bias + 1/sqrt(d) folded into weights ---
        h = jnp.concatenate([ln(x, ln1_g, ln1_b), ones_aug], axis=1)          # (BS, EAUG)
        attn = None
        for hh in range(HEADS):
            base = (d * HEADS + hh) * 3
            q = jnp.dot(h, w_qkv_ref[base + 0], preferred_element_type=f32)   # (BS, Dh)
            k = jnp.dot(h, w_qkv_ref[base + 1], preferred_element_type=f32)
            v = jnp.dot(h, w_qkv_ref[base + 2], preferred_element_type=f32)
            s = jax.lax.dot_general(q, k, (((1,), (1,)), ((), ())),
                                    preferred_element_type=f32) + bias        # (BS, BS)
            p = softmax_rows(s)
            o = jnp.dot(p, v, preferred_element_type=f32)                     # (BS, Dh)
            pw = w_blk_ref[d, WB_PROJ + hh * HEAD_DIM:WB_PROJ + (hh + 1) * HEAD_DIM, 0:EMBED]
            contrib = jnp.dot(o, pw, preferred_element_type=f32)              # (BS, E)
            if attn is None:
                attn = contrib + proj_b                 # proj bias folded into first head
            else:
                attn = attn + contrib
        x = x + attn

        # --- MLP (exact erf-GELU, matching nn.GELU) ---
        z = ln(x, ln2_g, ln2_b)
        z = jnp.dot(z, w_blk_ref[d, WB_FC1:WB_FC1 + EMBED, :],
                    preferred_element_type=f32) + fc1_b                       # (BS, MLP)
        z = 0.5 * z * (1.0 + jax.lax.erf(z * inv_sqrt2))
        z = jnp.dot(z, w_blk_ref[d, WB_FC2:WB_FC2 + MLP, 0:EMBED],
                    preferred_element_type=f32) + fc2_b
        x = x + z

    # ---- final LN + backbone head + relu on first PB rows (rows 0..B-1 are the cls rows) ----
    norm_g = vecs_ref[VR_NORM_G:VR_NORM_G + 1, 0:EMBED]
    norm_b = vecs_ref[VR_NORM_B:VR_NORM_B + 1, 0:EMBED]
    xf = ln(x[0:PB, :], norm_g, norm_b)
    head_w = w_misc_ref[WM_HEAD:WM_HEAD + EMBED, 0:NHID]
    head_b = vecs_ref[VR_HEAD_B:VR_HEAD_B + 1, 0:NHID]
    feat = jnp.maximum(jnp.dot(xf, head_w, preferred_element_type=f32) + head_b, 0.0)

    # ---- 2-level hierarchical softmax (rows >= B are padding; wrapper ignores them) ----
    tp = data_ref[DROW_TP:DROW_TP + PB, 0:1]            # (PB, 1) f32 : label // K
    bp = data_ref[DROW_BP:DROW_BP + PB, 0:1]            # (PB, 1) f32 : label %  K
    hs_wt = w_misc_ref[WM_HST:WM_HST + NHID, 0:NCLASSES]
    hs_bt = vecs_ref[VR_HS_BT:VR_HS_BT + 1, 0:NCLASSES]
    hs_wb = w_misc_ref[WM_HSB:WM_HSB + NHID, 0:NTOKENS]
    hs_bb = vecs_ref[VR_HS_BB:VR_HS_BB + 1, 0:NTOKENS]

    # level-1 ("class") log-softmax
    tl = jnp.dot(feat, hs_wt, preferred_element_type=f32) + hs_bt             # (PB, C)
    mt = jnp.max(tl, axis=1, keepdims=True)
    lse_t = mt + jnp.log(jnp.sum(jnp.exp(tl - mt), axis=1, keepdims=True))
    logp_top = tl - lse_t
    top_probs = jnp.exp(logp_top)

    # level-2 logits for ALL classes in one matmul; select the target class' K-slice by mask
    bl_all = jnp.dot(feat, hs_wb, preferred_element_type=f32) + hs_bb         # (PB, C*K)
    iota_ck = jax.lax.broadcasted_iota(jnp.int32, (PB, NTOKENS), 1).astype(f32)
    lo = tp * K_PER_CLASS
    mask_t = jnp.logical_and(iota_ck >= lo, iota_ck < lo + K_PER_CLASS)
    bl = jnp.where(mask_t, bl_all, NEG_BIG)
    mb = jnp.max(bl, axis=1, keepdims=True)
    lse_b = mb + jnp.log(jnp.sum(jnp.exp(bl - mb), axis=1, keepdims=True))
    logp_bot = bl - lse_b
    bot_probs = jnp.exp(logp_bot)                                  # zero outside target class

    iota_c = jax.lax.broadcasted_iota(jnp.int32, (PB, NCLASSES), 1).astype(f32)
    t_logp_top = jnp.sum(jnp.where(iota_c == tp, logp_top, 0.0), axis=1, keepdims=True)
    t_logp_bot = jnp.sum(jnp.where(iota_ck == lo + bp, logp_bot, 0.0), axis=1, keepdims=True)
    nll = -(t_logp_top + t_logp_bot)                               # (PB, 1) per-sample loss

    # predictions: argmax at each level (first-max index, like torch.argmax)
    mt_p = jnp.max(top_probs, axis=1, keepdims=True)
    top_idx = jnp.min(jnp.where(top_probs >= mt_p, iota_c, float(NCLASSES)),
                      axis=1, keepdims=True)
    mb_p = jnp.max(bot_probs, axis=1, keepdims=True)
    flat_idx = jnp.min(jnp.where(bot_probs >= mb_p, iota_ck, float(NTOKENS)),
                       axis=1, keepdims=True)
    real_f = top_idx * K_PER_CLASS + (flat_idx - lo)               # global predicted index
    preds = mt_p * mb_p

    # ---- single lane-dense (8,128) store: lane0 = NLL, lane1 = real_indx, lane2 = preds ----
    col = jax.lax.broadcasted_iota(jnp.int32, (PB, OUT_LANES), 1)
    out_ref[...] = (jnp.where(col == 0, nll, 0.0)
                    + jnp.where(col == 1, real_f, 0.0)
                    + jnp.where(col == 2, preds, 0.0))


# ----------------------------------- JAX glue (model) -----------------------------------
def extract_patches(x):
    """NCHW -> (B*num_patches, C*ph*pw), matching Conv2d(k=stride=patch) weight flatten."""
    bb, c, h, w = x.shape
    gh, gw = h // PATCH, w // PATCH
    xp = x.reshape(bb, c, gh, PATCH, gw, PATCH)
    xp = xp.transpose(0, 2, 4, 1, 3, 5)                      # (B, gh, gw, C, p, p)
    return xp.reshape(bb * gh * gw, c * PATCH * PATCH)


def pack_params(params):
    """One-time host-side packing of all parameters into 4 VMEM-friendly slabs."""
    blk = params["blocks"]
    scale = HEAD_DIM ** -0.5

    # per-head q/k/v weights with bias folded into row EMBED (rows EMBED+1.. are zero);
    # scale folded into q.  index = (d*HEADS + head)*3 + {0:q, 1:k, 2:v}
    w_qkv = np.zeros((DEPTH * HEADS * 3, EAUG, HEAD_DIM), np.float32)
    qkv_w = np.asarray(blk["qkv_w"])          # (D, E, 3E)
    qkv_b = np.asarray(blk["qkv_b"])          # (D, 1, 3E)
    for d in range(DEPTH):
        for h in range(HEADS):
            for j in range(3):
                c0 = j * EMBED + h * HEAD_DIM
                s = scale if j == 0 else 1.0
                idx = (d * HEADS + h) * 3 + j
                w_qkv[idx, 0:EMBED, :] = qkv_w[d, :, c0:c0 + HEAD_DIM] * s
                w_qkv[idx, EMBED, :] = qkv_b[d, 0, c0:c0 + HEAD_DIM] * s

    # per-block fc1/fc2 + per-head output-projection rows
    w_blk = np.zeros((DEPTH, WB_ROWS, MLP), np.float32)
    fc1_w = np.asarray(blk["fc1_w"])
    fc2_w = np.asarray(blk["fc2_w"])
    proj_w = np.asarray(blk["proj_w"])
    for d in range(DEPTH):
        w_blk[d, WB_FC1:WB_FC1 + EMBED, :] = fc1_w[d]
        w_blk[d, WB_FC2:WB_FC2 + MLP, 0:EMBED] = fc2_w[d]
        for h in range(HEADS):
            w_blk[d, WB_PROJ + h * HEAD_DIM:WB_PROJ + (h + 1) * HEAD_DIM, 0:EMBED] = \
                proj_w[d, h * HEAD_DIM:(h + 1) * HEAD_DIM, :]

    # patch-embed / backbone-head / hierarchical-softmax weights
    w_misc = np.zeros((WM_ROWS, WM_LANES), np.float32)
    w_misc[WM_PATCH:WM_PATCH + CPP, 0:EMBED] = np.asarray(params["patch_w"])
    w_misc[WM_HEAD:WM_HEAD + EMBED, 0:NHID] = np.asarray(params["head_w"])
    w_misc[WM_HST:WM_HST + NHID, 0:NCLASSES] = np.asarray(params["hs_wt"])
    w_misc[WM_HSB:WM_HSB + NHID, 0:NTOKENS] = \
        np.asarray(params["hs_wb"]).transpose(1, 0, 2).reshape(NHID, NTOKENS)

    # every small vector / bias / constant mask
    vecs = np.zeros((VEC_ROWS, MLP), np.float32)
    pos = np.asarray(params["pos_embed"])[0]                       # (SEQ, E)
    cls = np.asarray(params["cls_token"])[0, 0]                    # (E,)
    patch_b = np.asarray(params["patch_b"])                        # (E,)
    vecs[VR_ADD:VR_ADD + B, 0:EMBED] = cls + pos[0]
    vecs[VR_ADD + B:VR_ADD + BS, 0:EMBED] = np.tile(pos[1:], (B, 1)) + patch_b
    batch_id = np.concatenate([np.arange(B), np.repeat(np.arange(B), NPATCH)])
    vecs[VR_BIAS:VR_BIAS + BS, 0:BS] = np.where(
        batch_id[:, None] == batch_id[None, :], 0.0, NEG_BIG).astype(np.float32)
    vecs[VR_NORM_G, 0:EMBED] = np.asarray(params["norm_g"])
    vecs[VR_NORM_B, 0:EMBED] = np.asarray(params["norm_b"])
    vecs[VR_HEAD_B, 0:NHID] = np.asarray(params["head_b"])
    vecs[VR_HS_BT, 0:NCLASSES] = np.asarray(params["hs_bt"])
    vecs[VR_HS_BB, 0:NTOKENS] = np.asarray(params["hs_bb"]).reshape(NTOKENS)
    for d in range(DEPTH):
        r = VR_BLK + 8 * d
        vecs[r + 0, 0:EMBED] = np.asarray(blk["ln1_g"])[d, 0]
        vecs[r + 1, 0:EMBED] = np.asarray(blk["ln1_b"])[d, 0]
        vecs[r + 2, 0:EMBED] = np.asarray(blk["ln2_g"])[d, 0]
        vecs[r + 3, 0:EMBED] = np.asarray(blk["ln2_b"])[d, 0]
        vecs[r + 4, 0:EMBED] = np.asarray(blk["proj_b"])[d, 0]
        vecs[r + 5, 0:MLP] = np.asarray(blk["fc1_b"])[d, 0]
        vecs[r + 6, 0:EMBED] = np.asarray(blk["fc2_b"])[d, 0]

    return dict(w_qkv=jnp.asarray(w_qkv), w_blk=jnp.asarray(w_blk),
                w_misc=jnp.asarray(w_misc), vecs=jnp.asarray(vecs))


def vitae_forward(x, y, packed):
    bb = x.shape[0]

    # per-call layout plumbing: patches + labels packed into ONE data slab
    patches = extract_patches(x.astype(jnp.float32))               # (B*NP, CPP)
    tp = (y // K_PER_CLASS).astype(jnp.float32)
    bp = (y % K_PER_CLASS).astype(jnp.float32)
    data = jnp.zeros((DATA_ROWS, CPP), jnp.float32)
    data = data.at[bb:bb + bb * NPATCH, :].set(patches)            # rows 0..bb-1 = cls (zeros)
    data = data.at[DROW_TP:DROW_TP + bb, 0].set(tp)
    data = data.at[DROW_BP:DROW_BP + bb, 0].set(bp)

    out = pl.pallas_call(
        _fused_vitae_kernel,
        out_shape=jax.ShapeDtypeStruct((PB, OUT_LANES), jnp.float32),
        in_specs=[pl.BlockSpec(memory_space=VMEM)] * 5,
        out_specs=pl.BlockSpec(memory_space=VMEM),
    )(data, packed["w_qkv"], packed["w_blk"], packed["w_misc"], packed["vecs"])

    loss = jnp.mean(out[:bb, 0])
    real_indx = out[:bb, 1].astype(jnp.int32)
    preds = out[:bb, 2]
    return loss, real_indx, preds


# -------------------------------- deterministic parameters --------------------------------
def init_params(key):
    keys = iter(jax.random.split(key, 64))

    def w(shape, std=0.02):
        return jax.random.normal(next(keys), shape, jnp.float32) * std

    def u(shape, r=0.1):
        return jax.random.uniform(next(keys), shape, jnp.float32, -r, r)

    p = dict(
        patch_w=w((CPP, EMBED)),
        patch_b=jnp.zeros((EMBED,), jnp.float32),
        cls_token=w((1, 1, EMBED)),
        pos_embed=w((1, SEQ, EMBED)),
        norm_g=jnp.ones((EMBED,), jnp.float32),
        norm_b=jnp.zeros((EMBED,), jnp.float32),
        head_w=w((EMBED, NHID)),
        head_b=jnp.zeros((NHID,), jnp.float32),
        # hierarchical softmax params (uniform(-0.1, 0.1) weights, zero biases)
        hs_wt=u((NHID, NCLASSES)),
        hs_bt=jnp.zeros((NCLASSES,), jnp.float32),
        hs_wb=u((NCLASSES, NHID, K_PER_CLASS)),
        hs_bb=jnp.zeros((NCLASSES, K_PER_CLASS), jnp.float32),
        # transformer blocks, stacked along a leading DEPTH axis
        blocks=dict(
            ln1_g=jnp.ones((DEPTH, 1, EMBED), jnp.float32),
            ln1_b=jnp.zeros((DEPTH, 1, EMBED), jnp.float32),
            qkv_w=w((DEPTH, EMBED, 3 * EMBED)),
            qkv_b=jnp.zeros((DEPTH, 1, 3 * EMBED), jnp.float32),
            proj_w=w((DEPTH, EMBED, EMBED)),
            proj_b=jnp.zeros((DEPTH, 1, EMBED), jnp.float32),
            ln2_g=jnp.ones((DEPTH, 1, EMBED), jnp.float32),
            ln2_b=jnp.zeros((DEPTH, 1, EMBED), jnp.float32),
            fc1_w=w((DEPTH, EMBED, MLP)),
            fc1_b=jnp.zeros((DEPTH, 1, MLP), jnp.float32),
            fc2_w=w((DEPTH, MLP, EMBED)),
            fc2_b=jnp.zeros((DEPTH, 1, EMBED), jnp.float32),
        ),
    )
    return p


if __name__ == "__main__":
    key = jax.random.PRNGKey(0)
    kx, ky, kp = jax.random.split(key, 3)
    x = jax.random.normal(kx, (B, IN_CH, IMG, IMG), jnp.float32)          # NCHW like PyTorch
    y = jax.random.randint(ky, (B,), 0, NTOKENS, jnp.int32)
    params = init_params(kp)
    packed = pack_params(params)                                          # one-time packing

    loss, real_indx, preds = jax.jit(vitae_forward)(x, y, packed)
    jax.block_until_ready((loss, real_indx, preds))
    print("KERNEL_OK")
</pallas_src>

<mosaic_0001>
module attributes {stable_mosaic.version = 11 : i64} {
  func.func @_fused_vitae_kernel(%arg0: memref<32x192xf32, #tpu.memory_space<vmem>>, %arg1: memref<24x40x8xf32, #tpu.memory_space<vmem>>, %arg2: memref<2x192x128xf32, #tpu.memory_space<vmem>>, %arg3: memref<288x32xf32, #tpu.memory_space<vmem>>, %arg4: memref<56x128xf32, #tpu.memory_space<vmem>>, %arg5: memref<8x128xf32, #tpu.memory_space<vmem>>) attributes {dimension_semantics = [], scalar_prefetch = 0 : i64, scratch_operands = 0 : i64, tpu.core_type = #tpu.core_type<tc>} {
    %c0 = arith.constant 0 : index
    %c0_0 = arith.constant 0 : index
    %0 = vector.load %arg0[%c0, %c0_0] : memref<32x192xf32, #tpu.memory_space<vmem>>, vector<10x192xf32>
    %c0_1 = arith.constant 0 : index
    %c0_2 = arith.constant 0 : index
    %1 = vector.load %arg3[%c0_1, %c0_2] : memref<288x32xf32, #tpu.memory_space<vmem>>, vector<192x32xf32>
    %c0_3 = arith.constant 0 : index
    %c0_4 = arith.constant 0 : index
    %2 = vector.load %arg4[%c0_3, %c0_4] : memref<56x128xf32, #tpu.memory_space<vmem>>, vector<10x32xf32>
    %cst = arith.constant dense<0.000000e+00> : vector<10x32xf32>
    %3 = tpu.matmul %0, %1, %cst {dimension_numbers = #tpu.dot_dimension_numbers<[1], [0], [0], [1], [0, 0, 1, 1], [], []>} : vector<10x192xf32>, vector<192x32xf32>, vector<10x32xf32> -> vector<10x32xf32>
    %4 = arith.addf %3, %2 : vector<10x32xf32>
    %c16 = arith.constant 16 : index
    %c0_5 = arith.constant 0 : index
    %5 = vector.load %arg4[%c16, %c0_5] : memref<56x128xf32, #tpu.memory_space<vmem>>, vector<10x10xf32>
    %cst_6 = arith.constant 1.000000e+00 : f32
    %6 = vector.broadcast %cst_6 : f32 to vector<10x8xf32>
    %c40 = arith.constant 40 : index
    %c0_7 = arith.constant 0 : index
    %7 = vector.load %arg4[%c40, %c0_7] : memref<56x128xf32, #tpu.memory_space<vmem>>, vector<1x32xf32>
    %c41 = arith.constant 41 : index
    %c0_8 = arith.constant 0 : index
    %8 = vector.load %arg4[%c41, %c0_8] : memref<56x128xf32, #tpu.memory_space<vmem>>, vector<1x32xf32>
    %c42 = arith.constant 42 : index
    %c0_9 = arith.constant 0 : index
    %9 = vector.load %arg4[%c42, %c0_9] : memref<56x128xf32, #tpu.memory_space<vmem>>, vector<1x32xf32>
    %c43 = arith.constant 43 : index
    %c0_10 = arith.constant 0 : index
    %10 = vector.load %arg4[%c43, %c0_10] : memref<56x128xf32, #tpu.memory_space<vmem>>, vector<1x32xf32>
    %c44 = arith.constant 44 : index
    %c0_11 = arith.constant 0 : index
    %11 = vector.load %arg4[%c44, %c0_11] : memref<56x128xf32, #tpu.memory_space<vmem>>, vector<1x32xf32>
    %c45 = arith.constant 45 : index
    %c0_12 = arith.constant 0 : index
    %12 = vector.load %arg4[%c45, %c0_12] : memref<56x128xf32, #tpu.memory_space<vmem>>, vector<1x128xf32>
    %c46 = arith.constant 46 : index
    %c0_13 = arith.constant 0 : index
    %13 = vector.load %arg4[%c46, %c0_13] : memref<56x128xf32, #tpu.memory_space<vmem>>, vector<1x32xf32>
    %cst_14 = arith.constant dense<0.000000e+00> : vector<10xf32>
    %14 = vector.multi_reduction <add>, %4, %cst_14 [1] : vector<10x32xf32> to vector<10xf32>
    %15 = vector.shape_cast %14 : vector<10xf32> to vector<10x1xf32>
    %cst_15 = arith.constant 3.200000e+01 : f32
    %16 = vector.broadcast %cst_15 : f32 to vector<10x1xf32>
    %17 = arith.divf %15, %16 : vector<10x1xf32>
    %18 = vector.broadcast %17 : vector<10x1xf32> to vector<10x32xf32>
    %19 = arith.subf %4, %18 : vector<10x32xf32>
    %20 = arith.mulf %19, %19 : vector<10x32xf32>
    %cst_16 = arith.constant dense<0.000000e+00> : vector<10xf32>
    %21 = vector.multi_reduction <add>, %20, %cst_16 [1] : vector<10x32xf32> to vector<10xf32>
    %22 = vector.shape_cast %21 : vector<10xf32> to vector<10x1xf32>
    %cst_17 = arith.constant 3.200000e+01 : f32
    %23 = vector.broadcast %cst_17 : f32 to vector<10x1xf32>
    %24 = arith.divf %22, %23 : vector<10x1xf32>
    %cst_18 = arith.constant 9.99999997E-7 : f32
    %25 = vector.broadcast %cst_18 : f32 to vector<10x1xf32>
    %26 = arith.addf %24, %25 : vector<10x1xf32>
    %27 = math.rsqrt %26 : vector<10x1xf32>
    %28 = vector.broadcast %27 : vector<10x1xf32> to vector<10x32xf32>
    %29 = arith.mulf %19, %28 : vector<10x32xf32>
    %30 = vector.broadcast %7 : vector<1x32xf32> to vector<10x32xf32>
    %31 = arith.mulf %29, %30 : vector<10x32xf32>
    %32 = vector.broadcast %8 : vector<1x32xf32> to vector<10x32xf32>
    %33 = arith.addf %31, %32 : vector<10x32xf32>
    %34 = tpu.concatenate %33, %6 in 1 : vector<10x32xf32>, vector<10x8xf32> -> vector<10x40xf32>
    %c0_19 = arith.constant 0 : index
    %c0_20 = arith.constant 0 : index
    %c0_21 = arith.constant 0 : index
    %35 = vector.load %arg1[%c0_19, %c0_20, %c0_21] : memref<24x40x8xf32, #tpu.memory_space<vmem>>, vector<1x40x8xf32>
    %36 = vector.shape_cast %35 : vector<1x40x8xf32> to vector<40x8xf32>
    %cst_22 = arith.constant dense<0.000000e+00> : vector<10x8xf32>
    %37 = tpu.matmul %34, %36, %cst_22 {dimension_numbers = #tpu.dot_dimension_numbers<[1], [0], [0], [1], [0, 0, 1, 1], [], []>} : vector<10x40xf32>, vector<40x8xf32>, vector<10x8xf32> -> vector<10x8xf32>
    %c1 = arith.constant 1 : index
    %c0_23 = arith.constant 0 : index
    %c0_24 = arith.constant 0 : index
    %38 = vector.load %arg1[%c1, %c0_23, %c0_24] : memref<24x40x8xf32, #tpu.memory_space<vmem>>, vector<1x40x8xf32>
    %39 = vector.shape_cast %38 : vector<1x40x8xf32> to vector<40x8xf32>
    %cst_25 = arith.constant dense<0.000000e+00> : vector<10x8xf32>
    %40 = tpu.matmul %34, %39, %cst_25 {dimension_numbers = #tpu.dot_dimension_numbers<[1], [0], [0], [1], [0, 0, 1, 1], [], []>} : vector<10x40xf32>, vector<40x8xf32>, vector<10x8xf32> -> vector<10x8xf32>
    %c2 = arith.constant 2 : index
    %c0_26 = arith.constant 0 : index
    %c0_27 = arith.constant 0 : index
    %41 = vector.load %arg1[%c2, %c0_26, %c0_27] : memref<24x40x8xf32, #tpu.memory_space<vmem>>, vector<1x40x8xf32>
    %42 = vector.shape_cast %41 : vector<1x40x8xf32> to vector<40x8xf32>
    %cst_28 = arith.constant dense<0.000000e+00> : vector<10x8xf32>
    %43 = tpu.matmul %34, %42, %cst_28 {dimension_numbers = #tpu.dot_dimension_numbers<[1], [0], [0], [1], [0, 0, 1, 1], [], []>} : vector<10x40xf32>, vector<40x8xf32>, vector<10x8xf32> -> vector<10x8xf32>
    %cst_29 = arith.constant dense<0.000000e+00> : vector<10x10xf32>
    %44 = tpu.matmul %37, %40, %cst_29 {dimension_numbers = #tpu.dot_dimension_numbers<[1], [1], [0], [0], [0, 0, 1, 0], [], []>} : vector<10x8xf32>, vector<10x8xf32>, vector<10x10xf32> -> vector<10x10xf32>
    %45 = arith.addf %44, %5 : vector<10x10xf32>
    %cst_30 = arith.constant dense<0xFF800000> : vector<10xf32>
    %46 = vector.multi_reduction <maximumf>, %45, %cst_30 [1] : vector<10x10xf32> to vector<10xf32>
    %47 = vector.shape_cast %46 : vector<10xf32> to vector<10x1xf32>
    %48 = vector.broadcast %47 : vector<10x1xf32> to vector<10x10xf32>
    %49 = arith.subf %45, %48 : vector<10x10xf32>
    %50 = math.exp %49 : vector<10x10xf32>
    %cst_31 = arith.constant dense<0.000000e+00> : vector<10xf32>
    %51 = vector.multi_reduction <add>, %50, %cst_31 [1] : vector<10x10xf32> to vector<10xf32>
    %52 = vector.shape_cast %51 : vector<10xf32> to vector<10x1xf32>
    %53 = tpu.reciprocal %52 {approx = true} : vector<10x1xf32> -> vector<10x1xf32>
    %54 = vector.broadcast %53 : vector<10x1xf32> to vector<10x10xf32>
    %55 = arith.mulf %50, %54 : vector<10x10xf32>
    %cst_32 = arith.constant dense<0.000000e+00> : vector<10x8xf32>
    %56 = tpu.matmul %55, %43, %cst_32 {dimension_numbers = #tpu.dot_dimension_numbers<[1], [0], [0], [1], [0, 0, 1, 1], [], []>} : vector<10x10xf32>, vector<10x8xf32>, vector<10x8xf32> -> vector<10x8xf32>
    %c0_33 = arith.constant 0 : index
    %c160 = arith.constant 160 : index
    %c0_34 = arith.constant 0 : index
    %57 = vector.load %arg2[%c0_33, %c160, %c0_34] : memref<2x192x128xf32, #tpu.memory_space<vmem>>, vector<1x8x32xf32>
    %58 = vector.shape_cast %57 : vector<1x8x32xf32> to vector<8x32xf32>
    %cst_35 = arith.constant dense<0.000000e+00> : vector<10x32xf32>
    %59 = tpu.matmul %56, %58, %cst_35 {dimension_numbers = #tpu.dot_dimension_numbers<[1], [0], [0], [1], [0, 0, 1, 1], [], []>} : vector<10x8xf32>, vector<8x32xf32>, vector<10x32xf32> -> vector<10x32xf32>
    %60 = vector.broadcast %11 : vector<1x32xf32> to vector<10x32xf32>
    %61 = arith.addf %59, %60 : vector<10x32xf32>
    %c3 = arith.constant 3 : index
    %c0_36 = arith.constant 0 : index
    %c0_37 = arith.constant 0 : index
    %62 = vector.load %arg1[%c3, %c0_36, %c0_37] : memref<24x40x8xf32, #tpu.memory_space<vmem>>, vector<1x40x8xf32>
    %63 = vector.shape_cast %62 : vector<1x40x8xf32> to vector<40x8xf32>
    %cst_38 = arith.constant dense<0.000000e+00> : vector<10x8xf32>
    %64 = tpu.matmul %34, %63, %cst_38 {dimension_numbers = #tpu.dot_dimension_numbers<[1], [0], [0], [1], [0, 0, 1, 1], [], []>} : vector<10x40xf32>, vector<40x8xf32>, vector<10x8xf32> -> vector<10x8xf32>
    %c4 = arith.constant 4 : index
    %c0_39 = arith.constant 0 : index
    %c0_40 = arith.constant 0 : index
    %65 = vector.load %arg1[%c4, %c0_39, %c0_40] : memref<24x40x8xf32, #tpu.memory_space<vmem>>, vector<1x40x8xf32>
    %66 = vector.shape_cast %65 : vector<1x40x8xf32> to vector<40x8xf32>
    %cst_41 = arith.constant dense<0.000000e+00> : vector<10x8xf32>
    %67 = tpu.matmul %34, %66, %cst_41 {dimension_numbers = #tpu.dot_dimension_numbers<[1], [0], [0], [1], [0, 0, 1, 1], [], []>} : vector<10x40xf32>, vector<40x8xf32>, vector<10x8xf32> -> vector<10x8xf32>
    %c5 = arith.constant 5 : index
    %c0_42 = arith.constant 0 : index
    %c0_43 = arith.constant 0 : index
    %68 = vector.load %arg1[%c5, %c0_42, %c0_43] : memref<24x40x8xf32, #tpu.memory_space<vmem>>, vector<1x40x8xf32>
    %69 = vector.shape_cast %68 : vector<1x40x8xf32> to vector<40x8xf32>
    %cst_44 = arith.constant dense<0.000000e+00> : vector<10x8xf32>
    %70 = tpu.matmul %34, %69, %cst_44 {dimension_numbers = #tpu.dot_dimension_numbers<[1], [0], [0], [1], [0, 0, 1, 1], [], []>} : vector<10x40xf32>, vector<40x8xf32>, vector<10x8xf32> -> vector<10x8xf32>
    %cst_45 = arith.constant dense<0.000000e+00> : vector<10x10xf32>
    %71 = tpu.matmul %64, %67, %cst_45 {dimension_numbers = #tpu.dot_dimension_numbers<[1], [1], [0], [0], [0, 0, 1, 0], [], []>} : vector<10x8xf32>, vector<10x8xf32>, vector<10x10xf32> -> vector<10x10xf32>
    %72 = arith.addf %71, %5 : vector<10x10xf32>
    %cst_46 = arith.constant dense<0xFF800000> : vector<10xf32>
    %73 = vector.multi_reduction <maximumf>, %72, %cst_46 [1] : vector<10x10xf32> to vector<10xf32>
    %74 = vector.shape_cast %73 : vector<10xf32> to vector<10x1xf32>
    %75 = vector.broadcast %74 : vector<10x1xf32> to vector<10x10xf32>
    %76 = arith.subf %72, %75 : vector<10x10xf32>
    %77 = math.exp %76 : vector<10x10xf32>
    %cst_47 = arith.constant dense<0.000000e+00> : vector<10xf32>
    %78 = vector.multi_reduction <add>, %77, %cst_47 [1] : vector<10x10xf32> to vector<10xf32>
    %79 = vector.shape_cast %78 : vector<10xf32> to vector<10x1xf32>
    %80 = tpu.reciprocal %79 {approx = true} : vector<10x1xf32> -> vector<10x1xf32>
    %81 = vector.broadcast %80 : vector<10x1xf32> to vector<10x10xf32>
    %82 = arith.mulf %77, %81 : vector<10x10xf32>
    %cst_48 = arith.constant dense<0.000000e+00> : vector<10x8xf32>
    %83 = tpu.matmul %82, %70, %cst_48 {dimension_numbers = #tpu.dot_dimension_numbers<[1], [0], [0], [1], [0, 0, 1, 1], [], []>} : vector<10x10xf32>, vector<10x8xf32>, vector<10x8xf32> -> vector<10x8xf32>
    %c0_49 = arith.constant 0 : index
    %c168 = arith.constant 168 : index
    %c0_50 = arith.constant 0 : index
    %84 = vector.load %arg2[%c0_49, %c168, %c0_50] : memref<2x192x128xf32, #tpu.memory_space<vmem>>, vector<1x8x32xf32>
    %85 = vector.shape_cast %84 : vector<1x8x32xf32> to vector<8x32xf32>
    %cst_51 = arith.constant dense<0.000000e+00> : vector<10x32xf32>
    %86 = tpu.matmul %83, %85, %cst_51 {dimension_numbers = #tpu.dot_dimension_numbers<[1], [0], [0], [1], [0, 0, 1, 1], [], []>} : vector<10x8xf32>, vector<8x32xf32>, vector<10x32xf32> -> vector<10x32xf32>
    %87 = arith.addf %61, %86 : vector<10x32xf32>
    %c6 = arith.constant 6 : index
    %c0_52 = arith.constant 0 : index
    %c0_53 = arith.constant 0 : index
    %88 = vector.load %arg1[%c6, %c0_52, %c0_53] : memref<24x40x8xf32, #tpu.memory_space<vmem>>, vector<1x40x8xf32>
    %89 = vector.shape_cast %88 : vector<1x40x8xf32> to vector<40x8xf32>
    %cst_54 = arith.constant dense<0.000000e+00> : vector<10x8xf32>
    %90 = tpu.matmul %34, %89, %cst_54 {dimension_numbers = #tpu.dot_dimension_numbers<[1], [0], [0], [1], [0, 0, 1, 1], [], []>} : vector<10x40xf32>, vector<40x8xf32>, vector<10x8xf32> -> vector<10x8xf32>
    %c7 = arith.constant 7 : index
    %c0_55 = arith.constant 0 : index
    %c0_56 = arith.constant 0 : index
    %91 = vector.load %arg1[%c7, %c0_55, %c0_56] : memref<24x40x8xf32, #tpu.memory_space<vmem>>, vector<1x40x8xf32>
    %92 = vector.shape_cast %91 : vector<1x40x8xf32> to vector<40x8xf32>
    %cst_57 = arith.constant dense<0.000000e+00> : vector<10x8xf32>
    %93 = tpu.matmul %34, %92, %cst_57 {dimension_numbers = #tpu.dot_dimension_numbers<[1], [0], [0], [1], [0, 0, 1, 1], [], []>} : vector<10x40xf32>, vector<40x8xf32>, vector<10x8xf32> -> vector<10x8xf32>
    %c8 = arith.constant 8 : index
    %c0_58 = arith.constant 0 : index
    %c0_59 = arith.constant 0 : index
    %94 = vector.load %arg1[%c8, %c0_58, %c0_59] : memref<24x40x8xf32, #tpu.memory_space<vmem>>, vector<1x40x8xf32>
    %95 = vector.shape_cast %94 : vector<1x40x8xf32> to vector<40x8xf32>
    %cst_60 = arith.constant dense<0.000000e+00> : vector<10x8xf32>
    %96 = tpu.matmul %34, %95, %cst_60 {dimension_numbers = #tpu.dot_dimension_numbers<[1], [0], [0], [1], [0, 0, 1, 1], [], []>} : vector<10x40xf32>, vector<40x8xf32>, vector<10x8xf32> -> vector<10x8xf32>
    %cst_61 = arith.constant dense<0.000000e+00> : vector<10x10xf32>
    %97 = tpu.matmul %90, %93, %cst_61 {dimension_numbers = #tpu.dot_dimension_numbers<[1], [1], [0], [0], [0, 0, 1, 0], [], []>} : vector<10x8xf32>, vector<10x8xf32>, vector<10x10xf32> -> vector<10x10xf32>
    %98 = arith.addf %97, %5 : vector<10x10xf32>
    %cst_62 = arith.constant dense<0xFF800000> : vector<10xf32>
    %99 = vector.multi_reduction <maximumf>, %98, %cst_62 [1] : vector<10x10xf32> to vector<10xf32>
    %100 = vector.shape_cast %99 : vector<10xf32> to vector<10x1xf32>
    %101 = vector.broadcast %100 : vector<10x1xf32> to vector<10x10xf32>
    %102 = arith.subf %98, %101 : vector<10x10xf32>
    %103 = math.exp %102 : vector<10x10xf32>
    %cst_63 = arith.constant dense<0.000000e+00> : vector<10xf32>
    %104 = vector.multi_reduction <add>, %103, %cst_63 [1] : vector<10x10xf32> to vector<10xf32>
    %105 = vector.shape_cast %104 : vector<10xf32> to vector<10x1xf32>
    %106 = tpu.reciprocal %105 {approx = true} : vector<10x1xf32> -> vector<10x1xf32>
    %107 = vector.broadcast %106 : vector<10x1xf32> to vector<10x10xf32>
    %108 = arith.mulf %103, %107 : vector<10x10xf32>
    %cst_64 = arith.constant dense<0.000000e+00> : vector<10x8xf32>
    %109 = tpu.matmul %108, %96, %cst_64 {dimension_numbers = #tpu.dot_dimension_numbers<[1], [0], [0], [1], [0, 0, 1, 1], [], []>} : vector<10x10xf32>, vector<10x8xf32>, vector<10x8xf32> -> vector<10x8xf32>
    %c0_65 = arith.constant 0 : index
    %c176 = arith.constant 176 : index
    %c0_66 = arith.constant 0 : index
    %110 = vector.load %arg2[%c0_65, %c176, %c0_66] : memref<2x192x128xf32, #tpu.memory_space<vmem>>, vector<1x8x32xf32>
    %111 = vector.shape_cast %110 : vector<1x8x32xf32> to vector<8x32xf32>
    %cst_67 = arith.constant dense<0.000000e+00> : vector<10x32xf32>
    %112 = tpu.matmul %109, %111, %cst_67 {dimension_numbers = #tpu.dot_dimension_numbers<[1], [0], [0], [1], [0, 0, 1, 1], [], []>} : vector<10x8xf32>, vector<8x32xf32>, vector<10x32xf32> -> vector<10x32xf32>
    %113 = arith.addf %87, %112 : vector<10x32xf32>
    %c9 = arith.constant 9 : index
    %c0_68 = arith.constant 0 : index
    %c0_69 = arith.constant 0 : index
    %114 = vector.load %arg1[%c9, %c0_68, %c0_69] : memref<24x40x8xf32, #tpu.memory_space<vmem>>, vector<1x40x8xf32>
    %115 = vector.shape_cast %114 : vector<1x40x8xf32> to vector<40x8xf32>
    %cst_70 = arith.constant dense<0.000000e+00> : vector<10x8xf32>
    %116 = tpu.matmul %34, %115, %cst_70 {dimension_numbers = #tpu.dot_dimension_numbers<[1], [0], [0], [1], [0, 0, 1, 1], [], []>} : vector<10x40xf32>, vector<40x8xf32>, vector<10x8xf32> -> vector<10x8xf32>
    %c10 = arith.constant 10 : index
    %c0_71 = arith.constant 0 : index
    %c0_72 = arith.constant 0 : index
    %117 = vector.load %arg1[%c10, %c0_71, %c0_72] : memref<24x40x8xf32, #tpu.memory_space<vmem>>, vector<1x40x8xf32>
    %118 = vector.shape_cast %117 : vector<1x40x8xf32> to vector<40x8xf32>
    %cst_73 = arith.constant dense<0.000000e+00> : vector<10x8xf32>
    %119 = tpu.matmul %34, %118, %cst_73 {dimension_numbers = #tpu.dot_dimension_numbers<[1], [0], [0], [1], [0, 0, 1, 1], [], []>} : vector<10x40xf32>, vector<40x8xf32>, vector<10x8xf32> -> vector<10x8xf32>
    %c11 = arith.constant 11 : index
    %c0_74 = arith.constant 0 : index
    %c0_75 = arith.constant 0 : index
    %120 = vector.load %arg1[%c11, %c0_74, %c0_75] : memref<24x40x8xf32, #tpu.memory_space<vmem>>, vector<1x40x8xf32>
    %121 = vector.shape_cast %120 : vector<1x40x8xf32> to vector<40x8xf32>
    %cst_76 = arith.constant dense<0.000000e+00> : vector<10x8xf32>
    %122 = tpu.matmul %34, %121, %cst_76 {dimension_numbers = #tpu.dot_dimension_numbers<[1], [0], [0], [1], [0, 0, 1, 1], [], []>} : vector<10x40xf32>, vector<40x8xf32>, vector<10x8xf32> -> vector<10x8xf32>
    %cst_77 = arith.constant dense<0.000000e+00> : vector<10x10xf32>
    %123 = tpu.matmul %116, %119, %cst_77 {dimension_numbers = #tpu.dot_dimension_numbers<[1], [1], [0], [0], [0, 0, 1, 0], [], []>} : vector<10x8xf32>, vector<10x8xf32>, vector<10x10xf32> -> vector<10x10xf32>
    %124 = arith.addf %123, %5 : vector<10x10xf32>
    %cst_78 = arith.constant dense<0xFF800000> : vector<10xf32>
    %125 = vector.multi_reduction <maximumf>, %124, %cst_78 [1] : vector<10x10xf32> to vector<10xf32>
    %126 = vector.shape_cast %125 : vector<10xf32> to vector<10x1xf32>
    %127 = vector.broadcast %126 : vector<10x1xf32> to vector<10x10xf32>
    %128 = arith.subf %124, %127 : vector<10x10xf32>
    %129 = math.exp %128 : vector<10x10xf32>
    %cst_79 = arith.constant dense<0.000000e+00> : vector<10xf32>
    %130 = vector.multi_reduction <add>, %129, %cst_79 [1] : vector<10x10xf32> to vector<10xf32>
    %131 = vector.shape_cast %130 : vector<10xf32> to vector<10x1xf32>
    %132 = tpu.reciprocal %131 {approx = true} : vector<10x1xf32> -> vector<10x1xf32>
    %133 = vector.broadcast %132 : vector<10x1xf32> to vector<10x10xf32>
    %134 = arith.mulf %129, %133 : vector<10x10xf32>
    %cst_80 = arith.constant dense<0.000000e+00> : vector<10x8xf32>
    %135 = tpu.matmul %134, %122, %cst_80 {dimension_numbers = #tpu.dot_dimension_numbers<[1], [0], [0], [1], [0, 0, 1, 1], [], []>} : vector<10x10xf32>, vector<10x8xf32>, vector<10x8xf32> -> vector<10x8xf32>
    %c0_81 = arith.constant 0 : index
    %c184 = arith.constant 184 : index
    %c0_82 = arith.constant 0 : index
    %136 = vector.load %arg2[%c0_81, %c184, %c0_82] : memref<2x192x128xf32, #tpu.memory_space<vmem>>, vector<1x8x32xf32>
    %137 = vector.shape_cast %136 : vector<1x8x32xf32> to vector<8x32xf32>
    %cst_83 = arith.constant dense<0.000000e+00> : vector<10x32xf32>
    %138 = tpu.matmul %135, %137, %cst_83 {dimension_numbers = #tpu.dot_dimension_numbers<[1], [0], [0], [1], [0, 0, 1, 1], [], []>} : vector<10x8xf32>, vector<8x32xf32>, vector<10x32xf32> -> vector<10x32xf32>
    %139 = arith.addf %113, %138 : vector<10x32xf32>
    %140 = arith.addf %4, %139 : vector<10x32xf32>
    %cst_84 = arith.constant dense<0.000000e+00> : vector<10xf32>
    %141 = vector.multi_reduction <add>, %140, %cst_84 [1] : vector<10x32xf32> to vector<10xf32>
    %142 = vector.shape_cast %141 : vector<10xf32> to vector<10x1xf32>
    %cst_85 = arith.constant 3.200000e+01 : f32
    %143 = vector.broadcast %cst_85 : f32 to vector<10x1xf32>
    %144 = arith.divf %142, %143 : vector<10x1xf32>
    %145 = vector.broadcast %144 : vector<10x1xf32> to vector<10x32xf32>
    %146 = arith.subf %140, %145 : vector<10x32xf32>
    %147 = arith.mulf %146, %146 : vector<10x32xf32>
    %cst_86 = arith.constant dense<0.000000e+00> : vector<10xf32>
    %148 = vector.multi_reduction <add>, %147, %cst_86 [1] : vector<10x32xf32> to vector<10xf32>
    %149 = vector.shape_cast %148 : vector<10xf32> to vector<10x1xf32>
    %cst_87 = arith.constant 3.200000e+01 : f32
    %150 = vector.broadcast %cst_87 : f32 to vector<10x1xf32>
    %151 = arith.divf %149, %150 : vector<10x1xf32>
    %cst_88 = arith.constant 9.99999997E-7 : f32
    %152 = vector.broadcast %cst_88 : f32 to vector<10x1xf32>
    %153 = arith.addf %151, %152 : vector<10x1xf32>
    %154 = math.rsqrt %153 : vector<10x1xf32>
    %155 = vector.broadcast %154 : vector<10x1xf32> to vector<10x32xf32>
    %156 = arith.mulf %146, %155 : vector<10x32xf32>
    %157 = vector.broadcast %9 : vector<1x32xf32> to vector<10x32xf32>
    %158 = arith.mulf %156, %157 : vector<10x32xf32>
    %159 = vector.broadcast %10 : vector<1x32xf32> to vector<10x32xf32>
    %160 = arith.addf %158, %159 : vector<10x32xf32>
    %c0_89 = arith.constant 0 : index
    %c0_90 = arith.constant 0 : index
    %c0_91 = arith.constant 0 : index
    %161 = vector.load %arg2[%c0_89, %c0_90, %c0_91] : memref<2x192x128xf32, #tpu.memory_space<vmem>>, vector<1x32x128xf32>
    %162 = vector.shape_cast %161 : vector<1x32x128xf32> to vector<32x128xf32>
    %cst_92 = arith.constant dense<0.000000e+00> : vector<10x128xf32>
    %163 = tpu.matmul %160, %162, %cst_92 {dimension_numbers = #tpu.dot_dimension_numbers<[1], [0], [0], [1], [0, 0, 1, 1], [], []>} : vector<10x32xf32>, vector<32x128xf32>, vector<10x128xf32> -> vector<10x128xf32>
    %164 = vector.broadcast %12 : vector<1x128xf32> to vector<10x128xf32>
    %165 = arith.addf %163, %164 : vector<10x128xf32>
    %cst_93 = arith.constant 5.000000e-01 : f32
    %166 = vector.broadcast %cst_93 : f32 to vector<10x128xf32>
    %167 = arith.mulf %166, %165 : vector<10x128xf32>
    %cst_94 = arith.constant 0.707106769 : f32
    %168 = vector.broadcast %cst_94 : f32 to vector<10x128xf32>
    %169 = arith.mulf %165, %168 : vector<10x128xf32>
    %170 = math.erf %169 : vector<10x128xf32>
    %cst_95 = arith.constant 1.000000e+00 : f32
    %171 = vector.broadcast %cst_95 : f32 to vector<10x128xf32>
    %172 = arith.addf %171, %170 : vector<10x128xf32>
    %173 = arith.mulf %167, %172 : vector<10x128xf32>
    %c0_96 = arith.constant 0 : index
    %c32 = arith.constant 32 : index
    %c0_97 = arith.constant 0 : index
    %174 = vector.load %arg2[%c0_96, %c32, %c0_97] : memref<2x192x128xf32, #tpu.memory_space<vmem>>, vector<1x128x32xf32>
    %175 = vector.shape_cast %174 : vector<1x128x32xf32> to vector<128x32xf32>
    %cst_98 = arith.constant dense<0.000000e+00> : vector<10x32xf32>
    %176 = tpu.matmul %173, %175, %cst_98 {dimension_numbers = #tpu.dot_dimension_numbers<[1], [0], [0], [1], [0, 0, 1, 1], [], []>} : vector<10x128xf32>, vector<128x32xf32>, vector<10x32xf32> -> vector<10x32xf32>
    %177 = vector.broadcast %13 : vector<1x32xf32> to vector<10x32xf32>
    %178 = arith.addf %176, %177 : vector<10x32xf32>
    %179 = arith.addf %140, %178 : vector<10x32xf32>
    %c48 = arith.constant 48 : index
    %c0_99 = arith.constant 0 : index
    %180 = vector.load %arg4[%c48, %c0_99] : memref<56x128xf32, #tpu.memory_space<vmem>>, vector<1x32xf32>
    %c49 = arith.constant 49 : index
    %c0_100 = arith.constant 0 : index
    %181 = vector.load %arg4[%c49, %c0_100] : memref<56x128xf32, #tpu.memory_space<vmem>>, vector<1x32xf32>
    %c50 = arith.constant 50 : index
    %c0_101 = arith.constant 0 : index
    %182 = vector.load %arg4[%c50, %c0_101] : memref<56x128xf32, #tpu.memory_space<vmem>>, vector<1x32xf32>
    %c51 = arith.constant 51 : index
    %c0_102 = arith.constant 0 : index
    %183 = vector.load %arg4[%c51, %c0_102] : memref<56x128xf32, #tpu.memory_space<vmem>>, vector<1x32xf32>
    %c52 = arith.constant 52 : index
    %c0_103 = arith.constant 0 : index
    %184 = vector.load %arg4[%c52, %c0_103] : memref<56x128xf32, #tpu.memory_space<vmem>>, vector<1x32xf32>
    %c53 = arith.constant 53 : index
    %c0_104 = arith.constant 0 : index
    %185 = vector.load %arg4[%c53, %c0_104] : memref<56x128xf32, #tpu.memory_space<vmem>>, vector<1x128xf32>
    %c54 = arith.constant 54 : index
    %c0_105 = arith.constant 0 : index
    %186 = vector.load %arg4[%c54, %c0_105] : memref<56x128xf32, #tpu.memory_space<vmem>>, vector<1x32xf32>
    %cst_106 = arith.constant dense<0.000000e+00> : vector<10xf32>
    %187 = vector.multi_reduction <add>, %179, %cst_106 [1] : vector<10x32xf32> to vector<10xf32>
    %188 = vector.shape_cast %187 : vector<10xf32> to vector<10x1xf32>
    %cst_107 = arith.constant 3.200000e+01 : f32
    %189 = vector.broadcast %cst_107 : f32 to vector<10x1xf32>
    %190 = arith.divf %188, %189 : vector<10x1xf32>
    %191 = vector.broadcast %190 : vector<10x1xf32> to vector<10x32xf32>
    %192 = arith.subf %179, %191 : vector<10x32xf32>
    %193 = arith.mulf %192, %192 : vector<10x32xf32>
    %cst_108 = arith.constant dense<0.000000e+00> : vector<10xf32>
    %194 = vector.multi_reduction <add>, %193, %cst_108 [1] : vector<10x32xf32> to vector<10xf32>
    %195 = vector.shape_cast %194 : vector<10xf32> to vector<10x1xf32>
    %cst_109 = arith.constant 3.200000e+01 : f32
    %196 = vector.broadcast %cst_109 : f32 to vector<10x1xf32>
    %197 = arith.divf %195, %196 : vector<10x1xf32>
    %cst_110 = arith.constant 9.99999997E-7 : f32
    %198 = vector.broadcast %cst_110 : f32 to vector<10x1xf32>
    %199 = arith.addf %197, %198 : vector<10x1xf32>
    %200 = math.rsqrt %199 : vector<10x1xf32>
    %201 = vector.broadcast %200 : vector<10x1xf32> to vector<10x32xf32>
    %202 = arith.mulf %192, %201 : vector<10x32xf32>
    %203 = vector.broadcast %180 : vector<1x32xf32> to vector<10x32xf32>
    %204 = arith.mulf %202, %203 : vector<10x32xf32>
    %205 = vector.broadcast %181 : vector<1x32xf32> to vector<10x32xf32>
    %206 = arith.addf %204, %205 : vector<10x32xf32>
    %207 = tpu.concatenate %206, %6 in 1 : vector<10x32xf32>, vector<10x8xf32> -> vector<10x40xf32>
    %c12 = arith.constant 12 : index
    %c0_111 = arith.constant 0 : index
    %c0_112 = arith.constant 0 : index
    %208 = vector.load %arg1[%c12, %c0_111, %c0_112] : memref<24x40x8xf32, #tpu.memory_space<vmem>>, vector<1x40x8xf32>
    %209 = vector.shape_cast %208 : vector<1x40x8xf32> to vector<40x8xf32>
    %cst_113 = arith.constant dense<0.000000e+00> : vector<10x8xf32>
    %210 = tpu.matmul %207, %209, %cst_113 {dimension_numbers = #tpu.dot_dimension_numbers<[1], [0], [0], [1], [0, 0, 1, 1], [], []>} : vector<10x40xf32>, vector<40x8xf32>, vector<10x8xf32> -> vector<10x8xf32>
    %c13 = arith.constant 13 : index
    %c0_114 = arith.constant 0 : index
    %c0_115 = arith.constant 0 : index
    %211 = vector.load %arg1[%c13, %c0_114, %c0_115] : memref<24x40x8xf32, #tpu.memory_space<vmem>>, vector<1x40x8xf32>
    %212 = vector.shape_cast %211 : vector<1x40x8xf32> to vector<40x8xf32>
    %cst_116 = arith.constant dense<0.000000e+00> : vector<10x8xf32>
    %213 = tpu.matmul %207, %212, %cst_116 {dimension_numbers = #tpu.dot_dimension_numbers<[1], [0], [0], [1], [0, 0, 1, 1], [], []>} : vector<10x40xf32>, vector<40x8xf32>, vector<10x8xf32> -> vector<10x8xf32>
    %c14 = arith.constant 14 : index
    %c0_117 = arith.constant 0 : index
    %c0_118 = arith.constant 0 : index
    %214 = vector.load %arg1[%c14, %c0_117, %c0_118] : memref<24x40x8xf32, #tpu.memory_space<vmem>>, vector<1x40x8xf32>
    %215 = vector.shape_cast %214 : vector<1x40x8xf32> to vector<40x8xf32>
    %cst_119 = arith.constant dense<0.000000e+00> : vector<10x8xf32>
    %216 = tpu.matmul %207, %215, %cst_119 {dimension_numbers = #tpu.dot_dimension_numbers<[1], [0], [0], [1], [0, 0, 1, 1], [], []>} : vector<10x40xf32>, vector<40x8xf32>, vector<10x8xf32> -> vector<10x8xf32>
    %cst_120 = arith.constant dense<0.000000e+00> : vector<10x10xf32>
    %217 = tpu.matmul %210, %213, %cst_120 {dimension_numbers = #tpu.dot_dimension_numbers<[1], [1], [0], [0], [0, 0, 1, 0], [], []>} : vector<10x8xf32>, vector<10x8xf32>, vector<10x10xf32> -> vector<10x10xf32>
    %218 = arith.addf %217, %5 : vector<10x10xf32>
    %cst_121 = arith.constant dense<0xFF800000> : vector<10xf32>
    %219 = vector.multi_reduction <maximumf>, %218, %cst_121 [1] : vector<10x10xf32> to vector<10xf32>
    %220 = vector.shape_cast %219 : vector<10xf32> to vector<10x1xf32>
    %221 = vector.broadcast %220 : vector<10x1xf32> to vector<10x10xf32>
    %222 = arith.subf %218, %221 : vector<10x10xf32>
    %223 = math.exp %222 : vector<10x10xf32>
    %cst_122 = arith.constant dense<0.000000e+00> : vector<10xf32>
    %224 = vector.multi_reduction <add>, %223, %cst_122 [1] : vector<10x10xf32> to vector<10xf32>
    %225 = vector.shape_cast %224 : vector<10xf32> to vector<10x1xf32>
    %226 = tpu.reciprocal %225 {approx = true} : vector<10x1xf32> -> vector<10x1xf32>
    %227 = vector.broadcast %226 : vector<10x1xf32> to vector<10x10xf32>
    %228 = arith.mulf %223, %227 : vector<10x10xf32>
    %cst_123 = arith.constant dense<0.000000e+00> : vector<10x8xf32>
    %229 = tpu.matmul %228, %216, %cst_123 {dimension_numbers = #tpu.dot_dimension_numbers<[1], [0], [0], [1], [0, 0, 1, 1], [], []>} : vector<10x10xf32>, vector<10x8xf32>, vector<10x8xf32> -> vector<10x8xf32>
    %c1_124 = arith.constant 1 : index
    %c160_125 = arith.constant 160 : index
    %c0_126 = arith.constant 0 : index
    %230 = vector.load %arg2[%c1_124, %c160_125, %c0_126] : memref<2x192x128xf32, #tpu.memory_space<vmem>>, vector<1x8x32xf32>
    %231 = vector.shape_cast %230 : vector<1x8x32xf32> to vector<8x32xf32>
    %cst_127 = arith.constant dense<0.000000e+00> : vector<10x32xf32>
    %232 = tpu.matmul %229, %231, %cst_127 {dimension_numbers = #tpu.dot_dimension_numbers<[1], [0], [0], [1], [0, 0, 1, 1], [], []>} : vector<10x8xf32>, vector<8x32xf32>, vector<10x32xf32> -> vector<10x32xf32>
    %233 = vector.broadcast %184 : vector<1x32xf32> to vector<10x32xf32>
    %234 = arith.addf %232, %233 : vector<10x32xf32>
    %c15 = arith.constant 15 : index
    %c0_128 = arith.constant 0 : index
    %c0_129 = arith.constant 0 : index
    %235 = vector.load %arg1[%c15, %c0_128, %c0_129] : memref<24x40x8xf32, #tpu.memory_space<vmem>>, vector<1x40x8xf32>
    %236 = vector.shape_cast %235 : vector<1x40x8xf32> to vector<40x8xf32>
    %cst_130 = arith.constant dense<0.000000e+00> : vector<10x8xf32>
    %237 = tpu.matmul %207, %236, %cst_130 {dimension_numbers = #tpu.dot_dimension_numbers<[1], [0], [0], [1], [0, 0, 1, 1], [], []>} : vector<10x40xf32>, vector<40x8xf32>, vector<10x8xf32> -> vector<10x8xf32>
    %c16_131 = arith.constant 16 : index
    %c0_132 = arith.constant 0 : index
    %c0_133 = arith.constant 0 : index
    %238 = vector.load %arg1[%c16_131, %c0_132, %c0_133] : memref<24x40x8xf32, #tpu.memory_space<vmem>>, vector<1x40x8xf32>
    %239 = vector.shape_cast %238 : vector<1x40x8xf32> to vector<40x8xf32>
    %cst_134 = arith.constant dense<0.000000e+00> : vector<10x8xf32>
    %240 = tpu.matmul %207, %239, %cst_134 {dimension_numbers = #tpu.dot_dimension_numbers<[1], [0], [0], [1], [0, 0, 1, 1], [], []>} : vector<10x40xf32>, vector<40x8xf32>, vector<10x8xf32> -> vector<10x8xf32>
    %c17 = arith.constant 17 : index
    %c0_135 = arith.constant 0 : index
    %c0_136 = arith.constant 0 : index
    %241 = vector.load %arg1[%c17, %c0_135, %c0_136] : memref<24x40x8xf32, #tpu.memory_space<vmem>>, vector<1x40x8xf32>
    %242 = vector.shape_cast %241 : vector<1x40x8xf32> to vector<40x8xf32>
    %cst_137 = arith.constant dense<0.000000e+00> : vector<10x8xf32>
    %243 = tpu.matmul %207, %242, %cst_137 {dimension_numbers = #tpu.dot_dimension_numbers<[1], [0], [0], [1], [0, 0, 1, 1], [], []>} : vector<10x40xf32>, vector<40x8xf32>, vector<10x8xf32> -> vector<10x8xf32>
    %cst_138 = arith.constant dense<0.000000e+00> : vector<10x10xf32>
    %244 = tpu.matmul %237, %240, %cst_138 {dimension_numbers = #tpu.dot_dimension_numbers<[1], [1], [0], [0], [0, 0, 1, 0], [], []>} : vector<10x8xf32>, vector<10x8xf32>, vector<10x10xf32> -> vector<10x10xf32>
    %245 = arith.addf %244, %5 : vector<10x10xf32>
    %cst_139 = arith.constant dense<0xFF800000> : vector<10xf32>
    %246 = vector.multi_reduction <maximumf>, %245, %cst_139 [1] : vector<10x10xf32> to vector<10xf32>
    %247 = vector.shape_cast %246 : vector<10xf32> to vector<10x1xf32>
    %248 = vector.broadcast %247 : vector<10x1xf32> to vector<10x10xf32>
    %249 = arith.subf %245, %248 : vector<10x10xf32>
    %250 = math.exp %249 : vector<10x10xf32>
    %cst_140 = arith.constant dense<0.000000e+00> : vector<10xf32>
    %251 = vector.multi_reduction <add>, %250, %cst_140 [1] : vector<10x10xf32> to vector<10xf32>
    %252 = vector.shape_cast %251 : vector<10xf32> to vector<10x1xf32>
    %253 = tpu.reciprocal %252 {approx = true} : vector<10x1xf32> -> vector<10x1xf32>
    %254 = vector.broadcast %253 : vector<10x1xf32> to vector<10x10xf32>
    %255 = arith.mulf %250, %254 : vector<10x10xf32>
    %cst_141 = arith.constant dense<0.000000e+00> : vector<10x8xf32>
    %256 = tpu.matmul %255, %243, %cst_141 {dimension_numbers = #tpu.dot_dimension_numbers<[1], [0], [0], [1], [0, 0, 1, 1], [], []>} : vector<10x10xf32>, vector<10x8xf32>, vector<10x8xf32> -> vector<10x8xf32>
    %c1_142 = arith.constant 1 : index
    %c168_143 = arith.constant 168 : index
    %c0_144 = arith.constant 0 : index
    %257 = vector.load %arg2[%c1_142, %c168_143, %c0_144] : memref<2x192x128xf32, #tpu.memory_space<vmem>>, vector<1x8x32xf32>
    %258 = vector.shape_cast %257 : vector<1x8x32xf32> to vector<8x32xf32>
    %cst_145 = arith.constant dense<0.000000e+00> : vector<10x32xf32>
    %259 = tpu.matmul %256, %258, %cst_145 {dimension_numbers = #tpu.dot_dimension_numbers<[1], [0], [0], [1], [0, 0, 1, 1], [], []>} : vector<10x8xf32>, vector<8x32xf32>, vector<10x32xf32> -> vector<10x32xf32>
    %260 = arith.addf %234, %259 : vector<10x32xf32>
    %c18 = arith.constant 18 : index
    %c0_146 = arith.constant 0 : index
    %c0_147 = arith.constant 0 : index
    %261 = vector.load %arg1[%c18, %c0_146, %c0_147] : memref<24x40x8xf32, #tpu.memory_space<vmem>>, vector<1x40x8xf32>
    %262 = vector.shape_cast %261 : vector<1x40x8xf32> to vector<40x8xf32>
    %cst_148 = arith.constant dense<0.000000e+00> : vector<10x8xf32>
    %263 = tpu.matmul %207, %262, %cst_148 {dimension_numbers = #tpu.dot_dimension_numbers<[1], [0], [0], [1], [0, 0, 1, 1], [], []>} : vector<10x40xf32>, vector<40x8xf32>, vector<10x8xf32> -> vector<10x8xf32>
    %c19 = arith.constant 19 : index
    %c0_149 = arith.constant 0 : index
    %c0_150 = arith.constant 0 : index
    %264 = vector.load %arg1[%c19, %c0_149, %c0_150] : memref<24x40x8xf32, #tpu.memory_space<vmem>>, vector<1x40x8xf32>
    %265 = vector.shape_cast %264 : vector<1x40x8xf32> to vector<40x8xf32>
    %cst_151 = arith.constant dense<0.000000e+00> : vector<10x8xf32>
    %266 = tpu.matmul %207, %265, %cst_151 {dimension_numbers = #tpu.dot_dimension_numbers<[1], [0], [0], [1], [0, 0, 1, 1], [], []>} : vector<10x40xf32>, vector<40x8xf32>, vector<10x8xf32> -> vector<10x8xf32>
    %c20 = arith.constant 20 : index
    %c0_152 = arith.constant 0 : index
    %c0_153 = arith.constant 0 : index
    %267 = vector.load %arg1[%c20, %c0_152, %c0_153] : memref<24x40x8xf32, #tpu.memory_space<vmem>>, vector<1x40x8xf32>
    %268 = vector.shape_cast %267 : vector<1x40x8xf32> to vector<40x8xf32>
    %cst_154 = arith.constant dense<0.000000e+00> : vector<10x8xf32>
    %269 = tpu.matmul %207, %268, %cst_154 {dimension_numbers = #tpu.dot_dimension_numbers<[1], [0], [0], [1], [0, 0, 1, 1], [], []>} : vector<10x40xf32>, vector<40x8xf32>, vector<10x8xf32> -> vector<10x8xf32>
    %cst_155 = arith.constant dense<0.000000e+00> : vector<10x10xf32>
    %270 = tpu.matmul %263, %266, %cst_155 {dimension_numbers = #tpu.dot_dimension_numbers<[1], [1], [0], [0], [0, 0, 1, 0], [], []>} : vector<10x8xf32>, vector<10x8xf32>, vector<10x10xf32> -> vector<10x10xf32>
    %271 = arith.addf %270, %5 : vector<10x10xf32>
    %cst_156 = arith.constant dense<0xFF800000> : vector<10xf32>
    %272 = vector.multi_reduction <maximumf>, %271, %cst_156 [1] : vector<10x10xf32> to vector<10xf32>
    %273 = vector.shape_cast %272 : vector<10xf32> to vector<10x1xf32>
    %274 = vector.broadcast %273 : vector<10x1xf32> to vector<10x10xf32>
    %275 = arith.subf %271, %274 : vector<10x10xf32>
    %276 = math.exp %275 : vector<10x10xf32>
    %cst_157 = arith.constant dense<0.000000e+00> : vector<10xf32>
    %277 = vector.multi_reduction <add>, %276, %cst_157 [1] : vector<10x10xf32> to vector<10xf32>
    %278 = vector.shape_cast %277 : vector<10xf32> to vector<10x1xf32>
    %279 = tpu.reciprocal %278 {approx = true} : vector<10x1xf32> -> vector<10x1xf32>
    %280 = vector.broadcast %279 : vector<10x1xf32> to vector<10x10xf32>
    %281 = arith.mulf %276, %280 : vector<10x10xf32>
    %cst_158 = arith.constant dense<0.000000e+00> : vector<10x8xf32>
    %282 = tpu.matmul %281, %269, %cst_158 {dimension_numbers = #tpu.dot_dimension_numbers<[1], [0], [0], [1], [0, 0, 1, 1], [], []>} : vector<10x10xf32>, vector<10x8xf32>, vector<10x8xf32> -> vector<10x8xf32>
    %c1_159 = arith.constant 1 : index
    %c176_160 = arith.constant 176 : index
    %c0_161 = arith.constant 0 : index
    %283 = vector.load %arg2[%c1_159, %c176_160, %c0_161] : memref<2x192x128xf32, #tpu.memory_space<vmem>>, vector<1x8x32xf32>
    %284 = vector.shape_cast %283 : vector<1x8x32xf32> to vector<8x32xf32>
    %cst_162 = arith.constant dense<0.000000e+00> : vector<10x32xf32>
    %285 = tpu.matmul %282, %284, %cst_162 {dimension_numbers = #tpu.dot_dimension_numbers<[1], [0], [0], [1], [0, 0, 1, 1], [], []>} : vector<10x8xf32>, vector<8x32xf32>, vector<10x32xf32> -> vector<10x32xf32>
    %286 = arith.addf %260, %285 : vector<10x32xf32>
    %c21 = arith.constant 21 : index
    %c0_163 = arith.constant 0 : index
    %c0_164 = arith.constant 0 : index
    %287 = vector.load %arg1[%c21, %c0_163, %c0_164] : memref<24x40x8xf32, #tpu.memory_space<vmem>>, vector<1x40x8xf32>
    %288 = vector.shape_cast %287 : vector<1x40x8xf32> to vector<40x8xf32>
    %cst_165 = arith.constant dense<0.000000e+00> : vector<10x8xf32>
    %289 = tpu.matmul %207, %288, %cst_165 {dimension_numbers = #tpu.dot_dimension_numbers<[1], [0], [0], [1], [0, 0, 1, 1], [], []>} : vector<10x40xf32>, vector<40x8xf32>, vector<10x8xf32> -> vector<10x8xf32>
    %c22 = arith.constant 22 : index
    %c0_166 = arith.constant 0 : index
    %c0_167 = arith.constant 0 : index
    %290 = vector.load %arg1[%c22, %c0_166, %c0_167] : memref<24x40x8xf32, #tpu.memory_space<vmem>>, vector<1x40x8xf32>
    %291 = vector.shape_cast %290 : vector<1x40x8xf32> to vector<40x8xf32>
    %cst_168 = arith.constant dense<0.000000e+00> : vector<10x8xf32>
    %292 = tpu.matmul %207, %291, %cst_168 {dimension_numbers = #tpu.dot_dimension_numbers<[1], [0], [0], [1], [0, 0, 1, 1], [], []>} : vector<10x40xf32>, vector<40x8xf32>, vector<10x8xf32> -> vector<10x8xf32>
    %c23 = arith.constant 23 : index
    %c0_169 = arith.constant 0 : index
    %c0_170 = arith.constant 0 : index
    %293 = vector.load %arg1[%c23, %c0_169, %c0_170] : memref<24x40x8xf32, #tpu.memory_space<vmem>>, vector<1x40x8xf32>
    %294 = vector.shape_cast %293 : vector<1x40x8xf32> to vector<40x8xf32>
    %cst_171 = arith.constant dense<0.000000e+00> : vector<10x8xf32>
    %295 = tpu.matmul %207, %294, %cst_171 {dimension_numbers = #tpu.dot_dimension_numbers<[1], [0], [0], [1], [0, 0, 1, 1], [], []>} : vector<10x40xf32>, vector<40x8xf32>, vector<10x8xf32> -> vector<10x8xf32>
    %cst_172 = arith.constant dense<0.000000e+00> : vector<10x10xf32>
    %296 = tpu.matmul %289, %292, %cst_172 {dimension_numbers = #tpu.dot_dimension_numbers<[1], [1], [0], [0], [0, 0, 1, 0], [], []>} : vector<10x8xf32>, vector<10x8xf32>, vector<10x10xf32> -> vector<10x10xf32>
    %297 = arith.addf %296, %5 : vector<10x10xf32>
    %cst_173 = arith.constant dense<0xFF800000> : vector<10xf32>
    %298 = vector.multi_reduction <maximumf>, %297, %cst_173 [1] : vector<10x10xf32> to vector<10xf32>
    %299 = vector.shape_cast %298 : vector<10xf32> to vector<10x1xf32>
    %300 = vector.broadcast %299 : vector<10x1xf32> to vector<10x10xf32>
    %301 = arith.subf %297, %300 : vector<10x10xf32>
    %302 = math.exp %301 : vector<10x10xf32>
    %cst_174 = arith.constant dense<0.000000e+00> : vector<10xf32>
    %303 = vector.multi_reduction <add>, %302, %cst_174 [1] : vector<10x10xf32> to vector<10xf32>
    %304 = vector.shape_cast %303 : vector<10xf32> to vector<10x1xf32>
    %305 = tpu.reciprocal %304 {approx = true} : vector<10x1xf32> -> vector<10x1xf32>
    %306 = vector.broadcast %305 : vector<10x1xf32> to vector<10x10xf32>
    %307 = arith.mulf %302, %306 : vector<10x10xf32>
    %cst_175 = arith.constant dense<0.000000e+00> : vector<10x8xf32>
    %308 = tpu.matmul %307, %295, %cst_175 {dimension_numbers = #tpu.dot_dimension_numbers<[1], [0], [0], [1], [0, 0, 1, 1], [], []>} : vector<10x10xf32>, vector<10x8xf32>, vector<10x8xf32> -> vector<10x8xf32>
    %c1_176 = arith.constant 1 : index
    %c184_177 = arith.constant 184 : index
    %c0_178 = arith.constant 0 : index
    %309 = vector.load %arg2[%c1_176, %c184_177, %c0_178] : memref<2x192x128xf32, #tpu.memory_space<vmem>>, vector<1x8x32xf32>
    %310 = vector.shape_cast %309 : vector<1x8x32xf32> to vector<8x32xf32>
    %cst_179 = arith.constant dense<0.000000e+00> : vector<10x32xf32>
    %311 = tpu.matmul %308, %310, %cst_179 {dimension_numbers = #tpu.dot_dimension_numbers<[1], [0], [0], [1], [0, 0, 1, 1], [], []>} : vector<10x8xf32>, vector<8x32xf32>, vector<10x32xf32> -> vector<10x32xf32>
    %312 = arith.addf %286, %311 : vector<10x32xf32>
    %313 = arith.addf %179, %312 : vector<10x32xf32>
    %cst_180 = arith.constant dense<0.000000e+00> : vector<10xf32>
    %314 = vector.multi_reduction <add>, %313, %cst_180 [1] : vector<10x32xf32> to vector<10xf32>
    %315 = vector.shape_cast %314 : vector<10xf32> to vector<10x1xf32>
    %cst_181 = arith.constant 3.200000e+01 : f32
    %316 = vector.broadcast %cst_181 : f32 to vector<10x1xf32>
    %317 = arith.divf %315, %316 : vector<10x1xf32>
    %318 = vector.broadcast %317 : vector<10x1xf32> to vector<10x32xf32>
    %319 = arith.subf %313, %318 : vector<10x32xf32>
    %320 = arith.mulf %319, %319 : vector<10x32xf32>
    %cst_182 = arith.constant dense<0.000000e+00> : vector<10xf32>
    %321 = vector.multi_reduction <add>, %320, %cst_182 [1] : vector<10x32xf32> to vector<10xf32>
    %322 = vector.shape_cast %321 : vector<10xf32> to vector<10x1xf32>
    %cst_183 = arith.constant 3.200000e+01 : f32
    %323 = vector.broadcast %cst_183 : f32 to vector<10x1xf32>
    %324 = arith.divf %322, %323 : vector<10x1xf32>
    %cst_184 = arith.constant 9.99999997E-7 : f32
    %325 = vector.broadcast %cst_184 : f32 to vector<10x1xf32>
    %326 = arith.addf %324, %325 : vector<10x1xf32>
    %327 = math.rsqrt %326 : vector<10x1xf32>
    %328 = vector.broadcast %327 : vector<10x1xf32> to vector<10x32xf32>
    %329 = arith.mulf %319, %328 : vector<10x32xf32>
    %330 = vector.broadcast %182 : vector<1x32xf32> to vector<10x32xf32>
    %331 = arith.mulf %329, %330 : vector<10x32xf32>
    %332 = vector.broadcast %183 : vector<1x32xf32> to vector<10x32xf32>
    %333 = arith.addf %331, %332 : vector<10x32xf32>
    %c1_185 = arith.constant 1 : index
    %c0_186 = arith.constant 0 : index
    %c0_187 = arith.constant 0 : index
    %334 = vector.load %arg2[%c1_185, %c0_186, %c0_187] : memref<2x192x128xf32, #tpu.memory_space<vmem>>, vector<1x32x128xf32>
    %335 = vector.shape_cast %334 : vector<1x32x128xf32> to vector<32x128xf32>
    %cst_188 = arith.constant dense<0.000000e+00> : vector<10x128xf32>
    %336 = tpu.matmul %333, %335, %cst_188 {dimension_numbers = #tpu.dot_dimension_numbers<[1], [0], [0], [1], [0, 0, 1, 1], [], []>} : vector<10x32xf32>, vector<32x128xf32>, vector<10x128xf32> -> vector<10x128xf32>
    %337 = vector.broadcast %185 : vector<1x128xf32> to vector<10x128xf32>
    %338 = arith.addf %336, %337 : vector<10x128xf32>
    %cst_189 = arith.constant 5.000000e-01 : f32
    %339 = vector.broadcast %cst_189 : f32 to vector<10x128xf32>
    %340 = arith.mulf %339, %338 : vector<10x128xf32>
    %cst_190 = arith.constant 0.707106769 : f32
    %341 = vector.broadcast %cst_190 : f32 to vector<10x128xf32>
    %342 = arith.mulf %338, %341 : vector<10x128xf32>
    %343 = math.erf %342 : vector<10x128xf32>
    %cst_191 = arith.constant 1.000000e+00 : f32
    %344 = vector.broadcast %cst_191 : f32 to vector<10x128xf32>
    %345 = arith.addf %344, %343 : vector<10x128xf32>
    %346 = arith.mulf %340, %345 : vector<10x128xf32>
    %c1_192 = arith.constant 1 : index
    %c32_193 = arith.constant 32 : index
    %c0_194 = arith.constant 0 : index
    %347 = vector.load %arg2[%c1_192, %c32_193, %c0_194] : memref<2x192x128xf32, #tpu.memory_space<vmem>>, vector<1x128x32xf32>
    %348 = vector.shape_cast %347 : vector<1x128x32xf32> to vector<128x32xf32>
    %cst_195 = arith.constant dense<0.000000e+00> : vector<10x32xf32>
    %349 = tpu.matmul %346, %348, %cst_195 {dimension_numbers = #tpu.dot_dimension_numbers<[1], [0], [0], [1], [0, 0, 1, 1], [], []>} : vector<10x128xf32>, vector<128x32xf32>, vector<10x32xf32> -> vector<10x32xf32>
    %350 = vector.broadcast %186 : vector<1x32xf32> to vector<10x32xf32>
    %351 = arith.addf %349, %350 : vector<10x32xf32>
    %352 = arith.addf %313, %351 : vector<10x32xf32>
    %c32_196 = arith.constant 32 : index
    %c0_197 = arith.constant 0 : index
    %353 = vector.load %arg4[%c32_196, %c0_197] : memref<56x128xf32, #tpu.memory_space<vmem>>, vector<1x32xf32>
    %c33 = arith.constant 33 : index
    %c0_198 = arith.constant 0 : index
    %354 = vector.load %arg4[%c33, %c0_198] : memref<56x128xf32, #tpu.memory_space<vmem>>, vector<1x32xf32>
    %355 = vector.extract_strided_slice %352 {offsets = [0, 0], sizes = [8, 32], strides = [1, 1]} : vector<10x32xf32> to vector<8x32xf32>
    %cst_199 = arith.constant dense<0.000000e+00> : vector<8xf32>
    %356 = vector.multi_reduction <add>, %355, %cst_199 [1] : vector<8x32xf32> to vector<8xf32>
    %357 = vector.shape_cast %356 : vector<8xf32> to vector<8x1xf32>
    %cst_200 = arith.constant 3.200000e+01 : f32
    %358 = vector.broadcast %cst_200 : f32 to vector<8x1xf32>
    %359 = arith.divf %357, %358 : vector<8x1xf32>
    %360 = vector.broadcast %359 : vector<8x1xf32> to vector<8x32xf32>
    %361 = arith.subf %355, %360 : vector<8x32xf32>
    %362 = arith.mulf %361, %361 : vector<8x32xf32>
    %cst_201 = arith.constant dense<0.000000e+00> : vector<8xf32>
    %363 = vector.multi_reduction <add>, %362, %cst_201 [1] : vector<8x32xf32> to vector<8xf32>
    %364 = vector.shape_cast %363 : vector<8xf32> to vector<8x1xf32>
    %cst_202 = arith.constant 3.200000e+01 : f32
    %365 = vector.broadcast %cst_202 : f32 to vector<8x1xf32>
    %366 = arith.divf %364, %365 : vector<8x1xf32>
    %cst_203 = arith.constant 9.99999997E-7 : f32
    %367 = vector.broadcast %cst_203 : f32 to vector<8x1xf32>
    %368 = arith.addf %366, %367 : vector<8x1xf32>
    %369 = math.rsqrt %368 : vector<8x1xf32>
    %370 = vector.broadcast %369 : vector<8x1xf32> to vector<8x32xf32>
    %371 = arith.mulf %361, %370 : vector<8x32xf32>
    %372 = vector.broadcast %353 : vector<1x32xf32> to vector<8x32xf32>
    %373 = arith.mulf %371, %372 : vector<8x32xf32>
    %374 = vector.broadcast %354 : vector<1x32xf32> to vector<8x32xf32>
    %375 = arith.addf %373, %374 : vector<8x32xf32>
    %c192 = arith.constant 192 : index
    %c0_204 = arith.constant 0 : index
    %376 = vector.load %arg3[%c192, %c0_204] : memref<288x32xf32, #tpu.memory_space<vmem>>, vector<32x32xf32>
    %c34 = arith.constant 34 : index
    %c0_205 = arith.constant 0 : index
    %377 = vector.load %arg4[%c34, %c0_205] : memref<56x128xf32, #tpu.memory_space<vmem>>, vector<1x32xf32>
    %cst_206 = arith.constant dense<0.000000e+00> : vector<8x32xf32>
    %378 = tpu.matmul %375, %376, %cst_206 {dimension_numbers = #tpu.dot_dimension_numbers<[1], [0], [0], [1], [0, 0, 1, 1], [], []>} : vector<8x32xf32>, vector<32x32xf32>, vector<8x32xf32> -> vector<8x32xf32>
    %379 = vector.broadcast %377 : vector<1x32xf32> to vector<8x32xf32>
    %380 = arith.addf %378, %379 : vector<8x32xf32>
    %cst_207 = arith.constant 0.000000e+00 : f32
    %381 = vector.broadcast %cst_207 : f32 to vector<8x32xf32>
    %382 = arith.maximumf %380, %381 : vector<8x32xf32>
    %c16_208 = arith.constant 16 : index
    %c0_209 = arith.constant 0 : index
    %383 = vector.load %arg0[%c16_208, %c0_209] : memref<32x192xf32, #tpu.memory_space<vmem>>, vector<8x1xf32>
    %c24 = arith.constant 24 : index
    %c0_210 = arith.constant 0 : index
    %384 = vector.load %arg0[%c24, %c0_210] : memref<32x192xf32, #tpu.memory_space<vmem>>, vector<8x1xf32>
    %c224 = arith.constant 224 : index
    %c0_211 = arith.constant 0 : index
    %385 = vector.load %arg3[%c224, %c0_211] : memref<288x32xf32, #tpu.memory_space<vmem>>, vector<32x2xf32>
    %c35 = arith.constant 35 : index
    %c0_212 = arith.constant 0 : index
    %386 = vector.load %arg4[%c35, %c0_212] : memref<56x128xf32, #tpu.memory_space<vmem>>, vector<1x2xf32>
    %c256 = arith.constant 256 : index
    %c0_213 = arith.constant 0 : index
    %387 = vector.load %arg3[%c256, %c0_213] : memref<288x32xf32, #tpu.memory_space<vmem>>, vector<32x8xf32>
    %c36 = arith.constant 36 : index
    %c0_214 = arith.constant 0 : index
    %388 = vector.load %arg4[%c36, %c0_214] : memref<56x128xf32, #tpu.memory_space<vmem>>, vector<1x8xf32>
    %cst_215 = arith.constant dense<0.000000e+00> : vector<8x2xf32>
    %389 = tpu.matmul %382, %385, %cst_215 {dimension_numbers = #tpu.dot_dimension_numbers<[1], [0], [0], [1], [0, 0, 1, 1], [], []>} : vector<8x32xf32>, vector<32x2xf32>, vector<8x2xf32> -> vector<8x2xf32>
    %390 = vector.broadcast %386 : vector<1x2xf32> to vector<8x2xf32>
    %391 = arith.addf %389, %390 : vector<8x2xf32>
    %cst_216 = arith.constant dense<0xFF800000> : vector<8xf32>
    %392 = vector.multi_reduction <maximumf>, %391, %cst_216 [1] : vector<8x2xf32> to vector<8xf32>
    %393 = vector.shape_cast %392 : vector<8xf32> to vector<8x1xf32>
    %394 = vector.broadcast %393 : vector<8x1xf32> to vector<8x2xf32>
    %395 = arith.subf %391, %394 : vector<8x2xf32>
    %396 = math.exp %395 : vector<8x2xf32>
    %cst_217 = arith.constant dense<0.000000e+00> : vector<8xf32>
    %397 = vector.multi_reduction <add>, %396, %cst_217 [1] : vector<8x2xf32> to vector<8xf32>
    %398 = vector.shape_cast %397 : vector<8xf32> to vector<8x1xf32>
    %399 = math.log %398 : vector<8x1xf32>
    %400 = arith.addf %393, %399 : vector<8x1xf32>
    %401 = vector.broadcast %400 : vector<8x1xf32> to vector<8x2xf32>
    %402 = arith.subf %391, %401 : vector<8x2xf32>
    %403 = math.exp %402 : vector<8x2xf32>
    %cst_218 = arith.constant dense<0.000000e+00> : vector<8x8xf32>
    %404 = tpu.matmul %382, %387, %cst_218 {dimension_numbers = #tpu.dot_dimension_numbers<[1], [0], [0], [1], [0, 0, 1, 1], [], []>} : vector<8x32xf32>, vector<32x8xf32>, vector<8x8xf32> -> vector<8x8xf32>
    %405 = vector.broadcast %388 : vector<1x8xf32> to vector<8x8xf32>
    %406 = arith.addf %404, %405 : vector<8x8xf32>
    %407 = tpu.iota {dimensions = array<i32: 1>} : vector<8x8xi32>
    %408 = arith.sitofp %407 : vector<8x8xi32> to vector<8x8xf32>
    %cst_219 = arith.constant 4.000000e+00 : f32
    %409 = vector.broadcast %cst_219 : f32 to vector<8x1xf32>
    %410 = arith.mulf %383, %409 : vector<8x1xf32>
    %411 = vector.broadcast %410 : vector<8x1xf32> to vector<8x8xf32>
    %412 = arith.cmpf oge, %408, %411 : vector<8x8xf32>
    %cst_220 = arith.constant 4.000000e+00 : f32
    %413 = vector.broadcast %cst_220 : f32 to vector<8x1xf32>
    %414 = arith.addf %410, %413 : vector<8x1xf32>
    %415 = vector.broadcast %414 : vector<8x1xf32> to vector<8x8xf32>
    %416 = arith.cmpf olt, %408, %415 : vector<8x8xf32>
    %417 = arith.andi %412, %416 : vector<8x8xi1>
    %cst_221 = arith.constant -1.000000e+30 : f32
    %418 = vector.broadcast %cst_221 : f32 to vector<8x8xf32>
    %419 = arith.select %417, %406, %418 : vector<8x8xi1>, vector<8x8xf32>
    %cst_222 = arith.constant dense<0xFF800000> : vector<8xf32>
    %420 = vector.multi_reduction <maximumf>, %419, %cst_222 [1] : vector<8x8xf32> to vector<8xf32>
    %421 = vector.shape_cast %420 : vector<8xf32> to vector<8x1xf32>
    %422 = vector.broadcast %421 : vector<8x1xf32> to vector<8x8xf32>
    %423 = arith.subf %419, %422 : vector<8x8xf32>
    %424 = math.exp %423 : vector<8x8xf32>
    %cst_223 = arith.constant dense<0.000000e+00> : vector<8xf32>
    %425 = vector.multi_reduction <add>, %424, %cst_223 [1] : vector<8x8xf32> to vector<8xf32>
    %426 = vector.shape_cast %425 : vector<8xf32> to vector<8x1xf32>
    %427 = math.log %426 : vector<8x1xf32>
    %428 = arith.addf %421, %427 : vector<8x1xf32>
    %429 = vector.broadcast %428 : vector<8x1xf32> to vector<8x8xf32>
    %430 = arith.subf %419, %429 : vector<8x8xf32>
    %431 = math.exp %430 : vector<8x8xf32>
    %432 = tpu.iota {dimensions = array<i32: 1>} : vector<8x2xi32>
    %433 = arith.sitofp %432 : vector<8x2xi32> to vector<8x2xf32>
    %434 = vector.broadcast %383 : vector<8x1xf32> to vector<8x2xf32>
    %435 = arith.cmpf oeq, %433, %434 : vector<8x2xf32>
    %cst_224 = arith.constant 0.000000e+00 : f32
    %436 = vector.broadcast %cst_224 : f32 to vector<8x2xf32>
    %437 = arith.select %435, %402, %436 : vector<8x2xi1>, vector<8x2xf32>
    %cst_225 = arith.constant dense<0.000000e+00> : vector<8xf32>
    %438 = vector.multi_reduction <add>, %437, %cst_225 [1] : vector<8x2xf32> to vector<8xf32>
    %439 = vector.shape_cast %438 : vector<8xf32> to vector<8x1xf32>
    %440 = arith.addf %410, %384 : vector<8x1xf32>
    %441 = vector.broadcast %440 : vector<8x1xf32> to vector<8x8xf32>
    %442 = arith.cmpf oeq, %408, %441 : vector<8x8xf32>
    %cst_226 = arith.constant 0.000000e+00 : f32
    %443 = vector.broadcast %cst_226 : f32 to vector<8x8xf32>
    %444 = arith.select %442, %430, %443 : vector<8x8xi1>, vector<8x8xf32>
    %cst_227 = arith.constant dense<0.000000e+00> : vector<8xf32>
    %445 = vector.multi_reduction <add>, %444, %cst_227 [1] : vector<8x8xf32> to vector<8xf32>
    %446 = vector.shape_cast %445 : vector<8xf32> to vector<8x1xf32>
    %447 = arith.addf %439, %446 : vector<8x1xf32>
    %cst_228 = arith.constant 0.000000e+00 : f32
    %448 = vector.broadcast %cst_228 : f32 to vector<8x1xf32>
    %449 = arith.subf %448, %447 : vector<8x1xf32>
    %cst_229 = arith.constant dense<0xFF800000> : vector<8xf32>
    %450 = vector.multi_reduction <maximumf>, %403, %cst_229 [1] : vector<8x2xf32> to vector<8xf32>
    %451 = vector.shape_cast %450 : vector<8xf32> to vector<8x1xf32>
    %452 = vector.broadcast %451 : vector<8x1xf32> to vector<8x2xf32>
    %453 = arith.cmpf oge, %403, %452 : vector<8x2xf32>
    %cst_230 = arith.constant 2.000000e+00 : f32
    %454 = vector.broadcast %cst_230 : f32 to vector<8x2xf32>
    %455 = arith.select %453, %433, %454 : vector<8x2xi1>, vector<8x2xf32>
    %cst_231 = arith.constant dense<0x7F800000> : vector<8xf32>
    %456 = vector.multi_reduction <minimumf>, %455, %cst_231 [1] : vector<8x2xf32> to vector<8xf32>
    %457 = vector.shape_cast %456 : vector<8xf32> to vector<8x1xf32>
    %cst_232 = arith.constant dense<0xFF800000> : vector<8xf32>
    %458 = vector.multi_reduction <maximumf>, %431, %cst_232 [1] : vector<8x8xf32> to vector<8xf32>
    %459 = vector.shape_cast %458 : vector<8xf32> to vector<8x1xf32>
    %460 = vector.broadcast %459 : vector<8x1xf32> to vector<8x8xf32>
    %461 = arith.cmpf oge, %431, %460 : vector<8x8xf32>
    %cst_233 = arith.constant 8.000000e+00 : f32
    %462 = vector.broadcast %cst_233 : f32 to vector<8x8xf32>
    %463 = arith.select %461, %408, %462 : vector<8x8xi1>, vector<8x8xf32>
    %cst_234 = arith.constant dense<0x7F800000> : vector<8xf32>
    %464 = vector.multi_reduction <minimumf>, %463, %cst_234 [1] : vector<8x8xf32> to vector<8xf32>
    %465 = vector.shape_cast %464 : vector<8xf32> to vector<8x1xf32>
    %cst_235 = arith.constant 4.000000e+00 : f32
    %466 = vector.broadcast %cst_235 : f32 to vector<8x1xf32>
    %467 = arith.mulf %457, %466 : vector<8x1xf32>
    %468 = arith.subf %465, %410 : vector<8x1xf32>
    %469 = arith.addf %467, %468 : vector<8x1xf32>
    %470 = arith.mulf %451, %459 : vector<8x1xf32>
    %471 = tpu.iota {dimensions = array<i32: 1>} : vector<8x128xi32>
    %c0_i32 = arith.constant 0 : i32
    %472 = vector.broadcast %c0_i32 : i32 to vector<8x128xi32>
    %473 = arith.cmpi eq, %471, %472 : vector<8x128xi32>
    %cst_236 = arith.constant 0.000000e+00 : f32
    %474 = vector.shape_cast %449 : vector<8x1xf32> to vector<8x1xf32>
    %475 = vector.broadcast %474 : vector<8x1xf32> to vector<8x128xf32>
    %476 = vector.broadcast %cst_236 : f32 to vector<8x128xf32>
    %477 = arith.select %473, %475, %476 : vector<8x128xi1>, vector<8x128xf32>
    %c1_i32 = arith.constant 1 : i32
    %478 = vector.broadcast %c1_i32 : i32 to vector<8x128xi32>
    %479 = arith.cmpi eq, %471, %478 : vector<8x128xi32>
    %cst_237 = arith.constant 0.000000e+00 : f32
    %480 = vector.shape_cast %469 : vector<8x1xf32> to vector<8x1xf32>
    %481 = vector.broadcast %480 : vector<8x1xf32> to vector<8x128xf32>
    %482 = vector.broadcast %cst_237 : f32 to vector<8x128xf32>
    %483 = arith.select %479, %481, %482 : vector<8x128xi1>, vector<8x128xf32>
    %484 = arith.addf %477, %483 : vector<8x128xf32>
    %c2_i32 = arith.constant 2 : i32
    %485 = vector.broadcast %c2_i32 : i32 to vector<8x128xi32>
    %486 = arith.cmpi eq, %471, %485 : vector<8x128xi32>
    %cst_238 = arith.constant 0.000000e+00 : f32
    %487 = vector.shape_cast %470 : vector<8x1xf32> to vector<8x1xf32>
    %488 = vector.broadcast %487 : vector<8x1xf32> to vector<8x128xf32>
    %489 = vector.broadcast %cst_238 : f32 to vector<8x128xf32>
    %490 = arith.select %486, %488, %489 : vector<8x128xi1>, vector<8x128xf32>
    %491 = arith.addf %484, %490 : vector<8x128xf32>
    %c0_239 = arith.constant 0 : index
    %c0_240 = arith.constant 0 : index
    %492 = vector.load %arg5[%c0_239, %c0_240] : memref<8x128xf32, #tpu.memory_space<vmem>>, vector<8x128xf32>
    tpu.vector_store %arg5[%c0_239, %c0_240], %491 {strides = array<i32>} : memref<8x128xf32, #tpu.memory_space<vmem>>, vector<8x128xf32>,
    return
  }
}

</mosaic_0001>

<llo_original>
// kernel: vitae_forward.1
$region0: #{vitae_forward.1}
  #allocation0 [shape = 'u32[]', space=smem, size = 0x4, offset = 0x4, fixed_abs, tag = 'smem constant byte address 0x4 - core index']
  #allocation1 [shape = 'u32[144,128]{1,0:T(1,128)}', space=vmem, size = 0x12000, scoped, tag = 'internal scratch']
  %s0 = inlined_call_operand.vmem [shape: f32[32,192], index: 0, kind: input, shape index: {}]
  %s1 = inlined_call_operand.vmem [shape: f32[24,40,8], index: 1, kind: input, shape index: {}]
  %s2 = inlined_call_operand.vmem [shape: f32[2,192,128], index: 2, kind: input, shape index: {}]
  %s3 = inlined_call_operand.vmem [shape: f32[288,32], index: 3, kind: input, shape index: {}]
  %s4 = inlined_call_operand.vmem [shape: f32[56,128], index: 4, kind: input, shape index: {}]
  %s5 = inlined_call_operand.vmem [shape: f32[8,128], index: 5, kind: output, shape index: {}]
  %s6 = sld [smem:[#allocation0]]
  $region30: #{vitae_forward.1} parent=0
    _
  %s8 = ssub.s32 1, %s6
  %s9 = scalar_select 0, %s8, %s6
  // Predicated region
  $region2: #{vitae_forward.1} parent=0 // pred_check
    _
  $region3: #{vitae_forward.1} parent=0 // pred_check_branch
    %11 = sbr.rel (0) target = $region5
  $region4: #{vitae_forward.1} parent=0 // pred_region
    _
  $region5: #{vitae_forward.1} parent=0 // pred_fallthru
    _
  // Predicated region
  $region6: #{vitae_forward.1} parent=0 // pred_check
    _
  $region7: #{vitae_forward.1} parent=0 // pred_check_branch
    %13 = sbr.rel (0) target = $region9
  $region8: #{vitae_forward.1} parent=0 // pred_region
    _
  $region9: #{vitae_forward.1} parent=0 // pred_fallthru
    _
  // Predicated region
  $region10: #{vitae_forward.1} parent=0 // pred_check
    _
  $region11: #{vitae_forward.1} parent=0 // pred_check_branch
    %15 = sbr.rel (0) target = $region13
  $region12: #{vitae_forward.1} parent=0 // pred_region
    _
  $region13: #{vitae_forward.1} parent=0 // pred_fallthru
    _
  // Predicated region
  $region14: #{vitae_forward.1} parent=0 // pred_check
    _
  $region15: #{vitae_forward.1} parent=0 // pred_check_branch
    %17 = sbr.rel (0) target = $region17
  $region16: #{vitae_forward.1} parent=0 // pred_region
    _
  $region17: #{vitae_forward.1} parent=0 // pred_fallthru
    _
  // Predicated region
  $region18: #{vitae_forward.1} parent=0 // pred_check
    _
  $region19: #{vitae_forward.1} parent=0 // pred_check_branch
    %19 = sbr.rel (0) target = $region21
  $region20: #{vitae_forward.1} parent=0 // pred_region
    _
  $region21: #{vitae_forward.1} parent=0 // pred_fallthru
    _
  %v20 = vld [vmem:[%s0] sm:$0xff]
  %v21 = vld [vmem:[%s0 + $0x8] sm:$0xff]
  %v22 = vld [vmem:[%s0 + $0x10] sm:$0x3]
  %v23 = vld [vmem:[%s0 + $0x18] sm:$0x3]
  %v24 = vld [vmem:[%s3] sm:$0xff]
  %v25 = vld [vmem:[%s3 + $0x8] sm:$0xff]
  %v26 = vld [vmem:[%s3 + $0x10] sm:$0xff]
  %v27 = vld [vmem:[%s3 + $0x18] sm:$0xff]
  %v28 = vld [vmem:[%s3 + $0x20] sm:$0xff]
  %v29 = vld [vmem:[%s3 + $0x28] sm:$0xff]
  %v30 = vld [vmem:[%s3 + $0x30] sm:$0xff]
  %v31 = vld [vmem:[%s3 + $0x38] sm:$0xff]
  %v32 = vld [vmem:[%s3 + $0x40] sm:$0xff]
  %v33 = vld [vmem:[%s3 + $0x48] sm:$0xff]
  %v34 = vld [vmem:[%s3 + $0x50] sm:$0xff]
  %v35 = vld [vmem:[%s3 + $0x58] sm:$0xff]
  %v36 = vld [vmem:[%s3 + $0x60] sm:$0xff]
  %v37 = vld [vmem:[%s3 + $0x68] sm:$0xff]
  %v38 = vld [vmem:[%s3 + $0x70] sm:$0xff]
  %v39 = vld [vmem:[%s3 + $0x78] sm:$0xff]
  %v40 = vld [vmem:[%s3 + $0x80] sm:$0xff]
  %v41 = vld [vmem:[%s3 + $0x88] sm:$0xff]
  %v42 = vld [vmem:[%s3 + $0x90] sm:$0xff]
  %v43 = vld [vmem:[%s3 + $0x98] sm:$0xff]
  %v44 = vld [vmem:[%s3 + $0xa0] sm:$0xff]
  %v45 = vld [vmem:[%s3 + $0xa8] sm:$0xff]
  %v46 = vld [vmem:[%s3 + $0xb0] sm:$0xff]
  %v47 = vld [vmem:[%s3 + $0xb8] sm:$0xff]
  %v48 = vld [vmem:[%s4] sm:$0xff]
  %v49 = vld [vmem:[%s4 + $0x8] sm:$0x3]
  %vm50 = vcmask 523264
  %v52 = vsel %vm50, %v21, 0
  %v55 = vsel %vm50, %v23, 0
  %57 = vmatprep.subr.mxu0 0.0
  %58 = vmatpush1.msra.mxu0 %v24
  %59 = vmatprep.subr.mxu0 0.0
  %60 = vmatpush1.msra.mxu0 %v25
  %61 = vmatprep.subr.mxu0 0.0
  %62 = vmatpush1.msra.mxu0 %v26
  %63 = vmatprep.subr.mxu0 0.0
  %64 = vmatpush1.msra.mxu0 %v27
  %65 = vmatprep.subr.mxu0 0.0
  %66 = vmatpush1.msra.mxu0 %v28
  %67 = vmatprep.subr.mxu0 0.0
  %68 = vmatpush1.msra.mxu0 %v29
  %69 = vmatprep.subr.mxu0 0.0
  %70 = vmatpush1.msra.mxu0 %v30
  %71 = vmatprep.subr.mxu0 0.0
  %72 = vmatpush1.msra.mxu0 %v31
  %73 = vmatprep.subr.mxu0 0.0
  %74 = vmatpush1.msra.mxu0 %v32
  %75 = vmatprep.subr.mxu0 0.0
  %76 = vmatpush1.msra.mxu0 %v33
  %77 = vmatprep.subr.mxu0 0.0
  %78 = vmatpush1.msra.mxu0 %v34
  %79 = vmatprep.subr.mxu0 0.0
  %80 = vmatpush1.msra.mxu0 %v35
  %81 = vmatprep.subr.mxu0 0.0
  %82 = vmatpush1.msra.mxu0 %v36
  %83 = vmatprep.subr.mxu0 0.0
  %84 = vmatpush1.msra.mxu0 %v37
  %85 = vmatprep.subr.mxu0 0.0
  %86 = vmatpush1.msra.mxu0 %v38
  %87 = vmatprep.subr.mxu0 0.0
  %88 = vmatpush1.msra.mxu0 %v39
  %89 = vmatprep.subr.mxu0 0.0
  %90 = vmatpush1.msra.mxu0 %v40
  %91 = vmatprep.subr.mxu0 0.0
  %92 = vmatpush1.msra.mxu0 %v41
  %93 = vmatprep.subr.mxu0 0.0
  %94 = vmatpush1.msra.mxu0 %v42
  %95 = vmatprep.subr.mxu0 0.0
  %96 = vmatpush1.msra.mxu0 %v43
  %97 = vmatprep.subr.mxu0 0.0
  %98 = vmatpush1.msra.mxu0 %v44
  %99 = vmatprep.subr.mxu0 0.0
  %100 = vmatpush1.msra.mxu0 %v45
  %101 = vmatprep.subr.mxu0 0.0
  %102 = vmatpush1.msra.mxu0 %v46
  %103 = vmatprep.subr.mxu0 0.0
  %104 = vmatpush1.msra.mxu0 %v47
  %105 = vmatprep.subr.mxu0 0.0
  %106 = vmatpush1.msra.mxu0 0.0
  %107 = vmatprep.subr.mxu0 0.0
  %108 = vmatpush1.msra.mxu0 0.0
  %109 = vmatprep.subr.mxu0 0.0
  %110 = vmatpush1.msra.mxu0 0.0
  %111 = vmatprep.subr.mxu0 0.0
  %112 = vmatpush1.msra.mxu0 0.0
  %113 = vmatprep.subr.mxu0 0.0
  %114 = vmatpush1.msra.mxu0 0.0
  %115 = vmatprep.subr.mxu0 0.0
  %116 = vmatpush1.msra.mxu0 0.0
  %117 = vmatprep.subr.mxu0 0.0
  %118 = vmatpush1.msra.mxu0 0.0
  %119 = vmatprep.subr.mxu0 0.0
  %120 = vmatpush1.msra.mxu0 0.0
  %121 = vmatprep.mubr.f32.mxu0 %v52
  %122 = vmatmul.mubr.f32.gmra.mrb[0].mxu0 %v20
  %v123 = vpop.f32.mrb[0].mxu0
  %v124 = vadd.f32 %v48, %v123
  %v125 = vpop.f32.mrb[0].mxu0
  %126 = vmatprep.mubr.f32.mxu0 %v55
  %127 = vmatmul.mubr.f32.gmra.mrb[0].mxu0 %v22
  %v128 = vpop.f32.mrb[0].mxu0
  %v129 = vadd.f32 %v49, %v128
  %v130 = vpop.f32.mrb[0].mxu0
  %131 = vdwg.mxu0
  %v132 = vld [vmem:[%s4 + $0x10] sm:$0xff]
  %v133 = vld [vmem:[%s4 + $0x18] sm:$0x3]
  %v134 = vld [vmem:[%s4 + $0x28] sm:$0x1]
  %v135 = vld [vmem:[%s4 + $0x29] sm:$0x1]
  %v136 = vld [vmem:[%s4 + $0x2a] sm:$0x1]
  %v137 = vld [vmem:[%s4 + $0x2b] sm:$0x1]
  %v138 = vld [vmem:[%s4 + $0x2c] sm:$0x1]
  %v139 = vld [vmem:[%s4 + $0x2d] sm:$0x1]
  %v140 = vld [vmem:[%s4 + $0x2e] sm:$0x1]
  %vm141 = vcmask 261120
  %v142 = vsel %vm141, %v124, 0.0
  %143 = vadd.xlane.f32.xlu0 %v142
  %v144 = vpop.xlane.xlu0 %143
  %vm145 = vcmask 254976
  %v146 = vsel %vm145, %v129, 0.0
  %147 = vadd.xlane.f32.xlu0 %v146
  %v148 = vpop.xlane.xlu0 %147
  %v149 = vrcp.pop 32.0
  %v150 = vmul.f32 %v144, %v149
  %v151 = vmul.f32 %v148, %v149
  %v152 = vsub.f32 %v124, %v150
  %v153 = vsub.f32 %v129, %v151
  %v154 = vmul.f32 %v152, %v152
  %v155 = vmul.f32 %v153, %v153
  %v156 = vsel %vm141, %v154, 0.0
  %157 = vadd.xlane.f32.xlu0 %v156
  %v158 = vpop.xlane.xlu0 %157
  %v159 = vsel %vm145, %v155, 0.0
  %160 = vadd.xlane.f32.xlu0 %v159
  %v161 = vpop.xlane.xlu0 %160
  %v162 = vmul.f32 %v158, %v149
  %v163 = vmul.f32 %v161, %v149
  %v164 = vadd.f32 %v162, 1e-06
  %v165 = vadd.f32 %v163, 1e-06
  %v166 = vrsqrt.pop %v164
  %v167 = vrsqrt.pop %v165
  %v168 = vmul.f32 %v152, %v166
  %v169 = vmul.f32 %v153, %v167
  %v170 = vlaneseq
  %v171 = vshrl.u32 %v170, 7
  %v172 = vsub.s32 0, %v171
  %v173 = vrot.slane %v134, %v172
  %v174 = vmul.f32 %v168, %v173
  %v175 = vmul.f32 %v169, %v173
  %v176 = vlaneseq
  %v177 = vshrl.u32 %v176, 7
  %v178 = vsub.s32 0, %v177
  %v179 = vrot.slane %v135, %v178
  %v180 = vadd.f32 %v174, %v179
  %v181 = vadd.f32 %v175, %v179
  %v182 = vsel %vm141, %v180, 1.0
  %v183 = vsel %vm141, %v181, 1.0
  %v184 = vld [vmem:[%s1] sm:$0xff]
  %v185 = vld [vmem:[%s1 + $0x8] sm:$0xff]
  %v186 = vld [vmem:[%s1 + $0x10] sm:$0xff]
  %v187 = vld [vmem:[%s1 + $0x18] sm:$0xff]
  %v188 = vld [vmem:[%s1 + $0x20] sm:$0xff]
  %vm189 = vcmask 326656
  %v191 = vsel %vm189, %v182, 0
  %v194 = vsel %vm189, %v183, 0
  %196 = vmatprep.subr.mxu0 0.0
  %197 = vmatpush1.msra.mxu0 %v184
  %198 = vmatprep.subr.mxu0 0.0
  %199 = vmatpush1.msra.mxu0 %v185
  %200 = vmatprep.subr.mxu0 0.0
  %201 = vmatpush1.msra.mxu0 %v186
  %202 = vmatprep.subr.mxu0 0.0
  %203 = vmatpush1.msra.mxu0 %v187
  %204 = vmatprep.subr.mxu0 0.0
  %205 = vmatpush1.msra.mxu0 %v188
  %206 = vmatprep.subr.mxu0 0.0
  %207 = vmatpush1.msra.mxu0 0.0
  %208 = vmatprep.subr.mxu0 0.0
  %209 = vmatpush1.msra.mxu0 0.0
  %210 = vmatprep.subr.mxu0 0.0
  %211 = vmatpush1.msra.mxu0 0.0
  %212 = vmatprep.subr.mxu0 0.0
  %213 = vmatpush1.msra.mxu0 0.0
  %214 = vmatprep.subr.mxu0 0.0
  %215 = vmatpush1.msra.mxu0 0.0
  %216 = vmatprep.subr.mxu0 0.0
  %217 = vmatpush1.msra.mxu0 0.0
  %218 = vmatprep.subr.mxu0 0.0
  %219 = vmatpush1.msra.mxu0 0.0
  %220 = vmatprep.subr.mxu0 0.0
  %221 = vmatpush1.msra.mxu0 0.0
  %222 = vmatprep.subr.mxu0 0.0
  %223 = vmatpush1.msra.mxu0 0.0
  %224 = vmatprep.subr.mxu0 0.0
  %225 = vmatpush1.msra.mxu0 0.0
  %226 = vmatprep.subr.mxu0 0.0
  %227 = vmatpush1.msra.mxu0 0.0
  %228 = vmatprep.subr.mxu0 0.0
  %229 = vmatpush1.msra.mxu0 0.0
  %230 = vmatprep.subr.mxu0 0.0
  %231 = vmatpush1.msra.mxu0 0.0
  %232 = vmatprep.subr.mxu0 0.0
  %233 = vmatpush1.msra.mxu0 0.0
  %234 = vmatprep.subr.mxu0 0.0
  %235 = vmatpush1.msra.mxu0 0.0
  %236 = vmatprep.subr.mxu0 0.0
  %237 = vmatpush1.msra.mxu0 0.0
  %238 = vmatprep.subr.mxu0 0.0
  %239 = vmatpush1.msra.mxu0 0.0
  %240 = vmatprep.subr.mxu0 0.0
  %241 = vmatpush1.msra.mxu0 0.0
  %242 = vmatprep.subr.mxu0 0.0
  %243 = vmatpush1.msra.mxu0 0.0
  %244 = vmatprep.subr.mxu0 0.0
  %245 = vmatpush1.msra.mxu0 0.0
  %246 = vmatprep.subr.mxu0 0.0
  %247 = vmatpush1.msra.mxu0 0.0
  %248 = vmatprep.subr.mxu0 0.0
  %249 = vmatpush1.msra.mxu0 0.0
  %250 = vmatprep.subr.mxu0 0.0
  %251 = vmatpush1.msra.mxu0 0.0
  %252 = vmatprep.subr.mxu0 0.0
  %253 = vmatpush1.msra.mxu0 0.0
  %254 = vmatprep.subr.mxu0 0.0
  %255 = vmatpush1.msra.mxu0 0.0
  %256 = vmatprep.subr.mxu0 0.0
  %257 = vmatpush1.msra.mxu0 0.0
  %258 = vmatprep.subr.mxu0 0.0
  %259 = vmatpush1.msra.mxu0 0.0
  %260 = vmatprep.mubr.f32.mxu0 0.0
  %261 = vmatmul.mubr.f32.gmra.mrb[0].mxu0 %v191
  %v262 = vpop.f32.mrb[0].mxu0
  %v263 = vadd.f32 0.0, %v262
  %v264 = vpop.f32.mrb[0].mxu0
  %265 = vmatprep.mubr.f32.mxu0 0.0
  %266 = vmatmul.mubr.f32.gmra.mrb[0].mxu0 %v194
  %v267 = vpop.f32.mrb[0].mxu0
  %v268 = vadd.f32 0.0, %v267
  %v269 = vpop.f32.mrb[0].mxu0
  %270 = vdwg.mxu0
  %s271 = scalar_lea.vmem %s1, 40
  %v272 = vld [vmem:[%s271] sm:$0xff]
  %v273 = vld [vmem:[%s271 + $0x8] sm:$0xff]
  %v274 = vld [vmem:[%s271 + $0x10] sm:$0xff]
  %v275 = vld [vmem:[%s271 + $0x18] sm:$0xff]
  %v276 = vld [vmem:[%s271 + $0x20] sm:$0xff]
  %277 = vmatprep.subr.mxu0 0.0
  %278 = vmatpush1.msra.mxu0 %v272
  %279 = vmatprep.subr.mxu0 0.0
  %280 = vmatpush1.msra.mxu0 %v273
  %281 = vmatprep.subr.mxu0 0.0
  %282 = vmatpush1.msra.mxu0 %v274
  %283 = vmatprep.subr.mxu0 0.0
  %284 = vmatpush1.msra.mxu0 %v275
  %285 = vmatprep.subr.mxu0 0.0
  %286 = vmatpush1.msra.mxu0 %v276
  %287 = vmatprep.subr.mxu0 0.0
  %288 = vmatpush1.msra.mxu0 0.0
  %289 = vmatprep.subr.mxu0 0.0
  %290 = vmatpush1.msra.mxu0 0.0
  %291 = vmatprep.subr.mxu0 0.0
  %292 = vmatpush1.msra.mxu0 0.0
  %293 = vmatprep.subr.mxu0 0.0
  %294 = vmatpush1.msra.mxu0 0.0
  %295 = vmatprep.subr.mxu0 0.0
  %296 = vmatpush1.msra.mxu0 0.0
  %297 = vmatprep.subr.mxu0 0.0
  %298 = vmatpush1.msra.mxu0 0.0
  %299 = vmatprep.subr.mxu0 0.0
  %300 = vmatpush1.msra.mxu0 0.0
  %301 = vmatprep.subr.mxu0 0.0
  %302 = vmatpush1.msra.mxu0 0.0
  %303 = vmatprep.subr.mxu0 0.0
  %304 = vmatpush1.msra.mxu0 0.0
  %305 = vmatprep.subr.mxu0 0.0
  %306 = vmatpush1.msra.mxu0 0.0
  %307 = vmatprep.subr.mxu0 0.0
  %308 = vmatpush1.msra.mxu0 0.0
  %309 = vmatprep.subr.mxu0 0.0
  %310 = vmatpush1.msra.mxu0 0.0
  %311 = vmatprep.subr.mxu0 0.0
  %312 = vmatpush1.msra.mxu0 0.0
  %313 = vmatprep.subr.mxu0 0.0
  %314 = vmatpush1.msra.mxu0 0.0
  %315 = vmatprep.subr.mxu0 0.0
  %316 = vmatpush1.msra.mxu0 0.0
  %317 = vmatprep.subr.mxu0 0.0
  %318 = vmatpush1.msra.mxu0 0.0
  %319 = vmatprep.subr.mxu0 0.0
  %320 = vmatpush1.msra.mxu0 0.0
  %321 = vmatprep.subr.mxu0 0.0
  %322 = vmatpush1.msra.mxu0 0.0
  %323 = vmatprep.subr.mxu0 0.0
  %324 = vmatpush1.msra.mxu0 0.0
  %325 = vmatprep.subr.mxu0 0.0
  %326 = vmatpush1.msra.mxu0 0.0
  %327 = vmatprep.subr.mxu0 0.0
  %328 = vmatpush1.msra.mxu0 0.0
  %329 = vmatprep.subr.mxu0 0.0
  %330 = vmatpush1.msra.mxu0 0.0
  %331 = vmatprep.subr.mxu0 0.0
  %332 = vmatpush1.msra.mxu0 0.0
  %333 = vmatprep.subr.mxu0 0.0
  %334 = vmatpush1.msra.mxu0 0.0
  %335 = vmatprep.subr.mxu0 0.0
  %336 = vmatpush1.msra.mxu0 0.0
  %337 = vmatprep.subr.mxu0 0.0
  %338 = vmatpush1.msra.mxu0 0.0
  %339 = vmatprep.subr.mxu0 0.0
  %340 = vmatpush1.msra.mxu0 0.0
  %341 = vmatprep.mubr.f32.mxu0 0.0
  %342 = vmatmul.mubr.f32.gmra.mrb[0].mxu0 %v191
  %v343 = vpop.f32.mrb[0].mxu0
  %v344 = vadd.f32 0.0, %v343
  %v345 = vpop.f32.mrb[0].mxu0
  %346 = vmatprep.mubr.f32.mxu0 0.0
  %347 = vmatmul.mubr.f32.gmra.mrb[0].mxu0 %v194
  %v348 = vpop.f32.mrb[0].mxu0
  %v349 = vadd.f32 0.0, %v348
  %v350 = vpop.f32.mrb[0].mxu0
  %351 = vdwg.mxu0
  %s352 = scalar_lea.vmem %s1, 80
  %v353 = vld [vmem:[%s352] sm:$0xff]
  %v354 = vld [vmem:[%s352 + $0x8] sm:$0xff]
  %v355 = vld [vmem:[%s352 + $0x10] sm:$0xff]
  %v356 = vld [vmem:[%s352 + $0x18] sm:$0xff]
  %v357 = vld [vmem:[%s352 + $0x20] sm:$0xff]
  %358 = vmatprep.subr.mxu0 0.0
  %359 = vmatpush1.msra.mxu0 %v353
  %360 = vmatprep.subr.mxu0 0.0
  %361 = vmatpush1.msra.mxu0 %v354
  %362 = vmatprep.subr.mxu0 0.0
  %363 = vmatpush1.msra.mxu0 %v355
  %364 = vmatprep.subr.mxu0 0.0
  %365 = vmatpush1.msra.mxu0 %v356
  %366 = vmatprep.subr.mxu0 0.0
  %367 = vmatpush1.msra.mxu0 %v357
  %368 = vmatprep.subr.mxu0 0.0
  %369 = vmatpush1.msra.mxu0 0.0
  %370 = vmatprep.subr.mxu0 0.0
  %371 = vmatpush1.msra.mxu0 0.0
  %372 = vmatprep.subr.mxu0 0.0
  %373 = vmatpush1.msra.mxu0 0.0
  %374 = vmatprep.subr.mxu0 0.0
  %375 = vmatpush1.msra.mxu0 0.0
  %376 = vmatprep.subr.mxu0 0.0
  %377 = vmatpush1.msra.mxu0 0.0
  %378 = vmatprep.subr.mxu0 0.0
  %379 = vmatpush1.msra.mxu0 0.0
  %380 = vmatprep.subr.mxu0 0.0
  %381 = vmatpush1.msra.mxu0 0.0
  %382 = vmatprep.subr.mxu0 0.0
  %383 = vmatpush1.msra.mxu0 0.0
  %384 = vmatprep.subr.mxu0 0.0
  %385 = vmatpush1.msra.mxu0 0.0
  %386 = vmatprep.subr.mxu0 0.0
  %387 = vmatpush1.msra.mxu0 0.0
  %388 = vmatprep.subr.mxu0 0.0
  %389 = vmatpush1.msra.mxu0 0.0
  %390 = vmatprep.subr.mxu0 0.0
  %391 = vmatpush1.msra.mxu0 0.0
  %392 = vmatprep.subr.mxu0 0.0
  %393 = vmatpush1.msra.mxu0 0.0
  %394 = vmatprep.subr.mxu0 0.0
  %395 = vmatpush1.msra.mxu0 0.0
  %396 = vmatprep.subr.mxu0 0.0
  %397 = vmatpush1.msra.mxu0 0.0
  %398 = vmatprep.subr.mxu0 0.0
  %399 = vmatpush1.msra.mxu0 0.0
  %400 = vmatprep.subr.mxu0 0.0
  %401 = vmatpush1.msra.mxu0 0.0
  %402 = vmatprep.subr.mxu0 0.0
  %403 = vmatpush1.msra.mxu0 0.0
  %404 = vmatprep.subr.mxu0 0.0
  %405 = vmatpush1.msra.mxu0 0.0
  %406 = vmatprep.subr.mxu0 0.0
  %407 = vmatpush1.msra.mxu0 0.0
  %408 = vmatprep.subr.mxu0 0.0
  %409 = vmatpush1.msra.mxu0 0.0
  %410 = vmatprep.subr.mxu0 0.0
  %411 = vmatpush1.msra.mxu0 0.0
  %412 = vmatprep.subr.mxu0 0.0
  %413 = vmatpush1.msra.mxu0 0.0
  %414 = vmatprep.subr.mxu0 0.0
  %415 = vmatpush1.msra.mxu0 0.0
  %416 = vmatprep.subr.mxu0 0.0
  %417 = vmatpush1.msra.mxu0 0.0
  %418 = vmatprep.subr.mxu0 0.0
  %419 = vmatpush1.msra.mxu0 0.0
  %420 = vmatprep.subr.mxu0 0.0
  %421 = vmatpush1.msra.mxu0 0.0
  %422 = vmatprep.mubr.f32.mxu0 0.0
  %423 = vmatmul.mubr.f32.gmra.mrb[0].mxu0 %v191
  %v424 = vpop.f32.mrb[0].mxu0
  %v425 = vadd.f32 0.0, %v424
  %v426 = vpop.f32.mrb[0].mxu0
  %427 = vmatprep.mubr.f32.mxu0 0.0
  %428 = vmatmul.mubr.f32.gmra.mrb[0].mxu0 %v194
  %v429 = vpop.f32.mrb[0].mxu0
  %v430 = vadd.f32 0.0, %v429
  %v431 = vpop.f32.mrb[0].mxu0
  %432 = vdwg.mxu0
  %vm433 = vcmask 64512
  %v435 = vsel %vm433, %v263, 0
  %v438 = vsel %vm433, %v268, 0
  %v441 = vsel %vm433, %v344, 0
  %v444 = vsel %vm433, %v349, 0
  %446 = vmatprep.subr.mxu0 0.0
  %447 = vmatpush1.xpose.msra.mxu0 %v441
  %448 = vmatprep.subr.mxu0 0.0
  %449 = vmatpush1.xpose.msra.mxu0 %v444
  %450 = vmatprep.subr.mxu0 0.0
  %451 = vmatpush1.xpose.msra.mxu0 0.0
  %452 = vmatprep.subr.mxu0 0.0
  %453 = vmatpush1.xpose.msra.mxu0 0.0
  %454 = vmatprep.subr.mxu0 0.0
  %455 = vmatpush1.xpose.msra.mxu0 0.0
  %456 = vmatprep.subr.mxu0 0.0
  %457 = vmatpush1.xpose.msra.mxu0 0.0
  %458 = vmatprep.subr.mxu0 0.0
  %459 = vmatpush1.xpose.msra.mxu0 0.0
  %460 = vmatprep.subr.mxu0 0.0
  %461 = vmatpush1.xpose.msra.mxu0 0.0
  %462 = vmatprep.subr.mxu0 0.0
  %463 = vmatpush1.xpose.msra.mxu0 0.0
  %464 = vmatprep.subr.mxu0 0.0
  %465 = vmatpush1.xpose.msra.mxu0 0.0
  %466 = vmatprep.subr.mxu0 0.0
  %467 = vmatpush1.xpose.msra.mxu0 0.0
  %468 = vmatprep.subr.mxu0 0.0
  %469 = vmatpush1.xpose.msra.mxu0 0.0
  %470 = vmatprep.subr.mxu0 0.0
  %471 = vmatpush1.xpose.msra.mxu0 0.0
  %472 = vmatprep.subr.mxu0 0.0
  %473 = vmatpush1.xpose.msra.mxu0 0.0
  %474 = vmatprep.subr.mxu0 0.0
  %475 = vmatpush1.xpose.msra.mxu0 0.0
  %476 = vmatprep.subr.mxu0 0.0
  %477 = vmatpush1.xpose.msra.mxu0 0.0
  %478 = vmatprep.subr.mxu0 0.0
  %479 = vmatpush1.xpose.msra.mxu0 0.0
  %480 = vmatprep.subr.mxu0 0.0
  %481 = vmatpush1.xpose.msra.mxu0 0.0
  %482 = vmatprep.subr.mxu0 0.0
  %483 = vmatpush1.xpose.msra.mxu0 0.0
  %484 = vmatprep.subr.mxu0 0.0
  %485 = vmatpush1.xpose.msra.mxu0 0.0
  %486 = vmatprep.subr.mxu0 0.0
  %487 = vmatpush1.xpose.msra.mxu0 0.0
  %488 = vmatprep.subr.mxu0 0.0
  %489 = vmatpush1.xpose.msra.mxu0 0.0
  %490 = vmatprep.subr.mxu0 0.0
  %491 = vmatpush1.xpose.msra.mxu0 0.0
  %492 = vmatprep.subr.mxu0 0.0
  %493 = vmatpush1.xpose.msra.mxu0 0.0
  %494 = vmatprep.subr.mxu0 0.0
  %495 = vmatpush1.xpose.msra.mxu0 0.0
  %496 = vmatprep.subr.mxu0 0.0
  %497 = vmatpush1.xpose.msra.mxu0 0.0
  %498 = vmatprep.subr.mxu0 0.0
  %499 = vmatpush1.xpose.msra.mxu0 0.0
  %500 = vmatprep.subr.mxu0 0.0
  %501 = vmatpush1.xpose.msra.mxu0 0.0
  %502 = vmatprep.subr.mxu0 0.0
  %503 = vmatpush1.xpose.msra.mxu0 0.0
  %504 = vmatprep.subr.mxu0 0.0
  %505 = vmatpush1.xpose.msra.mxu0 0.0
  %506 = vmatprep.subr.mxu0 0.0
  %507 = vmatpush1.xpose.msra.mxu0 0.0
  %508 = vmatprep.subr.mxu0 0.0
  %509 = vmatpush1.xpose.msra.mxu0 0.0
  %510 = vmatprep.mubr.f32.mxu0 0.0
  %511 = vmatmul.mubr.f32.gmra.mrb[0].mxu0 %v435
  %v512 = vpop.f32.mrb[0].mxu0
  %v513 = vadd.f32 %v132, %v512
  %v514 = vpop.f32.mrb[0].mxu0
  %515 = vmatprep.mubr.f32.mxu0 0.0
  %516 = vmatmul.mubr.f32.gmra.mrb[0].mxu0 %v438
  %v517 = vpop.f32.mrb[0].mxu0
  %v518 = vadd.f32 %v133, %v517
  %v519 = vpop.f32.mrb[0].mxu0
  %520 = vdwg.mxu0
  %vm521 = vcmask 80896
  %v522 = vsel %vm521, %v513, -inf
  %523 = vmax.xlane.f32.xlu0 %v522
  %v524 = vpop.xlane.xlu0 %523
  %vm525 = vcmask 74752
  %v526 = vsel %vm525, %v518, -inf
  %527 = vmax.xlane.f32.xlu0 %v526
  %v528 = vpop.xlane.xlu0 %527
  %v529 = vsub.f32 %v513, %v524
  %v530 = vsub.f32 %v518, %v528
  %v531 = vmul.f32 %v529, 1.442695
  %v532 = vpow.pop %v531
  %v533 = vmul.f32 %v530, 1.442695
  %v534 = vpow.pop %v533
  %v535 = vsel %vm521, %v532, 0.0
  %536 = vadd.xlane.f32.xlu0 %v535
  %v537 = vpop.xlane.xlu0 %536
  %v538 = vsel %vm525, %v534, 0.0
  %539 = vadd.xlane.f32.xlu0 %v538
  %v540 = vpop.xlane.xlu0 %539
  %v541 = vrcp.pop %v537
  %v542 = vrcp.pop %v540
  %v543 = vmul.f32 %v532, %v541
  %v544 = vmul.f32 %v534, %v542
  %v546 = vsel %vm521, %v543, 0
  %v549 = vsel %vm521, %v544, 0
  %vm551 = vcmask 1041408
  %v553 = vsel %vm551, %v430, 0
  %555 = vmatprep.subr.mxu0 0.0
  %556 = vmatpush1.msra.mxu0 %v425
  %557 = vmatprep.subr.mxu0 0.0
  %558 = vmatpush1.msra.mxu0 %v553
  %559 = vmatprep.subr.mxu0 0.0
  %560 = vmatpush1.msra.mxu0 0.0
  %561 = vmatprep.subr.mxu0 0.0
  %562 = vmatpush1.msra.mxu0 0.0
  %563 = vmatprep.subr.mxu0 0.0
  %564 = vmatpush1.msra.mxu0 0.0
  %565 = vmatprep.subr.mxu0 0.0
  %566 = vmatpush1.msra.mxu0 0.0
  %567 = vmatprep.subr.mxu0 0.0
  %568 = vmatpush1.msra.mxu0 0.0
  %569 = vmatprep.subr.mxu0 0.0
  %570 = vmatpush1.msra.mxu0 0.0
  %571 = vmatprep.subr.mxu0 0.0
  %572 = vmatpush1.msra.mxu0 0.0
  %573 = vmatprep.subr.mxu0 0.0
  %574 = vmatpush1.msra.mxu0 0.0
  %575 = vmatprep.subr.mxu0 0.0
  %576 = vmatpush1.msra.mxu0 0.0
  %577 = vmatprep.subr.mxu0 0.0
  %578 = vmatpush1.msra.mxu0 0.0
  %579 = vmatprep.subr.mxu0 0.0
  %580 = vmatpush1.msra.mxu0 0.0
  %581 = vmatprep.subr.mxu0 0.0
  %582 = vmatpush1.msra.mxu0 0.0
  %583 = vmatprep.subr.mxu0 0.0
  %584 = vmatpush1.msra.mxu0 0.0
  %585 = vmatprep.subr.mxu0 0.0
  %586 = vmatpush1.msra.mxu0 0.0
  %587 = vmatprep.subr.mxu0 0.0
  %588 = vmatpush1.msra.mxu0 0.0
  %589 = vmatprep.subr.mxu0 0.0
  %590 = vmatpush1.msra.mxu0 0.0
  %591 = vmatprep.subr.mxu0 0.0
  %592 = vmatpush1.msra.mxu0 0.0
  %593 = vmatprep.subr.mxu0 0.0
  %594 = vmatpush1.msra.mxu0 0.0
  %595 = vmatprep.subr.mxu0 0.0
  %596 = vmatpush1.msra.mxu0 0.0
  %597 = vmatprep.subr.mxu0 0.0
  %598 = vmatpush1.msra.mxu0 0.0
  %599 = vmatprep.subr.mxu0 0.0
  %600 = vmatpush1.msra.mxu0 0.0
  %601 = vmatprep.subr.mxu0 0.0
  %602 = vmatpush1.msra.mxu0 0.0
  %603 = vmatprep.subr.mxu0 0.0
  %604 = vmatpush1.msra.mxu0 0.0
  %605 = vmatprep.subr.mxu0 0.0
  %606 = vmatpush1.msra.mxu0 0.0
  %607 = vmatprep.subr.mxu0 0.0
  %608 = vmatpush1.msra.mxu0 0.0
  %609 = vmatprep.subr.mxu0 0.0
  %610 = vmatpush1.msra.mxu0 0.0
  %611 = vmatprep.subr.mxu0 0.0
  %612 = vmatpush1.msra.mxu0 0.0
  %613 = vmatprep.subr.mxu0 0.0
  %614 = vmatpush1.msra.mxu0 0.0
  %615 = vmatprep.subr.mxu0 0.0
  %616 = vmatpush1.msra.mxu0 0.0
  %617 = vmatprep.subr.mxu0 0.0
  %618 = vmatpush1.msra.mxu0 0.0
  %619 = vmatprep.mubr.f32.mxu0 0.0
  %620 = vmatmul.mubr.f32.gmra.mrb[0].mxu0 %v546
  %v621 = vpop.f32.mrb[0].mxu0
  %v622 = vadd.f32 0.0, %v621
  %v623 = vpop.f32.mrb[0].mxu0
  %624 = vmatprep.mubr.f32.mxu0 0.0
  %625 = vmatmul.mubr.f32.gmra.mrb[0].mxu0 %v549
  %v626 = vpop.f32.mrb[0].mxu0
  %v627 = vadd.f32 0.0, %v626
  %v628 = vpop.f32.mrb[0].mxu0
  %629 = vdwg.mxu0
  %v630 = vld [vmem:[%s2 + $0xa0] sm:$0xff]
  %v631 = vlaneseq
  %v632 = vshrl.u32 %v631, 7
  %v633 = vsub.s32 0, %v632
  %v634 = vrot.slane %v138, %v633
  %v636 = vsel %vm433, %v622, 0
  %v639 = vsel %vm433, %v627, 0
  %641 = vmatprep.subr.mxu0 0.0
  %642 = vmatpush1.msra.mxu0 %v630
  %643 = vmatprep.subr.mxu0 0.0
  %644 = vmatpush1.msra.mxu0 0.0
  %645 = vmatprep.subr.mxu0 0.0
  %646 = vmatpush1.msra.mxu0 0.0
  %647 = vmatprep.subr.mxu0 0.0
  %648 = vmatpush1.msra.mxu0 0.0
  %649 = vmatprep.subr.mxu0 0.0
  %650 = vmatpush1.msra.mxu0 0.0
  %651 = vmatprep.subr.mxu0 0.0
  %652 = vmatpush1.msra.mxu0 0.0
  %653 = vmatprep.subr.mxu0 0.0
  %654 = vmatpush1.msra.mxu0 0.0
  %655 = vmatprep.subr.mxu0 0.0
  %656 = vmatpush1.msra.mxu0 0.0
  %657 = vmatprep.subr.mxu0 0.0
  %658 = vmatpush1.msra.mxu0 0.0
  %659 = vmatprep.subr.mxu0 0.0
  %660 = vmatpush1.msra.mxu0 0.0
  %661 = vmatprep.subr.mxu0 0.0
  %662 = vmatpush1.msra.mxu0 0.0
  %663 = vmatprep.subr.mxu0 0.0
  %664 = vmatpush1.msra.mxu0 0.0
  %665 = vmatprep.subr.mxu0 0.0
  %666 = vmatpush1.msra.mxu0 0.0
  %667 = vmatprep.subr.mxu0 0.0
  %668 = vmatpush1.msra.mxu0 0.0
  %669 = vmatprep.subr.mxu0 0.0
  %670 = vmatpush1.msra.mxu0 0.0
  %671 = vmatprep.subr.mxu0 0.0
  %672 = vmatpush1.msra.mxu0 0.0
  %673 = vmatprep.subr.mxu0 0.0
  %674 = vmatpush1.msra.mxu0 0.0
  %675 = vmatprep.subr.mxu0 0.0
  %676 = vmatpush1.msra.mxu0 0.0
  %677 = vmatprep.subr.mxu0 0.0
  %678 = vmatpush1.msra.mxu0 0.0
  %679 = vmatprep.subr.mxu0 0.0
  %680 = vmatpush1.msra.mxu0 0.0
  %681 = vmatprep.subr.mxu0 0.0
  %682 = vmatpush1.msra.mxu0 0.0
  %683 = vmatprep.subr.mxu0 0.0
  %684 = vmatpush1.msra.mxu0 0.0
  %685 = vmatprep.subr.mxu0 0.0
  %686 = vmatpush1.msra.mxu0 0.0
  %687 = vmatprep.subr.mxu0 0.0
  %688 = vmatpush1.msra.mxu0 0.0
  %689 = vmatprep.subr.mxu0 0.0
  %690 = vmatpush1.msra.mxu0 0.0
  %691 = vmatprep.subr.mxu0 0.0
  %692 = vmatpush1.msra.mxu0 0.0
  %693 = vmatprep.subr.mxu0 0.0
  %694 = vmatpush1.msra.mxu0 0.0
  %695 = vmatprep.subr.mxu0 0.0
  %696 = vmatpush1.msra.mxu0 0.0
  %697 = vmatprep.subr.mxu0 0.0
  %698 = vmatpush1.msra.mxu0 0.0
  %699 = vmatprep.subr.mxu0 0.0
  %700 = vmatpush1.msra.mxu0 0.0
  %701 = vmatprep.subr.mxu0 0.0
  %702 = vmatpush1.msra.mxu0 0.0
  %703 = vmatprep.subr.mxu0 0.0
  %704 = vmatpush1.msra.mxu0 0.0
  %705 = vmatprep.mubr.f32.mxu0 0.0
  %706 = vmatmul.mubr.f32.gmra.mrb[0].mxu0 %v636
  %v707 = vpop.f32.mrb[0].mxu0
  %v708 = vadd.f32 %v634, %v707
  %v709 = vpop.f32.mrb[0].mxu0
  %710 = vmatprep.mubr.f32.mxu0 0.0
  %711 = vmatmul.mubr.f32.gmra.mrb[0].mxu0 %v639
  %v712 = vpop.f32.mrb[0].mxu0
  %v713 = vadd.f32 %v634, %v712
  %v714 = vpop.f32.mrb[0].mxu0
  %715 = vdwg.mxu0
  %s716 = scalar_lea.vmem %s1, 120
  %v717 = vld [vmem:[%s716] sm:$0xff]
  %v718 = vld [vmem:[%s716 + $0x8] sm:$0xff]
  %v719 = vld [vmem:[%s716 + $0x10] sm:$0xff]
  %v720 = vld [vmem:[%s716 + $0x18] sm:$0xff]
  %v721 = vld [vmem:[%s716 + $0x20] sm:$0xff]
  %722 = vmatprep.subr.mxu0 0.0
  %723 = vmatpush1.msra.mxu0 %v717
  %724 = vmatprep.subr.mxu0 0.0
  %725 = vmatpush1.msra.mxu0 %v718
  %726 = vmatprep.subr.mxu0 0.0
  %727 = vmatpush1.msra.mxu0 %v719
  %728 = vmatprep.subr.mxu0 0.0
  %729 = vmatpush1.msra.mxu0 %v720
  %730 = vmatprep.subr.mxu0 0.0
  %731 = vmatpush1.msra.mxu0 %v721
  %732 = vmatprep.subr.mxu0 0.0
  %733 = vmatpush1.msra.mxu0 0.0
  %734 = vmatprep.subr.mxu0 0.0
  %735 = vmatpush1.msra.mxu0 0.0
  %736 = vmatprep.subr.mxu0 0.0
  %737 = vmatpush1.msra.mxu0 0.0
  %738 = vmatprep.subr.mxu0 0.0
  %739 = vmatpush1.msra.mxu0 0.0
  %740 = vmatprep.subr.mxu0 0.0
  %741 = vmatpush1.msra.mxu0 0.0
  %742 = vmatprep.subr.mxu0 0.0
  %743 = vmatpush1.msra.mxu0 0.0
  %744 = vmatprep.subr.mxu0 0.0
  %745 = vmatpush1.msra.mxu0 0.0
  %746 = vmatprep.subr.mxu0 0.0
  %747 = vmatpush1.msra.mxu0 0.0
  %748 = vmatprep.subr.mxu0 0.0
  %749 = vmatpush1.msra.mxu0 0.0
  %750 = vmatprep.subr.mxu0 0.0
  %751 = vmatpush1.msra.mxu0 0.0
  %752 = vmatprep.subr.mxu0 0.0
  %753 = vmatpush1.msra.mxu0 0.0
  %754 = vmatprep.subr.mxu0 0.0
  %755 = vmatpush1.msra.mxu0 0.0
  %756 = vmatprep.subr.mxu0 0.0
  %757 = vmatpush1.msra.mxu0 0.0
  %758 = vmatprep.subr.mxu0 0.0
  %759 = vmatpush1.msra.mxu0 0.0
  %760 = vmatprep.subr.mxu0 0.0
  %761 = vmatpush1.msra.mxu0 0.0
  %762 = vmatprep.subr.mxu0 0.0
  %763 = vmatpush1.msra.mxu0 0.0
  %764 = vmatprep.subr.mxu0 0.0
  %765 = vmatpush1.msra.mxu0 0.0
  %766 = vmatprep.subr.mxu0 0.0
  %767 = vmatpush1.msra.mxu0 0.0
  %768 = vmatprep.subr.mxu0 0.0
  %769 = vmatpush1.msra.mxu0 0.0
  %770 = vmatprep.subr.mxu0 0.0
  %771 = vmatpush1.msra.mxu0 0.0
  %772 = vmatprep.subr.mxu0 0.0
  %773 = vmatpush1.msra.mxu0 0.0
  %774 = vmatprep.subr.mxu0 0.0
  %775 = vmatpush1.msra.mxu0 0.0
  %776 = vmatprep.subr.mxu0 0.0
  %777 = vmatpush1.msra.mxu0 0.0
  %778 = vmatprep.subr.mxu0 0.0
  %779 = vmatpush1.msra.mxu0 0.0
  %780 = vmatprep.subr.mxu0 0.0
  %781 = vmatpush1.msra.mxu0 0.0
  %782 = vmatprep.subr.mxu0 0.0
  %783 = vmatpush1.msra.mxu0 0.0
  %784 = vmatprep.subr.mxu0 0.0
  %785 = vmatpush1.msra.mxu0 0.0
  %786 = vmatprep.mubr.f32.mxu0 0.0
  %787 = vmatmul.mubr.f32.gmra.mrb[0].mxu0 %v191
  %v788 = vpop.f32.mrb[0].mxu0
  %v789 = vadd.f32 0.0, %v788
  %v790 = vpop.f32.mrb[0].mxu0
  %791 = vmatprep.mubr.f32.mxu0 0.0
  %792 = vmatmul.mubr.f32.gmra.mrb[0].mxu0 %v194
  %v793 = vpop.f32.mrb[0].mxu0
  %v794 = vadd.f32 0.0, %v793
  %v795 = vpop.f32.mrb[0].mxu0
  %796 = vdwg.mxu0
  %s797 = scalar_lea.vmem %s1, 160
  %v798 = vld [vmem:[%s797] sm:$0xff]
  %v799 = vld [vmem:[%s797 + $0x8] sm:$0xff]
  %v800 = vld [vmem:[%s797 + $0x10] sm:$0xff]
  %v801 = vld [vmem:[%s797 + $0x18] sm:$0xff]
  %v802 = vld [vmem:[%s797 + $0x20] sm:$0xff]
  %803 = vmatprep.subr.mxu0 0.0
  %804 = vmatpush1.msra.mxu0 %v798
  %805 = vmatprep.subr.mxu0 0.0
  %806 = vmatpush1.msra.mxu0 %v799
  %807 = vmatprep.subr.mxu0 0.0
  %808 = vmatpush1.msra.mxu0 %v800
  %809 = vmatprep.subr.mxu0 0.0
  %810 = vmatpush1.msra.mxu0 %v801
  %811 = vmatprep.subr.mxu0 0.0
  %812 = vmatpush1.msra.mxu0 %v802
  %813 = vmatprep.subr.mxu0 0.0
  %814 = vmatpush1.msra.mxu0 0.0
  %815 = vmatprep.subr.mxu0 0.0
  %816 = vmatpush1.msra.mxu0 0.0
  %817 = vmatprep.subr.mxu0 0.0
  %818 = vmatpush1.msra.mxu0 0.0
  %819 = vmatprep.subr.mxu0 0.0
  %820 = vmatpush1.msra.mxu0 0.0
  %821 = vmatprep.subr.mxu0 0.0
  %822 = vmatpush1.msra.mxu0 0.0
  %823 = vmatprep.subr.mxu0 0.0
  %824 = vmatpush1.msra.mxu0 0.0
  %825 = vmatprep.subr.mxu0 0.0
  %826 = vmatpush1.msra.mxu0 0.0
  %827 = vmatprep.subr.mxu0 0.0
  %828 = vmatpush1.msra.mxu0 0.0
  %829 = vmatprep.subr.mxu0 0.0
  %830 = vmatpush1.msra.mxu0 0.0
  %831 = vmatprep.subr.mxu0 0.0
  %832 = vmatpush1.msra.mxu0 0.0
  %833 = vmatprep.subr.mxu0 0.0
  %834 = vmatpush1.msra.mxu0 0.0
  %835 = vmatprep.subr.mxu0 0.0
  %836 = vmatpush1.msra.mxu0 0.0
  %837 = vmatprep.subr.mxu0 0.0
  %838 = vmatpush1.msra.mxu0 0.0
  %839 = vmatprep.subr.mxu0 0.0
  %840 = vmatpush1.msra.mxu0 0.0
  %841 = vmatprep.subr.mxu0 0.0
  %842 = vmatpush1.msra.mxu0 0.0
  %843 = vmatprep.subr.mxu0 0.0
  %844 = vmatpush1.msra.mxu0 0.0
  %845 = vmatprep.subr.mxu0 0.0
  %846 = vmatpush1.msra.mxu0 0.0
  %847 = vmatprep.subr.mxu0 0.0
  %848 = vmatpush1.msra.mxu0 0.0
  %849 = vmatprep.subr.mxu0 0.0
  %850 = vmatpush1.msra.mxu0 0.0
  %851 = vmatprep.subr.mxu0 0.0
  %852 = vmatpush1.msra.mxu0 0.0
  %853 = vmatprep.subr.mxu0 0.0
  %854 = vmatpush1.msra.mxu0 0.0
  %855 = vmatprep.subr.mxu0 0.0
  %856 = vmatpush1.msra.mxu0 0.0
  %857 = vmatprep.subr.mxu0 0.0
  %858 = vmatpush1.msra.mxu0 0.0
  %859 = vmatprep.subr.mxu0 0.0
  %860 = vmatpush1.msra.mxu0 0.0
  %861 = vmatprep.subr.mxu0 0.0
  %862 = vmatpush1.msra.mxu0 0.0
  %863 = vmatprep.subr.mxu0 0.0
  %864 = vmatpush1.msra.mxu0 0.0
  %865 = vmatprep.subr.mxu0 0.0
  %866 = vmatpush1.msra.mxu0 0.0
  %867 = vmatprep.mubr.f32.mxu0 0.0
  %868 = vmatmul.mubr.f32.gmra.mrb[0].mxu0 %v191
  %v869 = vpop.f32.mrb[0].mxu0
  %v870 = vadd.f32 0.0, %v869
  %v871 = vpop.f32.mrb[0].mxu0
  %872 = vmatprep.mubr.f32.mxu0 0.0
  %873 = vmatmul.mubr.f32.gmra.mrb[0].mxu0 %v194
  %v874 = vpop.f32.mrb[0].mxu0
  %v875 = vadd.f32 0.0, %v874
  %v876 = vpop.f32.mrb[0].mxu0
  %877 = vdwg.mxu0
  %s878 = scalar_lea.vmem %s1, 200
  %v879 = vld [vmem:[%s878] sm:$0xff]
  %v880 = vld [vmem:[%s878 + $0x8] sm:$0xff]
  %v881 = vld [vmem:[%s878 + $0x10] sm:$0xff]
  %v882 = vld [vmem:[%s878 + $0x18] sm:$0xff]
  %v883 = vld [vmem:[%s878 + $0x20] sm:$0xff]
  %884 = vmatprep.subr.mxu0 0.0
  %885 = vmatpush1.msra.mxu0 %v879
  %886 = vmatprep.subr.mxu0 0.0
  %887 = vmatpush1.msra.mxu0 %v880
  %888 = vmatprep.subr.mxu0 0.0
  %889 = vmatpush1.msra.mxu0 %v881
  %890 = vmatprep.subr.mxu0 0.0
  %891 = vmatpush1.msra.mxu0 %v882
  %892 = vmatprep.subr.mxu0 0.0
  %893 = vmatpush1.msra.mxu0 %v883
  %894 = vmatprep.subr.mxu0 0.0
  %895 = vmatpush1.msra.mxu0 0.0
  %896 = vmatprep.subr.mxu0 0.0
  %897 = vmatpush1.msra.mxu0 0.0
  %898 = vmatprep.subr.mxu0 0.0
  %899 = vmatpush1.msra.mxu0 0.0
  %900 = vmatprep.subr.mxu0 0.0
  %901 = vmatpush1.msra.mxu0 0.0
  %902 = vmatprep.subr.mxu0 0.0
  %903 = vmatpush1.msra.mxu0 0.0
  %904 = vmatprep.subr.mxu0 0.0
  %905 = vmatpush1.msra.mxu0 0.0
  %906 = vmatprep.subr.mxu0 0.0
  %907 = vmatpush1.msra.mxu0 0.0
  %908 = vmatprep.subr.mxu0 0.0
  %909 = vmatpush1.msra.mxu0 0.0
  %910 = vmatprep.subr.mxu0 0.0
  %911 = vmatpush1.msra.mxu0 0.0
  %912 = vmatprep.subr.mxu0 0.0
  %913 = vmatpush1.msra.mxu0 0.0
  %914 = vmatprep.subr.mxu0 0.0
  %915 = vmatpush1.msra.mxu0 0.0
  %916 = vmatprep.subr.mxu0 0.0
  %917 = vmatpush1.msra.mxu0 0.0
  %918 = vmatprep.subr.mxu0 0.0
  %919 = vmatpush1.msra.mxu0 0.0
  %920 = vmatprep.subr.mxu0 0.0
  %921 = vmatpush1.msra.mxu0 0.0
  %922 = vmatprep.subr.mxu0 0.0
  %923 = vmatpush1.msra.mxu0 0.0
  %924 = vmatprep.subr.mxu0 0.0
  %925 = vmatpush1.msra.mxu0 0.0
  %926 = vmatprep.subr.mxu0 0.0
  %927 = vmatpush1.msra.mxu0 0.0
  %928 = vmatprep.subr.mxu0 0.0
  %929 = vmatpush1.msra.mxu0 0.0
  %930 = vmatprep.subr.mxu0 0.0
  %931 = vmatpush1.msra.mxu0 0.0
  %932 = vmatprep.subr.mxu0 0.0
  %933 = vmatpush1.msra.mxu0 0.0
  %934 = vmatprep.subr.mxu0 0.0
  %935 = vmatpush1.msra.mxu0 0.0
  %936 = vmatprep.subr.mxu0 0.0
  %937 = vmatpush1.msra.mxu0 0.0
  %938 = vmatprep.subr.mxu0 0.0
  %939 = vmatpush1.msra.mxu0 0.0
  %940 = vmatprep.subr.mxu0 0.0
  %941 = vmatpush1.msra.mxu0 0.0
  %942 = vmatprep.subr.mxu0 0.0
  %943 = vmatpush1.msra.mxu0 0.0
  %944 = vmatprep.subr.mxu0 0.0
  %945 = vmatpush1.msra.mxu0 0.0
  %946 = vmatprep.subr.mxu0 0.0
  %947 = vmatpush1.msra.mxu0 0.0
  %948 = vmatprep.mubr.f32.mxu0 0.0
  %949 = vmatmul.mubr.f32.gmra.mrb[0].mxu0 %v191
  %v950 = vpop.f32.mrb[0].mxu0
  %v951 = vadd.f32 0.0, %v950
  %v952 = vpop.f32.mrb[0].mxu0
  %953 = vmatprep.mubr.f32.mxu0 0.0
  %954 = vmatmul.mubr.f32.gmra.mrb[0].mxu0 %v194
  %v955 = vpop.f32.mrb[0].mxu0
  %v956 = vadd.f32 0.0, %v955
  %v957 = vpop.f32.mrb[0].mxu0
  %958 = vdwg.mxu0
  %v960 = vsel %vm433, %v789, 0
  %v963 = vsel %vm433, %v794, 0
  %v966 = vsel %vm433, %v870, 0
  %v969 = vsel %vm433, %v875, 0
  %971 = vmatprep.subr.mxu0 0.0
  %972 = vmatpush1.xpose.msra.mxu0 %v966
  %973 = vmatprep.subr.mxu0 0.0
  %974 = vmatpush1.xpose.msra.mxu0 %v969
  %975 = vmatprep.subr.mxu0 0.0
  %976 = vmatpush1.xpose.msra.mxu0 0.0
  %977 = vmatprep.subr.mxu0 0.0
  %978 = vmatpush1.xpose.msra.mxu0 0.0
  %979 = vmatprep.subr.mxu0 0.0
  %980 = vmatpush1.xpose.msra.mxu0 0.0
  %981 = vmatprep.subr.mxu0 0.0
  %982 = vmatpush1.xpose.msra.mxu0 0.0
  %983 = vmatprep.subr.mxu0 0.0
  %984 = vmatpush1.xpose.msra.mxu0 0.0
  %985 = vmatprep.subr.mxu0 0.0
  %986 = vmatpush1.xpose.msra.mxu0 0.0
  %987 = vmatprep.subr.mxu0 0.0
  %988 = vmatpush1.xpose.msra.mxu0 0.0
  %989 = vmatprep.subr.mxu0 0.0
  %990 = vmatpush1.xpose.msra.mxu0 0.0
  %991 = vmatprep.subr.mxu0 0.0
  %992 = vmatpush1.xpose.msra.mxu0 0.0
  %993 = vmatprep.subr.mxu0 0.0
  %994 = vmatpush1.xpose.msra.mxu0 0.0
  %995 = vmatprep.subr.mxu0 0.0
  %996 = vmatpush1.xpose.msra.mxu0 0.0
  %997 = vmatprep.subr.mxu0 0.0
  %998 = vmatpush1.xpose.msra.mxu0 0.0
  %999 = vmatprep.subr.mxu0 0.0
  %1000 = vmatpush1.xpose.msra.mxu0 0.0
  %1001 = vmatprep.subr.mxu0 0.0
  %1002 = vmatpush1.xpose.msra.mxu0 0.0
  %1003 = vmatprep.subr.mxu0 0.0
  %1004 = vmatpush1.xpose.msra.mxu0 0.0
  %1005 = vmatprep.subr.mxu0 0.0
  %1006 = vmatpush1.xpose.msra.mxu0 0.0
  %1007 = vmatprep.subr.mxu0 0.0
  %1008 = vmatpush1.xpose.msra.mxu0 0.0
  %1009 = vmatprep.subr.mxu0 0.0
  %1010 = vmatpush1.xpose.msra.mxu0 0.0
  %1011 = vmatprep.subr.mxu0 0.0
  %1012 = vmatpush1.xpose.msra.mxu0 0.0
  %1013 = vmatprep.subr.mxu0 0.0
  %1014 = vmatpush1.xpose.msra.mxu0 0.0
  %1015 = vmatprep.subr.mxu0 0.0
  %1016 = vmatpush1.xpose.msra.mxu0 0.0
  %1017 = vmatprep.subr.mxu0 0.0
  %1018 = vmatpush1.xpose.msra.mxu0 0.0
  %1019 = vmatprep.subr.mxu0 0.0
  %1020 = vmatpush1.xpose.msra.mxu0 0.0
  %1021 = vmatprep.subr.mxu0 0.0
  %1022 = vmatpush1.xpose.msra.mxu0 0.0
  %1023 = vmatprep.subr.mxu0 0.0
  %1024 = vmatpush1.xpose.msra.mxu0 0.0
  %1025 = vmatprep.subr.mxu0 0.0
  %1026 = vmatpush1.xpose.msra.mxu0 0.0
  %1027 = vmatprep.subr.mxu0 0.0
  %1028 = vmatpush1.xpose.msra.mxu0 0.0
  %1029 = vmatprep.subr.mxu0 0.0
  %1030 = vmatpush1.xpose.msra.mxu0 0.0
  %1031 = vmatprep.subr.mxu0 0.0
  %1032 = vmatpush1.xpose.msra.mxu0 0.0
  %1033 = vmatprep.subr.mxu0 0.0
  %1034 = vmatpush1.xpose.msra.mxu0 0.0
  %1035 = vmatprep.mubr.f32.mxu0 0.0
  %1036 = vmatmul.mubr.f32.gmra.mrb[0].mxu0 %v960
  %v1037 = vpop.f32.mrb[0].mxu0
  %v1038 = vadd.f32 %v132, %v1037
  %v1039 = vpop.f32.mrb[0].mxu0
  %1040 = vmatprep.mubr.f32.mxu0 0.0
  %1041 = vmatmul.mubr.f32.gmra.mrb[0].mxu0 %v963
  %v1042 = vpop.f32.mrb[0].mxu0
  %v1043 = vadd.f32 %v133, %v1042
  %v1044 = vpop.f32.mrb[0].mxu0
  %1045 = vdwg.mxu0
  %v1046 = vsel %vm521, %v1038, -inf
  %1047 = vmax.xlane.f32.xlu0 %v1046
  %v1048 = vpop.xlane.xlu0 %1047
  %v1049 = vsel %vm525, %v1043, -inf
  %1050 = vmax.xlane.f32.xlu0 %v1049
  %v1051 = vpop.xlane.xlu0 %1050
  %v1052 = vsub.f32 %v1038, %v1048
  %v1053 = vsub.f32 %v1043, %v1051
  %v1054 = vmul.f32 %v1052, 1.442695
  %v1055 = vpow.pop %v1054
  %v1056 = vmul.f32 %v1053, 1.442695
  %v1057 = vpow.pop %v1056
  %v1058 = vsel %vm521, %v1055, 0.0
  %1059 = vadd.xlane.f32.xlu0 %v1058
  %v1060 = vpop.xlane.xlu0 %1059
  %v1061 = vsel %vm525, %v1057, 0.0
  %1062 = vadd.xlane.f32.xlu0 %v1061
  %v1063 = vpop.xlane.xlu0 %1062
  %v1064 = vrcp.pop %v1060
  %v1065 = vrcp.pop %v1063
  %v1066 = vmul.f32 %v1055, %v1064
  %v1067 = vmul.f32 %v1057, %v1065
  %v1069 = vsel %vm521, %v1066, 0
  %v1072 = vsel %vm521, %v1067, 0
  %v1075 = vsel %vm551, %v956, 0
  %1077 = vmatprep.subr.mxu0 0.0
  %1078 = vmatpush1.msra.mxu0 %v951
  %1079 = vmatprep.subr.mxu0 0.0
  %1080 = vmatpush1.msra.mxu0 %v1075
  %1081 = vmatprep.subr.mxu0 0.0
  %1082 = vmatpush1.msra.mxu0 0.0
  %1083 = vmatprep.subr.mxu0 0.0
  %1084 = vmatpush1.msra.mxu0 0.0
  %1085 = vmatprep.subr.mxu0 0.0
  %1086 = vmatpush1.msra.mxu0 0.0
  %1087 = vmatprep.subr.mxu0 0.0
  %1088 = vmatpush1.msra.mxu0 0.0
  %1089 = vmatprep.subr.mxu0 0.0
  %1090 = vmatpush1.msra.mxu0 0.0
  %1091 = vmatprep.subr.mxu0 0.0
  %1092 = vmatpush1.msra.mxu0 0.0
  %1093 = vmatprep.subr.mxu0 0.0
  %1094 = vmatpush1.msra.mxu0 0.0
  %1095 = vmatprep.subr.mxu0 0.0
  %1096 = vmatpush1.msra.mxu0 0.0
  %1097 = vmatprep.subr.mxu0 0.0
  %1098 = vmatpush1.msra.mxu0 0.0
  %1099 = vmatprep.subr.mxu0 0.0
  %1100 = vmatpush1.msra.mxu0 0.0
  %1101 = vmatprep.subr.mxu0 0.0
  %1102 = vmatpush1.msra.mxu0 0.0
  %1103 = vmatprep.subr.mxu0 0.0
  %1104 = vmatpush1.msra.mxu0 0.0
  %1105 = vmatprep.subr.mxu0 0.0
  %1106 = vmatpush1.msra.mxu0 0.0
  %1107 = vmatprep.subr.mxu0 0.0
  %1108 = vmatpush1.msra.mxu0 0.0
  %1109 = vmatprep.subr.mxu0 0.0
  %1110 = vmatpush1.msra.mxu0 0.0
  %1111 = vmatprep.subr.mxu0 0.0
  %1112 = vmatpush1.msra.mxu0 0.0
  %1113 = vmatprep.subr.mxu0 0.0
  %1114 = vmatpush1.msra.mxu0 0.0
  %1115 = vmatprep.subr.mxu0 0.0
  %1116 = vmatpush1.msra.mxu0 0.0
  %1117 = vmatprep.subr.mxu0 0.0
  %1118 = vmatpush1.msra.mxu0 0.0
  %1119 = vmatprep.subr.mxu0 0.0
  %1120 = vmatpush1.msra.mxu0 0.0
  %1121 = vmatprep.subr.mxu0 0.0
  %1122 = vmatpush1.msra.mxu0 0.0
  %1123 = vmatprep.subr.mxu0 0.0
  %1124 = vmatpush1.msra.mxu0 0.0
  %1125 = vmatprep.subr.mxu0 0.0
  %1126 = vmatpush1.msra.mxu0 0.0
  %1127 = vmatprep.subr.mxu0 0.0
  %1128 = vmatpush1.msra.mxu0 0.0
  %1129 = vmatprep.subr.mxu0 0.0
  %1130 = vmatpush1.msra.mxu0 0.0
  %1131 = vmatprep.subr.mxu0 0.0
  %1132 = vmatpush1.msra.mxu0 0.0
  %1133 = vmatprep.subr.mxu0 0.0
  %1134 = vmatpush1.msra.mxu0 0.0
  %1135 = vmatprep.subr.mxu0 0.0
  %1136 = vmatpush1.msra.mxu0 0.0
  %1137 = vmatprep.subr.mxu0 0.0
  %1138 = vmatpush1.msra.mxu0 0.0
  %1139 = vmatprep.subr.mxu0 0.0
  %1140 = vmatpush1.msra.mxu0 0.0
  %1141 = vmatprep.mubr.f32.mxu0 0.0
  %1142 = vmatmul.mubr.f32.gmra.mrb[0].mxu0 %v1069
  %v1143 = vpop.f32.mrb[0].mxu0
  %v1144 = vadd.f32 0.0, %v1143
  %v1145 = vpop.f32.mrb[0].mxu0
  %1146 = vmatprep.mubr.f32.mxu0 0.0
  %1147 = vmatmul.mubr.f32.gmra.mrb[0].mxu0 %v1072
  %v1148 = vpop.f32.mrb[0].mxu0
  %v1149 = vadd.f32 0.0, %v1148
  %v1150 = vpop.f32.mrb[0].mxu0
  %1151 = vdwg.mxu0
  %v1152 = vld [vmem:[%s2 + $0xa8] sm:$0xff]
  %v1154 = vsel %vm433, %v1144, 0
  %v1157 = vsel %vm433, %v1149, 0
  %1159 = vmatprep.subr.mxu0 0.0
  %1160 = vmatpush1.msra.mxu0 %v1152
  %1161 = vmatprep.subr.mxu0 0.0
  %1162 = vmatpush1.msra.mxu0 0.0
  %1163 = vmatprep.subr.mxu0 0.0
  %1164 = vmatpush1.msra.mxu0 0.0
  %1165 = vmatprep.subr.mxu0 0.0
  %1166 = vmatpush1.msra.mxu0 0.0
  %1167 = vmatprep.subr.mxu0 0.0
  %1168 = vmatpush1.msra.mxu0 0.0
  %1169 = vmatprep.subr.mxu0 0.0
  %1170 = vmatpush1.msra.mxu0 0.0
  %1171 = vmatprep.subr.mxu0 0.0
  %1172 = vmatpush1.msra.mxu0 0.0
  %1173 = vmatprep.subr.mxu0 0.0
  %1174 = vmatpush1.msra.mxu0 0.0
  %1175 = vmatprep.subr.mxu0 0.0
  %1176 = vmatpush1.msra.mxu0 0.0
  %1177 = vmatprep.subr.mxu0 0.0
  %1178 = vmatpush1.msra.mxu0 0.0
  %1179 = vmatprep.subr.mxu0 0.0
  %1180 = vmatpush1.msra.mxu0 0.0
  %1181 = vmatprep.subr.mxu0 0.0
  %1182 = vmatpush1.msra.mxu0 0.0
  %1183 = vmatprep.subr.mxu0 0.0
  %1184 = vmatpush1.msra.mxu0 0.0
  %1185 = vmatprep.subr.mxu0 0.0
  %1186 = vmatpush1.msra.mxu0 0.0
  %1187 = vmatprep.subr.mxu0 0.0
  %1188 = vmatpush1.msra.mxu0 0.0
  %1189 = vmatprep.subr.mxu0 0.0
  %1190 = vmatpush1.msra.mxu0 0.0
  %1191 = vmatprep.subr.mxu0 0.0
  %1192 = vmatpush1.msra.mxu0 0.0
  %1193 = vmatprep.subr.mxu0 0.0
  %1194 = vmatpush1.msra.mxu0 0.0
  %1195 = vmatprep.subr.mxu0 0.0
  %1196 = vmatpush1.msra.mxu0 0.0
  %1197 = vmatprep.subr.mxu0 0.0
  %1198 = vmatpush1.msra.mxu0 0.0
  %1199 = vmatprep.subr.mxu0 0.0
  %1200 = vmatpush1.msra.mxu0 0.0
  %1201 = vmatprep.subr.mxu0 0.0
  %1202 = vmatpush1.msra.mxu0 0.0
  %1203 = vmatprep.subr.mxu0 0.0
  %1204 = vmatpush1.msra.mxu0 0.0
  %1205 = vmatprep.subr.mxu0 0.0
  %1206 = vmatpush1.msra.mxu0 0.0
  %1207 = vmatprep.subr.mxu0 0.0
  %1208 = vmatpush1.msra.mxu0 0.0
  %1209 = vmatprep.subr.mxu0 0.0
  %1210 = vmatpush1.msra.mxu0 0.0
  %1211 = vmatprep.subr.mxu0 0.0
  %1212 = vmatpush1.msra.mxu0 0.0
  %1213 = vmatprep.subr.mxu0 0.0
  %1214 = vmatpush1.msra.mxu0 0.0
  %1215 = vmatprep.subr.mxu0 0.0
  %1216 = vmatpush1.msra.mxu0 0.0
  %1217 = vmatprep.subr.mxu0 0.0
  %1218 = vmatpush1.msra.mxu0 0.0
  %1219 = vmatprep.subr.mxu0 0.0
  %1220 = vmatpush1.msra.mxu0 0.0
  %1221 = vmatprep.subr.mxu0 0.0
  %1222 = vmatpush1.msra.mxu0 0.0
  %1223 = vmatprep.mubr.f32.mxu0 0.0
  %1224 = vmatmul.mubr.f32.gmra.mrb[0].mxu0 %v1154
  %v1225 = vpop.f32.mrb[0].mxu0
  %v1226 = vadd.f32 0.0, %v1225
  %v1227 = vpop.f32.mrb[0].mxu0
  %1228 = vmatprep.mubr.f32.mxu0 0.0
  %1229 = vmatmul.mubr.f32.gmra.mrb[0].mxu0 %v1157
  %v1230 = vpop.f32.mrb[0].mxu0
  %v1231 = vadd.f32 0.0, %v1230
  %v1232 = vpop.f32.mrb[0].mxu0
  %1233 = vdwg.mxu0
  %v1234 = vadd.f32 %v708, %v1226
  %v1235 = vadd.f32 %v713, %v1231
  %s1236 = scalar_lea.vmem %s1, 240
  %v1237 = vld [vmem:[%s1236] sm:$0xff]
  %v1238 = vld [vmem:[%s1236 + $0x8] sm:$0xff]
  %v1239 = vld [vmem:[%s1236 + $0x10] sm:$0xff]
  %v1240 = vld [vmem:[%s1236 + $0x18] sm:$0xff]
  %v1241 = vld [vmem:[%s1236 + $0x20] sm:$0xff]
  %1242 = vmatprep.subr.mxu0 0.0
  %1243 = vmatpush1.msra.mxu0 %v1237
  %1244 = vmatprep.subr.mxu0 0.0
  %1245 = vmatpush1.msra.mxu0 %v1238
  %1246 = vmatprep.subr.mxu0 0.0
  %1247 = vmatpush1.msra.mxu0 %v1239
  %1248 = vmatprep.subr.mxu0 0.0
  %1249 = vmatpush1.msra.mxu0 %v1240
  %1250 = vmatprep.subr.mxu0 0.0
  %1251 = vmatpush1.msra.mxu0 %v1241
  %1252 = vmatprep.subr.mxu0 0.0
  %1253 = vmatpush1.msra.mxu0 0.0
  %1254 = vmatprep.subr.mxu0 0.0
  %1255 = vmatpush1.msra.mxu0 0.0
  %1256 = vmatprep.subr.mxu0 0.0
  %1257 = vmatpush1.msra.mxu0 0.0
  %1258 = vmatprep.subr.mxu0 0.0
  %1259 = vmatpush1.msra.mxu0 0.0
  %1260 = vmatprep.subr.mxu0 0.0
  %1261 = vmatpush1.msra.mxu0 0.0
  %1262 = vmatprep.subr.mxu0 0.0
  %1263 = vmatpush1.msra.mxu0 0.0
  %1264 = vmatprep.subr.mxu0 0.0
  %1265 = vmatpush1.msra.mxu0 0.0
  %1266 = vmatprep.subr.mxu0 0.0
  %1267 = vmatpush1.msra.mxu0 0.0
  %1268 = vmatprep.subr.mxu0 0.0
  %1269 = vmatpush1.msra.mxu0 0.0
  %1270 = vmatprep.subr.mxu0 0.0
  %1271 = vmatpush1.msra.mxu0 0.0
  %1272 = vmatprep.subr.mxu0 0.0
  %1273 = vmatpush1.msra.mxu0 0.0
  %1274 = vmatprep.subr.mxu0 0.0
  %1275 = vmatpush1.msra.mxu0 0.0
  %1276 = vmatprep.subr.mxu0 0.0
  %1277 = vmatpush1.msra.mxu0 0.0
  %1278 = vmatprep.subr.mxu0 0.0
  %1279 = vmatpush1.msra.mxu0 0.0
  %1280 = vmatprep.subr.mxu0 0.0
  %1281 = vmatpush1.msra.mxu0 0.0
  %1282 = vmatprep.subr.mxu0 0.0
  %1283 = vmatpush1.msra.mxu0 0.0
  %1284 = vmatprep.subr.mxu0 0.0
  %1285 = vmatpush1.msra.mxu0 0.0
  %1286 = vmatprep.subr.mxu0 0.0
  %1287 = vmatpush1.msra.mxu0 0.0
  %1288 = vmatprep.subr.mxu0 0.0
  %1289 = vmatpush1.msra.mxu0 0.0
  %1290 = vmatprep.subr.mxu0 0.0
  %1291 = vmatpush1.msra.mxu0 0.0
  %1292 = vmatprep.subr.mxu0 0.0
  %1293 = vmatpush1.msra.mxu0 0.0
  %1294 = vmatprep.subr.mxu0 0.0
  %1295 = vmatpush1.msra.mxu0 0.0
  %1296 = vmatprep.subr.mxu0 0.0
  %1297 = vmatpush1.msra.mxu0 0.0
  %1298 = vmatprep.subr.mxu0 0.0
  %1299 = vmatpush1.msra.mxu0 0.0
  %1300 = vmatprep.subr.mxu0 0.0
  %1301 = vmatpush1.msra.mxu0 0.0
  %1302 = vmatprep.subr.mxu0 0.0
  %1303 = vmatpush1.msra.mxu0 0.0
  %1304 = vmatprep.subr.mxu0 0.0
  %1305 = vmatpush1.msra.mxu0 0.0
  %1306 = vmatprep.mubr.f32.mxu0 0.0
  %1307 = vmatmul.mubr.f32.gmra.mrb[0].mxu0 %v191
  %v1308 = vpop.f32.mrb[0].mxu0
  %v1309 = vadd.f32 0.0, %v1308
  %v1310 = vpop.f32.mrb[0].mxu0
  %1311 = vmatprep.mubr.f32.mxu0 0.0
  %1312 = vmatmul.mubr.f32.gmra.mrb[0].mxu0 %v194
  %v1313 = vpop.f32.mrb[0].mxu0
  %v1314 = vadd.f32 0.0, %v1313
  %v1315 = vpop.f32.mrb[0].mxu0
  %1316 = vdwg.mxu0
  %s1317 = scalar_lea.vmem %s1, 280
  %v1318 = vld [vmem:[%s1317] sm:$0xff]
  %v1319 = vld [vmem:[%s1317 + $0x8] sm:$0xff]
  %v1320 = vld [vmem:[%s1317 + $0x10] sm:$0xff]
  %v1321 = vld [vmem:[%s1317 + $0x18] sm:$0xff]
  %v1322 = vld [vmem:[%s1317 + $0x20] sm:$0xff]
  %1323 = vmatprep.subr.mxu0 0.0
  %1324 = vmatpush1.msra.mxu0 %v1318
  %1325 = vmatprep.subr.mxu0 0.0
  %1326 = vmatpush1.msra.mxu0 %v1319
  %1327 = vmatprep.subr.mxu0 0.0
  %1328 = vmatpush1.msra.mxu0 %v1320
  %1329 = vmatprep.subr.mxu0 0.0
  %1330 = vmatpush1.msra.mxu0 %v1321
  %1331 = vmatprep.subr.mxu0 0.0
  %1332 = vmatpush1.msra.mxu0 %v1322
  %1333 = vmatprep.subr.mxu0 0.0
  %1334 = vmatpush1.msra.mxu0 0.0
  %1335 = vmatprep.subr.mxu0 0.0
  %1336 = vmatpush1.msra.mxu0 0.0
  %1337 = vmatprep.subr.mxu0 0.0
  %1338 = vmatpush1.msra.mxu0 0.0
  %1339 = vmatprep.subr.mxu0 0.0
  %1340 = vmatpush1.msra.mxu0 0.0
  %1341 = vmatprep.subr.mxu0 0.0
  %1342 = vmatpush1.msra.mxu0 0.0
  %1343 = vmatprep.subr.mxu0 0.0
  %1344 = vmatpush1.msra.mxu0 0.0
  %1345 = vmatprep.subr.mxu0 0.0
  %1346 = vmatpush1.msra.mxu0 0.0
  %1347 = vmatprep.subr.mxu0 0.0
  %1348 = vmatpush1.msra.mxu0 0.0
  %1349 = vmatprep.subr.mxu0 0.0
  %1350 = vmatpush1.msra.mxu0 0.0
  %1351 = vmatprep.subr.mxu0 0.0
  %1352 = vmatpush1.msra.mxu0 0.0
  %1353 = vmatprep.subr.mxu0 0.0
  %1354 = vmatpush1.msra.mxu0 0.0
  %1355 = vmatprep.subr.mxu0 0.0
  %1356 = vmatpush1.msra.mxu0 0.0
  %1357 = vmatprep.subr.mxu0 0.0
  %1358 = vmatpush1.msra.mxu0 0.0
  %1359 = vmatprep.subr.mxu0 0.0
  %1360 = vmatpush1.msra.mxu0 0.0
  %1361 = vmatprep.subr.mxu0 0.0
  %1362 = vmatpush1.msra.mxu0 0.0
  %1363 = vmatprep.subr.mxu0 0.0
  %1364 = vmatpush1.msra.mxu0 0.0
  %1365 = vmatprep.subr.mxu0 0.0
  %1366 = vmatpush1.msra.mxu0 0.0
  %1367 = vmatprep.subr.mxu0 0.0
  %1368 = vmatpush1.msra.mxu0 0.0
  %1369 = vmatprep.subr.mxu0 0.0
  %1370 = vmatpush1.msra.mxu0 0.0
  %1371 = vmatprep.subr.mxu0 0.0
  %1372 = vmatpush1.msra.mxu0 0.0
  %1373 = vmatprep.subr.mxu0 0.0
  %1374 = vmatpush1.msra.mxu0 0.0
  %1375 = vmatprep.subr.mxu0 0.0
  %1376 = vmatpush1.msra.mxu0 0.0
  %1377 = vmatprep.subr.mxu0 0.0
  %1378 = vmatpush1.msra.mxu0 0.0
  %1379 = vmatprep.subr.mxu0 0.0
  %1380 = vmatpush1.msra.mxu0 0.0
  %1381 = vmatprep.subr.mxu0 0.0
  %1382 = vmatpush1.msra.mxu0 0.0
  %1383 = vmatprep.subr.mxu0 0.0
  %1384 = vmatpush1.msra.mxu0 0.0
  %1385 = vmatprep.subr.mxu0 0.0
  %1386 = vmatpush1.msra.mxu0 0.0
  %1387 = vmatprep.mubr.f32.mxu0 0.0
  %1388 = vmatmul.mubr.f32.gmra.mrb[0].mxu0 %v191
  %v1389 = vpop.f32.mrb[0].mxu0
  %v1390 = vadd.f32 0.0, %v1389
  %v1391 = vpop.f32.mrb[0].mxu0
  %1392 = vmatprep.mubr.f32.mxu0 0.0
  %1393 = vmatmul.mubr.f32.gmra.mrb[0].mxu0 %v194
  %v1394 = vpop.f32.mrb[0].mxu0
  %v1395 = vadd.f32 0.0, %v1394
  %v1396 = vpop.f32.mrb[0].mxu0
  %1397 = vdwg.mxu0
  %s1398 = scalar_lea.vmem %s1, 320
  %v1399 = vld [vmem:[%s1398] sm:$0xff]
  %v1400 = vld [vmem:[%s1398 + $0x8] sm:$0xff]
  %v1401 = vld [vmem:[%s1398 + $0x10] sm:$0xff]
  %v1402 = vld [vmem:[%s1398 + $0x18] sm:$0xff]
  %v1403 = vld [vmem:[%s1398 + $0x20] sm:$0xff]
  %1404 = vmatprep.subr.mxu0 0.0
  %1405 = vmatpush1.msra.mxu0 %v1399
  %1406 = vmatprep.subr.mxu0 0.0
  %1407 = vmatpush1.msra.mxu0 %v1400
  %1408 = vmatprep.subr.mxu0 0.0
  %1409 = vmatpush1.msra.mxu0 %v1401
  %1410 = vmatprep.subr.mxu0 0.0
  %1411 = vmatpush1.msra.mxu0 %v1402
  %1412 = vmatprep.subr.mxu0 0.0
  %1413 = vmatpush1.msra.mxu0 %v1403
  %1414 = vmatprep.subr.mxu0 0.0
  %1415 = vmatpush1.msra.mxu0 0.0
  %1416 = vmatprep.subr.mxu0 0.0
  %1417 = vmatpush1.msra.mxu0 0.0
  %1418 = vmatprep.subr.mxu0 0.0
  %1419 = vmatpush1.msra.mxu0 0.0
  %1420 = vmatprep.subr.mxu0 0.0
  %1421 = vmatpush1.msra.mxu0 0.0
  %1422 = vmatprep.subr.mxu0 0.0
  %1423 = vmatpush1.msra.mxu0 0.0
  %1424 = vmatprep.subr.mxu0 0.0
  %1425 = vmatpush1.msra.mxu0 0.0
  %1426 = vmatprep.subr.mxu0 0.0
  %1427 = vmatpush1.msra.mxu0 0.0
  %1428 = vmatprep.subr.mxu0 0.0
  %1429 = vmatpush1.msra.mxu0 0.0
  %1430 = vmatprep.subr.mxu0 0.0
  %1431 = vmatpush1.msra.mxu0 0.0
  %1432 = vmatprep.subr.mxu0 0.0
  %1433 = vmatpush1.msra.mxu0 0.0
  %1434 = vmatprep.subr.mxu0 0.0
  %1435 = vmatpush1.msra.mxu0 0.0
  %1436 = vmatprep.subr.mxu0 0.0
  %1437 = vmatpush1.msra.mxu0 0.0
  %1438 = vmatprep.subr.mxu0 0.0
  %1439 = vmatpush1.msra.mxu0 0.0
  %1440 = vmatprep.subr.mxu0 0.0
  %1441 = vmatpush1.msra.mxu0 0.0
  %1442 = vmatprep.subr.mxu0 0.0
  %1443 = vmatpush1.msra.mxu0 0.0
  %1444 = vmatprep.subr.mxu0 0.0
  %1445 = vmatpush1.msra.mxu0 0.0
  %1446 = vmatprep.subr.mxu0 0.0
  %1447 = vmatpush1.msra.mxu0 0.0
  %1448 = vmatprep.subr.mxu0 0.0
  %1449 = vmatpush1.msra.mxu0 0.0
  %1450 = vmatprep.subr.mxu0 0.0
  %1451 = vmatpush1.msra.mxu0 0.0
  %1452 = vmatprep.subr.mxu0 0.0
  %1453 = vmatpush1.msra.mxu0 0.0
  %1454 = vmatprep.subr.mxu0 0.0
  %1455 = vmatpush1.msra.mxu0 0.0
  %1456 = vmatprep.subr.mxu0 0.0
  %1457 = vmatpush1.msra.mxu0 0.0
  %1458 = vmatprep.subr.mxu0 0.0
  %1459 = vmatpush1.msra.mxu0 0.0
  %1460 = vmatprep.subr.mxu0 0.0
  %1461 = vmatpush1.msra.mxu0 0.0
  %1462 = vmatprep.subr.mxu0 0.0
  %1463 = vmatpush1.msra.mxu0 0.0
  %1464 = vmatprep.subr.mxu0 0.0
  %1465 = vmatpush1.msra.mxu0 0.0
  %1466 = vmatprep.subr.mxu0 0.0
  %1467 = vmatpush1.msra.mxu0 0.0
  %1468 = vmatprep.mubr.f32.mxu0 0.0
  %1469 = vmatmul.mubr.f32.gmra.mrb[0].mxu0 %v191
  %v1470 = vpop.f32.mrb[0].mxu0
  %v1471 = vadd.f32 0.0, %v1470
  %v1472 = vpop.f32.mrb[0].mxu0
  %1473 = vmatprep.mubr.f32.mxu0 0.0
  %1474 = vmatmul.mubr.f32.gmra.mrb[0].mxu0 %v194
  %v1475 = vpop.f32.mrb[0].mxu0
  %v1476 = vadd.f32 0.0, %v1475
  %v1477 = vpop.f32.mrb[0].mxu0
  %1478 = vdwg.mxu0
  %v1480 = vsel %vm433, %v1309, 0
  %v1483 = vsel %vm433, %v1314, 0
  %v1486 = vsel %vm433, %v1390, 0
  %v1489 = vsel %vm433, %v1395, 0
  %1491 = vmatprep.subr.mxu0 0.0
  %1492 = vmatpush1.xpose.msra.mxu0 %v1486
  %1493 = vmatprep.subr.mxu0 0.0
  %1494 = vmatpush1.xpose.msra.mxu0 %v1489
  %1495 = vmatprep.subr.mxu0 0.0
  %1496 = vmatpush1.xpose.msra.mxu0 0.0
  %1497 = vmatprep.subr.mxu0 0.0
  %1498 = vmatpush1.xpose.msra.mxu0 0.0
  %1499 = vmatprep.subr.mxu0 0.0
  %1500 = vmatpush1.xpose.msra.mxu0 0.0
  %1501 = vmatprep.subr.mxu0 0.0
  %1502 = vmatpush1.xpose.msra.mxu0 0.0
  %1503 = vmatprep.subr.mxu0 0.0
  %1504 = vmatpush1.xpose.msra.mxu0 0.0
  %1505 = vmatprep.subr.mxu0 0.0
  %1506 = vmatpush1.xpose.msra.mxu0 0.0
  %1507 = vmatprep.subr.mxu0 0.0
  %1508 = vmatpush1.xpose.msra.mxu0 0.0
  %1509 = vmatprep.subr.mxu0 0.0
  %1510 = vmatpush1.xpose.msra.mxu0 0.0
  %1511 = vmatprep.subr.mxu0 0.0
  %1512 = vmatpush1.xpose.msra.mxu0 0.0
  %1513 = vmatprep.subr.mxu0 0.0
  %1514 = vmatpush1.xpose.msra.mxu0 0.0
  %1515 = vmatprep.subr.mxu0 0.0
  %1516 = vmatpush1.xpose.msra.mxu0 0.0
  %1517 = vmatprep.subr.mxu0 0.0
  %1518 = vmatpush1.xpose.msra.mxu0 0.0
  %1519 = vmatprep.subr.mxu0 0.0
  %1520 = vmatpush1.xpose.msra.mxu0 0.0
  %1521 = vmatprep.subr.mxu0 0.0
  %1522 = vmatpush1.xpose.msra.mxu0 0.0
  %1523 = vmatprep.subr.mxu0 0.0
  %1524 = vmatpush1.xpose.msra.mxu0 0.0
  %1525 = vmatprep.subr.mxu0 0.0
  %1526 = vmatpush1.xpose.msra.mxu0 0.0
  %1527 = vmatprep.subr.mxu0 0.0
  %1528 = vmatpush1.xpose.msra.mxu0 0.0
  %1529 = vmatprep.subr.mxu0 0.0
  %1530 = vmatpush1.xpose.msra.mxu0 0.0
  %1531 = vmatprep.subr.mxu0 0.0
  %1532 = vmatpush1.xpose.msra.mxu0 0.0
  %1533 = vmatprep.subr.mxu0 0.0
  %1534 = vmatpush1.xpose.msra.mxu0 0.0
  %1535 = vmatprep.subr.mxu0 0.0
  %1536 = vmatpush1.xpose.msra.mxu0 0.0
  %1537 = vmatprep.subr.mxu0 0.0
  %1538 = vmatpush1.xpose.msra.mxu0 0.0
  %1539 = vmatprep.subr.mxu0 0.0
  %1540 = vmatpush1.xpose.msra.mxu0 0.0
  %1541 = vmatprep.subr.mxu0 0.0
  %1542 = vmatpush1.xpose.msra.mxu0 0.0
  %1543 = vmatprep.subr.mxu0 0.0
  %1544 = vmatpush1.xpose.msra.mxu0 0.0
  %1545 = vmatprep.subr.mxu0 0.0
  %1546 = vmatpush1.xpose.msra.mxu0 0.0
  %1547 = vmatprep.subr.mxu0 0.0
  %1548 = vmatpush1.xpose.msra.mxu0 0.0
  %1549 = vmatprep.subr.mxu0 0.0
  %1550 = vmatpush1.xpose.msra.mxu0 0.0
  %1551 = vmatprep.subr.mxu0 0.0
  %1552 = vmatpush1.xpose.msra.mxu0 0.0
  %1553 = vmatprep.subr.mxu0 0.0
  %1554 = vmatpush1.xpose.msra.mxu0 0.0
  %1555 = vmatprep.mubr.f32.mxu0 0.0
  %1556 = vmatmul.mubr.f32.gmra.mrb[0].mxu0 %v1480
  %v1557 = vpop.f32.mrb[0].mxu0
  %v1558 = vadd.f32 %v132, %v1557
  %v1559 = vpop.f32.mrb[0].mxu0
  %1560 = vmatprep.mubr.f32.mxu0 0.0
  %1561 = vmatmul.mubr.f32.gmra.mrb[0].mxu0 %v1483
  %v1562 = vpop.f32.mrb[0].mxu0
  %v1563 = vadd.f32 %v133, %v1562
  %v1564 = vpop.f32.mrb[0].mxu0
  %1565 = vdwg.mxu0
  %v1566 = vsel %vm521, %v1558, -inf
  %1567 = vmax.xlane.f32.xlu0 %v1566
  %v1568 = vpop.xlane.xlu0 %1567
  %v1569 = vsel %vm525, %v1563, -inf
  %1570 = vmax.xlane.f32.xlu0 %v1569
  %v1571 = vpop.xlane.xlu0 %1570
  %v1572 = vsub.f32 %v1558, %v1568
  %v1573 = vsub.f32 %v1563, %v1571
  %v1574 = vmul.f32 %v1572, 1.442695
  %v1575 = vpow.pop %v1574
  %v1576 = vmul.f32 %v1573, 1.442695
  %v1577 = vpow.pop %v1576
  %v1578 = vsel %vm521, %v1575, 0.0
  %1579 = vadd.xlane.f32.xlu0 %v1578
  %v1580 = vpop.xlane.xlu0 %1579
  %v1581 = vsel %vm525, %v1577, 0.0
  %1582 = vadd.xlane.f32.xlu0 %v1581
  %v1583 = vpop.xlane.xlu0 %1582
  %v1584 = vrcp.pop %v1580
  %v1585 = vrcp.pop %v1583
  %v1586 = vmul.f32 %v1575, %v1584
  %v1587 = vmul.f32 %v1577, %v1585
  %v1589 = vsel %vm521, %v1586, 0
  %v1592 = vsel %vm521, %v1587, 0
  %v1595 = vsel %vm551, %v1476, 0
  %1597 = vmatprep.subr.mxu0 0.0
  %1598 = vmatpush1.msra.mxu0 %v1471
  %1599 = vmatprep.subr.mxu0 0.0
  %1600 = vmatpush1.msra.mxu0 %v1595
  %1601 = vmatprep.subr.mxu0 0.0
  %1602 = vmatpush1.msra.mxu0 0.0
  %1603 = vmatprep.subr.mxu0 0.0
  %1604 = vmatpush1.msra.mxu0 0.0
  %1605 = vmatprep.subr.mxu0 0.0
  %1606 = vmatpush1.msra.mxu0 0.0
  %1607 = vmatprep.subr.mxu0 0.0
  %1608 = vmatpush1.msra.mxu0 0.0
  %1609 = vmatprep.subr.mxu0 0.0
  %1610 = vmatpush1.msra.mxu0 0.0
  %1611 = vmatprep.subr.mxu0 0.0
  %1612 = vmatpush1.msra.mxu0 0.0
  %1613 = vmatprep.subr.mxu0 0.0
  %1614 = vmatpush1.msra.mxu0 0.0
  %1615 = vmatprep.subr.mxu0 0.0
  %1616 = vmatpush1.msra.mxu0 0.0
  %1617 = vmatprep.subr.mxu0 0.0
  %1618 = vmatpush1.msra.mxu0 0.0
  %1619 = vmatprep.subr.mxu0 0.0
  %1620 = vmatpush1.msra.mxu0 0.0
  %1621 = vmatprep.subr.mxu0 0.0
  %1622 = vmatpush1.msra.mxu0 0.0
  %1623 = vmatprep.subr.mxu0 0.0
  %1624 = vmatpush1.msra.mxu0 0.0
  %1625 = vmatprep.subr.mxu0 0.0
  %1626 = vmatpush1.msra.mxu0 0.0
  %1627 = vmatprep.subr.mxu0 0.0
  %1628 = vmatpush1.msra.mxu0 0.0
  %1629 = vmatprep.subr.mxu0 0.0
  %1630 = vmatpush1.msra.mxu0 0.0
  %1631 = vmatprep.subr.mxu0 0.0
  %1632 = vmatpush1.msra.mxu0 0.0
  %1633 = vmatprep.subr.mxu0 0.0
  %1634 = vmatpush1.msra.mxu0 0.0
  %1635 = vmatprep.subr.mxu0 0.0
  %1636 = vmatpush1.msra.mxu0 0.0
  %1637 = vmatprep.subr.mxu0 0.0
  %1638 = vmatpush1.msra.mxu0 0.0
  %1639 = vmatprep.subr.mxu0 0.0
  %1640 = vmatpush1.msra.mxu0 0.0
  %1641 = vmatprep.subr.mxu0 0.0
  %1642 = vmatpush1.msra.mxu0 0.0
  %1643 = vmatprep.subr.mxu0 0.0
  %1644 = vmatpush1.msra.mxu0 0.0
  %1645 = vmatprep.subr.mxu0 0.0
  %1646 = vmatpush1.msra.mxu0 0.0
  %1647 = vmatprep.subr.mxu0 0.0
  %1648 = vmatpush1.msra.mxu0 0.0
  %1649 = vmatprep.subr.mxu0 0.0
  %1650 = vmatpush1.msra.mxu0 0.0
  %1651 = vmatprep.subr.mxu0 0.0
  %1652 = vmatpush1.msra.mxu0 0.0
  %1653 = vmatprep.subr.mxu0 0.0
  %1654 = vmatpush1.msra.mxu0 0.0
  %1655 = vmatprep.subr.mxu0 0.0
  %1656 = vmatpush1.msra.mxu0 0.0
  %1657 = vmatprep.subr.mxu0 0.0
  %1658 = vmatpush1.msra.mxu0 0.0
  %1659 = vmatprep.subr.mxu0 0.0
  %1660 = vmatpush1.msra.mxu0 0.0
  %1661 = vmatprep.mubr.f32.mxu0 0.0
  %1662 = vmatmul.mubr.f32.gmra.mrb[0].mxu0 %v1589
  %v1663 = vpop.f32.mrb[0].mxu0
  %v1664 = vadd.f32 0.0, %v1663
  %v1665 = vpop.f32.mrb[0].mxu0
  %1666 = vmatprep.mubr.f32.mxu0 0.0
  %1667 = vmatmul.mubr.f32.gmra.mrb[0].mxu0 %v1592
  %v1668 = vpop.f32.mrb[0].mxu0
  %v1669 = vadd.f32 0.0, %v1668
  %v1670 = vpop.f32.mrb[0].mxu0
  %1671 = vdwg.mxu0
  %v1672 = vld [vmem:[%s2 + $0xb0] sm:$0xff]
  %v1674 = vsel %vm433, %v1664, 0
  %v1677 = vsel %vm433, %v1669, 0
  %1679 = vmatprep.subr.mxu0 0.0
  %1680 = vmatpush1.msra.mxu0 %v1672
  %1681 = vmatprep.subr.mxu0 0.0
  %1682 = vmatpush1.msra.mxu0 0.0
  %1683 = vmatprep.subr.mxu0 0.0
  %1684 = vmatpush1.msra.mxu0 0.0
  %1685 = vmatprep.subr.mxu0 0.0
  %1686 = vmatpush1.msra.mxu0 0.0
  %1687 = vmatprep.subr.mxu0 0.0
  %1688 = vmatpush1.msra.mxu0 0.0
  %1689 = vmatprep.subr.mxu0 0.0
  %1690 = vmatpush1.msra.mxu0 0.0
  %1691 = vmatprep.subr.mxu0 0.0
  %1692 = vmatpush1.msra.mxu0 0.0
  %1693 = vmatprep.subr.mxu0 0.0
  %1694 = vmatpush1.msra.mxu0 0.0
  %1695 = vmatprep.subr.mxu0 0.0
  %1696 = vmatpush1.msra.mxu0 0.0
  %1697 = vmatprep.subr.mxu0 0.0
  %1698 = vmatpush1.msra.mxu0 0.0
  %1699 = vmatprep.subr.mxu0 0.0
  %1700 = vmatpush1.msra.mxu0 0.0
  %1701 = vmatprep.subr.mxu0 0.0
  %1702 = vmatpush1.msra.mxu0 0.0
  %1703 = vmatprep.subr.mxu0 0.0
  %1704 = vmatpush1.msra.mxu0 0.0
  %1705 = vmatprep.subr.mxu0 0.0
  %1706 = vmatpush1.msra.mxu0 0.0
  %1707 = vmatprep.subr.mxu0 0.0
  %1708 = vmatpush1.msra.mxu0 0.0
  %1709 = vmatprep.subr.mxu0 0.0
  %1710 = vmatpush1.msra.mxu0 0.0
  %1711 = vmatprep.subr.mxu0 0.0
  %1712 = vmatpush1.msra.mxu0 0.0
  %1713 = vmatprep.subr.mxu0 0.0
  %1714 = vmatpush1.msra.mxu0 0.0
  %1715 = vmatprep.subr.mxu0 0.0
  %1716 = vmatpush1.msra.mxu0 0.0
  %1717 = vmatprep.subr.mxu0 0.0
  %1718 = vmatpush1.msra.mxu0 0.0
  %1719 = vmatprep.subr.mxu0 0.0
  %1720 = vmatpush1.msra.mxu0 0.0
  %1721 = vmatprep.subr.mxu0 0.0
  %1722 = vmatpush1.msra.mxu0 0.0
  %1723 = vmatprep.subr.mxu0 0.0
  %1724 = vmatpush1.msra.mxu0 0.0
  %1725 = vmatprep.subr.mxu0 0.0
  %1726 = vmatpush1.msra.mxu0 0.0
  %1727 = vmatprep.subr.mxu0 0.0
  %1728 = vmatpush1.msra.mxu0 0.0
  %1729 = vmatprep.subr.mxu0 0.0
  %1730 = vmatpush1.msra.mxu0 0.0
  %1731 = vmatprep.subr.mxu0 0.0
  %1732 = vmatpush1.msra.mxu0 0.0
  %1733 = vmatprep.subr.mxu0 0.0
  %1734 = vmatpush1.msra.mxu0 0.0
  %1735 = vmatprep.subr.mxu0 0.0
  %1736 = vmatpush1.msra.mxu0 0.0
  %1737 = vmatprep.subr.mxu0 0.0
  %1738 = vmatpush1.msra.mxu0 0.0
  %1739 = vmatprep.subr.mxu0 0.0
  %1740 = vmatpush1.msra.mxu0 0.0
  %1741 = vmatprep.subr.mxu0 0.0
  %1742 = vmatpush1.msra.mxu0 0.0
  %1743 = vmatprep.mubr.f32.mxu0 0.0
  %1744 = vmatmul.mubr.f32.gmra.mrb[0].mxu0 %v1674
  %v1745 = vpop.f32.mrb[0].mxu0
  %v1746 = vadd.f32 0.0, %v1745
  %v1747 = vpop.f32.mrb[0].mxu0
  %1748 = vmatprep.mubr.f32.mxu0 0.0
  %1749 = vmatmul.mubr.f32.gmra.mrb[0].mxu0 %v1677
  %v1750 = vpop.f32.mrb[0].mxu0
  %v1751 = vadd.f32 0.0, %v1750
  %v1752 = vpop.f32.mrb[0].mxu0
  %1753 = vdwg.mxu0
  %v1754 = vadd.f32 %v1234, %v1746
  %v1755 = vadd.f32 %v1235, %v1751
  %s1756 = scalar_lea.vmem %s1, 360
  %v1757 = vld [vmem:[%s1756] sm:$0xff]
  %v1758 = vld [vmem:[%s1756 + $0x8] sm:$0xff]
  %v1759 = vld [vmem:[%s1756 + $0x10] sm:$0xff]
  %v1760 = vld [vmem:[%s1756 + $0x18] sm:$0xff]
  %v1761 = vld [vmem:[%s1756 + $0x20] sm:$0xff]
  %1762 = vmatprep.subr.mxu0 0.0
  %1763 = vmatpush1.msra.mxu0 %v1757
  %1764 = vmatprep.subr.mxu0 0.0
  %1765 = vmatpush1.msra.mxu0 %v1758
  %1766 = vmatprep.subr.mxu0 0.0
  %1767 = vmatpush1.msra.mxu0 %v1759
  %1768 = vmatprep.subr.mxu0 0.0
  %1769 = vmatpush1.msra.mxu0 %v1760
  %1770 = vmatprep.subr.mxu0 0.0
  %1771 = vmatpush1.msra.mxu0 %v1761
  %1772 = vmatprep.subr.mxu0 0.0
  %1773 = vmatpush1.msra.mxu0 0.0
  %1774 = vmatprep.subr.mxu0 0.0
  %1775 = vmatpush1.msra.mxu0 0.0
  %1776 = vmatprep.subr.mxu0 0.0
  %1777 = vmatpush1.msra.mxu0 0.0
  %1778 = vmatprep.subr.mxu0 0.0
  %1779 = vmatpush1.msra.mxu0 0.0
  %1780 = vmatprep.subr.mxu0 0.0
  %1781 = vmatpush1.msra.mxu0 0.0
  %1782 = vmatprep.subr.mxu0 0.0
  %1783 = vmatpush1.msra.mxu0 0.0
  %1784 = vmatprep.subr.mxu0 0.0
  %1785 = vmatpush1.msra.mxu0 0.0
  %1786 = vmatprep.subr.mxu0 0.0
  %1787 = vmatpush1.msra.mxu0 0.0
  %1788 = vmatprep.subr.mxu0 0.0
  %1789 = vmatpush1.msra.mxu0 0.0
  %1790 = vmatprep.subr.mxu0 0.0
  %1791 = vmatpush1.msra.mxu0 0.0
  %1792 = vmatprep.subr.mxu0 0.0
  %1793 = vmatpush1.msra.mxu0 0.0
  %1794 = vmatprep.subr.mxu0 0.0
  %1795 = vmatpush1.msra.mxu0 0.0
  %1796 = vmatprep.subr.mxu0 0.0
  %1797 = vmatpush1.msra.mxu0 0.0
  %1798 = vmatprep.subr.mxu0 0.0
  %1799 = vmatpush1.msra.mxu0 0.0
  %1800 = vmatprep.subr.mxu0 0.0
  %1801 = vmatpush1.msra.mxu0 0.0
  %1802 = vmatprep.subr.mxu0 0.0
  %1803 = vmatpush1.msra.mxu0 0.0
  %1804 = vmatprep.subr.mxu0 0.0
  %1805 = vmatpush1.msra.mxu0 0.0
  %1806 = vmatprep.subr.mxu0 0.0
  %1807 = vmatpush1.msra.mxu0 0.0
  %1808 = vmatprep.subr.mxu0 0.0
  %1809 = vmatpush1.msra.mxu0 0.0
  %1810 = vmatprep.subr.mxu0 0.0
  %1811 = vmatpush1.msra.mxu0 0.0
  %1812 = vmatprep.subr.mxu0 0.0
  %1813 = vmatpush1.msra.mxu0 0.0
  %1814 = vmatprep.subr.mxu0 0.0
  %1815 = vmatpush1.msra.mxu0 0.0
  %1816 = vmatprep.subr.mxu0 0.0
  %1817 = vmatpush1.msra.mxu0 0.0
  %1818 = vmatprep.subr.mxu0 0.0
  %1819 = vmatpush1.msra.mxu0 0.0
  %1820 = vmatprep.subr.mxu0 0.0
  %1821 = vmatpush1.msra.mxu0 0.0
  %1822 = vmatprep.subr.mxu0 0.0
  %1823 = vmatpush1.msra.mxu0 0.0
  %1824 = vmatprep.subr.mxu0 0.0
  %1825 = vmatpush1.msra.mxu0 0.0
  %1826 = vmatprep.mubr.f32.mxu0 0.0
  %1827 = vmatmul.mubr.f32.gmra.mrb[0].mxu0 %v191
  %v1828 = vpop.f32.mrb[0].mxu0
  %v1829 = vadd.f32 0.0, %v1828
  %v1830 = vpop.f32.mrb[0].mxu0
  %1831 = vmatprep.mubr.f32.mxu0 0.0
  %1832 = vmatmul.mubr.f32.gmra.mrb[0].mxu0 %v194
  %v1833 = vpop.f32.mrb[0].mxu0
  %v1834 = vadd.f32 0.0, %v1833
  %v1835 = vpop.f32.mrb[0].mxu0
  %1836 = vdwg.mxu0
  %s1837 = scalar_lea.vmem %s1, 400
  %v1838 = vld [vmem:[%s1837] sm:$0xff]
  %v1839 = vld [vmem:[%s1837 + $0x8] sm:$0xff]
  %v1840 = vld [vmem:[%s1837 + $0x10] sm:$0xff]
  %v1841 = vld [vmem:[%s1837 + $0x18] sm:$0xff]
  %v1842 = vld [vmem:[%s1837 + $0x20] sm:$0xff]
  %1843 = vmatprep.subr.mxu0 0.0
  %1844 = vmatpush1.msra.mxu0 %v1838
  %1845 = vmatprep.subr.mxu0 0.0
  %1846 = vmatpush1.msra.mxu0 %v1839
  %1847 = vmatprep.subr.mxu0 0.0
  %1848 = vmatpush1.msra.mxu0 %v1840
  %1849 = vmatprep.subr.mxu0 0.0
  %1850 = vmatpush1.msra.mxu0 %v1841
  %1851 = vmatprep.subr.mxu0 0.0
  %1852 = vmatpush1.msra.mxu0 %v1842
  %1853 = vmatprep.subr.mxu0 0.0
  %1854 = vmatpush1.msra.mxu0 0.0
  %1855 = vmatprep.subr.mxu0 0.0
  %1856 = vmatpush1.msra.mxu0 0.0
  %1857 = vmatprep.subr.mxu0 0.0
  %1858 = vmatpush1.msra.mxu0 0.0
  %1859 = vmatprep.subr.mxu0 0.0
  %1860 = vmatpush1.msra.mxu0 0.0
  %1861 = vmatprep.subr.mxu0 0.0
  %1862 = vmatpush1.msra.mxu0 0.0
  %1863 = vmatprep.subr.mxu0 0.0
  %1864 = vmatpush1.msra.mxu0 0.0
  %1865 = vmatprep.subr.mxu0 0.0
  %1866 = vmatpush1.msra.mxu0 0.0
  %1867 = vmatprep.subr.mxu0 0.0
  %1868 = vmatpush1.msra.mxu0 0.0
  %1869 = vmatprep.subr.mxu0 0.0
  %1870 = vmatpush1.msra.mxu0 0.0
  %1871 = vmatprep.subr.mxu0 0.0
  %1872 = vmatpush1.msra.mxu0 0.0
  %1873 = vmatprep.subr.mxu0 0.0
  %1874 = vmatpush1.msra.mxu0 0.0
  %1875 = vmatprep.subr.mxu0 0.0
  %1876 = vmatpush1.msra.mxu0 0.0
  %1877 = vmatprep.subr.mxu0 0.0
  %1878 = vmatpush1.msra.mxu0 0.0
  %1879 = vmatprep.subr.mxu0 0.0
  %1880 = vmatpush1.msra.mxu0 0.0
  %1881 = vmatprep.subr.mxu0 0.0
  %1882 = vmatpush1.msra.mxu0 0.0
  %1883 = vmatprep.subr.mxu0 0.0
  %1884 = vmatpush1.msra.mxu0 0.0
  %1885 = vmatprep.subr.mxu0 0.0
  %1886 = vmatpush1.msra.mxu0 0.0
  %1887 = vmatprep.subr.mxu0 0.0
  %1888 = vmatpush1.msra.mxu0 0.0
  %1889 = vmatprep.subr.mxu0 0.0
  %1890 = vmatpush1.msra.mxu0 0.0
  %1891 = vmatprep.subr.mxu0 0.0
  %1892 = vmatpush1.msra.mxu0 0.0
  %1893 = vmatprep.subr.mxu0 0.0
  %1894 = vmatpush1.msra.mxu0 0.0
  %1895 = vmatprep.subr.mxu0 0.0
  %1896 = vmatpush1.msra.mxu0 0.0
  %1897 = vmatprep.subr.mxu0 0.0
  %1898 = vmatpush1.msra.mxu0 0.0
  %1899 = vmatprep.subr.mxu0 0.0
  %1900 = vmatpush1.msra.mxu0 0.0
  %1901 = vmatprep.subr.mxu0 0.0
  %1902 = vmatpush1.msra.mxu0 0.0
  %1903 = vmatprep.subr.mxu0 0.0
  %1904 = vmatpush1.msra.mxu0 0.0
  %1905 = vmatprep.subr.mxu0 0.0
  %1906 = vmatpush1.msra.mxu0 0.0
  %1907 = vmatprep.mubr.f32.mxu0 0.0
  %1908 = vmatmul.mubr.f32.gmra.mrb[0].mxu0 %v191
  %v1909 = vpop.f32.mrb[0].mxu0
  %v1910 = vadd.f32 0.0, %v1909
  %v1911 = vpop.f32.mrb[0].mxu0
  %1912 = vmatprep.mubr.f32.mxu0 0.0
  %1913 = vmatmul.mubr.f32.gmra.mrb[0].mxu0 %v194
  %v1914 = vpop.f32.mrb[0].mxu0
  %v1915 = vadd.f32 0.0, %v1914
  %v1916 = vpop.f32.mrb[0].mxu0
  %1917 = vdwg.mxu0
  %s1918 = scalar_lea.vmem %s1, 440
  %v1919 = vld [vmem:[%s1918] sm:$0xff]
  %v1920 = vld [vmem:[%s1918 + $0x8] sm:$0xff]
  %v1921 = vld [vmem:[%s1918 + $0x10] sm:$0xff]
  %v1922 = vld [vmem:[%s1918 + $0x18] sm:$0xff]
  %v1923 = vld [vmem:[%s1918 + $0x20] sm:$0xff]
  %1924 = vmatprep.subr.mxu0 0.0
  %1925 = vmatpush1.msra.mxu0 %v1919
  %1926 = vmatprep.subr.mxu0 0.0
  %1927 = vmatpush1.msra.mxu0 %v1920
  %1928 = vmatprep.subr.mxu0 0.0
  %1929 = vmatpush1.msra.mxu0 %v1921
  %1930 = vmatprep.subr.mxu0 0.0
  %1931 = vmatpush1.msra.mxu0 %v1922
  %1932 = vmatprep.subr.mxu0 0.0
  %1933 = vmatpush1.msra.mxu0 %v1923
  %1934 = vmatprep.subr.mxu0 0.0
  %1935 = vmatpush1.msra.mxu0 0.0
  %1936 = vmatprep.subr.mxu0 0.0
  %1937 = vmatpush1.msra.mxu0 0.0
  %1938 = vmatprep.subr.mxu0 0.0
  %1939 = vmatpush1.msra.mxu0 0.0
  %1940 = vmatprep.subr.mxu0 0.0
  %1941 = vmatpush1.msra.mxu0 0.0
  %1942 = vmatprep.subr.mxu0 0.0
  %1943 = vmatpush1.msra.mxu0 0.0
  %1944 = vmatprep.subr.mxu0 0.0
  %1945 = vmatpush1.msra.mxu0 0.0
  %1946 = vmatprep.subr.mxu0 0.0
  %1947 = vmatpush1.msra.mxu0 0.0
  %1948 = vmatprep.subr.mxu0 0.0
  %1949 = vmatpush1.msra.mxu0 0.0
  %1950 = vmatprep.subr.mxu0 0.0
  %1951 = vmatpush1.msra.mxu0 0.0
  %1952 = vmatprep.subr.mxu0 0.0
  %1953 = vmatpush1.msra.mxu0 0.0
  %1954 = vmatprep.subr.mxu0 0.0
  %1955 = vmatpush1.msra.mxu0 0.0
  %1956 = vmatprep.subr.mxu0 0.0
  %1957 = vmatpush1.msra.mxu0 0.0
  %1958 = vmatprep.subr.mxu0 0.0
  %1959 = vmatpush1.msra.mxu0 0.0
  %1960 = vmatprep.subr.mxu0 0.0
  %1961 = vmatpush1.msra.mxu0 0.0
  %1962 = vmatprep.subr.mxu0 0.0
  %1963 = vmatpush1.msra.mxu0 0.0
  %1964 = vmatprep.subr.mxu0 0.0
  %1965 = vmatpush1.msra.mxu0 0.0
  %1966 = vmatprep.subr.mxu0 0.0
  %1967 = vmatpush1.msra.mxu0 0.0
  %1968 = vmatprep.subr.mxu0 0.0
  %1969 = vmatpush1.msra.mxu0 0.0
  %1970 = vmatprep.subr.mxu0 0.0
  %1971 = vmatpush1.msra.mxu0 0.0
  %1972 = vmatprep.subr.mxu0 0.0
  %1973 = vmatpush1.msra.mxu0 0.0
  %1974 = vmatprep.subr.mxu0 0.0
  %1975 = vmatpush1.msra.mxu0 0.0
  %1976 = vmatprep.subr.mxu0 0.0
  %1977 = vmatpush1.msra.mxu0 0.0
  %1978 = vmatprep.subr.mxu0 0.0
  %1979 = vmatpush1.msra.mxu0 0.0
  %1980 = vmatprep.subr.mxu0 0.0
  %1981 = vmatpush1.msra.mxu0 0.0
  %1982 = vmatprep.subr.mxu0 0.0
  %1983 = vmatpush1.msra.mxu0 0.0
  %1984 = vmatprep.subr.mxu0 0.0
  %1985 = vmatpush1.msra.mxu0 0.0
  %1986 = vmatprep.subr.mxu0 0.0
  %1987 = vmatpush1.msra.mxu0 0.0
  %1988 = vmatprep.mubr.f32.mxu0 0.0
  %1989 = vmatmul.mubr.f32.gmra.mrb[0].mxu0 %v191
  %v1990 = vpop.f32.mrb[0].mxu0
  %v1991 = vadd.f32 0.0, %v1990
  %v1992 = vpop.f32.mrb[0].mxu0
  %1993 = vmatprep.mubr.f32.mxu0 0.0
  %1994 = vmatmul.mubr.f32.gmra.mrb[0].mxu0 %v194
  %v1995 = vpop.f32.mrb[0].mxu0
  %v1996 = vadd.f32 0.0, %v1995
  %v1997 = vpop.f32.mrb[0].mxu0
  %1998 = vdwg.mxu0
  %v2000 = vsel %vm433, %v1829, 0
  %v2003 = vsel %vm433, %v1834, 0
  %v2006 = vsel %vm433, %v1910, 0
  %v2009 = vsel %vm433, %v1915, 0
  %2011 = vmatprep.subr.mxu0 0.0
  %2012 = vmatpush1.xpose.msra.mxu0 %v2006
  %2013 = vmatprep.subr.mxu0 0.0
  %2014 = vmatpush1.xpose.msra.mxu0 %v2009
  %2015 = vmatprep.subr.mxu0 0.0
  %2016 = vmatpush1.xpose.msra.mxu0 0.0
  %2017 = vmatprep.subr.mxu0 0.0
  %2018 = vmatpush1.xpose.msra.mxu0 0.0
  %2019 = vmatprep.subr.mxu0 0.0
  %2020 = vmatpush1.xpose.msra.mxu0 0.0
  %2021 = vmatprep.subr.mxu0 0.0
  %2022 = vmatpush1.xpose.msra.mxu0 0.0
  %2023 = vmatprep.subr.mxu0 0.0
  %2024 = vmatpush1.xpose.msra.mxu0 0.0
  %2025 = vmatprep.subr.mxu0 0.0
  %2026 = vmatpush1.xpose.msra.mxu0 0.0
  %2027 = vmatprep.subr.mxu0 0.0
  %2028 = vmatpush1.xpose.msra.mxu0 0.0
  %2029 = vmatprep.subr.mxu0 0.0
  %2030 = vmatpush1.xpose.msra.mxu0 0.0
  %2031 = vmatprep.subr.mxu0 0.0
  %2032 = vmatpush1.xpose.msra.mxu0 0.0
  %2033 = vmatprep.subr.mxu0 0.0
  %2034 = vmatpush1.xpose.msra.mxu0 0.0
  %2035 = vmatprep.subr.mxu0 0.0
  %2036 = vmatpush1.xpose.msra.mxu0 0.0
  %2037 = vmatprep.subr.mxu0 0.0
  %2038 = vmatpush1.xpose.msra.mxu0 0.0
  %2039 = vmatprep.subr.mxu0 0.0
  %2040 = vmatpush1.xpose.msra.mxu0 0.0
  %2041 = vmatprep.subr.mxu0 0.0
  %2042 = vmatpush1.xpose.msra.mxu0 0.0
  %2043 = vmatprep.subr.mxu0 0.0
  %2044 = vmatpush1.xpose.msra.mxu0 0.0
  %2045 = vmatprep.subr.mxu0 0.0
  %2046 = vmatpush1.xpose.msra.mxu0 0.0
  %2047 = vmatprep.subr.mxu0 0.0
  %2048 = vmatpush1.xpose.msra.mxu0 0.0
  %2049 = vmatprep.subr.mxu0 0.0
  %2050 = vmatpush1.xpose.msra.mxu0 0.0
  %2051 = vmatprep.subr.mxu0 0.0
  %2052 = vmatpush1.xpose.msra.mxu0 0.0
  %2053 = vmatprep.subr.mxu0 0.0
  %2054 = vmatpush1.xpose.msra.mxu0 0.0
  %2055 = vmatprep.subr.mxu0 0.0
  %2056 = vmatpush1.xpose.msra.mxu0 0.0
  %2057 = vmatprep.subr.mxu0 0.0
  %2058 = vmatpush1.xpose.msra.mxu0 0.0
  %2059 = vmatprep.subr.mxu0 0.0
  %2060 = vmatpush1.xpose.msra.mxu0 0.0
  %2061 = vmatprep.subr.mxu0 0.0
  %2062 = vmatpush1.xpose.msra.mxu0 0.0
  %2063 = vmatprep.subr.mxu0 0.0
  %2064 = vmatpush1.xpose.msra.mxu0 0.0
  %2065 = vmatprep.subr.mxu0 0.0
  %2066 = vmatpush1.xpose.msra.mxu0 0.0
  %2067 = vmatprep.subr.mxu0 0.0
  %2068 = vmatpush1.xpose.msra.mxu0 0.0
  %2069 = vmatprep.subr.mxu0 0.0
  %2070 = vmatpush1.xpose.msra.mxu0 0.0
  %2071 = vmatprep.subr.mxu0 0.0
  %2072 = vmatpush1.xpose.msra.mxu0 0.0
  %2073 = vmatprep.subr.mxu0 0.0
  %2074 = vmatpush1.xpose.msra.mxu0 0.0
  %2075 = vmatprep.mubr.f32.mxu0 0.0
  %2076 = vmatmul.mubr.f32.gmra.mrb[0].mxu0 %v2000
  %v2077 = vpop.f32.mrb[0].mxu0
  %v2078 = vadd.f32 %v132, %v2077
  %v2079 = vpop.f32.mrb[0].mxu0
  %2080 = vmatprep.mubr.f32.mxu0 0.0
  %2081 = vmatmul.mubr.f32.gmra.mrb[0].mxu0 %v2003
  %v2082 = vpop.f32.mrb[0].mxu0
  %v2083 = vadd.f32 %v133, %v2082
  %v2084 = vpop.f32.mrb[0].mxu0
  %2085 = vdwg.mxu0
  %v2086 = vsel %vm521, %v2078, -inf
  %2087 = vmax.xlane.f32.xlu0 %v2086
  %v2088 = vpop.xlane.xlu0 %2087
  %v2089 = vsel %vm525, %v2083, -inf
  %2090 = vmax.xlane.f32.xlu0 %v2089
  %v2091 = vpop.xlane.xlu0 %2090
  %v2092 = vsub.f32 %v2078, %v2088
  %v2093 = vsub.f32 %v2083, %v2091
  %v2094 = vmul.f32 %v2092, 1.442695
  %v2095 = vpow.pop %v2094
  %v2096 = vmul.f32 %v2093, 1.442695
  %v2097 = vpow.pop %v2096
  %v2098 = vsel %vm521, %v2095, 0.0
  %2099 = vadd.xlane.f32.xlu0 %v2098
  %v2100 = vpop.xlane.xlu0 %2099
  %v2101 = vsel %vm525, %v2097, 0.0
  %2102 = vadd.xlane.f32.xlu0 %v2101
  %v2103 = vpop.xlane.xlu0 %2102
  %v2104 = vrcp.pop %v2100
  %v2105 = vrcp.pop %v2103
  %v2106 = vmul.f32 %v2095, %v2104
  %v2107 = vmul.f32 %v2097, %v2105
  %v2109 = vsel %vm521, %v2106, 0
  %v2112 = vsel %vm521, %v2107, 0
  %v2115 = vsel %vm551, %v1996, 0
  %2117 = vmatprep.subr.mxu0 0.0
  %2118 = vmatpush1.msra.mxu0 %v1991
  %2119 = vmatprep.subr.mxu0 0.0
  %2120 = vmatpush1.msra.mxu0 %v2115
  %2121 = vmatprep.subr.mxu0 0.0
  %2122 = vmatpush1.msra.mxu0 0.0
  %2123 = vmatprep.subr.mxu0 0.0
  %2124 = vmatpush1.msra.mxu0 0.0
  %2125 = vmatprep.subr.mxu0 0.0
  %2126 = vmatpush1.msra.mxu0 0.0
  %2127 = vmatprep.subr.mxu0 0.0
  %2128 = vmatpush1.msra.mxu0 0.0
  %2129 = vmatprep.subr.mxu0 0.0
  %2130 = vmatpush1.msra.mxu0 0.0
  %2131 = vmatprep.subr.mxu0 0.0
  %2132 = vmatpush1.msra.mxu0 0.0
  %2133 = vmatprep.subr.mxu0 0.0
  %2134 = vmatpush1.msra.mxu0 0.0
  %2135 = vmatprep.subr.mxu0 0.0
  %2136 = vmatpush1.msra.mxu0 0.0
  %2137 = vmatprep.subr.mxu0 0.0
  %2138 = vmatpush1.msra.mxu0 0.0
  %2139 = vmatprep.subr.mxu0 0.0
  %2140 = vmatpush1.msra.mxu0 0.0
  %2141 = vmatprep.subr.mxu0 0.0
  %2142 = vmatpush1.msra.mxu0 0.0
  %2143 = vmatprep.subr.mxu0 0.0
  %2144 = vmatpush1.msra.mxu0 0.0
  %2145 = vmatprep.subr.mxu0 0.0
  %2146 = vmatpush1.msra.mxu0 0.0
  %2147 = vmatprep.subr.mxu0 0.0
  %2148 = vmatpush1.msra.mxu0 0.0
  %2149 = vmatprep.subr.mxu0 0.0
  %2150 = vmatpush1.msra.mxu0 0.0
  %2151 = vmatprep.subr.mxu0 0.0
  %2152 = vmatpush1.msra.mxu0 0.0
  %2153 = vmatprep.subr.mxu0 0.0
  %2154 = vmatpush1.msra.mxu0 0.0
  %2155 = vmatprep.subr.mxu0 0.0
  %2156 = vmatpush1.msra.mxu0 0.0
  %2157 = vmatprep.subr.mxu0 0.0
  %2158 = vmatpush1.msra.mxu0 0.0
  %2159 = vmatprep.subr.mxu0 0.0
  %2160 = vmatpush1.msra.mxu0 0.0
  %2161 = vmatprep.subr.mxu0 0.0
  %2162 = vmatpush1.msra.mxu0 0.0
  %2163 = vmatprep.subr.mxu0 0.0
  %2164 = vmatpush1.msra.mxu0 0.0
  %2165 = vmatprep.subr.mxu0 0.0
  %2166 = vmatpush1.msra.mxu0 0.0
  %2167 = vmatprep.subr.mxu0 0.0
  %2168 = vmatpush1.msra.mxu0 0.0
  %2169 = vmatprep.subr.mxu0 0.0
  %2170 = vmatpush1.msra.mxu0 0.0
  %2171 = vmatprep.subr.mxu0 0.0
  %2172 = vmatpush1.msra.mxu0 0.0
  %2173 = vmatprep.subr.mxu0 0.0
  %2174 = vmatpush1.msra.mxu0 0.0
  %2175 = vmatprep.subr.mxu0 0.0
  %2176 = vmatpush1.msra.mxu0 0.0
  %2177 = vmatprep.subr.mxu0 0.0
  %2178 = vmatpush1.msra.mxu0 0.0
  %2179 = vmatprep.subr.mxu0 0.0
  %2180 = vmatpush1.msra.mxu0 0.0
  %2181 = vmatprep.mubr.f32.mxu0 0.0
  %2182 = vmatmul.mubr.f32.gmra.mrb[0].mxu0 %v2109
  %v2183 = vpop.f32.mrb[0].mxu0
  %v2184 = vadd.f32 0.0, %v2183
  %v2185 = vpop.f32.mrb[0].mxu0
  %2186 = vmatprep.mubr.f32.mxu0 0.0
  %2187 = vmatmul.mubr.f32.gmra.mrb[0].mxu0 %v2112
  %v2188 = vpop.f32.mrb[0].mxu0
  %v2189 = vadd.f32 0.0, %v2188
  %v2190 = vpop.f32.mrb[0].mxu0
  %2191 = vdwg.mxu0
  %v2192 = vld [vmem:[%s2 + $0xb8] sm:$0xff]
  %v2194 = vsel %vm433, %v2184, 0
  %v2197 = vsel %vm433, %v2189, 0
  %2199 = vmatprep.subr.mxu0 0.0
  %2200 = vmatpush1.msra.mxu0 %v2192
  %2201 = vmatprep.subr.mxu0 0.0
  %2202 = vmatpush1.msra.mxu0 0.0
  %2203 = vmatprep.subr.mxu0 0.0
  %2204 = vmatpush1.msra.mxu0 0.0
  %2205 = vmatprep.subr.mxu0 0.0
  %2206 = vmatpush1.msra.mxu0 0.0
  %2207 = vmatprep.subr.mxu0 0.0
  %2208 = vmatpush1.msra.mxu0 0.0
  %2209 = vmatprep.subr.mxu0 0.0
  %2210 = vmatpush1.msra.mxu0 0.0
  %2211 = vmatprep.subr.mxu0 0.0
  %2212 = vmatpush1.msra.mxu0 0.0
  %2213 = vmatprep.subr.mxu0 0.0
  %2214 = vmatpush1.msra.mxu0 0.0
  %2215 = vmatprep.subr.mxu0 0.0
  %2216 = vmatpush1.msra.mxu0 0.0
  %2217 = vmatprep.subr.mxu0 0.0
  %2218 = vmatpush1.msra.mxu0 0.0
  %2219 = vmatprep.subr.mxu0 0.0
  %2220 = vmatpush1.msra.mxu0 0.0
  %2221 = vmatprep.subr.mxu0 0.0
  %2222 = vmatpush1.msra.mxu0 0.0
  %2223 = vmatprep.subr.mxu0 0.0
  %2224 = vmatpush1.msra.mxu0 0.0
  %2225 = vmatprep.subr.mxu0 0.0
  %2226 = vmatpush1.msra.mxu0 0.0
  %2227 = vmatprep.subr.mxu0 0.0
  %2228 = vmatpush1.msra.mxu0 0.0
  %2229 = vmatprep.subr.mxu0 0.0
  %2230 = vmatpush1.msra.mxu0 0.0
  %2231 = vmatprep.subr.mxu0 0.0
  %2232 = vmatpush1.msra.mxu0 0.0
  %2233 = vmatprep.subr.mxu0 0.0
  %2234 = vmatpush1.msra.mxu0 0.0
  %2235 = vmatprep.subr.mxu0 0.0
  %2236 = vmatpush1.msra.mxu0 0.0
  %2237 = vmatprep.subr.mxu0 0.0
  %2238 = vmatpush1.msra.mxu0 0.0
  %2239 = vmatprep.subr.mxu0 0.0
  %2240 = vmatpush1.msra.mxu0 0.0
  %2241 = vmatprep.subr.mxu0 0.0
  %2242 = vmatpush1.msra.mxu0 0.0
  %2243 = vmatprep.subr.mxu0 0.0
  %2244 = vmatpush1.msra.mxu0 0.0
  %2245 = vmatprep.subr.mxu0 0.0
  %2246 = vmatpush1.msra.mxu0 0.0
  %2247 = vmatprep.subr.mxu0 0.0
  %2248 = vmatpush1.msra.mxu0 0.0
  %2249 = vmatprep.subr.mxu0 0.0
  %2250 = vmatpush1.msra.mxu0 0.0
  %2251 = vmatprep.subr.mxu0 0.0
  %2252 = vmatpush1.msra.mxu0 0.0
  %2253 = vmatprep.subr.mxu0 0.0
  %2254 = vmatpush1.msra.mxu0 0.0
  %2255 = vmatprep.subr.mxu0 0.0
  %2256 = vmatpush1.msra.mxu0 0.0
  %2257 = vmatprep.subr.mxu0 0.0
  %2258 = vmatpush1.msra.mxu0 0.0
  %2259 = vmatprep.subr.mxu0 0.0
  %2260 = vmatpush1.msra.mxu0 0.0
  %2261 = vmatprep.subr.mxu0 0.0
  %2262 = vmatpush1.msra.mxu0 0.0
  %2263 = vmatprep.mubr.f32.mxu0 0.0
  %2264 = vmatmul.mubr.f32.gmra.mrb[0].mxu0 %v2194
  %v2265 = vpop.f32.mrb[0].mxu0
  %v2266 = vadd.f32 0.0, %v2265
  %v2267 = vpop.f32.mrb[0].mxu0
  %2268 = vmatprep.mubr.f32.mxu0 0.0
  %2269 = vmatmul.mubr.f32.gmra.mrb[0].mxu0 %v2197
  %v2270 = vpop.f32.mrb[0].mxu0
  %v2271 = vadd.f32 0.0, %v2270
  %v2272 = vpop.f32.mrb[0].mxu0
  %2273 = vdwg.mxu0
  %v2274 = vadd.f32 %v1754, %v2266
  %v2275 = vadd.f32 %v1755, %v2271
  %v2276 = vadd.f32 %v124, %v2274
  %v2277 = vadd.f32 %v129, %v2275
  %v2278 = vsel %vm141, %v2276, 0.0
  %2279 = vadd.xlane.f32.xlu0 %v2278
  %v2280 = vpop.xlane.xlu0 %2279
  %v2281 = vsel %vm145, %v2277, 0.0
  %2282 = vadd.xlane.f32.xlu0 %v2281
  %v2283 = vpop.xlane.xlu0 %2282
  %v2284 = vmul.f32 %v2280, %v149
  %v2285 = vmul.f32 %v2283, %v149
  %v2286 = vsub.f32 %v2276, %v2284
  %v2287 = vsub.f32 %v2277, %v2285
  %v2288 = vmul.f32 %v2286, %v2286
  %v2289 = vmul.f32 %v2287, %v2287
  %v2290 = vsel %vm141, %v2288, 0.0
  %2291 = vadd.xlane.f32.xlu0 %v2290
  %v2292 = vpop.xlane.xlu0 %2291
  %v2293 = vsel %vm145, %v2289, 0.0
  %2294 = vadd.xlane.f32.xlu0 %v2293
  %v2295 = vpop.xlane.xlu0 %2294
  %v2296 = vmul.f32 %v2292, %v149
  %v2297 = vmul.f32 %v2295, %v149
  %v2298 = vadd.f32 %v2296, 1e-06
  %v2299 = vadd.f32 %v2297, 1e-06
  %v2300 = vrsqrt.pop %v2298
  %v2301 = vrsqrt.pop %v2299
  %v2302 = vmul.f32 %v2286, %v2300
  %v2303 = vmul.f32 %v2287, %v2301
  %v2304 = vlaneseq
  %v2305 = vshrl.u32 %v2304, 7
  %v2306 = vsub.s32 0, %v2305
  %v2307 = vrot.slane %v136, %v2306
  %v2308 = vmul.f32 %v2302, %v2307
  %v2309 = vmul.f32 %v2303, %v2307
  %v2310 = vlaneseq
  %v2311 = vshrl.u32 %v2310, 7
  %v2312 = vsub.s32 0, %v2311
  %v2313 = vrot.slane %v137, %v2312
  %v2314 = vadd.f32 %v2308, %v2313
  %v2315 = vadd.f32 %v2309, %v2313
  %v2316 = vld [vmem:[%s2] sm:$0xff]
  %v2317 = vld [vmem:[%s2 + $0x8] sm:$0xff]
  %v2318 = vld [vmem:[%s2 + $0x10] sm:$0xff]
  %v2319 = vld [vmem:[%s2 + $0x18] sm:$0xff]
  %v2320 = vlaneseq
  %v2321 = vshrl.u32 %v2320, 7
  %v2322 = vsub.s32 0, %v2321
  %v2323 = vrot.slane %v139, %v2322
  %v2325 = vsel %vm141, %v2314, 0
  %v2328 = vsel %vm141, %v2315, 0
  %2330 = vmatprep.subr.mxu0 0.0
  %2331 = vmatpush1.msra.mxu0 %v2316
  %2332 = vmatprep.subr.mxu0 0.0
  %2333 = vmatpush1.msra.mxu0 %v2317
  %2334 = vmatprep.subr.mxu0 0.0
  %2335 = vmatpush1.msra.mxu0 %v2318
  %2336 = vmatprep.subr.mxu0 0.0
  %2337 = vmatpush1.msra.mxu0 %v2319
  %2338 = vmatprep.subr.mxu0 0.0
  %2339 = vmatpush1.msra.mxu0 0.0
  %2340 = vmatprep.subr.mxu0 0.0
  %2341 = vmatpush1.msra.mxu0 0.0
  %2342 = vmatprep.subr.mxu0 0.0
  %2343 = vmatpush1.msra.mxu0 0.0
  %2344 = vmatprep.subr.mxu0 0.0
  %2345 = vmatpush1.msra.mxu0 0.0
  %2346 = vmatprep.subr.mxu0 0.0
  %2347 = vmatpush1.msra.mxu0 0.0
  %2348 = vmatprep.subr.mxu0 0.0
  %2349 = vmatpush1.msra.mxu0 0.0
  %2350 = vmatprep.subr.mxu0 0.0
  %2351 = vmatpush1.msra.mxu0 0.0
  %2352 = vmatprep.subr.mxu0 0.0
  %2353 = vmatpush1.msra.mxu0 0.0
  %2354 = vmatprep.subr.mxu0 0.0
  %2355 = vmatpush1.msra.mxu0 0.0
  %2356 = vmatprep.subr.mxu0 0.0
  %2357 = vmatpush1.msra.mxu0 0.0
  %2358 = vmatprep.subr.mxu0 0.0
  %2359 = vmatpush1.msra.mxu0 0.0
  %2360 = vmatprep.subr.mxu0 0.0
  %2361 = vmatpush1.msra.mxu0 0.0
  %2362 = vmatprep.subr.mxu0 0.0
  %2363 = vmatpush1.msra.mxu0 0.0
  %2364 = vmatprep.subr.mxu0 0.0
  %2365 = vmatpush1.msra.mxu0 0.0
  %2366 = vmatprep.subr.mxu0 0.0
  %2367 = vmatpush1.msra.mxu0 0.0
  %2368 = vmatprep.subr.mxu0 0.0
  %2369 = vmatpush1.msra.mxu0 0.0
  %2370 = vmatprep.subr.mxu0 0.0
  %2371 = vmatpush1.msra.mxu0 0.0
  %2372 = vmatprep.subr.mxu0 0.0
  %2373 = vmatpush1.msra.mxu0 0.0
  %2374 = vmatprep.subr.mxu0 0.0
  %2375 = vmatpush1.msra.mxu0 0.0
  %2376 = vmatprep.subr.mxu0 0.0
  %2377 = vmatpush1.msra.mxu0 0.0
  %2378 = vmatprep.subr.mxu0 0.0
  %2379 = vmatpush1.msra.mxu0 0.0
  %2380 = vmatprep.subr.mxu0 0.0
  %2381 = vmatpush1.msra.mxu0 0.0
  %2382 = vmatprep.subr.mxu0 0.0
  %2383 = vmatpush1.msra.mxu0 0.0
  %2384 = vmatprep.subr.mxu0 0.0
  %2385 = vmatpush1.msra.mxu0 0.0
  %2386 = vmatprep.subr.mxu0 0.0
  %2387 = vmatpush1.msra.mxu0 0.0
  %2388 = vmatprep.subr.mxu0 0.0
  %2389 = vmatpush1.msra.mxu0 0.0
  %2390 = vmatprep.subr.mxu0 0.0
  %2391 = vmatpush1.msra.mxu0 0.0
  %2392 = vmatprep.subr.mxu0 0.0
  %2393 = vmatpush1.msra.mxu0 0.0
  %2394 = vmatprep.mubr.f32.mxu0 0.0
  %2395 = vmatmul.mubr.f32.gmra.mrb[0].mxu0 %v2325
  %v2396 = vpop.f32.mrb[0].mxu0
  %v2397 = vadd.f32 %v2323, %v2396
  %v2398 = vpop.f32.mrb[0].mxu0
  %2399 = vmatprep.mubr.f32.mxu0 0.0
  %2400 = vmatmul.mubr.f32.gmra.mrb[0].mxu0 %v2328
  %v2401 = vpop.f32.mrb[0].mxu0
  %v2402 = vadd.f32 %v2323, %v2401
  %v2403 = vpop.f32.mrb[0].mxu0
  %2404 = vdwg.mxu0
  %v2405 = vmul.f32 %v2397, 0.5
  %v2406 = vmul.f32 %v2402, 0.5
  %v2407 = vmul.f32 %v2397, 0.70710677
  %v2408 = vmul.f32 %v2402, 0.70710677
  %v2409 = verf.f32.pop %v2407
  %v2410 = verf.f32.pop %v2408
  %v2411 = vadd.f32 %v2409, 1.0
  %v2412 = vadd.f32 %v2410, 1.0
  %v2413 = vmul.f32 %v2405, %v2411
  %v2414 = vmul.f32 %v2406, %v2412
  %v2415 = vld [vmem:[%s2 + $0x20] sm:$0xff]
  %v2416 = vld [vmem:[%s2 + $0x28] sm:$0xff]
  %v2417 = vld [vmem:[%s2 + $0x30] sm:$0xff]
  %v2418 = vld [vmem:[%s2 + $0x38] sm:$0xff]
  %v2419 = vld [vmem:[%s2 + $0x40] sm:$0xff]
  %v2420 = vld [vmem:[%s2 + $0x48] sm:$0xff]
  %v2421 = vld [vmem:[%s2 + $0x50] sm:$0xff]
  %v2422 = vld [vmem:[%s2 + $0x58] sm:$0xff]
  %v2423 = vld [vmem:[%s2 + $0x60] sm:$0xff]
  %v2424 = vld [vmem:[%s2 + $0x68] sm:$0xff]
  %v2425 = vld [vmem:[%s2 + $0x70] sm:$0xff]
  %v2426 = vld [vmem:[%s2 + $0x78] sm:$0xff]
  %v2427 = vld [vmem:[%s2 + $0x80] sm:$0xff]
  %v2428 = vld [vmem:[%s2 + $0x88] sm:$0xff]
  %v2429 = vld [vmem:[%s2 + $0x90] sm:$0xff]
  %v2430 = vld [vmem:[%s2 + $0x98] sm:$0xff]
  %v2431 = vlaneseq
  %v2432 = vshrl.u32 %v2431, 7
  %v2433 = vsub.s32 0, %v2432
  %v2434 = vrot.slane %v140, %v2433
  %2435 = vmatprep.subr.mxu0 0.0
  %2436 = vmatpush1.msra.mxu0 %v2415
  %2437 = vmatprep.subr.mxu0 0.0
  %2438 = vmatpush1.msra.mxu0 %v2416
  %2439 = vmatprep.subr.mxu0 0.0
  %2440 = vmatpush1.msra.mxu0 %v2417
  %2441 = vmatprep.subr.mxu0 0.0
  %2442 = vmatpush1.msra.mxu0 %v2418
  %2443 = vmatprep.subr.mxu0 0.0
  %2444 = vmatpush1.msra.mxu0 %v2419
  %2445 = vmatprep.subr.mxu0 0.0
  %2446 = vmatpush1.msra.mxu0 %v2420
  %2447 = vmatprep.subr.mxu0 0.0
  %2448 = vmatpush1.msra.mxu0 %v2421
  %2449 = vmatprep.subr.mxu0 0.0
  %2450 = vmatpush1.msra.mxu0 %v2422
  %2451 = vmatprep.subr.mxu0 0.0
  %2452 = vmatpush1.msra.mxu0 %v2423
  %2453 = vmatprep.subr.mxu0 0.0
  %2454 = vmatpush1.msra.mxu0 %v2424
  %2455 = vmatprep.subr.mxu0 0.0
  %2456 = vmatpush1.msra.mxu0 %v2425
  %2457 = vmatprep.subr.mxu0 0.0
  %2458 = vmatpush1.msra.mxu0 %v2426
  %2459 = vmatprep.subr.mxu0 0.0
  %2460 = vmatpush1.msra.mxu0 %v2427
  %2461 = vmatprep.subr.mxu0 0.0
  %2462 = vmatpush1.msra.mxu0 %v2428
  %2463 = vmatprep.subr.mxu0 0.0
  %2464 = vmatpush1.msra.mxu0 %v2429
  %2465 = vmatprep.subr.mxu0 0.0
  %2466 = vmatpush1.msra.mxu0 %v2430
  %2467 = vmatprep.subr.mxu0 0.0
  %2468 = vmatpush1.msra.mxu0 0.0
  %2469 = vmatprep.subr.mxu0 0.0
  %2470 = vmatpush1.msra.mxu0 0.0
  %2471 = vmatprep.subr.mxu0 0.0
  %2472 = vmatpush1.msra.mxu0 0.0
  %2473 = vmatprep.subr.mxu0 0.0
  %2474 = vmatpush1.msra.mxu0 0.0
  %2475 = vmatprep.subr.mxu0 0.0
  %2476 = vmatpush1.msra.mxu0 0.0
  %2477 = vmatprep.subr.mxu0 0.0
  %2478 = vmatpush1.msra.mxu0 0.0
  %2479 = vmatprep.subr.mxu0 0.0
  %2480 = vmatpush1.msra.mxu0 0.0
  %2481 = vmatprep.subr.mxu0 0.0
  %2482 = vmatpush1.msra.mxu0 0.0
  %2483 = vmatprep.subr.mxu0 0.0
  %2484 = vmatpush1.msra.mxu0 0.0
  %2485 = vmatprep.subr.mxu0 0.0
  %2486 = vmatpush1.msra.mxu0 0.0
  %2487 = vmatprep.subr.mxu0 0.0
  %2488 = vmatpush1.msra.mxu0 0.0
  %2489 = vmatprep.subr.mxu0 0.0
  %2490 = vmatpush1.msra.mxu0 0.0
  %2491 = vmatprep.subr.mxu0 0.0
  %2492 = vmatpush1.msra.mxu0 0.0
  %2493 = vmatprep.subr.mxu0 0.0
  %2494 = vmatpush1.msra.mxu0 0.0
  %2495 = vmatprep.subr.mxu0 0.0
  %2496 = vmatpush1.msra.mxu0 0.0
  %2497 = vmatprep.subr.mxu0 0.0
  %2498 = vmatpush1.msra.mxu0 0.0
  %2499 = vmatprep.mubr.f32.mxu0 0.0
  %2500 = vmatmul.mubr.f32.gmra.mrb[0].mxu0 %v2413
  %v2501 = vpop.f32.mrb[0].mxu0
  %v2502 = vadd.f32 %v2434, %v2501
  %v2503 = vpop.f32.mrb[0].mxu0
  %2504 = vmatprep.mubr.f32.mxu0 0.0
  %2505 = vmatmul.mubr.f32.gmra.mrb[0].mxu0 %v2414
  %v2506 = vpop.f32.mrb[0].mxu0
  %v2507 = vadd.f32 %v2434, %v2506
  %v2508 = vpop.f32.mrb[0].mxu0
  %2509 = vdwg.mxu0
  %v2510 = vadd.f32 %v2276, %v2502
  %v2511 = vadd.f32 %v2277, %v2507
  %v2512 = vld [vmem:[%s4 + $0x30] sm:$0x1]
  %v2513 = vld [vmem:[%s4 + $0x31] sm:$0x1]
  %v2514 = vld [vmem:[%s4 + $0x32] sm:$0x1]
  %v2515 = vld [vmem:[%s4 + $0x33] sm:$0x1]
  %v2516 = vld [vmem:[%s4 + $0x34] sm:$0x1]
  %v2517 = vld [vmem:[%s4 + $0x35] sm:$0x1]
  %v2518 = vld [vmem:[%s4 + $0x36] sm:$0x1]
  %v2519 = vsel %vm141, %v2510, 0.0
  %2520 = vadd.xlane.f32.xlu0 %v2519
  %v2521 = vpop.xlane.xlu0 %2520
  %v2522 = vsel %vm145, %v2511, 0.0
  %2523 = vadd.xlane.f32.xlu0 %v2522
  %v2524 = vpop.xlane.xlu0 %2523
  %v2525 = vmul.f32 %v2521, %v149
  %v2526 = vmul.f32 %v2524, %v149
  %v2527 = vsub.f32 %v2510, %v2525
  %v2528 = vsub.f32 %v2511, %v2526
  %v2529 = vmul.f32 %v2527, %v2527
  %v2530 = vmul.f32 %v2528, %v2528
  %v2531 = vsel %vm141, %v2529, 0.0
  %2532 = vadd.xlane.f32.xlu0 %v2531
  %v2533 = vpop.xlane.xlu0 %2532
  %v2534 = vsel %vm145, %v2530, 0.0
  %2535 = vadd.xlane.f32.xlu0 %v2534
  %v2536 = vpop.xlane.xlu0 %2535
  %v2537 = vmul.f32 %v2533, %v149
  %v2538 = vmul.f32 %v2536, %v149
  %v2539 = vadd.f32 %v2537, 1e-06
  %v2540 = vadd.f32 %v2538, 1e-06
  %v2541 = vrsqrt.pop %v2539
  %v2542 = vrsqrt.pop %v2540
  %v2543 = vmul.f32 %v2527, %v2541
  %v2544 = vmul.f32 %v2528, %v2542
  %v2545 = vlaneseq
  %v2546 = vshrl.u32 %v2545, 7
  %v2547 = vsub.s32 0, %v2546
  %v2548 = vrot.slane %v2512, %v2547
  %v2549 = vmul.f32 %v2543, %v2548
  %v2550 = vmul.f32 %v2544, %v2548
  %v2551 = vlaneseq
  %v2552 = vshrl.u32 %v2551, 7
  %v2553 = vsub.s32 0, %v2552
  %v2554 = vrot.slane %v2513, %v2553
  %v2555 = vadd.f32 %v2549, %v2554
  %v2556 = vadd.f32 %v2550, %v2554
  %v2557 = vsel %vm141, %v2555, 1.0
  %v2558 = vsel %vm141, %v2556, 1.0
  %s2559 = scalar_lea.vmem %s1, 480
  %v2560 = vld [vmem:[%s2559] sm:$0xff]
  %v2561 = vld [vmem:[%s2559 + $0x8] sm:$0xff]
  %v2562 = vld [vmem:[%s2559 + $0x10] sm:$0xff]
  %v2563 = vld [vmem:[%s2559 + $0x18] sm:$0xff]
  %v2564 = vld [vmem:[%s2559 + $0x20] sm:$0xff]
  %v2566 = vsel %vm189, %v2557, 0
  %v2569 = vsel %vm189, %v2558, 0
  %2571 = vmatprep.subr.mxu0 0.0
  %2572 = vmatpush1.msra.mxu0 %v2560
  %2573 = vmatprep.subr.mxu0 0.0
  %2574 = vmatpush1.msra.mxu0 %v2561
  %2575 = vmatprep.subr.mxu0 0.0
  %2576 = vmatpush1.msra.mxu0 %v2562
  %2577 = vmatprep.subr.mxu0 0.0
  %2578 = vmatpush1.msra.mxu0 %v2563
  %2579 = vmatprep.subr.mxu0 0.0
  %2580 = vmatpush1.msra.mxu0 %v2564
  %2581 = vmatprep.subr.mxu0 0.0
  %2582 = vmatpush1.msra.mxu0 0.0
  %2583 = vmatprep.subr.mxu0 0.0
  %2584 = vmatpush1.msra.mxu0 0.0
  %2585 = vmatprep.subr.mxu0 0.0
  %2586 = vmatpush1.msra.mxu0 0.0
  %2587 = vmatprep.subr.mxu0 0.0
  %2588 = vmatpush1.msra.mxu0 0.0
  %2589 = vmatprep.subr.mxu0 0.0
  %2590 = vmatpush1.msra.mxu0 0.0
  %2591 = vmatprep.subr.mxu0 0.0
  %2592 = vmatpush1.msra.mxu0 0.0
  %2593 = vmatprep.subr.mxu0 0.0
  %2594 = vmatpush1.msra.mxu0 0.0
  %2595 = vmatprep.subr.mxu0 0.0
  %2596 = vmatpush1.msra.mxu0 0.0
  %2597 = vmatprep.subr.mxu0 0.0
  %2598 = vmatpush1.msra.mxu0 0.0
  %2599 = vmatprep.subr.mxu0 0.0
  %2600 = vmatpush1.msra.mxu0 0.0
  %2601 = vmatprep.subr.mxu0 0.0
  %2602 = vmatpush1.msra.mxu0 0.0
  %2603 = vmatprep.subr.mxu0 0.0
  %2604 = vmatpush1.msra.mxu0 0.0
  %2605 = vmatprep.subr.mxu0 0.0
  %2606 = vmatpush1.msra.mxu0 0.0
  %2607 = vmatprep.subr.mxu0 0.0
  %2608 = vmatpush1.msra.mxu0 0.0
  %2609 = vmatprep.subr.mxu0 0.0
  %2610 = vmatpush1.msra.mxu0 0.0
  %2611 = vmatprep.subr.mxu0 0.0
  %2612 = vmatpush1.msra.mxu0 0.0
  %2613 = vmatprep.subr.mxu0 0.0
  %2614 = vmatpush1.msra.mxu0 0.0
  %2615 = vmatprep.subr.mxu0 0.0
  %2616 = vmatpush1.msra.mxu0 0.0
  %2617 = vmatprep.subr.mxu0 0.0
  %2618 = vmatpush1.msra.mxu0 0.0
  %2619 = vmatprep.subr.mxu0 0.0
  %2620 = vmatpush1.msra.mxu0 0.0
  %2621 = vmatprep.subr.mxu0 0.0
  %2622 = vmatpush1.msra.mxu0 0.0
  %2623 = vmatprep.subr.mxu0 0.0
  %2624 = vmatpush1.msra.mxu0 0.0
  %2625 = vmatprep.subr.mxu0 0.0
  %2626 = vmatpush1.msra.mxu0 0.0
  %2627 = vmatprep.subr.mxu0 0.0
  %2628 = vmatpush1.msra.mxu0 0.0
  %2629 = vmatprep.subr.mxu0 0.0
  %2630 = vmatpush1.msra.mxu0 0.0
  %2631 = vmatprep.subr.mxu0 0.0
  %2632 = vmatpush1.msra.mxu0 0.0
  %2633 = vmatprep.subr.mxu0 0.0
  %2634 = vmatpush1.msra.mxu0 0.0
  %2635 = vmatprep.mubr.f32.mxu0 0.0
  %2636 = vmatmul.mubr.f32.gmra.mrb[0].mxu0 %v2566
  %v2637 = vpop.f32.mrb[0].mxu0
  %v2638 = vadd.f32 0.0, %v2637
  %v2639 = vpop.f32.mrb[0].mxu0
  %2640 = vmatprep.mubr.f32.mxu0 0.0
  %2641 = vmatmul.mubr.f32.gmra.mrb[0].mxu0 %v2569
  %v2642 = vpop.f32.mrb[0].mxu0
  %v2643 = vadd.f32 0.0, %v2642
  %v2644 = vpop.f32.mrb[0].mxu0
  %2645 = vdwg.mxu0
  %s2646 = scalar_lea.vmem %s1, 520
  %v2647 = vld [vmem:[%s2646] sm:$0xff]
  %v2648 = vld [vmem:[%s2646 + $0x8] sm:$0xff]
  %v2649 = vld [vmem:[%s2646 + $0x10] sm:$0xff]
  %v2650 = vld [vmem:[%s2646 + $0x18] sm:$0xff]
  %v2651 = vld [vmem:[%s2646 + $0x20] sm:$0xff]
  %2652 = vmatprep.subr.mxu0 0.0
  %2653 = vmatpush1.msra.mxu0 %v2647
  %2654 = vmatprep.subr.mxu0 0.0
  %2655 = vmatpush1.msra.mxu0 %v2648
  %2656 = vmatprep.subr.mxu0 0.0
  %2657 = vmatpush1.msra.mxu0 %v2649
  %2658 = vmatprep.subr.mxu0 0.0
  %2659 = vmatpush1.msra.mxu0 %v2650
  %2660 = vmatprep.subr.mxu0 0.0
  %2661 = vmatpush1.msra.mxu0 %v2651
  %2662 = vmatprep.subr.mxu0 0.0
  %2663 = vmatpush1.msra.mxu0 0.0
  %2664 = vmatprep.subr.mxu0 0.0
  %2665 = vmatpush1.msra.mxu0 0.0
  %2666 = vmatprep.subr.mxu0 0.0
  %2667 = vmatpush1.msra.mxu0 0.0
  %2668 = vmatprep.subr.mxu0 0.0
  %2669 = vmatpush1.msra.mxu0 0.0
  %2670 = vmatprep.subr.mxu0 0.0
  %2671 = vmatpush1.msra.mxu0 0.0
  %2672 = vmatprep.subr.mxu0 0.0
  %2673 = vmatpush1.msra.mxu0 0.0
  %2674 = vmatprep.subr.mxu0 0.0
  %2675 = vmatpush1.msra.mxu0 0.0
  %2676 = vmatprep.subr.mxu0 0.0
  %2677 = vmatpush1.msra.mxu0 0.0
  %2678 = vmatprep.subr.mxu0 0.0
  %2679 = vmatpush1.msra.mxu0 0.0
  %2680 = vmatprep.subr.mxu0 0.0
  %2681 = vmatpush1.msra.mxu0 0.0
  %2682 = vmatprep.subr.mxu0 0.0
  %2683 = vmatpush1.msra.mxu0 0.0
  %2684 = vmatprep.subr.mxu0 0.0
  %2685 = vmatpush1.msra.mxu0 0.0
  %2686 = vmatprep.subr.mxu0 0.0
  %2687 = vmatpush1.msra.mxu0 0.0
  %2688 = vmatprep.subr.mxu0 0.0
  %2689 = vmatpush1.msra.mxu0 0.0
  %2690 = vmatprep.subr.mxu0 0.0
  %2691 = vmatpush1.msra.mxu0 0.0
  %2692 = vmatprep.subr.mxu0 0.0
  %2693 = vmatpush1.msra.mxu0 0.0
  %2694 = vmatprep.subr.mxu0 0.0
  %2695 = vmatpush1.msra.mxu0 0.0
  %2696 = vmatprep.subr.mxu0 0.0
  %2697 = vmatpush1.msra.mxu0 0.0
  %2698 = vmatprep.subr.mxu0 0.0
  %2699 = vmatpush1.msra.mxu0 0.0
  %2700 = vmatprep.subr.mxu0 0.0
  %2701 = vmatpush1.msra.mxu0 0.0
  %2702 = vmatprep.subr.mxu0 0.0
  %2703 = vmatpush1.msra.mxu0 0.0
  %2704 = vmatprep.subr.mxu0 0.0
  %2705 = vmatpush1.msra.mxu0 0.0
  %2706 = vmatprep.subr.mxu0 0.0
  %2707 = vmatpush1.msra.mxu0 0.0
  %2708 = vmatprep.subr.mxu0 0.0
  %2709 = vmatpush1.msra.mxu0 0.0
  %2710 = vmatprep.subr.mxu0 0.0
  %2711 = vmatpush1.msra.mxu0 0.0
  %2712 = vmatprep.subr.mxu0 0.0
  %2713 = vmatpush1.msra.mxu0 0.0
  %2714 = vmatprep.subr.mxu0 0.0
  %2715 = vmatpush1.msra.mxu0 0.0
  %2716 = vmatprep.mubr.f32.mxu0 0.0
  %2717 = vmatmul.mubr.f32.gmra.mrb[0].mxu0 %v2566
  %v2718 = vpop.f32.mrb[0].mxu0
  %v2719 = vadd.f32 0.0, %v2718
  %v2720 = vpop.f32.mrb[0].mxu0
  %2721 = vmatprep.mubr.f32.mxu0 0.0
  %2722 = vmatmul.mubr.f32.gmra.mrb[0].mxu0 %v2569
  %v2723 = vpop.f32.mrb[0].mxu0
  %v2724 = vadd.f32 0.0, %v2723
  %v2725 = vpop.f32.mrb[0].mxu0
  %2726 = vdwg.mxu0
  %s2727 = scalar_lea.vmem %s1, 560
  %v2728 = vld [vmem:[%s2727] sm:$0xff]
  %v2729 = vld [vmem:[%s2727 + $0x8] sm:$0xff]
  %v2730 = vld [vmem:[%s2727 + $0x10] sm:$0xff]
  %v2731 = vld [vmem:[%s2727 + $0x18] sm:$0xff]
  %v2732 = vld [vmem:[%s2727 + $0x20] sm:$0xff]
  %2733 = vmatprep.subr.mxu0 0.0
  %2734 = vmatpush1.msra.mxu0 %v2728
  %2735 = vmatprep.subr.mxu0 0.0
  %2736 = vmatpush1.msra.mxu0 %v2729
  %2737 = vmatprep.subr.mxu0 0.0
  %2738 = vmatpush1.msra.mxu0 %v2730
  %2739 = vmatprep.subr.mxu0 0.0
  %2740 = vmatpush1.msra.mxu0 %v2731
  %2741 = vmatprep.subr.mxu0 0.0
  %2742 = vmatpush1.msra.mxu0 %v2732
  %2743 = vmatprep.subr.mxu0 0.0
  %2744 = vmatpush1.msra.mxu0 0.0
  %2745 = vmatprep.subr.mxu0 0.0
  %2746 = vmatpush1.msra.mxu0 0.0
  %2747 = vmatprep.subr.mxu0 0.0
  %2748 = vmatpush1.msra.mxu0 0.0
  %2749 = vmatprep.subr.mxu0 0.0
  %2750 = vmatpush1.msra.mxu0 0.0
  %2751 = vmatprep.subr.mxu0 0.0
  %2752 = vmatpush1.msra.mxu0 0.0
  %2753 = vmatprep.subr.mxu0 0.0
  %2754 = vmatpush1.msra.mxu0 0.0
  %2755 = vmatprep.subr.mxu0 0.0
  %2756 = vmatpush1.msra.mxu0 0.0
  %2757 = vmatprep.subr.mxu0 0.0
  %2758 = vmatpush1.msra.mxu0 0.0
  %2759 = vmatprep.subr.mxu0 0.0
  %2760 = vmatpush1.msra.mxu0 0.0
  %2761 = vmatprep.subr.mxu0 0.0
  %2762 = vmatpush1.msra.mxu0 0.0
  %2763 = vmatprep.subr.mxu0 0.0
  %2764 = vmatpush1.msra.mxu0 0.0
  %2765 = vmatprep.subr.mxu0 0.0
  %2766 = vmatpush1.msra.mxu0 0.0
  %2767 = vmatprep.subr.mxu0 0.0
  %2768 = vmatpush1.msra.mxu0 0.0
  %2769 = vmatprep.subr.mxu0 0.0
  %2770 = vmatpush1.msra.mxu0 0.0
  %2771 = vmatprep.subr.mxu0 0.0
  %2772 = vmatpush1.msra.mxu0 0.0
  %2773 = vmatprep.subr.mxu0 0.0
  %2774 = vmatpush1.msra.mxu0 0.0
  %2775 = vmatprep.subr.mxu0 0.0
  %2776 = vmatpush1.msra.mxu0 0.0
  %2777 = vmatprep.subr.mxu0 0.0
  %2778 = vmatpush1.msra.mxu0 0.0
  %2779 = vmatprep.subr.mxu0 0.0
  %2780 = vmatpush1.msra.mxu0 0.0
  %2781 = vmatprep.subr.mxu0 0.0
  %2782 = vmatpush1.msra.mxu0 0.0
  %2783 = vmatprep.subr.mxu0 0.0
  %2784 = vmatpush1.msra.mxu0 0.0
  %2785 = vmatprep.subr.mxu0 0.0
  %2786 = vmatpush1.msra.mxu0 0.0
  %2787 = vmatprep.subr.mxu0 0.0
  %2788 = vmatpush1.msra.mxu0 0.0
  %2789 = vmatprep.subr.mxu0 0.0
  %2790 = vmatpush1.msra.mxu0 0.0
  %2791 = vmatprep.subr.mxu0 0.0
  %2792 = vmatpush1.msra.mxu0 0.0
  %2793 = vmatprep.subr.mxu0 0.0
  %2794 = vmatpush1.msra.mxu0 0.0
  %2795 = vmatprep.subr.mxu0 0.0
  %2796 = vmatpush1.msra.mxu0 0.0
  %2797 = vmatprep.mubr.f32.mxu0 0.0
  %2798 = vmatmul.mubr.f32.gmra.mrb[0].mxu0 %v2566
  %v2799 = vpop.f32.mrb[0].mxu0
  %v2800 = vadd.f32 0.0, %v2799
  %v2801 = vpop.f32.mrb[0].mxu0
  %2802 = vmatprep.mubr.f32.mxu0 0.0
  %2803 = vmatmul.mubr.f32.gmra.mrb[0].mxu0 %v2569
  %v2804 = vpop.f32.mrb[0].mxu0
  %v2805 = vadd.f32 0.0, %v2804
  %v2806 = vpop.f32.mrb[0].mxu0
  %2807 = vdwg.mxu0
  %v2809 = vsel %vm433, %v2638, 0
  %v2812 = vsel %vm433, %v2643, 0
  %v2815 = vsel %vm433, %v2719, 0
  %v2818 = vsel %vm433, %v2724, 0
  %2820 = vmatprep.subr.mxu0 0.0
  %2821 = vmatpush1.xpose.msra.mxu0 %v2815
  %2822 = vmatprep.subr.mxu0 0.0
  %2823 = vmatpush1.xpose.msra.mxu0 %v2818
  %2824 = vmatprep.subr.mxu0 0.0
  %2825 = vmatpush1.xpose.msra.mxu0 0.0
  %2826 = vmatprep.subr.mxu0 0.0
  %2827 = vmatpush1.xpose.msra.mxu0 0.0
  %2828 = vmatprep.subr.mxu0 0.0
  %2829 = vmatpush1.xpose.msra.mxu0 0.0
  %2830 = vmatprep.subr.mxu0 0.0
  %2831 = vmatpush1.xpose.msra.mxu0 0.0
  %2832 = vmatprep.subr.mxu0 0.0
  %2833 = vmatpush1.xpose.msra.mxu0 0.0
  %2834 = vmatprep.subr.mxu0 0.0
  %2835 = vmatpush1.xpose.msra.mxu0 0.0
  %2836 = vmatprep.subr.mxu0 0.0
  %2837 = vmatpush1.xpose.msra.mxu0 0.0
  %2838 = vmatprep.subr.mxu0 0.0
  %2839 = vmatpush1.xpose.msra.mxu0 0.0
  %2840 = vmatprep.subr.mxu0 0.0
  %2841 = vmatpush1.xpose.msra.mxu0 0.0
  %2842 = vmatprep.subr.mxu0 0.0
  %2843 = vmatpush1.xpose.msra.mxu0 0.0
  %2844 = vmatprep.subr.mxu0 0.0
  %2845 = vmatpush1.xpose.msra.mxu0 0.0
  %2846 = vmatprep.subr.mxu0 0.0
  %2847 = vmatpush1.xpose.msra.mxu0 0.0
  %2848 = vmatprep.subr.mxu0 0.0
  %2849 = vmatpush1.xpose.msra.mxu0 0.0
  %2850 = vmatprep.subr.mxu0 0.0
  %2851 = vmatpush1.xpose.msra.mxu0 0.0
  %2852 = vmatprep.subr.mxu0 0.0
  %2853 = vmatpush1.xpose.msra.mxu0 0.0
  %2854 = vmatprep.subr.mxu0 0.0
  %2855 = vmatpush1.xpose.msra.mxu0 0.0
  %2856 = vmatprep.subr.mxu0 0.0
  %2857 = vmatpush1.xpose.msra.mxu0 0.0
  %2858 = vmatprep.subr.mxu0 0.0
  %2859 = vmatpush1.xpose.msra.mxu0 0.0
  %2860 = vmatprep.subr.mxu0 0.0
  %2861 = vmatpush1.xpose.msra.mxu0 0.0
  %2862 = vmatprep.subr.mxu0 0.0
  %2863 = vmatpush1.xpose.msra.mxu0 0.0
  %2864 = vmatprep.subr.mxu0 0.0
  %2865 = vmatpush1.xpose.msra.mxu0 0.0
  %2866 = vmatprep.subr.mxu0 0.0
  %2867 = vmatpush1.xpose.msra.mxu0 0.0
  %2868 = vmatprep.subr.mxu0 0.0
  %2869 = vmatpush1.xpose.msra.mxu0 0.0
  %2870 = vmatprep.subr.mxu0 0.0
  %2871 = vmatpush1.xpose.msra.mxu0 0.0
  %2872 = vmatprep.subr.mxu0 0.0
  %2873 = vmatpush1.xpose.msra.mxu0 0.0
  %2874 = vmatprep.subr.mxu0 0.0
  %2875 = vmatpush1.xpose.msra.mxu0 0.0
  %2876 = vmatprep.subr.mxu0 0.0
  %2877 = vmatpush1.xpose.msra.mxu0 0.0
  %2878 = vmatprep.subr.mxu0 0.0
  %2879 = vmatpush1.xpose.msra.mxu0 0.0
  %2880 = vmatprep.subr.mxu0 0.0
  %2881 = vmatpush1.xpose.msra.mxu0 0.0
  %2882 = vmatprep.subr.mxu0 0.0
  %2883 = vmatpush1.xpose.msra.mxu0 0.0
  %2884 = vmatprep.mubr.f32.mxu0 0.0
  %2885 = vmatmul.mubr.f32.gmra.mrb[0].mxu0 %v2809
  %v2886 = vpop.f32.mrb[0].mxu0
  %v2887 = vadd.f32 %v132, %v2886
  %v2888 = vpop.f32.mrb[0].mxu0
  %2889 = vmatprep.mubr.f32.mxu0 0.0
  %2890 = vmatmul.mubr.f32.gmra.mrb[0].mxu0 %v2812
  %v2891 = vpop.f32.mrb[0].mxu0
  %v2892 = vadd.f32 %v133, %v2891
  %v2893 = vpop.f32.mrb[0].mxu0
  %2894 = vdwg.mxu0
  %v2895 = vsel %vm521, %v2887, -inf
  %2896 = vmax.xlane.f32.xlu0 %v2895
  %v2897 = vpop.xlane.xlu0 %2896
  %v2898 = vsel %vm525, %v2892, -inf
  %2899 = vmax.xlane.f32.xlu0 %v2898
  %v2900 = vpop.xlane.xlu0 %2899
  %v2901 = vsub.f32 %v2887, %v2897
  %v2902 = vsub.f32 %v2892, %v2900
  %v2903 = vmul.f32 %v2901, 1.442695
  %v2904 = vpow.pop %v2903
  %v2905 = vmul.f32 %v2902, 1.442695
  %v2906 = vpow.pop %v2905
  %v2907 = vsel %vm521, %v2904, 0.0
  %2908 = vadd.xlane.f32.xlu0 %v2907
  %v2909 = vpop.xlane.xlu0 %2908
  %v2910 = vsel %vm525, %v2906, 0.0
  %2911 = vadd.xlane.f32.xlu0 %v2910
  %v2912 = vpop.xlane.xlu0 %2911
  %v2913 = vrcp.pop %v2909
  %v2914 = vrcp.pop %v2912
  %v2915 = vmul.f32 %v2904, %v2913
  %v2916 = vmul.f32 %v2906, %v2914
  %v2918 = vsel %vm521, %v2915, 0
  %v2921 = vsel %vm521, %v2916, 0
  %v2924 = vsel %vm551, %v2805, 0
  %2926 = vmatprep.subr.mxu0 0.0
  %2927 = vmatpush1.msra.mxu0 %v2800
  %2928 = vmatprep.subr.mxu0 0.0
  %2929 = vmatpush1.msra.mxu0 %v2924
  %2930 = vmatprep.subr.mxu0 0.0
  %2931 = vmatpush1.msra.mxu0 0.0
  %2932 = vmatprep.subr.mxu0 0.0
  %2933 = vmatpush1.msra.mxu0 0.0
  %2934 = vmatprep.subr.mxu0 0.0
  %2935 = vmatpush1.msra.mxu0 0.0
  %2936 = vmatprep.subr.mxu0 0.0
  %2937 = vmatpush1.msra.mxu0 0.0
  %2938 = vmatprep.subr.mxu0 0.0
  %2939 = vmatpush1.msra.mxu0 0.0
  %2940 = vmatprep.subr.mxu0 0.0
  %2941 = vmatpush1.msra.mxu0 0.0
  %2942 = vmatprep.subr.mxu0 0.0
  %2943 = vmatpush1.msra.mxu0 0.0
  %2944 = vmatprep.subr.mxu0 0.0
  %2945 = vmatpush1.msra.mxu0 0.0
  %2946 = vmatprep.subr.mxu0 0.0
  %2947 = vmatpush1.msra.mxu0 0.0
  %2948 = vmatprep.subr.mxu0 0.0
  %2949 = vmatpush1.msra.mxu0 0.0
  %2950 = vmatprep.subr.mxu0 0.0
  %2951 = vmatpush1.msra.mxu0 0.0
  %2952 = vmatprep.subr.mxu0 0.0
  %2953 = vmatpush1.msra.mxu0 0.0
  %2954 = vmatprep.subr.mxu0 0.0
  %2955 = vmatpush1.msra.mxu0 0.0
  %2956 = vmatprep.subr.mxu0 0.0
  %2957 = vmatpush1.msra.mxu0 0.0
  %2958 = vmatprep.subr.mxu0 0.0
  %2959 = vmatpush1.msra.mxu0 0.0
  %2960 = vmatprep.subr.mxu0 0.0
  %2961 = vmatpush1.msra.mxu0 0.0
  %2962 = vmatprep.subr.mxu0 0.0
  %2963 = vmatpush1.msra.mxu0 0.0
  %2964 = vmatprep.subr.mxu0 0.0
  %2965 = vmatpush1.msra.mxu0 0.0
  %2966 = vmatprep.subr.mxu0 0.0
  %2967 = vmatpush1.msra.mxu0 0.0
  %2968 = vmatprep.subr.mxu0 0.0
  %2969 = vmatpush1.msra.mxu0 0.0
  %2970 = vmatprep.subr.mxu0 0.0
  %2971 = vmatpush1.msra.mxu0 0.0
  %2972 = vmatprep.subr.mxu0 0.0
  %2973 = vmatpush1.msra.mxu0 0.0
  %2974 = vmatprep.subr.mxu0 0.0
  %2975 = vmatpush1.msra.mxu0 0.0
  %2976 = vmatprep.subr.mxu0 0.0
  %2977 = vmatpush1.msra.mxu0 0.0
  %2978 = vmatprep.subr.mxu0 0.0
  %2979 = vmatpush1.msra.mxu0 0.0
  %2980 = vmatprep.subr.mxu0 0.0
  %2981 = vmatpush1.msra.mxu0 0.0
  %2982 = vmatprep.subr.mxu0 0.0
  %2983 = vmatpush1.msra.mxu0 0.0
  %2984 = vmatprep.subr.mxu0 0.0
  %2985 = vmatpush1.msra.mxu0 0.0
  %2986 = vmatprep.subr.mxu0 0.0
  %2987 = vmatpush1.msra.mxu0 0.0
  %2988 = vmatprep.subr.mxu0 0.0
  %2989 = vmatpush1.msra.mxu0 0.0
  %2990 = vmatprep.mubr.f32.mxu0 0.0
  %2991 = vmatmul.mubr.f32.gmra.mrb[0].mxu0 %v2918
  %v2992 = vpop.f32.mrb[0].mxu0
  %v2993 = vadd.f32 0.0, %v2992
  %v2994 = vpop.f32.mrb[0].mxu0
  %2995 = vmatprep.mubr.f32.mxu0 0.0
  %2996 = vmatmul.mubr.f32.gmra.mrb[0].mxu0 %v2921
  %v2997 = vpop.f32.mrb[0].mxu0
  %v2998 = vadd.f32 0.0, %v2997
  %v2999 = vpop.f32.mrb[0].mxu0
  %3000 = vdwg.mxu0
  %s3001 = scalar_lea.vmem %s2, 192
  %v3002 = vld [vmem:[%s3001 + $0xa0] sm:$0xff]
  %v3003 = vlaneseq
  %v3004 = vshrl.u32 %v3003, 7
  %v3005 = vsub.s32 0, %v3004
  %v3006 = vrot.slane %v2516, %v3005
  %v3008 = vsel %vm433, %v2993, 0
  %v3011 = vsel %vm433, %v2998, 0
  %3013 = vmatprep.subr.mxu0 0.0
  %3014 = vmatpush1.msra.mxu0 %v3002
  %3015 = vmatprep.subr.mxu0 0.0
  %3016 = vmatpush1.msra.mxu0 0.0
  %3017 = vmatprep.subr.mxu0 0.0
  %3018 = vmatpush1.msra.mxu0 0.0
  %3019 = vmatprep.subr.mxu0 0.0
  %3020 = vmatpush1.msra.mxu0 0.0
  %3021 = vmatprep.subr.mxu0 0.0
  %3022 = vmatpush1.msra.mxu0 0.0
  %3023 = vmatprep.subr.mxu0 0.0
  %3024 = vmatpush1.msra.mxu0 0.0
  %3025 = vmatprep.subr.mxu0 0.0
  %3026 = vmatpush1.msra.mxu0 0.0
  %3027 = vmatprep.subr.mxu0 0.0
  %3028 = vmatpush1.msra.mxu0 0.0
  %3029 = vmatprep.subr.mxu0 0.0
  %3030 = vmatpush1.msra.mxu0 0.0
  %3031 = vmatprep.subr.mxu0 0.0
  %3032 = vmatpush1.msra.mxu0 0.0
  %3033 = vmatprep.subr.mxu0 0.0
  %3034 = vmatpush1.msra.mxu0 0.0
  %3035 = vmatprep.subr.mxu0 0.0
  %3036 = vmatpush1.msra.mxu0 0.0
  %3037 = vmatprep.subr.mxu0 0.0
  %3038 = vmatpush1.msra.mxu0 0.0
  %3039 = vmatprep.subr.mxu0 0.0
  %3040 = vmatpush1.msra.mxu0 0.0
  %3041 = vmatprep.subr.mxu0 0.0
  %3042 = vmatpush1.msra.mxu0 0.0
  %3043 = vmatprep.subr.mxu0 0.0
  %3044 = vmatpush1.msra.mxu0 0.0
  %3045 = vmatprep.subr.mxu0 0.0
  %3046 = vmatpush1.msra.mxu0 0.0
  %3047 = vmatprep.subr.mxu0 0.0
  %3048 = vmatpush1.msra.mxu0 0.0
  %3049 = vmatprep.subr.mxu0 0.0
  %3050 = vmatpush1.msra.mxu0 0.0
  %3051 = vmatprep.subr.mxu0 0.0
  %3052 = vmatpush1.msra.mxu0 0.0
  %3053 = vmatprep.subr.mxu0 0.0
  %3054 = vmatpush1.msra.mxu0 0.0
  %3055 = vmatprep.subr.mxu0 0.0
  %3056 = vmatpush1.msra.mxu0 0.0
  %3057 = vmatprep.subr.mxu0 0.0
  %3058 = vmatpush1.msra.mxu0 0.0
  %3059 = vmatprep.subr.mxu0 0.0
  %3060 = vmatpush1.msra.mxu0 0.0
  %3061 = vmatprep.subr.mxu0 0.0
  %3062 = vmatpush1.msra.mxu0 0.0
  %3063 = vmatprep.subr.mxu0 0.0
  %3064 = vmatpush1.msra.mxu0 0.0
  %3065 = vmatprep.subr.mxu0 0.0
  %3066 = vmatpush1.msra.mxu0 0.0
  %3067 = vmatprep.subr.mxu0 0.0
  %3068 = vmatpush1.msra.mxu0 0.0
  %3069 = vmatprep.subr.mxu0 0.0
  %3070 = vmatpush1.msra.mxu0 0.0
  %3071 = vmatprep.subr.mxu0 0.0
  %3072 = vmatpush1.msra.mxu0 0.0
  %3073 = vmatprep.subr.mxu0 0.0
  %3074 = vmatpush1.msra.mxu0 0.0
  %3075 = vmatprep.subr.mxu0 0.0
  %3076 = vmatpush1.msra.mxu0 0.0
  %3077 = vmatprep.mubr.f32.mxu0 0.0
  %3078 = vmatmul.mubr.f32.gmra.mrb[0].mxu0 %v3008
  %v3079 = vpop.f32.mrb[0].mxu0
  %v3080 = vadd.f32 %v3006, %v3079
  %v3081 = vpop.f32.mrb[0].mxu0
  %3082 = vmatprep.mubr.f32.mxu0 0.0
  %3083 = vmatmul.mubr.f32.gmra.mrb[0].mxu0 %v3011
  %v3084 = vpop.f32.mrb[0].mxu0
  %v3085 = vadd.f32 %v3006, %v3084
  %v3086 = vpop.f32.mrb[0].mxu0
  %3087 = vdwg.mxu0
  %s3088 = scalar_lea.vmem %s1, 600
  %v3089 = vld [vmem:[%s3088] sm:$0xff]
  %v3090 = vld [vmem:[%s3088 + $0x8] sm:$0xff]
  %v3091 = vld [vmem:[%s3088 + $0x10] sm:$0xff]
  %v3092 = vld [vmem:[%s3088 + $0x18] sm:$0xff]
  %v3093 = vld [vmem:[%s3088 + $0x20] sm:$0xff]
  %3094 = vmatprep.subr.mxu0 0.0
  %3095 = vmatpush1.msra.mxu0 %v3089
  %3096 = vmatprep.subr.mxu0 0.0
  %3097 = vmatpush1.msra.mxu0 %v3090
  %3098 = vmatprep.subr.mxu0 0.0
  %3099 = vmatpush1.msra.mxu0 %v3091
  %3100 = vmatprep.subr.mxu0 0.0
  %3101 = vmatpush1.msra.mxu0 %v3092
  %3102 = vmatprep.subr.mxu0 0.0
  %3103 = vmatpush1.msra.mxu0 %v3093
  %3104 = vmatprep.subr.mxu0 0.0
  %3105 = vmatpush1.msra.mxu0 0.0
  %3106 = vmatprep.subr.mxu0 0.0
  %3107 = vmatpush1.msra.mxu0 0.0
  %3108 = vmatprep.subr.mxu0 0.0
  %3109 = vmatpush1.msra.mxu0 0.0
  %3110 = vmatprep.subr.mxu0 0.0
  %3111 = vmatpush1.msra.mxu0 0.0
  %3112 = vmatprep.subr.mxu0 0.0
  %3113 = vmatpush1.msra.mxu0 0.0
  %3114 = vmatprep.subr.mxu0 0.0
  %3115 = vmatpush1.msra.mxu0 0.0
  %3116 = vmatprep.subr.mxu0 0.0
  %3117 = vmatpush1.msra.mxu0 0.0
  %3118 = vmatprep.subr.mxu0 0.0
  %3119 = vmatpush1.msra.mxu0 0.0
  %3120 = vmatprep.subr.mxu0 0.0
  %3121 = vmatpush1.msra.mxu0 0.0
  %3122 = vmatprep.subr.mxu0 0.0
  %3123 = vmatpush1.msra.mxu0 0.0
  %3124 = vmatprep.subr.mxu0 0.0
  %3125 = vmatpush1.msra.mxu0 0.0
  %3126 = vmatprep.subr.mxu0 0.0
  %3127 = vmatpush1.msra.mxu0 0.0
  %3128 = vmatprep.subr.mxu0 0.0
  %3129 = vmatpush1.msra.mxu0 0.0
  %3130 = vmatprep.subr.mxu0 0.0
  %3131 = vmatpush1.msra.mxu0 0.0
  %3132 = vmatprep.subr.mxu0 0.0
  %3133 = vmatpush1.msra.mxu0 0.0
  %3134 = vmatprep.subr.mxu0 0.0
  %3135 = vmatpush1.msra.mxu0 0.0
  %3136 = vmatprep.subr.mxu0 0.0
  %3137 = vmatpush1.msra.mxu0 0.0
  %3138 = vmatprep.subr.mxu0 0.0
  %3139 = vmatpush1.msra.mxu0 0.0
  %3140 = vmatprep.subr.mxu0 0.0
  %3141 = vmatpush1.msra.mxu0 0.0
  %3142 = vmatprep.subr.mxu0 0.0
  %3143 = vmatpush1.msra.mxu0 0.0
  %3144 = vmatprep.subr.mxu0 0.0
  %3145 = vmatpush1.msra.mxu0 0.0
  %3146 = vmatprep.subr.mxu0 0.0
  %3147 = vmatpush1.msra.mxu0 0.0
  %3148 = vmatprep.subr.mxu0 0.0
  %3149 = vmatpush1.msra.mxu0 0.0
  %3150 = vmatprep.subr.mxu0 0.0
  %3151 = vmatpush1.msra.mxu0 0.0
  %3152 = vmatprep.subr.mxu0 0.0
  %3153 = vmatpush1.msra.mxu0 0.0
  %3154 = vmatprep.subr.mxu0 0.0
  %3155 = vmatpush1.msra.mxu0 0.0
  %3156 = vmatprep.subr.mxu0 0.0
  %3157 = vmatpush1.msra.mxu0 0.0
  %3158 = vmatprep.mubr.f32.mxu0 0.0
  %3159 = vmatmul.mubr.f32.gmra.mrb[0].mxu0 %v2566
  %v3160 = vpop.f32.mrb[0].mxu0
  %v3161 = vadd.f32 0.0, %v3160
  %v3162 = vpop.f32.mrb[0].mxu0
  %3163 = vmatprep.mubr.f32.mxu0 0.0
  %3164 = vmatmul.mubr.f32.gmra.mrb[0].mxu0 %v2569
  %v3165 = vpop.f32.mrb[0].mxu0
  %v3166 = vadd.f32 0.0, %v3165
  %v3167 = vpop.f32.mrb[0].mxu0
  %3168 = vdwg.mxu0
  %s3169 = scalar_lea.vmem %s1, 640
  %v3170 = vld [vmem:[%s3169] sm:$0xff]
  %v3171 = vld [vmem:[%s3169 + $0x8] sm:$0xff]
  %v3172 = vld [vmem:[%s3169 + $0x10] sm:$0xff]
  %v3173 = vld [vmem:[%s3169 + $0x18] sm:$0xff]
  %v3174 = vld [vmem:[%s3169 + $0x20] sm:$0xff]
  %3175 = vmatprep.subr.mxu0 0.0
  %3176 = vmatpush1.msra.mxu0 %v3170
  %3177 = vmatprep.subr.mxu0 0.0
  %3178 = vmatpush1.msra.mxu0 %v3171
  %3179 = vmatprep.subr.mxu0 0.0
  %3180 = vmatpush1.msra.mxu0 %v3172
  %3181 = vmatprep.subr.mxu0 0.0
  %3182 = vmatpush1.msra.mxu0 %v3173
  %3183 = vmatprep.subr.mxu0 0.0
  %3184 = vmatpush1.msra.mxu0 %v3174
  %3185 = vmatprep.subr.mxu0 0.0
  %3186 = vmatpush1.msra.mxu0 0.0
  %3187 = vmatprep.subr.mxu0 0.0
  %3188 = vmatpush1.msra.mxu0 0.0
  %3189 = vmatprep.subr.mxu0 0.0
  %3190 = vmatpush1.msra.mxu0 0.0
  %3191 = vmatprep.subr.mxu0 0.0
  %3192 = vmatpush1.msra.mxu0 0.0
  %3193 = vmatprep.subr.mxu0 0.0
  %3194 = vmatpush1.msra.mxu0 0.0
  %3195 = vmatprep.subr.mxu0 0.0
  %3196 = vmatpush1.msra.mxu0 0.0
  %3197 = vmatprep.subr.mxu0 0.0
  %3198 = vmatpush1.msra.mxu0 0.0
  %3199 = vmatprep.subr.mxu0 0.0
  %3200 = vmatpush1.msra.mxu0 0.0
  %3201 = vmatprep.subr.mxu0 0.0
  %3202 = vmatpush1.msra.mxu0 0.0
  %3203 = vmatprep.subr.mxu0 0.0
  %3204 = vmatpush1.msra.mxu0 0.0
  %3205 = vmatprep.subr.mxu0 0.0
  %3206 = vmatpush1.msra.mxu0 0.0
  %3207 = vmatprep.subr.mxu0 0.0
  %3208 = vmatpush1.msra.mxu0 0.0
  %3209 = vmatprep.subr.mxu0 0.0
  %3210 = vmatpush1.msra.mxu0 0.0
  %3211 = vmatprep.subr.mxu0 0.0
  %3212 = vmatpush1.msra.mxu0 0.0
  %3213 = vmatprep.subr.mxu0 0.0
  %3214 = vmatpush1.msra.mxu0 0.0
  %3215 = vmatprep.subr.mxu0 0.0
  %3216 = vmatpush1.msra.mxu0 0.0
  %3217 = vmatprep.subr.mxu0 0.0
  %3218 = vmatpush1.msra.mxu0 0.0
  %3219 = vmatprep.subr.mxu0 0.0
  %3220 = vmatpush1.msra.mxu0 0.0
  %3221 = vmatprep.subr.mxu0 0.0
  %3222 = vmatpush1.msra.mxu0 0.0
  %3223 = vmatprep.subr.mxu0 0.0
  %3224 = vmatpush1.msra.mxu0 0.0
  %3225 = vmatprep.subr.mxu0 0.0
  %3226 = vmatpush1.msra.mxu0 0.0
  %3227 = vmatprep.subr.mxu0 0.0
  %3228 = vmatpush1.msra.mxu0 0.0
  %3229 = vmatprep.subr.mxu0 0.0
  %3230 = vmatpush1.msra.mxu0 0.0
  %3231 = vmatprep.subr.mxu0 0.0
  %3232 = vmatpush1.msra.mxu0 0.0
  %3233 = vmatprep.subr.mxu0 0.0
  %3234 = vmatpush1.msra.mxu0 0.0
  %3235 = vmatprep.subr.mxu0 0.0
  %3236 = vmatpush1.msra.mxu0 0.0
  %3237 = vmatprep.subr.mxu0 0.0
  %3238 = vmatpush1.msra.mxu0 0.0
  %3239 = vmatprep.mubr.f32.mxu0 0.0
  %3240 = vmatmul.mubr.f32.gmra.mrb[0].mxu0 %v2566
  %v3241 = vpop.f32.mrb[0].mxu0
  %v3242 = vadd.f32 0.0, %v3241
  %v3243 = vpop.f32.mrb[0].mxu0
  %3244 = vmatprep.mubr.f32.mxu0 0.0
  %3245 = vmatmul.mubr.f32.gmra.mrb[0].mxu0 %v2569
  %v3246 = vpop.f32.mrb[0].mxu0
  %v3247 = vadd.f32 0.0, %v3246
  %v3248 = vpop.f32.mrb[0].mxu0
  %3249 = vdwg.mxu0
  %s3250 = scalar_lea.vmem %s1, 680
  %v3251 = vld [vmem:[%s3250] sm:$0xff]
  %v3252 = vld [vmem:[%s3250 + $0x8] sm:$0xff]
  %v3253 = vld [vmem:[%s3250 + $0x10] sm:$0xff]
  %v3254 = vld [vmem:[%s3250 + $0x18] sm:$0xff]
  %v3255 = vld [vmem:[%s3250 + $0x20] sm:$0xff]
  %3256 = vmatprep.subr.mxu0 0.0
  %3257 = vmatpush1.msra.mxu0 %v3251
  %3258 = vmatprep.subr.mxu0 0.0
  %3259 = vmatpush1.msra.mxu0 %v3252
  %3260 = vmatprep.subr.mxu0 0.0
  %3261 = vmatpush1.msra.mxu0 %v3253
  %3262 = vmatprep.subr.mxu0 0.0
  %3263 = vmatpush1.msra.mxu0 %v3254
  %3264 = vmatprep.subr.mxu0 0.0
  %3265 = vmatpush1.msra.mxu0 %v3255
  %3266 = vmatprep.subr.mxu0 0.0
  %3267 = vmatpush1.msra.mxu0 0.0
  %3268 = vmatprep.subr.mxu0 0.0
  %3269 = vmatpush1.msra.mxu0 0.0
  %3270 = vmatprep.subr.mxu0 0.0
  %3271 = vmatpush1.msra.mxu0 0.0
  %3272 = vmatprep.subr.mxu0 0.0
  %3273 = vmatpush1.msra.mxu0 0.0
  %3274 = vmatprep.subr.mxu0 0.0
  %3275 = vmatpush1.msra.mxu0 0.0
  %3276 = vmatprep.subr.mxu0 0.0
  %3277 = vmatpush1.msra.mxu0 0.0
  %3278 = vmatprep.subr.mxu0 0.0
  %3279 = vmatpush1.msra.mxu0 0.0
  %3280 = vmatprep.subr.mxu0 0.0
  %3281 = vmatpush1.msra.mxu0 0.0
  %3282 = vmatprep.subr.mxu0 0.0
  %3283 = vmatpush1.msra.mxu0 0.0
  %3284 = vmatprep.subr.mxu0 0.0
  %3285 = vmatpush1.msra.mxu0 0.0
  %3286 = vmatprep.subr.mxu0 0.0
  %3287 = vmatpush1.msra.mxu0 0.0
  %3288 = vmatprep.subr.mxu0 0.0
  %3289 = vmatpush1.msra.mxu0 0.0
  %3290 = vmatprep.subr.mxu0 0.0
  %3291 = vmatpush1.msra.mxu0 0.0
  %3292 = vmatprep.subr.mxu0 0.0
  %3293 = vmatpush1.msra.mxu0 0.0
  %3294 = vmatprep.subr.mxu0 0.0
  %3295 = vmatpush1.msra.mxu0 0.0
  %3296 = vmatprep.subr.mxu0 0.0
  %3297 = vmatpush1.msra.mxu0 0.0
  %3298 = vmatprep.subr.mxu0 0.0
  %3299 = vmatpush1.msra.mxu0 0.0
  %3300 = vmatprep.subr.mxu0 0.0
  %3301 = vmatpush1.msra.mxu0 0.0
  %3302 = vmatprep.subr.mxu0 0.0
  %3303 = vmatpush1.msra.mxu0 0.0
  %3304 = vmatprep.subr.mxu0 0.0
  %3305 = vmatpush1.msra.mxu0 0.0
  %3306 = vmatprep.subr.mxu0 0.0
  %3307 = vmatpush1.msra.mxu0 0.0
  %3308 = vmatprep.subr.mxu0 0.0
  %3309 = vmatpush1.msra.mxu0 0.0
  %3310 = vmatprep.subr.mxu0 0.0
  %3311 = vmatpush1.msra.mxu0 0.0
  %3312 = vmatprep.subr.mxu0 0.0
  %3313 = vmatpush1.msra.mxu0 0.0
  %3314 = vmatprep.subr.mxu0 0.0
  %3315 = vmatpush1.msra.mxu0 0.0
  %3316 = vmatprep.subr.mxu0 0.0
  %3317 = vmatpush1.msra.mxu0 0.0
  %3318 = vmatprep.subr.mxu0 0.0
  %3319 = vmatpush1.msra.mxu0 0.0
  %3320 = vmatprep.mubr.f32.mxu0 0.0
  %3321 = vmatmul.mubr.f32.gmra.mrb[0].mxu0 %v2566
  %v3322 = vpop.f32.mrb[0].mxu0
  %v3323 = vadd.f32 0.0, %v3322
  %v3324 = vpop.f32.mrb[0].mxu0
  %3325 = vmatprep.mubr.f32.mxu0 0.0
  %3326 = vmatmul.mubr.f32.gmra.mrb[0].mxu0 %v2569
  %v3327 = vpop.f32.mrb[0].mxu0
  %v3328 = vadd.f32 0.0, %v3327
  %v3329 = vpop.f32.mrb[0].mxu0
  %3330 = vdwg.mxu0
  %v3332 = vsel %vm433, %v3161, 0
  %v3335 = vsel %vm433, %v3166, 0
  %v3338 = vsel %vm433, %v3242, 0
  %v3341 = vsel %vm433, %v3247, 0
  %3343 = vmatprep.subr.mxu0 0.0
  %3344 = vmatpush1.xpose.msra.mxu0 %v3338
  %3345 = vmatprep.subr.mxu0 0.0
  %3346 = vmatpush1.xpose.msra.mxu0 %v3341
  %3347 = vmatprep.subr.mxu0 0.0
  %3348 = vmatpush1.xpose.msra.mxu0 0.0
  %3349 = vmatprep.subr.mxu0 0.0
  %3350 = vmatpush1.xpose.msra.mxu0 0.0
  %3351 = vmatprep.subr.mxu0 0.0
  %3352 = vmatpush1.xpose.msra.mxu0 0.0
  %3353 = vmatprep.subr.mxu0 0.0
  %3354 = vmatpush1.xpose.msra.mxu0 0.0
  %3355 = vmatprep.subr.mxu0 0.0
  %3356 = vmatpush1.xpose.msra.mxu0 0.0
  %3357 = vmatprep.subr.mxu0 0.0
  %3358 = vmatpush1.xpose.msra.mxu0 0.0
  %3359 = vmatprep.subr.mxu0 0.0
  %3360 = vmatpush1.xpose.msra.mxu0 0.0
  %3361 = vmatprep.subr.mxu0 0.0
  %3362 = vmatpush1.xpose.msra.mxu0 0.0
  %3363 = vmatprep.subr.mxu0 0.0
  %3364 = vmatpush1.xpose.msra.mxu0 0.0
  %3365 = vmatprep.subr.mxu0 0.0
  %3366 = vmatpush1.xpose.msra.mxu0 0.0
  %3367 = vmatprep.subr.mxu0 0.0
  %3368 = vmatpush1.xpose.msra.mxu0 0.0
  %3369 = vmatprep.subr.mxu0 0.0
  %3370 = vmatpush1.xpose.msra.mxu0 0.0
  %3371 = vmatprep.subr.mxu0 0.0
  %3372 = vmatpush1.xpose.msra.mxu0 0.0
  %3373 = vmatprep.subr.mxu0 0.0
  %3374 = vmatpush1.xpose.msra.mxu0 0.0
  %3375 = vmatprep.subr.mxu0 0.0
  %3376 = vmatpush1.xpose.msra.mxu0 0.0
  %3377 = vmatprep.subr.mxu0 0.0
  %3378 = vmatpush1.xpose.msra.mxu0 0.0
  %3379 = vmatprep.subr.mxu0 0.0
  %3380 = vmatpush1.xpose.msra.mxu0 0.0
  %3381 = vmatprep.subr.mxu0 0.0
  %3382 = vmatpush1.xpose.msra.mxu0 0.0
  %3383 = vmatprep.subr.mxu0 0.0
  %3384 = vmatpush1.xpose.msra.mxu0 0.0
  %3385 = vmatprep.subr.mxu0 0.0
  %3386 = vmatpush1.xpose.msra.mxu0 0.0
  %3387 = vmatprep.subr.mxu0 0.0
  %3388 = vmatpush1.xpose.msra.mxu0 0.0
  %3389 = vmatprep.subr.mxu0 0.0
  %3390 = vmatpush1.xpose.msra.mxu0 0.0
  %3391 = vmatprep.subr.mxu0 0.0
  %3392 = vmatpush1.xpose.msra.mxu0 0.0
  %3393 = vmatprep.subr.mxu0 0.0
  %3394 = vmatpush1.xpose.msra.mxu0 0.0
  %3395 = vmatprep.subr.mxu0 0.0
  %3396 = vmatpush1.xpose.msra.mxu0 0.0
  %3397 = vmatprep.subr.mxu0 0.0
  %3398 = vmatpush1.xpose.msra.mxu0 0.0
  %3399 = vmatprep.subr.mxu0 0.0
  %3400 = vmatpush1.xpose.msra.mxu0 0.0
  %3401 = vmatprep.subr.mxu0 0.0
  %3402 = vmatpush1.xpose.msra.mxu0 0.0
  %3403 = vmatprep.subr.mxu0 0.0
  %3404 = vmatpush1.xpose.msra.mxu0 0.0
  %3405 = vmatprep.subr.mxu0 0.0
  %3406 = vmatpush1.xpose.msra.mxu0 0.0
  %3407 = vmatprep.mubr.f32.mxu0 0.0
  %3408 = vmatmul.mubr.f32.gmra.mrb[0].mxu0 %v3332
  %v3409 = vpop.f32.mrb[0].mxu0
  %v3410 = vadd.f32 %v132, %v3409
  %v3411 = vpop.f32.mrb[0].mxu0
  %3412 = vmatprep.mubr.f32.mxu0 0.0
  %3413 = vmatmul.mubr.f32.gmra.mrb[0].mxu0 %v3335
  %v3414 = vpop.f32.mrb[0].mxu0
  %v3415 = vadd.f32 %v133, %v3414
  %v3416 = vpop.f32.mrb[0].mxu0
  %3417 = vdwg.mxu0
  %v3418 = vsel %vm521, %v3410, -inf
  %3419 = vmax.xlane.f32.xlu0 %v3418
  %v3420 = vpop.xlane.xlu0 %3419
  %v3421 = vsel %vm525, %v3415, -inf
  %3422 = vmax.xlane.f32.xlu0 %v3421
  %v3423 = vpop.xlane.xlu0 %3422
  %v3424 = vsub.f32 %v3410, %v3420
  %v3425 = vsub.f32 %v3415, %v3423
  %v3426 = vmul.f32 %v3424, 1.442695
  %v3427 = vpow.pop %v3426
  %v3428 = vmul.f32 %v3425, 1.442695
  %v3429 = vpow.pop %v3428
  %v3430 = vsel %vm521, %v3427, 0.0
  %3431 = vadd.xlane.f32.xlu0 %v3430
  %v3432 = vpop.xlane.xlu0 %3431
  %v3433 = vsel %vm525, %v3429, 0.0
  %3434 = vadd.xlane.f32.xlu0 %v3433
  %v3435 = vpop.xlane.xlu0 %3434
  %v3436 = vrcp.pop %v3432
  %v3437 = vrcp.pop %v3435
  %v3438 = vmul.f32 %v3427, %v3436
  %v3439 = vmul.f32 %v3429, %v3437
  %v3441 = vsel %vm521, %v3438, 0
  %v3444 = vsel %vm521, %v3439, 0
  %v3447 = vsel %vm551, %v3328, 0
  %3449 = vmatprep.subr.mxu0 0.0
  %3450 = vmatpush1.msra.mxu0 %v3323
  %3451 = vmatprep.subr.mxu0 0.0
  %3452 = vmatpush1.msra.mxu0 %v3447
  %3453 = vmatprep.subr.mxu0 0.0
  %3454 = vmatpush1.msra.mxu0 0.0
  %3455 = vmatprep.subr.mxu0 0.0
  %3456 = vmatpush1.msra.mxu0 0.0
  %3457 = vmatprep.subr.mxu0 0.0
  %3458 = vmatpush1.msra.mxu0 0.0
  %3459 = vmatprep.subr.mxu0 0.0
  %3460 = vmatpush1.msra.mxu0 0.0
  %3461 = vmatprep.subr.mxu0 0.0
  %3462 = vmatpush1.msra.mxu0 0.0
  %3463 = vmatprep.subr.mxu0 0.0
  %3464 = vmatpush1.msra.mxu0 0.0
  %3465 = vmatprep.subr.mxu0 0.0
  %3466 = vmatpush1.msra.mxu0 0.0
  %3467 = vmatprep.subr.mxu0 0.0
  %3468 = vmatpush1.msra.mxu0 0.0
  %3469 = vmatprep.subr.mxu0 0.0
  %3470 = vmatpush1.msra.mxu0 0.0
  %3471 = vmatprep.subr.mxu0 0.0
  %3472 = vmatpush1.msra.mxu0 0.0
  %3473 = vmatprep.subr.mxu0 0.0
  %3474 = vmatpush1.msra.mxu0 0.0
  %3475 = vmatprep.subr.mxu0 0.0
  %3476 = vmatpush1.msra.mxu0 0.0
  %3477 = vmatprep.subr.mxu0 0.0
  %3478 = vmatpush1.msra.mxu0 0.0
  %3479 = vmatprep.subr.mxu0 0.0
  %3480 = vmatpush1.msra.mxu0 0.0
  %3481 = vmatprep.subr.mxu0 0.0
  %3482 = vmatpush1.msra.mxu0 0.0
  %3483 = vmatprep.subr.mxu0 0.0
  %3484 = vmatpush1.msra.mxu0 0.0
  %3485 = vmatprep.subr.mxu0 0.0
  %3486 = vmatpush1.msra.mxu0 0.0
  %3487 = vmatprep.subr.mxu0 0.0
  %3488 = vmatpush1.msra.mxu0 0.0
  %3489 = vmatprep.subr.mxu0 0.0
  %3490 = vmatpush1.msra.mxu0 0.0
  %3491 = vmatprep.subr.mxu0 0.0
  %3492 = vmatpush1.msra.mxu0 0.0
  %3493 = vmatprep.subr.mxu0 0.0
  %3494 = vmatpush1.msra.mxu0 0.0
  %3495 = vmatprep.subr.mxu0 0.0
  %3496 = vmatpush1.msra.mxu0 0.0
  %3497 = vmatprep.subr.mxu0 0.0
  %3498 = vmatpush1.msra.mxu0 0.0
  %3499 = vmatprep.subr.mxu0 0.0
  %3500 = vmatpush1.msra.mxu0 0.0
  %3501 = vmatprep.subr.mxu0 0.0
  %3502 = vmatpush1.msra.mxu0 0.0
  %3503 = vmatprep.subr.mxu0 0.0
  %3504 = vmatpush1.msra.mxu0 0.0
  %3505 = vmatprep.subr.mxu0 0.0
  %3506 = vmatpush1.msra.mxu0 0.0
  %3507 = vmatprep.subr.mxu0 0.0
  %3508 = vmatpush1.msra.mxu0 0.0
  %3509 = vmatprep.subr.mxu0 0.0
  %3510 = vmatpush1.msra.mxu0 0.0
  %3511 = vmatprep.subr.mxu0 0.0
  %3512 = vmatpush1.msra.mxu0 0.0
  %3513 = vmatprep.mubr.f32.mxu0 0.0
  %3514 = vmatmul.mubr.f32.gmra.mrb[0].mxu0 %v3441
  %v3515 = vpop.f32.mrb[0].mxu0
  %v3516 = vadd.f32 0.0, %v3515
  %v3517 = vpop.f32.mrb[0].mxu0
  %3518 = vmatprep.mubr.f32.mxu0 0.0
  %3519 = vmatmul.mubr.f32.gmra.mrb[0].mxu0 %v3444
  %v3520 = vpop.f32.mrb[0].mxu0
  %v3521 = vadd.f32 0.0, %v3520
  %v3522 = vpop.f32.mrb[0].mxu0
  %3523 = vdwg.mxu0
  %v3524 = vld [vmem:[%s3001 + $0xa8] sm:$0xff]
  %v3526 = vsel %vm433, %v3516, 0
  %v3529 = vsel %vm433, %v3521, 0
  %3531 = vmatprep.subr.mxu0 0.0
  %3532 = vmatpush1.msra.mxu0 %v3524
  %3533 = vmatprep.subr.mxu0 0.0
  %3534 = vmatpush1.msra.mxu0 0.0
  %3535 = vmatprep.subr.mxu0 0.0
  %3536 = vmatpush1.msra.mxu0 0.0
  %3537 = vmatprep.subr.mxu0 0.0
  %3538 = vmatpush1.msra.mxu0 0.0
  %3539 = vmatprep.subr.mxu0 0.0
  %3540 = vmatpush1.msra.mxu0 0.0
  %3541 = vmatprep.subr.mxu0 0.0
  %3542 = vmatpush1.msra.mxu0 0.0
  %3543 = vmatprep.subr.mxu0 0.0
  %3544 = vmatpush1.msra.mxu0 0.0
  %3545 = vmatprep.subr.mxu0 0.0
  %3546 = vmatpush1.msra.mxu0 0.0
  %3547 = vmatprep.subr.mxu0 0.0
  %3548 = vmatpush1.msra.mxu0 0.0
  %3549 = vmatprep.subr.mxu0 0.0
  %3550 = vmatpush1.msra.mxu0 0.0
  %3551 = vmatprep.subr.mxu0 0.0
  %3552 = vmatpush1.msra.mxu0 0.0
  %3553 = vmatprep.subr.mxu0 0.0
  %3554 = vmatpush1.msra.mxu0 0.0
  %3555 = vmatprep.subr.mxu0 0.0
  %3556 = vmatpush1.msra.mxu0 0.0
  %3557 = vmatprep.subr.mxu0 0.0
  %3558 = vmatpush1.msra.mxu0 0.0
  %3559 = vmatprep.subr.mxu0 0.0
  %3560 = vmatpush1.msra.mxu0 0.0
  %3561 = vmatprep.subr.mxu0 0.0
  %3562 = vmatpush1.msra.mxu0 0.0
  %3563 = vmatprep.subr.mxu0 0.0
  %3564 = vmatpush1.msra.mxu0 0.0
  %3565 = vmatprep.subr.mxu0 0.0
  %3566 = vmatpush1.msra.mxu0 0.0
  %3567 = vmatprep.subr.mxu0 0.0
  %3568 = vmatpush1.msra.mxu0 0.0
  %3569 = vmatprep.subr.mxu0 0.0
  %3570 = vmatpush1.msra.mxu0 0.0
  %3571 = vmatprep.subr.mxu0 0.0
  %3572 = vmatpush1.msra.mxu0 0.0
  %3573 = vmatprep.subr.mxu0 0.0
  %3574 = vmatpush1.msra.mxu0 0.0
  %3575 = vmatprep.subr.mxu0 0.0
  %3576 = vmatpush1.msra.mxu0 0.0
  %3577 = vmatprep.subr.mxu0 0.0
  %3578 = vmatpush1.msra.mxu0 0.0
  %3579 = vmatprep.subr.mxu0 0.0
  %3580 = vmatpush1.msra.mxu0 0.0
  %3581 = vmatprep.subr.mxu0 0.0
  %3582 = vmatpush1.msra.mxu0 0.0
  %3583 = vmatprep.subr.mxu0 0.0
  %3584 = vmatpush1.msra.mxu0 0.0
  %3585 = vmatprep.subr.mxu0 0.0
  %3586 = vmatpush1.msra.mxu0 0.0
  %3587 = vmatprep.subr.mxu0 0.0
  %3588 = vmatpush1.msra.mxu0 0.0
  %3589 = vmatprep.subr.mxu0 0.0
  %3590 = vmatpush1.msra.mxu0 0.0
  %3591 = vmatprep.subr.mxu0 0.0
  %3592 = vmatpush1.msra.mxu0 0.0
  %3593 = vmatprep.subr.mxu0 0.0
  %3594 = vmatpush1.msra.mxu0 0.0
  %3595 = vmatprep.mubr.f32.mxu0 0.0
  %3596 = vmatmul.mubr.f32.gmra.mrb[0].mxu0 %v3526
  %v3597 = vpop.f32.mrb[0].mxu0
  %v3598 = vadd.f32 0.0, %v3597
  %v3599 = vpop.f32.mrb[0].mxu0
  %3600 = vmatprep.mubr.f32.mxu0 0.0
  %3601 = vmatmul.mubr.f32.gmra.mrb[0].mxu0 %v3529
  %v3602 = vpop.f32.mrb[0].mxu0
  %v3603 = vadd.f32 0.0, %v3602
  %v3604 = vpop.f32.mrb[0].mxu0
  %3605 = vdwg.mxu0
  %v3606 = vadd.f32 %v3080, %v3598
  %v3607 = vadd.f32 %v3085, %v3603
  %s3608 = scalar_lea.vmem %s1, 720
  %v3609 = vld [vmem:[%s3608] sm:$0xff]
  %v3610 = vld [vmem:[%s3608 + $0x8] sm:$0xff]
  %v3611 = vld [vmem:[%s3608 + $0x10] sm:$0xff]
  %v3612 = vld [vmem:[%s3608 + $0x18] sm:$0xff]
  %v3613 = vld [vmem:[%s3608 + $0x20] sm:$0xff]
  %3614 = vmatprep.subr.mxu0 0.0
  %3615 = vmatpush1.msra.mxu0 %v3609
  %3616 = vmatprep.subr.mxu0 0.0
  %3617 = vmatpush1.msra.mxu0 %v3610
  %3618 = vmatprep.subr.mxu0 0.0
  %3619 = vmatpush1.msra.mxu0 %v3611
  %3620 = vmatprep.subr.mxu0 0.0
  %3621 = vmatpush1.msra.mxu0 %v3612
  %3622 = vmatprep.subr.mxu0 0.0
  %3623 = vmatpush1.msra.mxu0 %v3613
  %3624 = vmatprep.subr.mxu0 0.0
  %3625 = vmatpush1.msra.mxu0 0.0
  %3626 = vmatprep.subr.mxu0 0.0
  %3627 = vmatpush1.msra.mxu0 0.0
  %3628 = vmatprep.subr.mxu0 0.0
  %3629 = vmatpush1.msra.mxu0 0.0
  %3630 = vmatprep.subr.mxu0 0.0
  %3631 = vmatpush1.msra.mxu0 0.0
  %3632 = vmatprep.subr.mxu0 0.0
  %3633 = vmatpush1.msra.mxu0 0.0
  %3634 = vmatprep.subr.mxu0 0.0
  %3635 = vmatpush1.msra.mxu0 0.0
  %3636 = vmatprep.subr.mxu0 0.0
  %3637 = vmatpush1.msra.mxu0 0.0
  %3638 = vmatprep.subr.mxu0 0.0
  %3639 = vmatpush1.msra.mxu0 0.0
  %3640 = vmatprep.subr.mxu0 0.0
  %3641 = vmatpush1.msra.mxu0 0.0
  %3642 = vmatprep.subr.mxu0 0.0
  %3643 = vmatpush1.msra.mxu0 0.0
  %3644 = vmatprep.subr.mxu0 0.0
  %3645 = vmatpush1.msra.mxu0 0.0
  %3646 = vmatprep.subr.mxu0 0.0
  %3647 = vmatpush1.msra.mxu0 0.0
  %3648 = vmatprep.subr.mxu0 0.0
  %3649 = vmatpush1.msra.mxu0 0.0
  %3650 = vmatprep.subr.mxu0 0.0
  %3651 = vmatpush1.msra.mxu0 0.0
  %3652 = vmatprep.subr.mxu0 0.0
  %3653 = vmatpush1.msra.mxu0 0.0
  %3654 = vmatprep.subr.mxu0 0.0
  %3655 = vmatpush1.msra.mxu0 0.0
  %3656 = vmatprep.subr.mxu0 0.0
  %3657 = vmatpush1.msra.mxu0 0.0
  %3658 = vmatprep.subr.mxu0 0.0
  %3659 = vmatpush1.msra.mxu0 0.0
  %3660 = vmatprep.subr.mxu0 0.0
  %3661 = vmatpush1.msra.mxu0 0.0
  %3662 = vmatprep.subr.mxu0 0.0
  %3663 = vmatpush1.msra.mxu0 0.0
  %3664 = vmatprep.subr.mxu0 0.0
  %3665 = vmatpush1.msra.mxu0 0.0
  %3666 = vmatprep.subr.mxu0 0.0
  %3667 = vmatpush1.msra.mxu0 0.0
  %3668 = vmatprep.subr.mxu0 0.0
  %3669 = vmatpush1.msra.mxu0 0.0
  %3670 = vmatprep.subr.mxu0 0.0
  %3671 = vmatpush1.msra.mxu0 0.0
  %3672 = vmatprep.subr.mxu0 0.0
  %3673 = vmatpush1.msra.mxu0 0.0
  %3674 = vmatprep.subr.mxu0 0.0
  %3675 = vmatpush1.msra.mxu0 0.0
  %3676 = vmatprep.subr.mxu0 0.0
  %3677 = vmatpush1.msra.mxu0 0.0
  %3678 = vmatprep.mubr.f32.mxu0 0.0
  %3679 = vmatmul.mubr.f32.gmra.mrb[0].mxu0 %v2566
  %v3680 = vpop.f32.mrb[0].mxu0
  %v3681 = vadd.f32 0.0, %v3680
  %v3682 = vpop.f32.mrb[0].mxu0
  %3683 = vmatprep.mubr.f32.mxu0 0.0
  %3684 = vmatmul.mubr.f32.gmra.mrb[0].mxu0 %v2569
  %v3685 = vpop.f32.mrb[0].mxu0
  %v3686 = vadd.f32 0.0, %v3685
  %v3687 = vpop.f32.mrb[0].mxu0
  %3688 = vdwg.mxu0
  %s3689 = scalar_lea.vmem %s1, 760
  %v3690 = vld [vmem:[%s3689] sm:$0xff]
  %v3691 = vld [vmem:[%s3689 + $0x8] sm:$0xff]
  %v3692 = vld [vmem:[%s3689 + $0x10] sm:$0xff]
  %v3693 = vld [vmem:[%s3689 + $0x18] sm:$0xff]
  %v3694 = vld [vmem:[%s3689 + $0x20] sm:$0xff]
  %3695 = vmatprep.subr.mxu0 0.0
  %3696 = vmatpush1.msra.mxu0 %v3690
  %3697 = vmatprep.subr.mxu0 0.0
  %3698 = vmatpush1.msra.mxu0 %v3691
  %3699 = vmatprep.subr.mxu0 0.0
  %3700 = vmatpush1.msra.mxu0 %v3692
  %3701 = vmatprep.subr.mxu0 0.0
  %3702 = vmatpush1.msra.mxu0 %v3693
  %3703 = vmatprep.subr.mxu0 0.0
  %3704 = vmatpush1.msra.mxu0 %v3694
  %3705 = vmatprep.subr.mxu0 0.0
  %3706 = vmatpush1.msra.mxu0 0.0
  %3707 = vmatprep.subr.mxu0 0.0
  %3708 = vmatpush1.msra.mxu0 0.0
  %3709 = vmatprep.subr.mxu0 0.0
  %3710 = vmatpush1.msra.mxu0 0.0
  %3711 = vmatprep.subr.mxu0 0.0
  %3712 = vmatpush1.msra.mxu0 0.0
  %3713 = vmatprep.subr.mxu0 0.0
  %3714 = vmatpush1.msra.mxu0 0.0
  %3715 = vmatprep.subr.mxu0 0.0
  %3716 = vmatpush1.msra.mxu0 0.0
  %3717 = vmatprep.subr.mxu0 0.0
  %3718 = vmatpush1.msra.mxu0 0.0
  %3719 = vmatprep.subr.mxu0 0.0
  %3720 = vmatpush1.msra.mxu0 0.0
  %3721 = vmatprep.subr.mxu0 0.0
  %3722 = vmatpush1.msra.mxu0 0.0
  %3723 = vmatprep.subr.mxu0 0.0
  %3724 = vmatpush1.msra.mxu0 0.0
  %3725 = vmatprep.subr.mxu0 0.0
  %3726 = vmatpush1.msra.mxu0 0.0
  %3727 = vmatprep.subr.mxu0 0.0
  %3728 = vmatpush1.msra.mxu0 0.0
  %3729 = vmatprep.subr.mxu0 0.0
  %3730 = vmatpush1.msra.mxu0 0.0
  %3731 = vmatprep.subr.mxu0 0.0
  %3732 = vmatpush1.msra.mxu0 0.0
  %3733 = vmatprep.subr.mxu0 0.0
  %3734 = vmatpush1.msra.mxu0 0.0
  %3735 = vmatprep.subr.mxu0 0.0
  %3736 = vmatpush1.msra.mxu0 0.0
  %3737 = vmatprep.subr.mxu0 0.0
  %3738 = vmatpush1.msra.mxu0 0.0
  %3739 = vmatprep.subr.mxu0 0.0
  %3740 = vmatpush1.msra.mxu0 0.0
  %3741 = vmatprep.subr.mxu0 0.0
  %3742 = vmatpush1.msra.mxu0 0.0
  %3743 = vmatprep.subr.mxu0 0.0
  %3744 = vmatpush1.msra.mxu0 0.0
  %3745 = vmatprep.subr.mxu0 0.0
  %3746 = vmatpush1.msra.mxu0 0.0
  %3747 = vmatprep.subr.mxu0 0.0
  %3748 = vmatpush1.msra.mxu0 0.0
  %3749 = vmatprep.subr.mxu0 0.0
  %3750 = vmatpush1.msra.mxu0 0.0
  %3751 = vmatprep.subr.mxu0 0.0
  %3752 = vmatpush1.msra.mxu0 0.0
  %3753 = vmatprep.subr.mxu0 0.0
  %3754 = vmatpush1.msra.mxu0 0.0
  %3755 = vmatprep.subr.mxu0 0.0
  %3756 = vmatpush1.msra.mxu0 0.0
  %3757 = vmatprep.subr.mxu0 0.0
  %3758 = vmatpush1.msra.mxu0 0.0
  %3759 = vmatprep.mubr.f32.mxu0 0.0
  %3760 = vmatmul.mubr.f32.gmra.mrb[0].mxu0 %v2566
  %v3761 = vpop.f32.mrb[0].mxu0
  %v3762 = vadd.f32 0.0, %v3761
  %v3763 = vpop.f32.mrb[0].mxu0
  %3764 = vmatprep.mubr.f32.mxu0 0.0
  %3765 = vmatmul.mubr.f32.gmra.mrb[0].mxu0 %v2569
  %v3766 = vpop.f32.mrb[0].mxu0
  %v3767 = vadd.f32 0.0, %v3766
  %v3768 = vpop.f32.mrb[0].mxu0
  %3769 = vdwg.mxu0
  %s3770 = scalar_lea.vmem %s1, 800
  %v3771 = vld [vmem:[%s3770] sm:$0xff]
  %v3772 = vld [vmem:[%s3770 + $0x8] sm:$0xff]
  %v3773 = vld [vmem:[%s3770 + $0x10] sm:$0xff]
  %v3774 = vld [vmem:[%s3770 + $0x18] sm:$0xff]
  %v3775 = vld [vmem:[%s3770 + $0x20] sm:$0xff]
  %3776 = vmatprep.subr.mxu0 0.0
  %3777 = vmatpush1.msra.mxu0 %v3771
  %3778 = vmatprep.subr.mxu0 0.0
  %3779 = vmatpush1.msra.mxu0 %v3772
  %3780 = vmatprep.subr.mxu0 0.0
  %3781 = vmatpush1.msra.mxu0 %v3773
  %3782 = vmatprep.subr.mxu0 0.0
  %3783 = vmatpush1.msra.mxu0 %v3774
  %3784 = vmatprep.subr.mxu0 0.0
  %3785 = vmatpush1.msra.mxu0 %v3775
  %3786 = vmatprep.subr.mxu0 0.0
  %3787 = vmatpush1.msra.mxu0 0.0
  %3788 = vmatprep.subr.mxu0 0.0
  %3789 = vmatpush1.msra.mxu0 0.0
  %3790 = vmatprep.subr.mxu0 0.0
  %3791 = vmatpush1.msra.mxu0 0.0
  %3792 = vmatprep.subr.mxu0 0.0
  %3793 = vmatpush1.msra.mxu0 0.0
  %3794 = vmatprep.subr.mxu0 0.0
  %3795 = vmatpush1.msra.mxu0 0.0
  %3796 = vmatprep.subr.mxu0 0.0
  %3797 = vmatpush1.msra.mxu0 0.0
  %3798 = vmatprep.subr.mxu0 0.0
  %3799 = vmatpush1.msra.mxu0 0.0
  %3800 = vmatprep.subr.mxu0 0.0
  %3801 = vmatpush1.msra.mxu0 0.0
  %3802 = vmatprep.subr.mxu0 0.0
  %3803 = vmatpush1.msra.mxu0 0.0
  %3804 = vmatprep.subr.mxu0 0.0
  %3805 = vmatpush1.msra.mxu0 0.0
  %3806 = vmatprep.subr.mxu0 0.0
  %3807 = vmatpush1.msra.mxu0 0.0
  %3808 = vmatprep.subr.mxu0 0.0
  %3809 = vmatpush1.msra.mxu0 0.0
  %3810 = vmatprep.subr.mxu0 0.0
  %3811 = vmatpush1.msra.mxu0 0.0
  %3812 = vmatprep.subr.mxu0 0.0
  %3813 = vmatpush1.msra.mxu0 0.0
  %3814 = vmatprep.subr.mxu0 0.0
  %3815 = vmatpush1.msra.mxu0 0.0
  %3816 = vmatprep.subr.mxu0 0.0
  %3817 = vmatpush1.msra.mxu0 0.0
  %3818 = vmatprep.subr.mxu0 0.0
  %3819 = vmatpush1.msra.mxu0 0.0
  %3820 = vmatprep.subr.mxu0 0.0
  %3821 = vmatpush1.msra.mxu0 0.0
  %3822 = vmatprep.subr.mxu0 0.0
  %3823 = vmatpush1.msra.mxu0 0.0
  %3824 = vmatprep.subr.mxu0 0.0
  %3825 = vmatpush1.msra.mxu0 0.0
  %3826 = vmatprep.subr.mxu0 0.0
  %3827 = vmatpush1.msra.mxu0 0.0
  %3828 = vmatprep.subr.mxu0 0.0
  %3829 = vmatpush1.msra.mxu0 0.0
  %3830 = vmatprep.subr.mxu0 0.0
  %3831 = vmatpush1.msra.mxu0 0.0
  %3832 = vmatprep.subr.mxu0 0.0
  %3833 = vmatpush1.msra.mxu0 0.0
  %3834 = vmatprep.subr.mxu0 0.0
  %3835 = vmatpush1.msra.mxu0 0.0
  %3836 = vmatprep.subr.mxu0 0.0
  %3837 = vmatpush1.msra.mxu0 0.0
  %3838 = vmatprep.subr.mxu0 0.0
  %3839 = vmatpush1.msra.mxu0 0.0
  %3840 = vmatprep.mubr.f32.mxu0 0.0
  %3841 = vmatmul.mubr.f32.gmra.mrb[0].mxu0 %v2566
  %v3842 = vpop.f32.mrb[0].mxu0
  %v3843 = vadd.f32 0.0, %v3842
  %v3844 = vpop.f32.mrb[0].mxu0
  %3845 = vmatprep.mubr.f32.mxu0 0.0
  %3846 = vmatmul.mubr.f32.gmra.mrb[0].mxu0 %v2569
  %v3847 = vpop.f32.mrb[0].mxu0
  %v3848 = vadd.f32 0.0, %v3847
  %v3849 = vpop.f32.mrb[0].mxu0
  %3850 = vdwg.mxu0
  %v3852 = vsel %vm433, %v3681, 0
  %v3855 = vsel %vm433, %v3686, 0
  %v3858 = vsel %vm433, %v3762, 0
  %v3861 = vsel %vm433, %v3767, 0
  %3863 = vmatprep.subr.mxu0 0.0
  %3864 = vmatpush1.xpose.msra.mxu0 %v3858
  %3865 = vmatprep.subr.mxu0 0.0
  %3866 = vmatpush1.xpose.msra.mxu0 %v3861
  %3867 = vmatprep.subr.mxu0 0.0
  %3868 = vmatpush1.xpose.msra.mxu0 0.0
  %3869 = vmatprep.subr.mxu0 0.0
  %3870 = vmatpush1.xpose.msra.mxu0 0.0
  %3871 = vmatprep.subr.mxu0 0.0
  %3872 = vmatpush1.xpose.msra.mxu0 0.0
  %3873 = vmatprep.subr.mxu0 0.0
  %3874 = vmatpush1.xpose.msra.mxu0 0.0
  %3875 = vmatprep.subr.mxu0 0.0
  %3876 = vmatpush1.xpose.msra.mxu0 0.0
  %3877 = vmatprep.subr.mxu0 0.0
  %3878 = vmatpush1.xpose.msra.mxu0 0.0
  %3879 = vmatprep.subr.mxu0 0.0
  %3880 = vmatpush1.xpose.msra.mxu0 0.0
  %3881 = vmatprep.subr.mxu0 0.0
  %3882 = vmatpush1.xpose.msra.mxu0 0.0
  %3883 = vmatprep.subr.mxu0 0.0
  %3884 = vmatpush1.xpose.msra.mxu0 0.0
  %3885 = vmatprep.subr.mxu0 0.0
  %3886 = vmatpush1.xpose.msra.mxu0 0.0
  %3887 = vmatprep.subr.mxu0 0.0
  %3888 = vmatpush1.xpose.msra.mxu0 0.0
  %3889 = vmatprep.subr.mxu0 0.0
  %3890 = vmatpush1.xpose.msra.mxu0 0.0
  %3891 = vmatprep.subr.mxu0 0.0
  %3892 = vmatpush1.xpose.msra.mxu0 0.0
  %3893 = vmatprep.subr.mxu0 0.0
  %3894 = vmatpush1.xpose.msra.mxu0 0.0
  %3895 = vmatprep.subr.mxu0 0.0
  %3896 = vmatpush1.xpose.msra.mxu0 0.0
  %3897 = vmatprep.subr.mxu0 0.0
  %3898 = vmatpush1.xpose.msra.mxu0 0.0
  %3899 = vmatprep.subr.mxu0 0.0
  %3900 = vmatpush1.xpose.msra.mxu0 0.0
  %3901 = vmatprep.subr.mxu0 0.0
  %3902 = vmatpush1.xpose.msra.mxu0 0.0
  %3903 = vmatprep.subr.mxu0 0.0
  %3904 = vmatpush1.xpose.msra.mxu0 0.0
  %3905 = vmatprep.subr.mxu0 0.0
  %3906 = vmatpush1.xpose.msra.mxu0 0.0
  %3907 = vmatprep.subr.mxu0 0.0
  %3908 = vmatpush1.xpose.msra.mxu0 0.0
  %3909 = vmatprep.subr.mxu0 0.0
  %3910 = vmatpush1.xpose.msra.mxu0 0.0
  %3911 = vmatprep.subr.mxu0 0.0
  %3912 = vmatpush1.xpose.msra.mxu0 0.0
  %3913 = vmatprep.subr.mxu0 0.0
  %3914 = vmatpush1.xpose.msra.mxu0 0.0
  %3915 = vmatprep.subr.mxu0 0.0
  %3916 = vmatpush1.xpose.msra.mxu0 0.0
  %3917 = vmatprep.subr.mxu0 0.0
  %3918 = vmatpush1.xpose.msra.mxu0 0.0
  %3919 = vmatprep.subr.mxu0 0.0
  %3920 = vmatpush1.xpose.msra.mxu0 0.0
  %3921 = vmatprep.subr.mxu0 0.0
  %3922 = vmatpush1.xpose.msra.mxu0 0.0
  %3923 = vmatprep.subr.mxu0 0.0
  %3924 = vmatpush1.xpose.msra.mxu0 0.0
  %3925 = vmatprep.subr.mxu0 0.0
  %3926 = vmatpush1.xpose.msra.mxu0 0.0
  %3927 = vmatprep.mubr.f32.mxu0 0.0
  %3928 = vmatmul.mubr.f32.gmra.mrb[0].mxu0 %v3852
  %v3929 = vpop.f32.mrb[0].mxu0
  %v3930 = vadd.f32 %v132, %v3929
  %v3931 = vpop.f32.mrb[0].mxu0
  %3932 = vmatprep.mubr.f32.mxu0 0.0
  %3933 = vmatmul.mubr.f32.gmra.mrb[0].mxu0 %v3855
  %v3934 = vpop.f32.mrb[0].mxu0
  %v3935 = vadd.f32 %v133, %v3934
  %v3936 = vpop.f32.mrb[0].mxu0
  %3937 = vdwg.mxu0
  %v3938 = vsel %vm521, %v3930, -inf
  %3939 = vmax.xlane.f32.xlu0 %v3938
  %v3940 = vpop.xlane.xlu0 %3939
  %v3941 = vsel %vm525, %v3935, -inf
  %3942 = vmax.xlane.f32.xlu0 %v3941
  %v3943 = vpop.xlane.xlu0 %3942
  %v3944 = vsub.f32 %v3930, %v3940
  %v3945 = vsub.f32 %v3935, %v3943
  %v3946 = vmul.f32 %v3944, 1.442695
  %v3947 = vpow.pop %v3946
  %v3948 = vmul.f32 %v3945, 1.442695
  %v3949 = vpow.pop %v3948
  %v3950 = vsel %vm521, %v3947, 0.0
  %3951 = vadd.xlane.f32.xlu0 %v3950
  %v3952 = vpop.xlane.xlu0 %3951
  %v3953 = vsel %vm525, %v3949, 0.0
  %3954 = vadd.xlane.f32.xlu0 %v3953
  %v3955 = vpop.xlane.xlu0 %3954
  %v3956 = vrcp.pop %v3952
  %v3957 = vrcp.pop %v3955
  %v3958 = vmul.f32 %v3947, %v3956
  %v3959 = vmul.f32 %v3949, %v3957
  %v3961 = vsel %vm521, %v3958, 0
  %v3964 = vsel %vm521, %v3959, 0
  %v3967 = vsel %vm551, %v3848, 0
  %3969 = vmatprep.subr.mxu0 0.0
  %3970 = vmatpush1.msra.mxu0 %v3843
  %3971 = vmatprep.subr.mxu0 0.0
  %3972 = vmatpush1.msra.mxu0 %v3967
  %3973 = vmatprep.subr.mxu0 0.0
  %3974 = vmatpush1.msra.mxu0 0.0
  %3975 = vmatprep.subr.mxu0 0.0
  %3976 = vmatpush1.msra.mxu0 0.0
  %3977 = vmatprep.subr.mxu0 0.0
  %3978 = vmatpush1.msra.mxu0 0.0
  %3979 = vmatprep.subr.mxu0 0.0
  %3980 = vmatpush1.msra.mxu0 0.0
  %3981 = vmatprep.subr.mxu0 0.0
  %3982 = vmatpush1.msra.mxu0 0.0
  %3983 = vmatprep.subr.mxu0 0.0
  %3984 = vmatpush1.msra.mxu0 0.0
  %3985 = vmatprep.subr.mxu0 0.0
  %3986 = vmatpush1.msra.mxu0 0.0
  %3987 = vmatprep.subr.mxu0 0.0
  %3988 = vmatpush1.msra.mxu0 0.0
  %3989 = vmatprep.subr.mxu0 0.0
  %3990 = vmatpush1.msra.mxu0 0.0
  %3991 = vmatprep.subr.mxu0 0.0
  %3992 = vmatpush1.msra.mxu0 0.0
  %3993 = vmatprep.subr.mxu0 0.0
  %3994 = vmatpush1.msra.mxu0 0.0
  %3995 = vmatprep.subr.mxu0 0.0
  %3996 = vmatpush1.msra.mxu0 0.0
  %3997 = vmatprep.subr.mxu0 0.0
  %3998 = vmatpush1.msra.mxu0 0.0
  %3999 = vmatprep.subr.mxu0 0.0
  %4000 = vmatpush1.msra.mxu0 0.0
  %4001 = vmatprep.subr.mxu0 0.0
  %4002 = vmatpush1.msra.mxu0 0.0
  %4003 = vmatprep.subr.mxu0 0.0
  %4004 = vmatpush1.msra.mxu0 0.0
  %4005 = vmatprep.subr.mxu0 0.0
  %4006 = vmatpush1.msra.mxu0 0.0
  %4007 = vmatprep.subr.mxu0 0.0
  %4008 = vmatpush1.msra.mxu0 0.0
  %4009 = vmatprep.subr.mxu0 0.0
  %4010 = vmatpush1.msra.mxu0 0.0
  %4011 = vmatprep.subr.mxu0 0.0
  %4012 = vmatpush1.msra.mxu0 0.0
  %4013 = vmatprep.subr.mxu0 0.0
  %4014 = vmatpush1.msra.mxu0 0.0
  %4015 = vmatprep.subr.mxu0 0.0
  %4016 = vmatpush1.msra.mxu0 0.0
  %4017 = vmatprep.subr.mxu0 0.0
  %4018 = vmatpush1.msra.mxu0 0.0
  %4019 = vmatprep.subr.mxu0 0.0
  %4020 = vmatpush1.msra.mxu0 0.0
  %4021 = vmatprep.subr.mxu0 0.0
  %4022 = vmatpush1.msra.mxu0 0.0
  %4023 = vmatprep.subr.mxu0 0.0
  %4024 = vmatpush1.msra.mxu0 0.0
  %4025 = vmatprep.subr.mxu0 0.0
  %4026 = vmatpush1.msra.mxu0 0.0
  %4027 = vmatprep.subr.mxu0 0.0
  %4028 = vmatpush1.msra.mxu0 0.0
  %4029 = vmatprep.subr.mxu0 0.0
  %4030 = vmatpush1.msra.mxu0 0.0
  %4031 = vmatprep.subr.mxu0 0.0
  %4032 = vmatpush1.msra.mxu0 0.0
  %4033 = vmatprep.mubr.f32.mxu0 0.0
  %4034 = vmatmul.mubr.f32.gmra.mrb[0].mxu0 %v3961
  %v4035 = vpop.f32.mrb[0].mxu0
  %v4036 = vadd.f32 0.0, %v4035
  %v4037 = vpop.f32.mrb[0].mxu0
  %4038 = vmatprep.mubr.f32.mxu0 0.0
  %4039 = vmatmul.mubr.f32.gmra.mrb[0].mxu0 %v3964
  %v4040 = vpop.f32.mrb[0].mxu0
  %v4041 = vadd.f32 0.0, %v4040
  %v4042 = vpop.f32.mrb[0].mxu0
  %4043 = vdwg.mxu0
  %v4044 = vld [vmem:[%s3001 + $0xb0] sm:$0xff]
  %v4046 = vsel %vm433, %v4036, 0
  %v4049 = vsel %vm433, %v4041, 0
  %4051 = vmatprep.subr.mxu0 0.0
  %4052 = vmatpush1.msra.mxu0 %v4044
  %4053 = vmatprep.subr.mxu0 0.0
  %4054 = vmatpush1.msra.mxu0 0.0
  %4055 = vmatprep.subr.mxu0 0.0
  %4056 = vmatpush1.msra.mxu0 0.0
  %4057 = vmatprep.subr.mxu0 0.0
  %4058 = vmatpush1.msra.mxu0 0.0
  %4059 = vmatprep.subr.mxu0 0.0
  %4060 = vmatpush1.msra.mxu0 0.0
  %4061 = vmatprep.subr.mxu0 0.0
  %4062 = vmatpush1.msra.mxu0 0.0
  %4063 = vmatprep.subr.mxu0 0.0
  %4064 = vmatpush1.msra.mxu0 0.0
  %4065 = vmatprep.subr.mxu0 0.0
  %4066 = vmatpush1.msra.mxu0 0.0
  %4067 = vmatprep.subr.mxu0 0.0
  %4068 = vmatpush1.msra.mxu0 0.0
  %4069 = vmatprep.subr.mxu0 0.0
  %4070 = vmatpush1.msra.mxu0 0.0
  %4071 = vmatprep.subr.mxu0 0.0
  %4072 = vmatpush1.msra.mxu0 0.0
  %4073 = vmatprep.subr.mxu0 0.0
  %4074 = vmatpush1.msra.mxu0 0.0
  %4075 = vmatprep.subr.mxu0 0.0
  %4076 = vmatpush1.msra.mxu0 0.0
  %4077 = vmatprep.subr.mxu0 0.0
  %4078 = vmatpush1.msra.mxu0 0.0
  %4079 = vmatprep.subr.mxu0 0.0
  %4080 = vmatpush1.msra.mxu0 0.0
  %4081 = vmatprep.subr.mxu0 0.0
  %4082 = vmatpush1.msra.mxu0 0.0
  %4083 = vmatprep.subr.mxu0 0.0
  %4084 = vmatpush1.msra.mxu0 0.0
  %4085 = vmatprep.subr.mxu0 0.0
  %4086 = vmatpush1.msra.mxu0 0.0
  %4087 = vmatprep.subr.mxu0 0.0
  %4088 = vmatpush1.msra.mxu0 0.0
  %4089 = vmatprep.subr.mxu0 0.0
  %4090 = vmatpush1.msra.mxu0 0.0
  %4091 = vmatprep.subr.mxu0 0.0
  %4092 = vmatpush1.msra.mxu0 0.0
  %4093 = vmatprep.subr.mxu0 0.0
  %4094 = vmatpush1.msra.mxu0 0.0
  %4095 = vmatprep.subr.mxu0 0.0
  %4096 = vmatpush1.msra.mxu0 0.0
  %4097 = vmatprep.subr.mxu0 0.0
  %4098 = vmatpush1.msra.mxu0 0.0
  %4099 = vmatprep.subr.mxu0 0.0
  %4100 = vmatpush1.msra.mxu0 0.0
  %4101 = vmatprep.subr.mxu0 0.0
  %4102 = vmatpush1.msra.mxu0 0.0
  %4103 = vmatprep.subr.mxu0 0.0
  %4104 = vmatpush1.msra.mxu0 0.0
  %4105 = vmatprep.subr.mxu0 0.0
  %4106 = vmatpush1.msra.mxu0 0.0
  %4107 = vmatprep.subr.mxu0 0.0
  %4108 = vmatpush1.msra.mxu0 0.0
  %4109 = vmatprep.subr.mxu0 0.0
  %4110 = vmatpush1.msra.mxu0 0.0
  %4111 = vmatprep.subr.mxu0 0.0
  %4112 = vmatpush1.msra.mxu0 0.0
  %4113 = vmatprep.subr.mxu0 0.0
  %4114 = vmatpush1.msra.mxu0 0.0
  %4115 = vmatprep.mubr.f32.mxu0 0.0
  %4116 = vmatmul.mubr.f32.gmra.mrb[0].mxu0 %v4046
  %v4117 = vpop.f32.mrb[0].mxu0
  %v4118 = vadd.f32 0.0, %v4117
  %v4119 = vpop.f32.mrb[0].mxu0
  %4120 = vmatprep.mubr.f32.mxu0 0.0
  %4121 = vmatmul.mubr.f32.gmra.mrb[0].mxu0 %v4049
  %v4122 = vpop.f32.mrb[0].mxu0
  %v4123 = vadd.f32 0.0, %v4122
  %v4124 = vpop.f32.mrb[0].mxu0
  %4125 = vdwg.mxu0
  %v4126 = vadd.f32 %v3606, %v4118
  %v4127 = vadd.f32 %v3607, %v4123
  %s4128 = scalar_lea.vmem %s1, 840
  %v4129 = vld [vmem:[%s4128] sm:$0xff]
  %v4130 = vld [vmem:[%s4128 + $0x8] sm:$0xff]
  %v4131 = vld [vmem:[%s4128 + $0x10] sm:$0xff]
  %v4132 = vld [vmem:[%s4128 + $0x18] sm:$0xff]
  %v4133 = vld [vmem:[%s4128 + $0x20] sm:$0xff]
  %4134 = vmatprep.subr.mxu0 0.0
  %4135 = vmatpush1.msra.mxu0 %v4129
  %4136 = vmatprep.subr.mxu0 0.0
  %4137 = vmatpush1.msra.mxu0 %v4130
  %4138 = vmatprep.subr.mxu0 0.0
  %4139 = vmatpush1.msra.mxu0 %v4131
  %4140 = vmatprep.subr.mxu0 0.0
  %4141 = vmatpush1.msra.mxu0 %v4132
  %4142 = vmatprep.subr.mxu0 0.0
  %4143 = vmatpush1.msra.mxu0 %v4133
  %4144 = vmatprep.subr.mxu0 0.0
  %4145 = vmatpush1.msra.mxu0 0.0
  %4146 = vmatprep.subr.mxu0 0.0
  %4147 = vmatpush1.msra.mxu0 0.0
  %4148 = vmatprep.subr.mxu0 0.0
  %4149 = vmatpush1.msra.mxu0 0.0
  %4150 = vmatprep.subr.mxu0 0.0
  %4151 = vmatpush1.msra.mxu0 0.0
  %4152 = vmatprep.subr.mxu0 0.0
  %4153 = vmatpush1.msra.mxu0 0.0
  %4154 = vmatprep.subr.mxu0 0.0
  %4155 = vmatpush1.msra.mxu0 0.0
  %4156 = vmatprep.subr.mxu0 0.0
  %4157 = vmatpush1.msra.mxu0 0.0
  %4158 = vmatprep.subr.mxu0 0.0
  %4159 = vmatpush1.msra.mxu0 0.0
  %4160 = vmatprep.subr.mxu0 0.0
  %4161 = vmatpush1.msra.mxu0 0.0
  %4162 = vmatprep.subr.mxu0 0.0
  %4163 = vmatpush1.msra.mxu0 0.0
  %4164 = vmatprep.subr.mxu0 0.0
  %4165 = vmatpush1.msra.mxu0 0.0
  %4166 = vmatprep.subr.mxu0 0.0
  %4167 = vmatpush1.msra.mxu0 0.0
  %4168 = vmatprep.subr.mxu0 0.0
  %4169 = vmatpush1.msra.mxu0 0.0
  %4170 = vmatprep.subr.mxu0 0.0
  %4171 = vmatpush1.msra.mxu0 0.0
  %4172 = vmatprep.subr.mxu0 0.0
  %4173 = vmatpush1.msra.mxu0 0.0
  %4174 = vmatprep.subr.mxu0 0.0
  %4175 = vmatpush1.msra.mxu0 0.0
  %4176 = vmatprep.subr.mxu0 0.0
  %4177 = vmatpush1.msra.mxu0 0.0
  %4178 = vmatprep.subr.mxu0 0.0
  %4179 = vmatpush1.msra.mxu0 0.0
  %4180 = vmatprep.subr.mxu0 0.0
  %4181 = vmatpush1.msra.mxu0 0.0
  %4182 = vmatprep.subr.mxu0 0.0
  %4183 = vmatpush1.msra.mxu0 0.0
  %4184 = vmatprep.subr.mxu0 0.0
  %4185 = vmatpush1.msra.mxu0 0.0
  %4186 = vmatprep.subr.mxu0 0.0
  %4187 = vmatpush1.msra.mxu0 0.0
  %4188 = vmatprep.subr.mxu0 0.0
  %4189 = vmatpush1.msra.mxu0 0.0
  %4190 = vmatprep.subr.mxu0 0.0
  %4191 = vmatpush1.msra.mxu0 0.0
  %4192 = vmatprep.subr.mxu0 0.0
  %4193 = vmatpush1.msra.mxu0 0.0
  %4194 = vmatprep.subr.mxu0 0.0
  %4195 = vmatpush1.msra.mxu0 0.0
  %4196 = vmatprep.subr.mxu0 0.0
  %4197 = vmatpush1.msra.mxu0 0.0
  %4198 = vmatprep.mubr.f32.mxu0 0.0
  %4199 = vmatmul.mubr.f32.gmra.mrb[0].mxu0 %v2566
  %v4200 = vpop.f32.mrb[0].mxu0
  %v4201 = vadd.f32 0.0, %v4200
  %v4202 = vpop.f32.mrb[0].mxu0
  %4203 = vmatprep.mubr.f32.mxu0 0.0
  %4204 = vmatmul.mubr.f32.gmra.mrb[0].mxu0 %v2569
  %v4205 = vpop.f32.mrb[0].mxu0
  %v4206 = vadd.f32 0.0, %v4205
  %v4207 = vpop.f32.mrb[0].mxu0
  %4208 = vdwg.mxu0
  %s4209 = scalar_lea.vmem %s1, 880
  %v4210 = vld [vmem:[%s4209] sm:$0xff]
  %v4211 = vld [vmem:[%s4209 + $0x8] sm:$0xff]
  %v4212 = vld [vmem:[%s4209 + $0x10] sm:$0xff]
  %v4213 = vld [vmem:[%s4209 + $0x18] sm:$0xff]
  %v4214 = vld [vmem:[%s4209 + $0x20] sm:$0xff]
  %4215 = vmatprep.subr.mxu0 0.0
  %4216 = vmatpush1.msra.mxu0 %v4210
  %4217 = vmatprep.subr.mxu0 0.0
  %4218 = vmatpush1.msra.mxu0 %v4211
  %4219 = vmatprep.subr.mxu0 0.0
  %4220 = vmatpush1.msra.mxu0 %v4212
  %4221 = vmatprep.subr.mxu0 0.0
  %4222 = vmatpush1.msra.mxu0 %v4213
  %4223 = vmatprep.subr.mxu0 0.0
  %4224 = vmatpush1.msra.mxu0 %v4214
  %4225 = vmatprep.subr.mxu0 0.0
  %4226 = vmatpush1.msra.mxu0 0.0
  %4227 = vmatprep.subr.mxu0 0.0
  %4228 = vmatpush1.msra.mxu0 0.0
  %4229 = vmatprep.subr.mxu0 0.0
  %4230 = vmatpush1.msra.mxu0 0.0
  %4231 = vmatprep.subr.mxu0 0.0
  %4232 = vmatpush1.msra.mxu0 0.0
  %4233 = vmatprep.subr.mxu0 0.0
  %4234 = vmatpush1.msra.mxu0 0.0
  %4235 = vmatprep.subr.mxu0 0.0
  %4236 = vmatpush1.msra.mxu0 0.0
  %4237 = vmatprep.subr.mxu0 0.0
  %4238 = vmatpush1.msra.mxu0 0.0
  %4239 = vmatprep.subr.mxu0 0.0
  %4240 = vmatpush1.msra.mxu0 0.0
  %4241 = vmatprep.subr.mxu0 0.0
  %4242 = vmatpush1.msra.mxu0 0.0
  %4243 = vmatprep.subr.mxu0 0.0
  %4244 = vmatpush1.msra.mxu0 0.0
  %4245 = vmatprep.subr.mxu0 0.0
  %4246 = vmatpush1.msra.mxu0 0.0
  %4247 = vmatprep.subr.mxu0 0.0
  %4248 = vmatpush1.msra.mxu0 0.0
  %4249 = vmatprep.subr.mxu0 0.0
  %4250 = vmatpush1.msra.mxu0 0.0
  %4251 = vmatprep.subr.mxu0 0.0
  %4252 = vmatpush1.msra.mxu0 0.0
  %4253 = vmatprep.subr.mxu0 0.0
  %4254 = vmatpush1.msra.mxu0 0.0
  %4255 = vmatprep.subr.mxu0 0.0
  %4256 = vmatpush1.msra.mxu0 0.0
  %4257 = vmatprep.subr.mxu0 0.0
  %4258 = vmatpush1.msra.mxu0 0.0
  %4259 = vmatprep.subr.mxu0 0.0
  %4260 = vmatpush1.msra.mxu0 0.0
  %4261 = vmatprep.subr.mxu0 0.0
  %4262 = vmatpush1.msra.mxu0 0.0
  %4263 = vmatprep.subr.mxu0 0.0
  %4264 = vmatpush1.msra.mxu0 0.0
  %4265 = vmatprep.subr.mxu0 0.0
  %4266 = vmatpush1.msra.mxu0 0.0
  %4267 = vmatprep.subr.mxu0 0.0
  %4268 = vmatpush1.msra.mxu0 0.0
  %4269 = vmatprep.subr.mxu0 0.0
  %4270 = vmatpush1.msra.mxu0 0.0
  %4271 = vmatprep.subr.mxu0 0.0
  %4272 = vmatpush1.msra.mxu0 0.0
  %4273 = vmatprep.subr.mxu0 0.0
  %4274 = vmatpush1.msra.mxu0 0.0
  %4275 = vmatprep.subr.mxu0 0.0
  %4276 = vmatpush1.msra.mxu0 0.0
  %4277 = vmatprep.subr.mxu0 0.0
  %4278 = vmatpush1.msra.mxu0 0.0
  %4279 = vmatprep.mubr.f32.mxu0 0.0
  %4280 = vmatmul.mubr.f32.gmra.mrb[0].mxu0 %v2566
  %v4281 = vpop.f32.mrb[0].mxu0
  %v4282 = vadd.f32 0.0, %v4281
  %v4283 = vpop.f32.mrb[0].mxu0
  %4284 = vmatprep.mubr.f32.mxu0 0.0
  %4285 = vmatmul.mubr.f32.gmra.mrb[0].mxu0 %v2569
  %v4286 = vpop.f32.mrb[0].mxu0
  %v4287 = vadd.f32 0.0, %v4286
  %v4288 = vpop.f32.mrb[0].mxu0
  %4289 = vdwg.mxu0
  %s4290 = scalar_lea.vmem %s1, 920
  %v4291 = vld [vmem:[%s4290] sm:$0xff]
  %v4292 = vld [vmem:[%s4290 + $0x8] sm:$0xff]
  %v4293 = vld [vmem:[%s4290 + $0x10] sm:$0xff]
  %v4294 = vld [vmem:[%s4290 + $0x18] sm:$0xff]
  %v4295 = vld [vmem:[%s4290 + $0x20] sm:$0xff]
  %4296 = vmatprep.subr.mxu0 0.0
  %4297 = vmatpush1.msra.mxu0 %v4291
  %4298 = vmatprep.subr.mxu0 0.0
  %4299 = vmatpush1.msra.mxu0 %v4292
  %4300 = vmatprep.subr.mxu0 0.0
  %4301 = vmatpush1.msra.mxu0 %v4293
  %4302 = vmatprep.subr.mxu0 0.0
  %4303 = vmatpush1.msra.mxu0 %v4294
  %4304 = vmatprep.subr.mxu0 0.0
  %4305 = vmatpush1.msra.mxu0 %v4295
  %4306 = vmatprep.subr.mxu0 0.0
  %4307 = vmatpush1.msra.mxu0 0.0
  %4308 = vmatprep.subr.mxu0 0.0
  %4309 = vmatpush1.msra.mxu0 0.0
  %4310 = vmatprep.subr.mxu0 0.0
  %4311 = vmatpush1.msra.mxu0 0.0
  %4312 = vmatprep.subr.mxu0 0.0
  %4313 = vmatpush1.msra.mxu0 0.0
  %4314 = vmatprep.subr.mxu0 0.0
  %4315 = vmatpush1.msra.mxu0 0.0
  %4316 = vmatprep.subr.mxu0 0.0
  %4317 = vmatpush1.msra.mxu0 0.0
  %4318 = vmatprep.subr.mxu0 0.0
  %4319 = vmatpush1.msra.mxu0 0.0
  %4320 = vmatprep.subr.mxu0 0.0
  %4321 = vmatpush1.msra.mxu0 0.0
  %4322 = vmatprep.subr.mxu0 0.0
  %4323 = vmatpush1.msra.mxu0 0.0
  %4324 = vmatprep.subr.mxu0 0.0
  %4325 = vmatpush1.msra.mxu0 0.0
  %4326 = vmatprep.subr.mxu0 0.0
  %4327 = vmatpush1.msra.mxu0 0.0
  %4328 = vmatprep.subr.mxu0 0.0
  %4329 = vmatpush1.msra.mxu0 0.0
  %4330 = vmatprep.subr.mxu0 0.0
  %4331 = vmatpush1.msra.mxu0 0.0
  %4332 = vmatprep.subr.mxu0 0.0
  %4333 = vmatpush1.msra.mxu0 0.0
  %4334 = vmatprep.subr.mxu0 0.0
  %4335 = vmatpush1.msra.mxu0 0.0
  %4336 = vmatprep.subr.mxu0 0.0
  %4337 = vmatpush1.msra.mxu0 0.0
  %4338 = vmatprep.subr.mxu0 0.0
  %4339 = vmatpush1.msra.mxu0 0.0
  %4340 = vmatprep.subr.mxu0 0.0
  %4341 = vmatpush1.msra.mxu0 0.0
  %4342 = vmatprep.subr.mxu0 0.0
  %4343 = vmatpush1.msra.mxu0 0.0
  %4344 = vmatprep.subr.mxu0 0.0
  %4345 = vmatpush1.msra.mxu0 0.0
  %4346 = vmatprep.subr.mxu0 0.0
  %4347 = vmatpush1.msra.mxu0 0.0
  %4348 = vmatprep.subr.mxu0 0.0
  %4349 = vmatpush1.msra.mxu0 0.0
  %4350 = vmatprep.subr.mxu0 0.0
  %4351 = vmatpush1.msra.mxu0 0.0
  %4352 = vmatprep.subr.mxu0 0.0
  %4353 = vmatpush1.msra.mxu0 0.0
  %4354 = vmatprep.subr.mxu0 0.0
  %4355 = vmatpush1.msra.mxu0 0.0
  %4356 = vmatprep.subr.mxu0 0.0
  %4357 = vmatpush1.msra.mxu0 0.0
  %4358 = vmatprep.subr.mxu0 0.0
  %4359 = vmatpush1.msra.mxu0 0.0
  %4360 = vmatprep.mubr.f32.mxu0 0.0
  %4361 = vmatmul.mubr.f32.gmra.mrb[0].mxu0 %v2566
  %v4362 = vpop.f32.mrb[0].mxu0
  %v4363 = vadd.f32 0.0, %v4362
  %v4364 = vpop.f32.mrb[0].mxu0
  %4365 = vmatprep.mubr.f32.mxu0 0.0
  %4366 = vmatmul.mubr.f32.gmra.mrb[0].mxu0 %v2569
  %v4367 = vpop.f32.mrb[0].mxu0
  %v4368 = vadd.f32 0.0, %v4367
  %v4369 = vpop.f32.mrb[0].mxu0
  %4370 = vdwg.mxu0
  %v4372 = vsel %vm433, %v4201, 0
  %v4375 = vsel %vm433, %v4206, 0
  %v4378 = vsel %vm433, %v4282, 0
  %v4381 = vsel %vm433, %v4287, 0
  %4383 = vmatprep.subr.mxu0 0.0
  %4384 = vmatpush1.xpose.msra.mxu0 %v4378
  %4385 = vmatprep.subr.mxu0 0.0
  %4386 = vmatpush1.xpose.msra.mxu0 %v4381
  %4387 = vmatprep.subr.mxu0 0.0
  %4388 = vmatpush1.xpose.msra.mxu0 0.0
  %4389 = vmatprep.subr.mxu0 0.0
  %4390 = vmatpush1.xpose.msra.mxu0 0.0
  %4391 = vmatprep.subr.mxu0 0.0
  %4392 = vmatpush1.xpose.msra.mxu0 0.0
  %4393 = vmatprep.subr.mxu0 0.0
  %4394 = vmatpush1.xpose.msra.mxu0 0.0
  %4395 = vmatprep.subr.mxu0 0.0
  %4396 = vmatpush1.xpose.msra.mxu0 0.0
  %4397 = vmatprep.subr.mxu0 0.0
  %4398 = vmatpush1.xpose.msra.mxu0 0.0
  %4399 = vmatprep.subr.mxu0 0.0
  %4400 = vmatpush1.xpose.msra.mxu0 0.0
  %4401 = vmatprep.subr.mxu0 0.0
  %4402 = vmatpush1.xpose.msra.mxu0 0.0
  %4403 = vmatprep.subr.mxu0 0.0
  %4404 = vmatpush1.xpose.msra.mxu0 0.0
  %4405 = vmatprep.subr.mxu0 0.0
  %4406 = vmatpush1.xpose.msra.mxu0 0.0
  %4407 = vmatprep.subr.mxu0 0.0
  %4408 = vmatpush1.xpose.msra.mxu0 0.0
  %4409 = vmatprep.subr.mxu0 0.0
  %4410 = vmatpush1.xpose.msra.mxu0 0.0
  %4411 = vmatprep.subr.mxu0 0.0
  %4412 = vmatpush1.xpose.msra.mxu0 0.0
  %4413 = vmatprep.subr.mxu0 0.0
  %4414 = vmatpush1.xpose.msra.mxu0 0.0
  %4415 = vmatprep.subr.mxu0 0.0
  %4416 = vmatpush1.xpose.msra.mxu0 0.0
  %4417 = vmatprep.subr.mxu0 0.0
  %4418 = vmatpush1.xpose.msra.mxu0 0.0
  %4419 = vmatprep.subr.mxu0 0.0
  %4420 = vmatpush1.xpose.msra.mxu0 0.0
  %4421 = vmatprep.subr.mxu0 0.0
  %4422 = vmatpush1.xpose.msra.mxu0 0.0
  %4423 = vmatprep.subr.mxu0 0.0
  %4424 = vmatpush1.xpose.msra.mxu0 0.0
  %4425 = vmatprep.subr.mxu0 0.0
  %4426 = vmatpush1.xpose.msra.mxu0 0.0
  %4427 = vmatprep.subr.mxu0 0.0
  %4428 = vmatpush1.xpose.msra.mxu0 0.0
  %4429 = vmatprep.subr.mxu0 0.0
  %4430 = vmatpush1.xpose.msra.mxu0 0.0
  %4431 = vmatprep.subr.mxu0 0.0
  %4432 = vmatpush1.xpose.msra.mxu0 0.0
  %4433 = vmatprep.subr.mxu0 0.0
  %4434 = vmatpush1.xpose.msra.mxu0 0.0
  %4435 = vmatprep.subr.mxu0 0.0
  %4436 = vmatpush1.xpose.msra.mxu0 0.0
  %4437 = vmatprep.subr.mxu0 0.0
  %4438 = vmatpush1.xpose.msra.mxu0 0.0
  %4439 = vmatprep.subr.mxu0 0.0
  %4440 = vmatpush1.xpose.msra.mxu0 0.0
  %4441 = vmatprep.subr.mxu0 0.0
  %4442 = vmatpush1.xpose.msra.mxu0 0.0
  %4443 = vmatprep.subr.mxu0 0.0
  %4444 = vmatpush1.xpose.msra.mxu0 0.0
  %4445 = vmatprep.subr.mxu0 0.0
  %4446 = vmatpush1.xpose.msra.mxu0 0.0
  %4447 = vmatprep.mubr.f32.mxu0 0.0
  %4448 = vmatmul.mubr.f32.gmra.mrb[0].mxu0 %v4372
  %v4449 = vpop.f32.mrb[0].mxu0
  %v4450 = vadd.f32 %v132, %v4449
  %v4451 = vpop.f32.mrb[0].mxu0
  %4452 = vmatprep.mubr.f32.mxu0 0.0
  %4453 = vmatmul.mubr.f32.gmra.mrb[0].mxu0 %v4375
  %v4454 = vpop.f32.mrb[0].mxu0
  %v4455 = vadd.f32 %v133, %v4454
  %v4456 = vpop.f32.mrb[0].mxu0
  %4457 = vdwg.mxu0
  %v4458 = vsel %vm521, %v4450, -inf
  %4459 = vmax.xlane.f32.xlu0 %v4458
  %v4460 = vpop.xlane.xlu0 %4459
  %v4461 = vsel %vm525, %v4455, -inf
  %4462 = vmax.xlane.f32.xlu0 %v4461
  %v4463 = vpop.xlane.xlu0 %4462
  %v4464 = vsub.f32 %v4450, %v4460
  %v4465 = vsub.f32 %v4455, %v4463
  %v4466 = vmul.f32 %v4464, 1.442695
  %v4467 = vpow.pop %v4466
  %v4468 = vmul.f32 %v4465, 1.442695
  %v4469 = vpow.pop %v4468
  %v4470 = vsel %vm521, %v4467, 0.0
  %4471 = vadd.xlane.f32.xlu0 %v4470
  %v4472 = vpop.xlane.xlu0 %4471
  %v4473 = vsel %vm525, %v4469, 0.0
  %4474 = vadd.xlane.f32.xlu0 %v4473
  %v4475 = vpop.xlane.xlu0 %4474
  %v4476 = vrcp.pop %v4472
  %v4477 = vrcp.pop %v4475
  %v4478 = vmul.f32 %v4467, %v4476
  %v4479 = vmul.f32 %v4469, %v4477
  %v4481 = vsel %vm521, %v4478, 0
  %v4484 = vsel %vm521, %v4479, 0
  %v4487 = vsel %vm551, %v4368, 0
  %4489 = vmatprep.subr.mxu0 0.0
  %4490 = vmatpush1.msra.mxu0 %v4363
  %4491 = vmatprep.subr.mxu0 0.0
  %4492 = vmatpush1.msra.mxu0 %v4487
  %4493 = vmatprep.subr.mxu0 0.0
  %4494 = vmatpush1.msra.mxu0 0.0
  %4495 = vmatprep.subr.mxu0 0.0
  %4496 = vmatpush1.msra.mxu0 0.0
  %4497 = vmatprep.subr.mxu0 0.0
  %4498 = vmatpush1.msra.mxu0 0.0
  %4499 = vmatprep.subr.mxu0 0.0
  %4500 = vmatpush1.msra.mxu0 0.0
  %4501 = vmatprep.subr.mxu0 0.0
  %4502 = vmatpush1.msra.mxu0 0.0
  %4503 = vmatprep.subr.mxu0 0.0
  %4504 = vmatpush1.msra.mxu0 0.0
  %4505 = vmatprep.subr.mxu0 0.0
  %4506 = vmatpush1.msra.mxu0 0.0
  %4507 = vmatprep.subr.mxu0 0.0
  %4508 = vmatpush1.msra.mxu0 0.0
  %4509 = vmatprep.subr.mxu0 0.0
  %4510 = vmatpush1.msra.mxu0 0.0
  %4511 = vmatprep.subr.mxu0 0.0
  %4512 = vmatpush1.msra.mxu0 0.0
  %4513 = vmatprep.subr.mxu0 0.0
  %4514 = vmatpush1.msra.mxu0 0.0
  %4515 = vmatprep.subr.mxu0 0.0
  %4516 = vmatpush1.msra.mxu0 0.0
  %4517 = vmatprep.subr.mxu0 0.0
  %4518 = vmatpush1.msra.mxu0 0.0
  %4519 = vmatprep.subr.mxu0 0.0
  %4520 = vmatpush1.msra.mxu0 0.0
  %4521 = vmatprep.subr.mxu0 0.0
  %4522 = vmatpush1.msra.mxu0 0.0
  %4523 = vmatprep.subr.mxu0 0.0
  %4524 = vmatpush1.msra.mxu0 0.0
  %4525 = vmatprep.subr.mxu0 0.0
  %4526 = vmatpush1.msra.mxu0 0.0
  %4527 = vmatprep.subr.mxu0 0.0
  %4528 = vmatpush1.msra.mxu0 0.0
  %4529 = vmatprep.subr.mxu0 0.0
  %4530 = vmatpush1.msra.mxu0 0.0
  %4531 = vmatprep.subr.mxu0 0.0
  %4532 = vmatpush1.msra.mxu0 0.0
  %4533 = vmatprep.subr.mxu0 0.0
  %4534 = vmatpush1.msra.mxu0 0.0
  %4535 = vmatprep.subr.mxu0 0.0
  %4536 = vmatpush1.msra.mxu0 0.0
  %4537 = vmatprep.subr.mxu0 0.0
  %4538 = vmatpush1.msra.mxu0 0.0
  %4539 = vmatprep.subr.mxu0 0.0
  %4540 = vmatpush1.msra.mxu0 0.0
  %4541 = vmatprep.subr.mxu0 0.0
  %4542 = vmatpush1.msra.mxu0 0.0
  %4543 = vmatprep.subr.mxu0 0.0
  %4544 = vmatpush1.msra.mxu0 0.0
  %4545 = vmatprep.subr.mxu0 0.0
  %4546 = vmatpush1.msra.mxu0 0.0
  %4547 = vmatprep.subr.mxu0 0.0
  %4548 = vmatpush1.msra.mxu0 0.0
  %4549 = vmatprep.subr.mxu0 0.0
  %4550 = vmatpush1.msra.mxu0 0.0
  %4551 = vmatprep.subr.mxu0 0.0
  %4552 = vmatpush1.msra.mxu0 0.0
  %4553 = vmatprep.mubr.f32.mxu0 0.0
  %4554 = vmatmul.mubr.f32.gmra.mrb[0].mxu0 %v4481
  %v4555 = vpop.f32.mrb[0].mxu0
  %v4556 = vadd.f32 0.0, %v4555
  %v4557 = vpop.f32.mrb[0].mxu0
  %4558 = vmatprep.mubr.f32.mxu0 0.0
  %4559 = vmatmul.mubr.f32.gmra.mrb[0].mxu0 %v4484
  %v4560 = vpop.f32.mrb[0].mxu0
  %v4561 = vadd.f32 0.0, %v4560
  %v4562 = vpop.f32.mrb[0].mxu0
  %4563 = vdwg.mxu0
  %v4564 = vld [vmem:[%s3001 + $0xb8] sm:$0xff]
  %v4566 = vsel %vm433, %v4556, 0
  %v4569 = vsel %vm433, %v4561, 0
  %4571 = vmatprep.subr.mxu0 0.0
  %4572 = vmatpush1.msra.mxu0 %v4564
  %4573 = vmatprep.subr.mxu0 0.0
  %4574 = vmatpush1.msra.mxu0 0.0
  %4575 = vmatprep.subr.mxu0 0.0
  %4576 = vmatpush1.msra.mxu0 0.0
  %4577 = vmatprep.subr.mxu0 0.0
  %4578 = vmatpush1.msra.mxu0 0.0
  %4579 = vmatprep.subr.mxu0 0.0
  %4580 = vmatpush1.msra.mxu0 0.0
  %4581 = vmatprep.subr.mxu0 0.0
  %4582 = vmatpush1.msra.mxu0 0.0
  %4583 = vmatprep.subr.mxu0 0.0
  %4584 = vmatpush1.msra.mxu0 0.0
  %4585 = vmatprep.subr.mxu0 0.0
  %4586 = vmatpush1.msra.mxu0 0.0
  %4587 = vmatprep.subr.mxu0 0.0
  %4588 = vmatpush1.msra.mxu0 0.0
  %4589 = vmatprep.subr.mxu0 0.0
  %4590 = vmatpush1.msra.mxu0 0.0
  %4591 = vmatprep.subr.mxu0 0.0
  %4592 = vmatpush1.msra.mxu0 0.0
  %4593 = vmatprep.subr.mxu0 0.0
  %4594 = vmatpush1.msra.mxu0 0.0
  %4595 = vmatprep.subr.mxu0 0.0
  %4596 = vmatpush1.msra.mxu0 0.0
  %4597 = vmatprep.subr.mxu0 0.0
  %4598 = vmatpush1.msra.mxu0 0.0
  %4599 = vmatprep.subr.mxu0 0.0
  %4600 = vmatpush1.msra.mxu0 0.0
  %4601 = vmatprep.subr.mxu0 0.0
  %4602 = vmatpush1.msra.mxu0 0.0
  %4603 = vmatprep.subr.mxu0 0.0
  %4604 = vmatpush1.msra.mxu0 0.0
  %4605 = vmatprep.subr.mxu0 0.0
  %4606 = vmatpush1.msra.mxu0 0.0
  %4607 = vmatprep.subr.mxu0 0.0
  %4608 = vmatpush1.msra.mxu0 0.0
  %4609 = vmatprep.subr.mxu0 0.0
  %4610 = vmatpush1.msra.mxu0 0.0
  %4611 = vmatprep.subr.mxu0 0.0
  %4612 = vmatpush1.msra.mxu0 0.0
  %4613 = vmatprep.subr.mxu0 0.0
  %4614 = vmatpush1.msra.mxu0 0.0
  %4615 = vmatprep.subr.mxu0 0.0
  %4616 = vmatpush1.msra.mxu0 0.0
  %4617 = vmatprep.subr.mxu0 0.0
  %4618 = vmatpush1.msra.mxu0 0.0
  %4619 = vmatprep.subr.mxu0 0.0
  %4620 = vmatpush1.msra.mxu0 0.0
  %4621 = vmatprep.subr.mxu0 0.0
  %4622 = vmatpush1.msra.mxu0 0.0
  %4623 = vmatprep.subr.mxu0 0.0
  %4624 = vmatpush1.msra.mxu0 0.0
  %4625 = vmatprep.subr.mxu0 0.0
  %4626 = vmatpush1.msra.mxu0 0.0
  %4627 = vmatprep.subr.mxu0 0.0
  %4628 = vmatpush1.msra.mxu0 0.0
  %4629 = vmatprep.subr.mxu0 0.0
  %4630 = vmatpush1.msra.mxu0 0.0
  %4631 = vmatprep.subr.mxu0 0.0
  %4632 = vmatpush1.msra.mxu0 0.0
  %4633 = vmatprep.subr.mxu0 0.0
  %4634 = vmatpush1.msra.mxu0 0.0
  %4635 = vmatprep.mubr.f32.mxu0 0.0
  %4636 = vmatmul.mubr.f32.gmra.mrb[0].mxu0 %v4566
  %v4637 = vpop.f32.mrb[0].mxu0
  %v4638 = vadd.f32 0.0, %v4637
  %v4639 = vpop.f32.mrb[0].mxu0
  %4640 = vmatprep.mubr.f32.mxu0 0.0
  %4641 = vmatmul.mubr.f32.gmra.mrb[0].mxu0 %v4569
  %v4642 = vpop.f32.mrb[0].mxu0
  %v4643 = vadd.f32 0.0, %v4642
  %v4644 = vpop.f32.mrb[0].mxu0
  %4645 = vdwg.mxu0
  %v4646 = vadd.f32 %v4126, %v4638
  %v4647 = vadd.f32 %v4127, %v4643
  %v4648 = vadd.f32 %v2510, %v4646
  %v4649 = vadd.f32 %v2511, %v4647
  %v4650 = vsel %vm141, %v4648, 0.0
  %4651 = vadd.xlane.f32.xlu0 %v4650
  %v4652 = vpop.xlane.xlu0 %4651
  %v4653 = vsel %vm145, %v4649, 0.0
  %4654 = vadd.xlane.f32.xlu0 %v4653
  %v4655 = vpop.xlane.xlu0 %4654
  %v4656 = vmul.f32 %v4652, %v149
  %v4657 = vmul.f32 %v4655, %v149
  %v4658 = vsub.f32 %v4648, %v4656
  %v4659 = vsub.f32 %v4649, %v4657
  %v4660 = vmul.f32 %v4658, %v4658
  %v4661 = vmul.f32 %v4659, %v4659
  %v4662 = vsel %vm141, %v4660, 0.0
  %4663 = vadd.xlane.f32.xlu0 %v4662
  %v4664 = vpop.xlane.xlu0 %4663
  %v4665 = vsel %vm145, %v4661, 0.0
  %4666 = vadd.xlane.f32.xlu0 %v4665
  %v4667 = vpop.xlane.xlu0 %4666
  %v4668 = vmul.f32 %v4664, %v149
  %v4669 = vmul.f32 %v4667, %v149
  %v4670 = vadd.f32 %v4668, 1e-06
  %v4671 = vadd.f32 %v4669, 1e-06
  %v4672 = vrsqrt.pop %v4670
  %v4673 = vrsqrt.pop %v4671
  %v4674 = vmul.f32 %v4658, %v4672
  %v4675 = vmul.f32 %v4659, %v4673
  %v4676 = vlaneseq
  %v4677 = vshrl.u32 %v4676, 7
  %v4678 = vsub.s32 0, %v4677
  %v4679 = vrot.slane %v2514, %v4678
  %v4680 = vmul.f32 %v4674, %v4679
  %v4681 = vmul.f32 %v4675, %v4679
  %v4682 = vlaneseq
  %v4683 = vshrl.u32 %v4682, 7
  %v4684 = vsub.s32 0, %v4683
  %v4685 = vrot.slane %v2515, %v4684
  %v4686 = vadd.f32 %v4680, %v4685
  %v4687 = vadd.f32 %v4681, %v4685
  %v4688 = vld [vmem:[%s3001] sm:$0xff]
  %v4689 = vld [vmem:[%s3001 + $0x8] sm:$0xff]
  %v4690 = vld [vmem:[%s3001 + $0x10] sm:$0xff]
  %v4691 = vld [vmem:[%s3001 + $0x18] sm:$0xff]
  %v4692 = vlaneseq
  %v4693 = vshrl.u32 %v4692, 7
  %v4694 = vsub.s32 0, %v4693
  %v4695 = vrot.slane %v2517, %v4694
  %v4697 = vsel %vm141, %v4686, 0
  %v4700 = vsel %vm141, %v4687, 0
  %4702 = vmatprep.subr.mxu0 0.0
  %4703 = vmatpush1.msra.mxu0 %v4688
  %4704 = vmatprep.subr.mxu0 0.0
  %4705 = vmatpush1.msra.mxu0 %v4689
  %4706 = vmatprep.subr.mxu0 0.0
  %4707 = vmatpush1.msra.mxu0 %v4690
  %4708 = vmatprep.subr.mxu0 0.0
  %4709 = vmatpush1.msra.mxu0 %v4691
  %4710 = vmatprep.subr.mxu0 0.0
  %4711 = vmatpush1.msra.mxu0 0.0
  %4712 = vmatprep.subr.mxu0 0.0
  %4713 = vmatpush1.msra.mxu0 0.0
  %4714 = vmatprep.subr.mxu0 0.0
  %4715 = vmatpush1.msra.mxu0 0.0
  %4716 = vmatprep.subr.mxu0 0.0
  %4717 = vmatpush1.msra.mxu0 0.0
  %4718 = vmatprep.subr.mxu0 0.0
  %4719 = vmatpush1.msra.mxu0 0.0
  %4720 = vmatprep.subr.mxu0 0.0
  %4721 = vmatpush1.msra.mxu0 0.0
  %4722 = vmatprep.subr.mxu0 0.0
  %4723 = vmatpush1.msra.mxu0 0.0
  %4724 = vmatprep.subr.mxu0 0.0
  %4725 = vmatpush1.msra.mxu0 0.0
  %4726 = vmatprep.subr.mxu0 0.0
  %4727 = vmatpush1.msra.mxu0 0.0
  %4728 = vmatprep.subr.mxu0 0.0
  %4729 = vmatpush1.msra.mxu0 0.0
  %4730 = vmatprep.subr.mxu0 0.0
  %4731 = vmatpush1.msra.mxu0 0.0
  %4732 = vmatprep.subr.mxu0 0.0
  %4733 = vmatpush1.msra.mxu0 0.0
  %4734 = vmatprep.subr.mxu0 0.0
  %4735 = vmatpush1.msra.mxu0 0.0
  %4736 = vmatprep.subr.mxu0 0.0
  %4737 = vmatpush1.msra.mxu0 0.0
  %4738 = vmatprep.subr.mxu0 0.0
  %4739 = vmatpush1.msra.mxu0 0.0
  %4740 = vmatprep.subr.mxu0 0.0
  %4741 = vmatpush1.msra.mxu0 0.0
  %4742 = vmatprep.subr.mxu0 0.0
  %4743 = vmatpush1.msra.mxu0 0.0
  %4744 = vmatprep.subr.mxu0 0.0
  %4745 = vmatpush1.msra.mxu0 0.0
  %4746 = vmatprep.subr.mxu0 0.0
  %4747 = vmatpush1.msra.mxu0 0.0
  %4748 = vmatprep.subr.mxu0 0.0
  %4749 = vmatpush1.msra.mxu0 0.0
  %4750 = vmatprep.subr.mxu0 0.0
  %4751 = vmatpush1.msra.mxu0 0.0
  %4752 = vmatprep.subr.mxu0 0.0
  %4753 = vmatpush1.msra.mxu0 0.0
  %4754 = vmatprep.subr.mxu0 0.0
  %4755 = vmatpush1.msra.mxu0 0.0
  %4756 = vmatprep.subr.mxu0 0.0
  %4757 = vmatpush1.msra.mxu0 0.0
  %4758 = vmatprep.subr.mxu0 0.0
  %4759 = vmatpush1.msra.mxu0 0.0
  %4760 = vmatprep.subr.mxu0 0.0
  %4761 = vmatpush1.msra.mxu0 0.0
  %4762 = vmatprep.subr.mxu0 0.0
  %4763 = vmatpush1.msra.mxu0 0.0
  %4764 = vmatprep.subr.mxu0 0.0
  %4765 = vmatpush1.msra.mxu0 0.0
  %4766 = vmatprep.mubr.f32.mxu0 0.0
  %4767 = vmatmul.mubr.f32.gmra.mrb[0].mxu0 %v4697
  %v4768 = vpop.f32.mrb[0].mxu0
  %v4769 = vadd.f32 %v4695, %v4768
  %v4770 = vpop.f32.mrb[0].mxu0
  %4771 = vmatprep.mubr.f32.mxu0 0.0
  %4772 = vmatmul.mubr.f32.gmra.mrb[0].mxu0 %v4700
  %v4773 = vpop.f32.mrb[0].mxu0
  %v4774 = vadd.f32 %v4695, %v4773
  %v4775 = vpop.f32.mrb[0].mxu0
  %4776 = vdwg.mxu0
  %v4777 = vmul.f32 %v4769, 0.5
  %v4778 = vmul.f32 %v4774, 0.5
  %v4779 = vmul.f32 %v4769, 0.70710677
  %v4780 = vmul.f32 %v4774, 0.70710677
  %v4781 = verf.f32.pop %v4779
  %v4782 = verf.f32.pop %v4780
  %v4783 = vadd.f32 %v4781, 1.0
  %v4784 = vadd.f32 %v4782, 1.0
  %v4785 = vmul.f32 %v4777, %v4783
  %v4786 = vmul.f32 %v4778, %v4784
  %v4787 = vld [vmem:[%s3001 + $0x20] sm:$0xff]
  %v4788 = vld [vmem:[%s3001 + $0x28] sm:$0xff]
  %v4789 = vld [vmem:[%s3001 + $0x30] sm:$0xff]
  %v4790 = vld [vmem:[%s3001 + $0x38] sm:$0xff]
  %v4791 = vld [vmem:[%s3001 + $0x40] sm:$0xff]
  %v4792 = vld [vmem:[%s3001 + $0x48] sm:$0xff]
  %v4793 = vld [vmem:[%s3001 + $0x50] sm:$0xff]
  %v4794 = vld [vmem:[%s3001 + $0x58] sm:$0xff]
  %v4795 = vld [vmem:[%s3001 + $0x60] sm:$0xff]
  %v4796 = vld [vmem:[%s3001 + $0x68] sm:$0xff]
  %v4797 = vld [vmem:[%s3001 + $0x70] sm:$0xff]
  %v4798 = vld [vmem:[%s3001 + $0x78] sm:$0xff]
  %v4799 = vld [vmem:[%s3001 + $0x80] sm:$0xff]
  %v4800 = vld [vmem:[%s3001 + $0x88] sm:$0xff]
  %v4801 = vld [vmem:[%s3001 + $0x90] sm:$0xff]
  %v4802 = vld [vmem:[%s3001 + $0x98] sm:$0xff]
  %v4803 = vlaneseq
  %v4804 = vshrl.u32 %v4803, 7
  %v4805 = vsub.s32 0, %v4804
  %v4806 = vrot.slane %v2518, %v4805
  %4807 = vmatprep.subr.mxu0 0.0
  %4808 = vmatpush1.msra.mxu0 %v4787
  %4809 = vmatprep.subr.mxu0 0.0
  %4810 = vmatpush1.msra.mxu0 %v4788
  %4811 = vmatprep.subr.mxu0 0.0
  %4812 = vmatpush1.msra.mxu0 %v4789
  %4813 = vmatprep.subr.mxu0 0.0
  %4814 = vmatpush1.msra.mxu0 %v4790
  %4815 = vmatprep.subr.mxu0 0.0
  %4816 = vmatpush1.msra.mxu0 %v4791
  %4817 = vmatprep.subr.mxu0 0.0
  %4818 = vmatpush1.msra.mxu0 %v4792
  %4819 = vmatprep.subr.mxu0 0.0
  %4820 = vmatpush1.msra.mxu0 %v4793
  %4821 = vmatprep.subr.mxu0 0.0
  %4822 = vmatpush1.msra.mxu0 %v4794
  %4823 = vmatprep.subr.mxu0 0.0
  %4824 = vmatpush1.msra.mxu0 %v4795
  %4825 = vmatprep.subr.mxu0 0.0
  %4826 = vmatpush1.msra.mxu0 %v4796
  %4827 = vmatprep.subr.mxu0 0.0
  %4828 = vmatpush1.msra.mxu0 %v4797
  %4829 = vmatprep.subr.mxu0 0.0
  %4830 = vmatpush1.msra.mxu0 %v4798
  %4831 = vmatprep.subr.mxu0 0.0
  %4832 = vmatpush1.msra.mxu0 %v4799
  %4833 = vmatprep.subr.mxu0 0.0
  %4834 = vmatpush1.msra.mxu0 %v4800
  %4835 = vmatprep.subr.mxu0 0.0
  %4836 = vmatpush1.msra.mxu0 %v4801
  %4837 = vmatprep.subr.mxu0 0.0
  %4838 = vmatpush1.msra.mxu0 %v4802
  %4839 = vmatprep.subr.mxu0 0.0
  %4840 = vmatpush1.msra.mxu0 0.0
  %4841 = vmatprep.subr.mxu0 0.0
  %4842 = vmatpush1.msra.mxu0 0.0
  %4843 = vmatprep.subr.mxu0 0.0
  %4844 = vmatpush1.msra.mxu0 0.0
  %4845 = vmatprep.subr.mxu0 0.0
  %4846 = vmatpush1.msra.mxu0 0.0
  %4847 = vmatprep.subr.mxu0 0.0
  %4848 = vmatpush1.msra.mxu0 0.0
  %4849 = vmatprep.subr.mxu0 0.0
  %4850 = vmatpush1.msra.mxu0 0.0
  %4851 = vmatprep.subr.mxu0 0.0
  %4852 = vmatpush1.msra.mxu0 0.0
  %4853 = vmatprep.subr.mxu0 0.0
  %4854 = vmatpush1.msra.mxu0 0.0
  %4855 = vmatprep.subr.mxu0 0.0
  %4856 = vmatpush1.msra.mxu0 0.0
  %4857 = vmatprep.subr.mxu0 0.0
  %4858 = vmatpush1.msra.mxu0 0.0
  %4859 = vmatprep.subr.mxu0 0.0
  %4860 = vmatpush1.msra.mxu0 0.0
  %4861 = vmatprep.subr.mxu0 0.0
  %4862 = vmatpush1.msra.mxu0 0.0
  %4863 = vmatprep.subr.mxu0 0.0
  %4864 = vmatpush1.msra.mxu0 0.0
  %4865 = vmatprep.subr.mxu0 0.0
  %4866 = vmatpush1.msra.mxu0 0.0
  %4867 = vmatprep.subr.mxu0 0.0
  %4868 = vmatpush1.msra.mxu0 0.0
  %4869 = vmatprep.subr.mxu0 0.0
  %4870 = vmatpush1.msra.mxu0 0.0
  %4871 = vmatprep.mubr.f32.mxu0 0.0
  %4872 = vmatmul.mubr.f32.gmra.mrb[0].mxu0 %v4785
  %v4873 = vpop.f32.mrb[0].mxu0
  %v4874 = vadd.f32 %v4806, %v4873
  %v4875 = vpop.f32.mrb[0].mxu0
  %4876 = vmatprep.mubr.f32.mxu0 0.0
  %4877 = vmatmul.mubr.f32.gmra.mrb[0].mxu0 %v4786
  %v4878 = vpop.f32.mrb[0].mxu0
  %v4879 = vpop.f32.mrb[0].mxu0
  %4880 = vdwg.mxu0
  %v4881 = vadd.f32 %v4648, %v4874
  %v4882 = vld [vmem:[%s4 + $0x20] sm:$0x1]
  %v4883 = vld [vmem:[%s4 + $0x21] sm:$0x1]
  %v4884 = vsel %vm141, %v4881, 0.0
  %4885 = vadd.xlane.f32.xlu0 %v4884
  %v4886 = vpop.xlane.xlu0 %4885
  %v4887 = vmul.f32 %v4886, %v149
  %v4888 = vsub.f32 %v4881, %v4887
  %v4889 = vmul.f32 %v4888, %v4888
  %v4890 = vsel %vm141, %v4889, 0.0
  %4891 = vadd.xlane.f32.xlu0 %v4890
  %v4892 = vpop.xlane.xlu0 %4891
  %v4893 = vmul.f32 %v4892, %v149
  %v4894 = vadd.f32 %v4893, 1e-06
  %v4895 = vrsqrt.pop %v4894
  %v4896 = vmul.f32 %v4888, %v4895
  %v4897 = vlaneseq
  %v4898 = vshrl.u32 %v4897, 7
  %v4899 = vsub.s32 0, %v4898
  %v4900 = vrot.slane %v4882, %v4899
  %v4901 = vmul.f32 %v4896, %v4900
  %v4902 = vlaneseq
  %v4903 = vshrl.u32 %v4902, 7
  %v4904 = vsub.s32 0, %v4903
  %v4905 = vrot.slane %v4883, %v4904
  %v4906 = vadd.f32 %v4901, %v4905
  %v4907 = vld [vmem:[%s3 + $0xc0] sm:$0xff]
  %v4908 = vld [vmem:[%s3 + $0xc8] sm:$0xff]
  %v4909 = vld [vmem:[%s3 + $0xd0] sm:$0xff]
  %v4910 = vld [vmem:[%s3 + $0xd8] sm:$0xff]
  %v4911 = vld [vmem:[%s4 + $0x22] sm:$0x1]
  %v4912 = vlaneseq
  %v4913 = vshrl.u32 %v4912, 7
  %v4914 = vsub.s32 0, %v4913
  %v4915 = vrot.slane %v4911, %v4914
  %v4917 = vsel %vm141, %v4906, 0
  %4919 = vmatprep.subr.mxu0 0.0
  %4920 = vmatpush1.msra.mxu0 %v4907
  %4921 = vmatprep.subr.mxu0 0.0
  %4922 = vmatpush1.msra.mxu0 %v4908
  %4923 = vmatprep.subr.mxu0 0.0
  %4924 = vmatpush1.msra.mxu0 %v4909
  %4925 = vmatprep.subr.mxu0 0.0
  %4926 = vmatpush1.msra.mxu0 %v4910
  %4927 = vmatprep.subr.mxu0 0.0
  %4928 = vmatpush1.msra.mxu0 0.0
  %4929 = vmatprep.subr.mxu0 0.0
  %4930 = vmatpush1.msra.mxu0 0.0
  %4931 = vmatprep.subr.mxu0 0.0
  %4932 = vmatpush1.msra.mxu0 0.0
  %4933 = vmatprep.subr.mxu0 0.0
  %4934 = vmatpush1.msra.mxu0 0.0
  %4935 = vmatprep.subr.mxu0 0.0
  %4936 = vmatpush1.msra.mxu0 0.0
  %4937 = vmatprep.subr.mxu0 0.0
  %4938 = vmatpush1.msra.mxu0 0.0
  %4939 = vmatprep.subr.mxu0 0.0
  %4940 = vmatpush1.msra.mxu0 0.0
  %4941 = vmatprep.subr.mxu0 0.0
  %4942 = vmatpush1.msra.mxu0 0.0
  %4943 = vmatprep.subr.mxu0 0.0
  %4944 = vmatpush1.msra.mxu0 0.0
  %4945 = vmatprep.subr.mxu0 0.0
  %4946 = vmatpush1.msra.mxu0 0.0
  %4947 = vmatprep.subr.mxu0 0.0
  %4948 = vmatpush1.msra.mxu0 0.0
  %4949 = vmatprep.subr.mxu0 0.0
  %4950 = vmatpush1.msra.mxu0 0.0
  %4951 = vmatprep.subr.mxu0 0.0
  %4952 = vmatpush1.msra.mxu0 0.0
  %4953 = vmatprep.subr.mxu0 0.0
  %4954 = vmatpush1.msra.mxu0 0.0
  %4955 = vmatprep.subr.mxu0 0.0
  %4956 = vmatpush1.msra.mxu0 0.0
  %4957 = vmatprep.subr.mxu0 0.0
  %4958 = vmatpush1.msra.mxu0 0.0
  %4959 = vmatprep.subr.mxu0 0.0
  %4960 = vmatpush1.msra.mxu0 0.0
  %4961 = vmatprep.subr.mxu0 0.0
  %4962 = vmatpush1.msra.mxu0 0.0
  %4963 = vmatprep.subr.mxu0 0.0
  %4964 = vmatpush1.msra.mxu0 0.0
  %4965 = vmatprep.subr.mxu0 0.0
  %4966 = vmatpush1.msra.mxu0 0.0
  %4967 = vmatprep.subr.mxu0 0.0
  %4968 = vmatpush1.msra.mxu0 0.0
  %4969 = vmatprep.subr.mxu0 0.0
  %4970 = vmatpush1.msra.mxu0 0.0
  %4971 = vmatprep.subr.mxu0 0.0
  %4972 = vmatpush1.msra.mxu0 0.0
  %4973 = vmatprep.subr.mxu0 0.0
  %4974 = vmatpush1.msra.mxu0 0.0
  %4975 = vmatprep.subr.mxu0 0.0
  %4976 = vmatpush1.msra.mxu0 0.0
  %4977 = vmatprep.subr.mxu0 0.0
  %4978 = vmatpush1.msra.mxu0 0.0
  %4979 = vmatprep.subr.mxu0 0.0
  %4980 = vmatpush1.msra.mxu0 0.0
  %4981 = vmatprep.subr.mxu0 0.0
  %4982 = vmatpush1.msra.mxu0 0.0
  %4983 = vmatprep.mubr.f32.mxu0 0.0
  %4984 = vmatmul.mubr.f32.gmra.mrb[0].mxu0 %v4917
  %v4985 = vpop.f32.mrb[0].mxu0
  %v4986 = vadd.f32 %v4915, %v4985
  %v4987 = vpop.f32.mrb[0].mxu0
  %4988 = vdwg.mxu0
  %v4989 = vmax.f32 %v4986, 0.0
  %v4990 = vld [vmem:[%s0 + $0x20] sm:$0xff]
  %v4991 = vld [vmem:[%s0 + $0x30] sm:$0xff]
  %v4992 = vld [vmem:[%s3 + $0xe0] sm:$0xff]
  %v4993 = vld [vmem:[%s3 + $0xe8] sm:$0xff]
  %v4994 = vld [vmem:[%s3 + $0xf0] sm:$0xff]
  %v4995 = vld [vmem:[%s3 + $0xf8] sm:$0xff]
  %v4996 = vld [vmem:[%s4 + $0x23] sm:$0x1]
  %v4997 = vld [vmem:[%s3 + $0x100] sm:$0xff]
  %v4998 = vld [vmem:[%s3 + $0x108] sm:$0xff]
  %v4999 = vld [vmem:[%s3 + $0x110] sm:$0xff]
  %v5000 = vld [vmem:[%s3 + $0x118] sm:$0xff]
  %v5001 = vld [vmem:[%s4 + $0x24] sm:$0x1]
  %v5002 = vlaneseq
  %v5003 = vshrl.u32 %v5002, 7
  %v5004 = vsub.s32 0, %v5003
  %v5005 = vrot.slane %v4996, %v5004
  %v5007 = vsel %vm141, %v4989, 0
  %5009 = vmatprep.subr.mxu0 0.0
  %5010 = vmatpush1.msra.mxu0 %v4992
  %5011 = vmatprep.subr.mxu0 0.0
  %5012 = vmatpush1.msra.mxu0 %v4993
  %5013 = vmatprep.subr.mxu0 0.0
  %5014 = vmatpush1.msra.mxu0 %v4994
  %5015 = vmatprep.subr.mxu0 0.0
  %5016 = vmatpush1.msra.mxu0 %v4995
  %5017 = vmatprep.subr.mxu0 0.0
  %5018 = vmatpush1.msra.mxu0 0.0
  %5019 = vmatprep.subr.mxu0 0.0
  %5020 = vmatpush1.msra.mxu0 0.0
  %5021 = vmatprep.subr.mxu0 0.0
  %5022 = vmatpush1.msra.mxu0 0.0
  %5023 = vmatprep.subr.mxu0 0.0
  %5024 = vmatpush1.msra.mxu0 0.0
  %5025 = vmatprep.subr.mxu0 0.0
  %5026 = vmatpush1.msra.mxu0 0.0
  %5027 = vmatprep.subr.mxu0 0.0
  %5028 = vmatpush1.msra.mxu0 0.0
  %5029 = vmatprep.subr.mxu0 0.0
  %5030 = vmatpush1.msra.mxu0 0.0
  %5031 = vmatprep.subr.mxu0 0.0
  %5032 = vmatpush1.msra.mxu0 0.0
  %5033 = vmatprep.subr.mxu0 0.0
  %5034 = vmatpush1.msra.mxu0 0.0
  %5035 = vmatprep.subr.mxu0 0.0
  %5036 = vmatpush1.msra.mxu0 0.0
  %5037 = vmatprep.subr.mxu0 0.0
  %5038 = vmatpush1.msra.mxu0 0.0
  %5039 = vmatprep.subr.mxu0 0.0
  %5040 = vmatpush1.msra.mxu0 0.0
  %5041 = vmatprep.subr.mxu0 0.0
  %5042 = vmatpush1.msra.mxu0 0.0
  %5043 = vmatprep.subr.mxu0 0.0
  %5044 = vmatpush1.msra.mxu0 0.0
  %5045 = vmatprep.subr.mxu0 0.0
  %5046 = vmatpush1.msra.mxu0 0.0
  %5047 = vmatprep.subr.mxu0 0.0
  %5048 = vmatpush1.msra.mxu0 0.0
  %5049 = vmatprep.subr.mxu0 0.0
  %5050 = vmatpush1.msra.mxu0 0.0
  %5051 = vmatprep.subr.mxu0 0.0
  %5052 = vmatpush1.msra.mxu0 0.0
  %5053 = vmatprep.subr.mxu0 0.0
  %5054 = vmatpush1.msra.mxu0 0.0
  %5055 = vmatprep.subr.mxu0 0.0
  %5056 = vmatpush1.msra.mxu0 0.0
  %5057 = vmatprep.subr.mxu0 0.0
  %5058 = vmatpush1.msra.mxu0 0.0
  %5059 = vmatprep.subr.mxu0 0.0
  %5060 = vmatpush1.msra.mxu0 0.0
  %5061 = vmatprep.subr.mxu0 0.0
  %5062 = vmatpush1.msra.mxu0 0.0
  %5063 = vmatprep.subr.mxu0 0.0
  %5064 = vmatpush1.msra.mxu0 0.0
  %5065 = vmatprep.subr.mxu0 0.0
  %5066 = vmatpush1.msra.mxu0 0.0
  %5067 = vmatprep.subr.mxu0 0.0
  %5068 = vmatpush1.msra.mxu0 0.0
  %5069 = vmatprep.subr.mxu0 0.0
  %5070 = vmatpush1.msra.mxu0 0.0
  %5071 = vmatprep.subr.mxu0 0.0
  %5072 = vmatpush1.msra.mxu0 0.0
  %5073 = vmatprep.mubr.f32.mxu0 0.0
  %5074 = vmatmul.mubr.f32.gmra.mrb[0].mxu0 %v5007
  %v5075 = vpop.f32.mrb[0].mxu0
  %v5076 = vadd.f32 %v5005, %v5075
  %v5077 = vpop.f32.mrb[0].mxu0
  %5078 = vdwg.mxu0
  %vm5079 = vcmask 15360
  %v5080 = vsel %vm5079, %v5076, -inf
  %5081 = vmax.xlane.f32.xlu0 %v5080
  %v5082 = vpop.xlane.xlu0 %5081
  %v5083 = vsub.f32 %v5076, %v5082
  %v5084 = vmul.f32 %v5083, 1.442695
  %v5085 = vpow.pop %v5084
  %v5086 = vsel %vm5079, %v5085, 0.0
  %5087 = vadd.xlane.f32.xlu0 %v5086
  %v5088 = vpop.xlane.xlu0 %5087
  %v5089 = vlog2.pop %v5088
  %v5090 = vmul.f32 %v5089, 0.6931472
  %v5091 = vadd.f32 %v5082, %v5090
  %v5092 = vsub.f32 %v5076, %v5091
  %v5093 = vmul.f32 %v5092, 1.442695
  %v5094 = vpow.pop %v5093
  %v5095 = vlaneseq
  %v5096 = vshrl.u32 %v5095, 7
  %v5097 = vsub.s32 0, %v5096
  %v5098 = vrot.slane %v5001, %v5097
  %5099 = vmatprep.subr.mxu0 0.0
  %5100 = vmatpush1.msra.mxu0 %v4997
  %5101 = vmatprep.subr.mxu0 0.0
  %5102 = vmatpush1.msra.mxu0 %v4998
  %5103 = vmatprep.subr.mxu0 0.0
  %5104 = vmatpush1.msra.mxu0 %v4999
  %5105 = vmatprep.subr.mxu0 0.0
  %5106 = vmatpush1.msra.mxu0 %v5000
  %5107 = vmatprep.subr.mxu0 0.0
  %5108 = vmatpush1.msra.mxu0 0.0
  %5109 = vmatprep.subr.mxu0 0.0
  %5110 = vmatpush1.msra.mxu0 0.0
  %5111 = vmatprep.subr.mxu0 0.0
  %5112 = vmatpush1.msra.mxu0 0.0
  %5113 = vmatprep.subr.mxu0 0.0
  %5114 = vmatpush1.msra.mxu0 0.0
  %5115 = vmatprep.subr.mxu0 0.0
  %5116 = vmatpush1.msra.mxu0 0.0
  %5117 = vmatprep.subr.mxu0 0.0
  %5118 = vmatpush1.msra.mxu0 0.0
  %5119 = vmatprep.subr.mxu0 0.0
  %5120 = vmatpush1.msra.mxu0 0.0
  %5121 = vmatprep.subr.mxu0 0.0
  %5122 = vmatpush1.msra.mxu0 0.0
  %5123 = vmatprep.subr.mxu0 0.0
  %5124 = vmatpush1.msra.mxu0 0.0
  %5125 = vmatprep.subr.mxu0 0.0
  %5126 = vmatpush1.msra.mxu0 0.0
  %5127 = vmatprep.subr.mxu0 0.0
  %5128 = vmatpush1.msra.mxu0 0.0
  %5129 = vmatprep.subr.mxu0 0.0
  %5130 = vmatpush1.msra.mxu0 0.0
  %5131 = vmatprep.subr.mxu0 0.0
  %5132 = vmatpush1.msra.mxu0 0.0
  %5133 = vmatprep.subr.mxu0 0.0
  %5134 = vmatpush1.msra.mxu0 0.0
  %5135 = vmatprep.subr.mxu0 0.0
  %5136 = vmatpush1.msra.mxu0 0.0
  %5137 = vmatprep.subr.mxu0 0.0
  %5138 = vmatpush1.msra.mxu0 0.0
  %5139 = vmatprep.subr.mxu0 0.0
  %5140 = vmatpush1.msra.mxu0 0.0
  %5141 = vmatprep.subr.mxu0 0.0
  %5142 = vmatpush1.msra.mxu0 0.0
  %5143 = vmatprep.subr.mxu0 0.0
  %5144 = vmatpush1.msra.mxu0 0.0
  %5145 = vmatprep.subr.mxu0 0.0
  %5146 = vmatpush1.msra.mxu0 0.0
  %5147 = vmatprep.subr.mxu0 0.0
  %5148 = vmatpush1.msra.mxu0 0.0
  %5149 = vmatprep.subr.mxu0 0.0
  %5150 = vmatpush1.msra.mxu0 0.0
  %5151 = vmatprep.subr.mxu0 0.0
  %5152 = vmatpush1.msra.mxu0 0.0
  %5153 = vmatprep.subr.mxu0 0.0
  %5154 = vmatpush1.msra.mxu0 0.0
  %5155 = vmatprep.subr.mxu0 0.0
  %5156 = vmatpush1.msra.mxu0 0.0
  %5157 = vmatprep.subr.mxu0 0.0
  %5158 = vmatpush1.msra.mxu0 0.0
  %5159 = vmatprep.subr.mxu0 0.0
  %5160 = vmatpush1.msra.mxu0 0.0
  %5161 = vmatprep.subr.mxu0 0.0
  %5162 = vmatpush1.msra.mxu0 0.0
  %5163 = vmatprep.mubr.f32.mxu0 0.0
  %5164 = vmatmul.mubr.f32.gmra.mrb[0].mxu0 %v5007
  %v5165 = vpop.f32.mrb[0].mxu0
  %v5166 = vadd.f32 %v5098, %v5165
  %v5167 = vpop.f32.mrb[0].mxu0
  %5168 = vdwg.mxu0
  %v5169 = vlaneseq
  %v5170 = vand.u32 %v5169, 127
  %v5171 = vcvt.s32.f32 %v5170
  %v5172 = vmul.f32 %v4990, 4.0
  %5174 = vset.pattern.permute.xlu0 0
  %5175 = vperm.xlu0 %5174, %v5172
  %v5176 = vpop.permute.xlu0 %5175
  %vm5178 = vcmp.ge.f32.partialorder %v5171, %v5176
  %v5179 = vadd.f32 %v5172, 4.0
  %5181 = vset.pattern.permute.xlu0 0
  %5182 = vperm.xlu0 %5181, %v5179
  %v5183 = vpop.permute.xlu0 %5182
  %vm5185 = vcmp.lt.f32.partialorder %v5171, %v5183
  %vm5186 = vmand %vm5178, %vm5185
  %v5187 = vsel %vm5186, %v5166, -1e+30
  %v5188 = vsel %vm433, %v5187, -inf
  %5189 = vmax.xlane.f32.xlu0 %v5188
  %v5190 = vpop.xlane.xlu0 %5189
  %v5191 = vsub.f32 %v5187, %v5190
  %v5192 = vmul.f32 %v5191, 1.442695
  %v5193 = vpow.pop %v5192
  %v5194 = vsel %vm433, %v5193, 0.0
  %5195 = vadd.xlane.f32.xlu0 %v5194
  %v5196 = vpop.xlane.xlu0 %5195
  %v5197 = vlog2.pop %v5196
  %v5198 = vmul.f32 %v5197, 0.6931472
  %v5199 = vadd.f32 %v5190, %v5198
  %v5200 = vsub.f32 %v5187, %v5199
  %v5201 = vmul.f32 %v5200, 1.442695
  %v5202 = vpow.pop %v5201
  %5204 = vset.pattern.permute.xlu0 0
  %5205 = vperm.xlu0 %5204, %v4990
  %v5206 = vpop.permute.xlu0 %5205
  %vm5208 = vcmp.eq.f32.partialorder %v5171, %v5206
  %v5209 = vsel %vm5208, %v5092, 0.0
  %v5210 = vsel %vm5079, %v5209, 0.0
  %5211 = vadd.xlane.f32.xlu0 %v5210
  %v5212 = vpop.xlane.xlu0 %5211
  %v5213 = vadd.f32 %v5172, %v4991
  %5215 = vset.pattern.permute.xlu0 0
  %5216 = vperm.xlu0 %5215, %v5213
  %v5217 = vpop.permute.xlu0 %5216
  %vm5219 = vcmp.eq.f32.partialorder %v5171, %v5217
  %v5220 = vsel %vm5219, %v5200, 0.0
  %v5221 = vsel %vm433, %v5220, 0.0
  %5222 = vadd.xlane.f32.xlu0 %v5221
  %v5223 = vpop.xlane.xlu0 %5222
  %v5224 = vadd.f32 %v5212, %v5223
  %v5225 = vsub.f32 0.0, %v5224
  %v5226 = vsel %vm5079, %v5094, -inf
  %5227 = vmax.xlane.f32.xlu0 %v5226
  %v5228 = vpop.xlane.xlu0 %5227
  %vm5229 = vcmp.ge.f32.partialorder %v5094, %v5228
  %v5230 = vsel %vm5229, %v5171, 2.0
  %v5231 = vsel %vm5079, %v5230, inf
  %5232 = vmin.xlane.f32.xlu0 %v5231
  %v5233 = vpop.xlane.xlu0 %5232
  %v5234 = vsel %vm433, %v5202, -inf
  %5235 = vmax.xlane.f32.xlu0 %v5234
  %v5236 = vpop.xlane.xlu0 %5235
  %vm5237 = vcmp.ge.f32.partialorder %v5202, %v5236
  %v5238 = vsel %vm5237, %v5171, 8.0
  %v5239 = vsel %vm433, %v5238, inf
  %5240 = vmin.xlane.f32.xlu0 %v5239
  %v5241 = vpop.xlane.xlu0 %5240
  %v5242 = vmul.f32 %v5233, 4.0
  %v5243 = vsub.f32 %v5241, %v5172
  %v5244 = vadd.f32 %v5242, %v5243
  %v5245 = vmul.f32 %v5228, %v5236
  %vm5246 = vcmp.eq.s32.totalorder %v5170, 0
  %v5247 = vsel %vm5246, %v5225, 0.0
  %vm5248 = vcmp.eq.s32.totalorder %v5170, 1
  %5250 = vset.pattern.permute.xlu0 0
  %5251 = vperm.xlu0 %5250, %v5244
  %v5252 = vpop.permute.xlu0 %5251
  %v5254 = vsel %vm5248, %v5252, 0.0
  %v5255 = vadd.f32 %v5247, %v5254
  %vm5256 = vcmp.eq.s32.totalorder %v5170, 2
  %v5257 = vsel %vm5256, %v5245, 0.0
  %v5258 = vadd.f32 %v5255, %v5257
  %5259 = vst [vmem:[%s5] sm:$0xff] %v5258
  // Predicated region
  $region22: #{vitae_forward.1} parent=0 // pred_check
    _
  $region23: #{vitae_forward.1} parent=0 // pred_check_branch
    %5261 = sbr.rel (0) target = $region25
  $region24: #{vitae_forward.1} parent=0 // pred_region
    _
  $region25: #{vitae_forward.1} parent=0 // pred_fallthru
    _
  // Predicated region
  $region26: #{vitae_forward.1} parent=0 // pred_check
    _
  $region27: #{vitae_forward.1} parent=0 // pred_check_branch
    %5263 = sbr.rel (0) target = $region29
  $region28: #{vitae_forward.1} parent=0 // pred_region
    _
  $region29: #{vitae_forward.1} parent=0 // pred_fallthru
    _

</llo_original>
